<compile_context>
chip_gen: v5e
topology: v5e:2x2
jax: 0.10.0
libtpu: 0.0.40
codegen_flags: <defaults>
</compile_context>

<pallas_src>
import functools
import numpy as np

import jax
import jax.numpy as jnp
from jax.experimental import pallas as pl
from jax.experimental.pallas import tpu as pltpu

BN_EPS = 1e-5


# ----------------------------- Pallas kernels -----------------------------

def _conv_bn_relu_pool_kernel(x_ref, w_ref, shift_ref, o_ref):
    """Fused 3x3 conv (im2col matmul, taps folded into K) + BN + ReLU + maxpool.

    x_ref:     (P, TM, K)  im2col rows; P = 4 pool-window taps (or 1 = no pool)
    w_ref:     (K, Cout)   conv weights with the BN scale folded in, K = 9*Cin
    shift_ref: (1, Cout)   folded BN shift
    o_ref:     (TM, Cout)
    """
    w = w_ref[...]
    shift = shift_ref[...]
    acc = jnp.dot(x_ref[0], w, preferred_element_type=jnp.float32)
    acc = jnp.maximum(acc + shift, 0.0)
    for t in range(1, x_ref.shape[0]):          # static unroll over pool taps
        y = jnp.dot(x_ref[t], w, preferred_element_type=jnp.float32)
        acc = jnp.maximum(acc, jnp.maximum(y + shift, 0.0))
    o_ref[...] = acc


def _maxpool_kernel(x_ref, o_ref):
    # x_ref: (4, TM, C) -- the four 2x2 window taps.  (Standalone pool; unused
    # for the default cfg because every conv here fuses its following pool.)
    m = x_ref[0]
    for t in range(1, x_ref.shape[0]):
        m = jnp.maximum(m, x_ref[t])
    o_ref[...] = m


def _avgpool_kernel(p_ref, x_ref, o_ref):
    # Adaptive avg-pool as one batched contraction:
    #   p_ref: (B, 49, HW), x_ref: (B, HW, C) -> o_ref: (B, 49, C)
    o_ref[...] = jnp.einsum("bow,bwc->boc", p_ref[...], x_ref[...],
                            preferred_element_type=jnp.float32)


def _linear_kernel(x_ref, w_ref, b_ref, o_ref, acc_ref, *, relu):
    # K-tiled matmul with f32 VMEM accumulator; grid axis = reduction over K.
    k = pl.program_id(0)

    @pl.when(k == 0)
    def _():
        acc_ref[...] = jnp.zeros_like(acc_ref)

    acc_ref[...] += jnp.dot(x_ref[...], w_ref[...],
                            preferred_element_type=jnp.float32)

    @pl.when(k == pl.num_programs(0) - 1)
    def _():
        y = acc_ref[...] + b_ref[...]
        if relu:
            y = jnp.maximum(y, 0.0)
        o_ref[...] = y


# ------------------------------ Wrappers -----------------------------------

def conv3x3_bn_relu(x, w, gamma, beta, mean, var, *, fuse_pool=False, tm=512):
    """x: (B,H,W,Cin) NHWC, w: (3,3,Cin,Cout).

    Fused conv(pad=1) + eval-mode BatchNorm + ReLU, optionally fused with the
    following 2x2/stride-2 maxpool (fuse_pool=True) so the pre-pool activation
    never touches HBM.
    """
    B, H, W, Cin = x.shape
    Cout = w.shape[-1]
    if Cin % 8 != 0:  # pad tiny channel counts; padded lanes are zero -> exact
        pad = 8 - Cin % 8
        x = jnp.pad(x, ((0, 0), (0, 0), (0, 0), (0, pad)))
        w = jnp.pad(w, ((0, 0), (0, 0), (0, pad), (0, 0)))
        Cin += pad

    # Fold eval-mode BN into the conv weights: conv(x, w*scale) + shift.
    scale = gamma / jnp.sqrt(var + BN_EPS)
    wf = (w * scale[None, None, None, :]).astype(jnp.float32)
    shift = (beta - mean * scale).astype(jnp.float32).reshape(1, Cout)

    K = 9 * Cin
    xp = jnp.pad(x, ((0, 0), (1, 1), (1, 1), (0, 0)))
    # im2col with the 9 taps fused into K: columns ordered (dy, dx, cin),
    # matching wf.reshape(9*Cin, Cout).
    # TODO(synk): for large spatial sizes, replace this JAX-side im2col with a
    # halo-tiled BlockSpec so each input byte is streamed from HBM only once.
    taps = [xp[:, dy:dy + H, dx:dx + W, :] for dy in range(3) for dx in range(3)]
    xs = jnp.concatenate(taps, axis=-1)                      # (B, H, W, 9*Cin)
    wk = wf.reshape(K, Cout)

    if fuse_pool:
        Ho, Wo = H // 2, W // 2
        # leading axis = the 4 positions of each 2x2 pool window
        xs = xs.reshape(B, Ho, 2, Wo, 2, K).transpose(2, 4, 0, 1, 3, 5)
        xs = xs.reshape(4, B * Ho * Wo, K)
        P = 4
    else:
        Ho, Wo = H, W
        xs = xs.reshape(1, B * H * W, K)
        P = 1

    M = B * Ho * Wo
    tm = min(tm, M)
    if M % tm != 0:          # fall back to one tile for awkward sizes
        tm = M

    out = pl.pallas_call(
        _conv_bn_relu_pool_kernel,
        out_shape=jax.ShapeDtypeStruct((M, Cout), jnp.float32),
        grid=(M // tm,),
        in_specs=[
            pl.BlockSpec((P, tm, K), lambda i: (0, i, 0)),
            pl.BlockSpec((K, Cout), lambda i: (0, 0)),
            pl.BlockSpec((1, Cout), lambda i: (0, 0)),
        ],
        out_specs=pl.BlockSpec((tm, Cout), lambda i: (i, 0)),
        compiler_params=pltpu.CompilerParams(
            dimension_semantics=("parallel",),
        ),
    )(xs, wk, shift)
    return out.reshape(B, Ho, Wo, Cout)


def maxpool2x2(x, *, tm=512):
    """Standalone 2x2/stride-2 maxpool (only used if a pool is not conv-fused)."""
    B, H, W, C = x.shape
    Ho, Wo = H // 2, W // 2
    M = B * Ho * Wo
    xr = x.reshape(B, Ho, 2, Wo, 2, C).transpose(2, 4, 0, 1, 3, 5).reshape(4, M, C)
    tm = min(tm, M)
    if M % tm != 0:
        tm = M
    out = pl.pallas_call(
        _maxpool_kernel,
        out_shape=jax.ShapeDtypeStruct((M, C), jnp.float32),
        grid=(M // tm,),
        in_specs=[pl.BlockSpec((4, tm, C), lambda i: (0, i, 0))],
        out_specs=pl.BlockSpec((tm, C), lambda i: (i, 0)),
        compiler_params=pltpu.CompilerParams(
            dimension_semantics=("parallel",),
        ),
    )(xr)
    return out.reshape(B, Ho, Wo, C)


def _adaptive_pool_matrix(in_size, out_size):
    P = np.zeros((out_size, in_size), np.float32)
    for i in range(out_size):
        s = (i * in_size) // out_size
        e = -(-((i + 1) * in_size) // out_size)  # ceil
        P[i, s:e] = 1.0 / (e - s)
    return P


def adaptive_avgpool_7x7(x):
    """x: (B,H,W,C) -> (B,49,C)  (rows ordered h*7+w, matching torch)."""
    B, H, W, C = x.shape
    Ph = _adaptive_pool_matrix(H, 7)
    Pw = _adaptive_pool_matrix(W, 7)
    P = np.einsum("ih,jw->ijhw", Ph, Pw).reshape(49, H * W)
    Pb = jnp.broadcast_to(jnp.asarray(P, jnp.float32)[None], (B, 49, H * W))
    xf = x.reshape(B, H * W, C)
    return pl.pallas_call(
        _avgpool_kernel,
        out_shape=jax.ShapeDtypeStruct((B, 49, C), jnp.float32),
    )(Pb, xf)


def linear(x, w, b, *, relu, tk=None):
    """x: (B,K), w: (K,N), b: (N,).  y = x @ w + b (f32 accumulate), fused ReLU.

    If w is bfloat16, x is cast to bf16 too so the MXU streams half the bytes;
    accumulation stays in float32.
    """
    B, K = x.shape
    N = w.shape[1]
    if tk is None:
        tk = K
    assert K % tk == 0
    if w.dtype == jnp.bfloat16:
        x = x.astype(jnp.bfloat16)
    kern = functools.partial(_linear_kernel, relu=relu)
    return pl.pallas_call(
        kern,
        out_shape=jax.ShapeDtypeStruct((B, N), jnp.float32),
        grid=(K // tk,),
        in_specs=[
            pl.BlockSpec((B, tk), lambda k: (0, k)),
            pl.BlockSpec((tk, N), lambda k: (k, 0)),
            pl.BlockSpec((1, N), lambda k: (0, 0)),
        ],
        out_specs=pl.BlockSpec((B, N), lambda k: (0, 0)),
        scratch_shapes=[pltpu.VMEM((B, N), jnp.float32)],
        compiler_params=pltpu.CompilerParams(
            dimension_semantics=("arbitrary",),
            vmem_limit_bytes=48 << 20,   # headroom on v7x's 64 MiB VMEM
        ),
    )(x, w, b.reshape(1, N).astype(jnp.float32))


# ------------------------------ VGG model ----------------------------------

CFG = [64, "M", 512, "M"]  # small cfg; must end with 512 for the classifier
NUM_CLASSES = 2
INPUT_CHANNELS = 1


def init_params(key):
    ks = jax.random.split(key, 8)
    params = {}
    # conv weights: kaiming_normal_(mode='fan_out', nonlinearity='relu')
    conv_shapes = [(3, 3, INPUT_CHANNELS, 64), (3, 3, 64, 512)]
    for i, shp in enumerate(conv_shapes):
        cout = shp[-1]
        std = np.sqrt(2.0 / (cout * 9))
        params[f"conv{i}_w"] = jax.random.normal(ks[i], shp, jnp.float32) * std
        # BatchNorm2d: gamma=1, beta=0, running_mean=0, running_var=1
        params[f"bn{i}_gamma"] = jnp.ones((cout,), jnp.float32)
        params[f"bn{i}_beta"] = jnp.zeros((cout,), jnp.float32)
        params[f"bn{i}_mean"] = jnp.zeros((cout,), jnp.float32)
        params[f"bn{i}_var"] = jnp.ones((cout,), jnp.float32)
    # classifier: Linear weights ~ N(0, 0.01), bias 0.  Stored transposed,
    # shape (in, out).  fc0's torch column index is c*49 + h*7 + w (torch
    # flattens channel-major); our avgpool output flattens as (h*7+w)*512 + c,
    # so we permute fc0's rows once offline -- no activation transpose at
    # runtime.  fc0/fc1 weights stored bf16 (halves the dominant HBM stream).
    fc_shapes = [(512 * 7 * 7, 512), (512, 256), (256, NUM_CLASSES)]
    for i, shp in enumerate(fc_shapes):
        w = jax.random.normal(ks[2 + i], shp, jnp.float32) * 0.01
        if i == 0:
            w = w.reshape(512, 49, shp[1]).transpose(1, 0, 2).reshape(*shp)
        if i < 2:
            w = w.astype(jnp.bfloat16)
        params[f"fc{i}_w"] = w
        params[f"fc{i}_b"] = jnp.zeros((shp[1],), jnp.float32)
    return params


def vgg_forward(x_nchw, params):
    # NCHW -> NHWC for the kernels
    x = jnp.transpose(x_nchw, (0, 2, 3, 1)).astype(jnp.float32)

    conv_idx = 0
    i = 0
    while i < len(CFG):
        v = CFG[i]
        if v == "M":
            x = maxpool2x2(x)
            i += 1
        else:
            fuse = (i + 1 < len(CFG) and CFG[i + 1] == "M")
            x = conv3x3_bn_relu(
                x,
                params[f"conv{conv_idx}_w"],
                params[f"bn{conv_idx}_gamma"],
                params[f"bn{conv_idx}_beta"],
                params[f"bn{conv_idx}_mean"],
                params[f"bn{conv_idx}_var"],
                fuse_pool=fuse,
            )
            conv_idx += 1
            i += 2 if fuse else 1

    # AdaptiveAvgPool2d((7,7)) -> (B, 49, C); flatten stays in (h,w,c) order
    # because the matching permutation is folded into fc0's weight rows.
    feat = adaptive_avgpool_7x7(x)                      # (B, 49, 512)
    B = feat.shape[0]
    flat = feat.reshape(B, 49 * 512)

    # self.drop (final_drop=0.0 -> None) and nn.Dropout in the classifier are
    # identity in eval mode.
    # TODO(synk): training-mode Dropout / batch-stat BatchNorm not implemented.
    h = linear(flat, params["fc0_w"], params["fc0_b"], relu=True, tk=3584)
    h = linear(h, params["fc1_w"], params["fc1_b"], relu=True)
    out = linear(h, params["fc2_w"], params["fc2_b"], relu=False)
    return out


# -------------------------------- main --------------------------------------

if __name__ == "__main__":
    key = jax.random.PRNGKey(0)
    pkey, xkey = jax.random.split(key)
    params = init_params(pkey)

    # small deterministic input, NCHW like PyTorch: (batch=2, C=1, 16, 16)
    x = jax.random.normal(xkey, (2, INPUT_CHANNELS, 16, 16), jnp.float32)

    fwd = jax.jit(vgg_forward)
    out = jax.block_until_ready(fwd(x, params))

    assert out.shape == (2, NUM_CLASSES), out.shape
    assert bool(jnp.all(jnp.isfinite(out)))
    print("KERNEL_OK")
</pallas_src>

<mosaic_0001>
module attributes {stable_mosaic.version = 11 : i64} {
  func.func @_conv_bn_relu_pool_kernel(%arg0: i32, %arg1: memref<4x128x72xf32, #tpu.memory_space<vmem>>, %arg2: memref<72x64xf32, #tpu.memory_space<vmem>>, %arg3: memref<1x64xf32, #tpu.memory_space<vmem>>, %arg4: memref<128x64xf32, #tpu.memory_space<vmem>>) attributes {dimension_semantics = [#tpu.dimension_semantics<parallel>], iteration_bounds = array<i64: 1>, scalar_prefetch = 0 : i64, scratch_operands = 0 : i64, tpu.core_type = #tpu.core_type<tc>, window_params = [{transform_indices = @transform_0, window_bounds = array<i64: 4, 128, 72>}, {pipeline_mode = #tpu.pipeline_mode<synchronous>, transform_indices = @transform_1, window_bounds = array<i64: 72, 64>}, {pipeline_mode = #tpu.pipeline_mode<synchronous>, transform_indices = @transform_2, window_bounds = array<i64: 1, 64>}, {transform_indices = @transform_3, window_bounds = array<i64: 128, 64>}]} {
    %c0 = arith.constant 0 : index
    %c0_0 = arith.constant 0 : index
    %0 = vector.load %arg2[%c0, %c0_0] : memref<72x64xf32, #tpu.memory_space<vmem>>, vector<72x64xf32>
    %c0_1 = arith.constant 0 : index
    %c0_2 = arith.constant 0 : index
    %1 = vector.load %arg3[%c0_1, %c0_2] : memref<1x64xf32, #tpu.memory_space<vmem>>, vector<1x64xf32>
    %c0_3 = arith.constant 0 : index
    %c0_4 = arith.constant 0 : index
    %c0_5 = arith.constant 0 : index
    %2 = vector.load %arg1[%c0_3, %c0_4, %c0_5] : memref<4x128x72xf32, #tpu.memory_space<vmem>>, vector<1x128x72xf32>
    %3 = vector.shape_cast %2 : vector<1x128x72xf32> to vector<128x72xf32>
    %cst = arith.constant dense<0.000000e+00> : vector<128x64xf32>
    %4 = tpu.matmul %3, %0, %cst {dimension_numbers = #tpu.dot_dimension_numbers<[1], [0], [0], [1], [0, 0, 1, 1], [], []>} : vector<128x72xf32>, vector<72x64xf32>, vector<128x64xf32> -> vector<128x64xf32>
    %5 = vector.broadcast %1 : vector<1x64xf32> to vector<128x64xf32>
    %6 = arith.addf %4, %5 : vector<128x64xf32>
    %cst_6 = arith.constant 0.000000e+00 : f32
    %7 = vector.broadcast %cst_6 : f32 to vector<128x64xf32>
    %8 = arith.maximumf %6, %7 : vector<128x64xf32>
    %c1 = arith.constant 1 : index
    %c0_7 = arith.constant 0 : index
    %c0_8 = arith.constant 0 : index
    %9 = vector.load %arg1[%c1, %c0_7, %c0_8] : memref<4x128x72xf32, #tpu.memory_space<vmem>>, vector<1x128x72xf32>
    %10 = vector.shape_cast %9 : vector<1x128x72xf32> to vector<128x72xf32>
    %cst_9 = arith.constant dense<0.000000e+00> : vector<128x64xf32>
    %11 = tpu.matmul %10, %0, %cst_9 {dimension_numbers = #tpu.dot_dimension_numbers<[1], [0], [0], [1], [0, 0, 1, 1], [], []>} : vector<128x72xf32>, vector<72x64xf32>, vector<128x64xf32> -> vector<128x64xf32>
    %12 = vector.broadcast %1 : vector<1x64xf32> to vector<128x64xf32>
    %13 = arith.addf %11, %12 : vector<128x64xf32>
    %cst_10 = arith.constant 0.000000e+00 : f32
    %14 = vector.broadcast %cst_10 : f32 to vector<128x64xf32>
    %15 = arith.maximumf %13, %14 : vector<128x64xf32>
    %16 = arith.maximumf %8, %15 : vector<128x64xf32>
    %c2 = arith.constant 2 : index
    %c0_11 = arith.constant 0 : index
    %c0_12 = arith.constant 0 : index
    %17 = vector.load %arg1[%c2, %c0_11, %c0_12] : memref<4x128x72xf32, #tpu.memory_space<vmem>>, vector<1x128x72xf32>
    %18 = vector.shape_cast %17 : vector<1x128x72xf32> to vector<128x72xf32>
    %cst_13 = arith.constant dense<0.000000e+00> : vector<128x64xf32>
    %19 = tpu.matmul %18, %0, %cst_13 {dimension_numbers = #tpu.dot_dimension_numbers<[1], [0], [0], [1], [0, 0, 1, 1], [], []>} : vector<128x72xf32>, vector<72x64xf32>, vector<128x64xf32> -> vector<128x64xf32>
    %20 = vector.broadcast %1 : vector<1x64xf32> to vector<128x64xf32>
    %21 = arith.addf %19, %20 : vector<128x64xf32>
    %cst_14 = arith.constant 0.000000e+00 : f32
    %22 = vector.broadcast %cst_14 : f32 to vector<128x64xf32>
    %23 = arith.maximumf %21, %22 : vector<128x64xf32>
    %24 = arith.maximumf %16, %23 : vector<128x64xf32>
    %c3 = arith.constant 3 : index
    %c0_15 = arith.constant 0 : index
    %c0_16 = arith.constant 0 : index
    %25 = vector.load %arg1[%c3, %c0_15, %c0_16] : memref<4x128x72xf32, #tpu.memory_space<vmem>>, vector<1x128x72xf32>
    %26 = vector.shape_cast %25 : vector<1x128x72xf32> to vector<128x72xf32>
    %cst_17 = arith.constant dense<0.000000e+00> : vector<128x64xf32>
    %27 = tpu.matmul %26, %0, %cst_17 {dimension_numbers = #tpu.dot_dimension_numbers<[1], [0], [0], [1], [0, 0, 1, 1], [], []>} : vector<128x72xf32>, vector<72x64xf32>, vector<128x64xf32> -> vector<128x64xf32>
    %28 = vector.broadcast %1 : vector<1x64xf32> to vector<128x64xf32>
    %29 = arith.addf %27, %28 : vector<128x64xf32>
    %cst_18 = arith.constant 0.000000e+00 : f32
    %30 = vector.broadcast %cst_18 : f32 to vector<128x64xf32>
    %31 = arith.maximumf %29, %30 : vector<128x64xf32>
    %32 = arith.maximumf %24, %31 : vector<128x64xf32>
    %c0_19 = arith.constant 0 : index
    %c0_20 = arith.constant 0 : index
    %33 = vector.load %arg4[%c0_19, %c0_20] : memref<128x64xf32, #tpu.memory_space<vmem>>, vector<128x64xf32>
    tpu.vector_store %arg4[%c0_19, %c0_20], %32 {strides = array<i32>} : memref<128x64xf32, #tpu.memory_space<vmem>>, vector<128x64xf32>,
    return
  }
  func.func @transform_0(%arg0: i32) -> (i32, i32, i32) {
    %c0_i32 = arith.constant 0 : i32
    %c0_i32_0 = arith.constant 0 : i32
    %c0_i32_1 = arith.constant 0 : i32
    return %c0_i32, %arg0, %c0_i32_0 : i32, i32, i32
  }
  func.func @transform_1(%arg0: i32) -> (i32, i32) {
    %c0_i32 = arith.constant 0 : i32
    %c0_i32_0 = arith.constant 0 : i32
    %c0_i32_1 = arith.constant 0 : i32
    return %c0_i32, %c0_i32_0 : i32, i32
  }
  func.func @transform_2(%arg0: i32) -> (i32, i32) {
    %c0_i32 = arith.constant 0 : i32
    %c0_i32_0 = arith.constant 0 : i32
    %c0_i32_1 = arith.constant 0 : i32
    return %c0_i32, %c0_i32_0 : i32, i32
  }
  func.func @transform_3(%arg0: i32) -> (i32, i32) {
    %c0_i32 = arith.constant 0 : i32
    %c0_i32_0 = arith.constant 0 : i32
    return %arg0, %c0_i32 : i32, i32
  }
}

module attributes {stable_mosaic.version = 11 : i64} {
  func.func @_conv_bn_relu_pool_kernel(%arg0: i32, %arg1: memref<4x32x576xf32, #tpu.memory_space<vmem>>, %arg2: memref<576x512xf32, #tpu.memory_space<vmem>>, %arg3: memref<1x512xf32, #tpu.memory_space<vmem>>, %arg4: memref<32x512xf32, #tpu.memory_space<vmem>>) attributes {dimension_semantics = [#tpu.dimension_semantics<parallel>], iteration_bounds = array<i64: 1>, scalar_prefetch = 0 : i64, scratch_operands = 0 : i64, tpu.core_type = #tpu.core_type<tc>, window_params = [{transform_indices = @transform_0, window_bounds = array<i64: 4, 32, 576>}, {pipeline_mode = #tpu.pipeline_mode<synchronous>, transform_indices = @transform_1, window_bounds = array<i64: 576, 512>}, {pipeline_mode = #tpu.pipeline_mode<synchronous>, transform_indices = @transform_2, window_bounds = array<i64: 1, 512>}, {transform_indices = @transform_3, window_bounds = array<i64: 32, 512>}]} {
    %c0 = arith.constant 0 : index
    %c0_0 = arith.constant 0 : index
    %0 = vector.load %arg2[%c0, %c0_0] : memref<576x512xf32, #tpu.memory_space<vmem>>, vector<576x512xf32>
    %c0_1 = arith.constant 0 : index
    %c0_2 = arith.constant 0 : index
    %1 = vector.load %arg3[%c0_1, %c0_2] : memref<1x512xf32, #tpu.memory_space<vmem>>, vector<1x512xf32>
    %c0_3 = arith.constant 0 : index
    %c0_4 = arith.constant 0 : index
    %c0_5 = arith.constant 0 : index
    %2 = vector.load %arg1[%c0_3, %c0_4, %c0_5] : memref<4x32x576xf32, #tpu.memory_space<vmem>>, vector<1x32x576xf32>
    %3 = vector.shape_cast %2 : vector<1x32x576xf32> to vector<32x576xf32>
    %cst = arith.constant dense<0.000000e+00> : vector<32x512xf32>
    %4 = tpu.matmul %3, %0, %cst {dimension_numbers = #tpu.dot_dimension_numbers<[1], [0], [0], [1], [0, 0, 1, 1], [], []>} : vector<32x576xf32>, vector<576x512xf32>, vector<32x512xf32> -> vector<32x512xf32>
    %5 = vector.broadcast %1 : vector<1x512xf32> to vector<32x512xf32>
    %6 = arith.addf %4, %5 : vector<32x512xf32>
    %cst_6 = arith.constant 0.000000e+00 : f32
    %7 = vector.broadcast %cst_6 : f32 to vector<32x512xf32>
    %8 = arith.maximumf %6, %7 : vector<32x512xf32>
    %c1 = arith.constant 1 : index
    %c0_7 = arith.constant 0 : index
    %c0_8 = arith.constant 0 : index
    %9 = vector.load %arg1[%c1, %c0_7, %c0_8] : memref<4x32x576xf32, #tpu.memory_space<vmem>>, vector<1x32x576xf32>
    %10 = vector.shape_cast %9 : vector<1x32x576xf32> to vector<32x576xf32>
    %cst_9 = arith.constant dense<0.000000e+00> : vector<32x512xf32>
    %11 = tpu.matmul %10, %0, %cst_9 {dimension_numbers = #tpu.dot_dimension_numbers<[1], [0], [0], [1], [0, 0, 1, 1], [], []>} : vector<32x576xf32>, vector<576x512xf32>, vector<32x512xf32> -> vector<32x512xf32>
    %12 = vector.broadcast %1 : vector<1x512xf32> to vector<32x512xf32>
    %13 = arith.addf %11, %12 : vector<32x512xf32>
    %cst_10 = arith.constant 0.000000e+00 : f32
    %14 = vector.broadcast %cst_10 : f32 to vector<32x512xf32>
    %15 = arith.maximumf %13, %14 : vector<32x512xf32>
    %16 = arith.maximumf %8, %15 : vector<32x512xf32>
    %c2 = arith.constant 2 : index
    %c0_11 = arith.constant 0 : index
    %c0_12 = arith.constant 0 : index
    %17 = vector.load %arg1[%c2, %c0_11, %c0_12] : memref<4x32x576xf32, #tpu.memory_space<vmem>>, vector<1x32x576xf32>
    %18 = vector.shape_cast %17 : vector<1x32x576xf32> to vector<32x576xf32>
    %cst_13 = arith.constant dense<0.000000e+00> : vector<32x512xf32>
    %19 = tpu.matmul %18, %0, %cst_13 {dimension_numbers = #tpu.dot_dimension_numbers<[1], [0], [0], [1], [0, 0, 1, 1], [], []>} : vector<32x576xf32>, vector<576x512xf32>, vector<32x512xf32> -> vector<32x512xf32>
    %20 = vector.broadcast %1 : vector<1x512xf32> to vector<32x512xf32>
    %21 = arith.addf %19, %20 : vector<32x512xf32>
    %cst_14 = arith.constant 0.000000e+00 : f32
    %22 = vector.broadcast %cst_14 : f32 to vector<32x512xf32>
    %23 = arith.maximumf %21, %22 : vector<32x512xf32>
    %24 = arith.maximumf %16, %23 : vector<32x512xf32>
    %c3 = arith.constant 3 : index
    %c0_15 = arith.constant 0 : index
    %c0_16 = arith.constant 0 : index
    %25 = vector.load %arg1[%c3, %c0_15, %c0_16] : memref<4x32x576xf32, #tpu.memory_space<vmem>>, vector<1x32x576xf32>
    %26 = vector.shape_cast %25 : vector<1x32x576xf32> to vector<32x576xf32>
    %cst_17 = arith.constant dense<0.000000e+00> : vector<32x512xf32>
    %27 = tpu.matmul %26, %0, %cst_17 {dimension_numbers = #tpu.dot_dimension_numbers<[1], [0], [0], [1], [0, 0, 1, 1], [], []>} : vector<32x576xf32>, vector<576x512xf32>, vector<32x512xf32> -> vector<32x512xf32>
    %28 = vector.broadcast %1 : vector<1x512xf32> to vector<32x512xf32>
    %29 = arith.addf %27, %28 : vector<32x512xf32>
    %cst_18 = arith.constant 0.000000e+00 : f32
    %30 = vector.broadcast %cst_18 : f32 to vector<32x512xf32>
    %31 = arith.maximumf %29, %30 : vector<32x512xf32>
    %32 = arith.maximumf %24, %31 : vector<32x512xf32>
    %c0_19 = arith.constant 0 : index
    %c0_20 = arith.constant 0 : index
    %33 = vector.load %arg4[%c0_19, %c0_20] : memref<32x512xf32, #tpu.memory_space<vmem>>, vector<32x512xf32>
    tpu.vector_store %arg4[%c0_19, %c0_20], %32 {strides = array<i32>} : memref<32x512xf32, #tpu.memory_space<vmem>>, vector<32x512xf32>,
    return
  }
  func.func @transform_0(%arg0: i32) -> (i32, i32, i32) {
    %c0_i32 = arith.constant 0 : i32
    %c0_i32_0 = arith.constant 0 : i32
    %c0_i32_1 = arith.constant 0 : i32
    return %c0_i32, %arg0, %c0_i32_0 : i32, i32, i32
  }
  func.func @transform_1(%arg0: i32) -> (i32, i32) {
    %c0_i32 = arith.constant 0 : i32
    %c0_i32_0 = arith.constant 0 : i32
    %c0_i32_1 = arith.constant 0 : i32
    return %c0_i32, %c0_i32_0 : i32, i32
  }
  func.func @transform_2(%arg0: i32) -> (i32, i32) {
    %c0_i32 = arith.constant 0 : i32
    %c0_i32_0 = arith.constant 0 : i32
    %c0_i32_1 = arith.constant 0 : i32
    return %c0_i32, %c0_i32_0 : i32, i32
  }
  func.func @transform_3(%arg0: i32) -> (i32, i32) {
    %c0_i32 = arith.constant 0 : i32
    %c0_i32_0 = arith.constant 0 : i32
    return %arg0, %c0_i32 : i32, i32
  }
}

module attributes {stable_mosaic.version = 11 : i64} {
  func.func @_avgpool_kernel(%arg0: memref<2x49x16xf32, #tpu.memory_space<vmem>>, %arg1: memref<2x16x512xf32, #tpu.memory_space<vmem>>, %arg2: memref<2x49x512xf32, #tpu.memory_space<vmem>>) attributes {dimension_semantics = [], scalar_prefetch = 0 : i64, scratch_operands = 0 : i64, tpu.core_type = #tpu.core_type<tc>} {
    %c0 = arith.constant 0 : index
    %c0_0 = arith.constant 0 : index
    %c0_1 = arith.constant 0 : index
    %0 = vector.load %arg0[%c0, %c0_0, %c0_1] : memref<2x49x16xf32, #tpu.memory_space<vmem>>, vector<2x49x16xf32>
    %c0_2 = arith.constant 0 : index
    %c0_3 = arith.constant 0 : index
    %c0_4 = arith.constant 0 : index
    %1 = vector.load %arg1[%c0_2, %c0_3, %c0_4] : memref<2x16x512xf32, #tpu.memory_space<vmem>>, vector<2x16x512xf32>
    "tpu.trace_start"() <{level = 10 : i32, message = "bow,bwc->boc"}> : () -> ()
    %cst = arith.constant dense<0.000000e+00> : vector<2x49x512xf32>
    %2 = tpu.matmul %0, %1, %cst {dimension_numbers = #tpu.dot_dimension_numbers<[2], [1], [1], [2], [0, 0, 0, 1, 1, 2], [0], [0]>} : vector<2x49x16xf32>, vector<2x16x512xf32>, vector<2x49x512xf32> -> vector<2x49x512xf32>
    "tpu.trace_stop"() : () -> ()
    %c0_5 = arith.constant 0 : index
    %c0_6 = arith.constant 0 : index
    %c0_7 = arith.constant 0 : index
    %3 = vector.load %arg2[%c0_5, %c0_6, %c0_7] : memref<2x49x512xf32, #tpu.memory_space<vmem>>, vector<2x49x512xf32>
    tpu.vector_store %arg2[%c0_5, %c0_6, %c0_7], %2 {strides = array<i32>} : memref<2x49x512xf32, #tpu.memory_space<vmem>>, vector<2x49x512xf32>,
    return
  }
}

module attributes {stable_mosaic.version = 11 : i64} {
  func.func @_linear_kernel(%arg0: i32, %arg1: memref<2x3584xbf16, #tpu.memory_space<vmem>>, %arg2: memref<3584x512xbf16, #tpu.memory_space<vmem>>, %arg3: memref<1x512xf32, #tpu.memory_space<vmem>>, %arg4: memref<2x512xf32, #tpu.memory_space<vmem>>, %arg5: memref<2x512xf32, #tpu.memory_space<vmem>>) attributes {dimension_semantics = [#tpu.dimension_semantics<arbitrary>], iteration_bounds = array<i64: 7>, scalar_prefetch = 0 : i64, scratch_operands = 1 : i64, tpu.core_type = #tpu.core_type<tc>, window_params = [{transform_indices = @transform_0, window_bounds = array<i64: 2, 3584>}, {transform_indices = @transform_1, window_bounds = array<i64: 3584, 512>}, {pipeline_mode = #tpu.pipeline_mode<synchronous>, transform_indices = @transform_2, window_bounds = array<i64: 1, 512>}, {pipeline_mode = #tpu.pipeline_mode<synchronous>, transform_indices = @transform_3, window_bounds = array<i64: 2, 512>}]} {
    %c0_i32 = arith.constant 0 : i32
    %0 = arith.cmpi eq, %arg0, %c0_i32 : i32
    %1 = arith.extui %0 : i1 to i32
    %c0_i32_0 = arith.constant 0 : i32
    %2 = arith.cmpi ne, %1, %c0_i32_0 : i32
    scf.if %2 {
      %cst_9 = arith.constant 0.000000e+00 : f32
      %12 = vector.broadcast %cst_9 : f32 to vector<2x512xf32>
      %c0_10 = arith.constant 0 : index
      %c0_11 = arith.constant 0 : index
      %13 = vector.load %arg5[%c0_10, %c0_11] : memref<2x512xf32, #tpu.memory_space<vmem>>, vector<2x512xf32>
      tpu.vector_store %arg5[%c0_10, %c0_11], %12 {strides = array<i32>} : memref<2x512xf32, #tpu.memory_space<vmem>>, vector<2x512xf32>,
    } else {
    }
    %c0 = arith.constant 0 : index
    %c0_1 = arith.constant 0 : index
    %3 = vector.load %arg5[%c0, %c0_1] : memref<2x512xf32, #tpu.memory_space<vmem>>, vector<2x512xf32>
    %c0_2 = arith.constant 0 : index
    %c0_3 = arith.constant 0 : index
    %4 = vector.load %arg1[%c0_2, %c0_3] : memref<2x3584xbf16, #tpu.memory_space<vmem>>, vector<2x3584xbf16>
    %c0_4 = arith.constant 0 : index
    %c0_5 = arith.constant 0 : index
    %5 = vector.load %arg2[%c0_4, %c0_5] : memref<3584x512xbf16, #tpu.memory_space<vmem>>, vector<3584x512xbf16>
    %cst = arith.constant dense<0.000000e+00> : vector<2x512xf32>
    %6 = tpu.matmul %4, %5, %cst {dimension_numbers = #tpu.dot_dimension_numbers<[1], [0], [0], [1], [0, 0, 1, 1], [], []>} : vector<2x3584xbf16>, vector<3584x512xbf16>, vector<2x512xf32> -> vector<2x512xf32>
    %7 = arith.addf %3, %6 : vector<2x512xf32>
    %c0_6 = arith.constant 0 : index
    %c0_7 = arith.constant 0 : index
    %8 = vector.load %arg5[%c0_6, %c0_7] : memref<2x512xf32, #tpu.memory_space<vmem>>, vector<2x512xf32>
    tpu.vector_store %arg5[%c0_6, %c0_7], %7 {strides = array<i32>} : memref<2x512xf32, #tpu.memory_space<vmem>>, vector<2x512xf32>,
    %c6_i32 = arith.constant 6 : i32
    %9 = arith.cmpi eq, %arg0, %c6_i32 : i32
    %10 = arith.extui %9 : i1 to i32
    %c0_i32_8 = arith.constant 0 : i32
    %11 = arith.cmpi ne, %10, %c0_i32_8 : i32
    scf.if %11 {
      %c0_9 = arith.constant 0 : index
      %c0_10 = arith.constant 0 : index
      %12 = vector.load %arg5[%c0_9, %c0_10] : memref<2x512xf32, #tpu.memory_space<vmem>>, vector<2x512xf32>
      %c0_11 = arith.constant 0 : index
      %c0_12 = arith.constant 0 : index
      %13 = vector.load %arg3[%c0_11, %c0_12] : memref<1x512xf32, #tpu.memory_space<vmem>>, vector<1x512xf32>
      %14 = vector.broadcast %13 : vector<1x512xf32> to vector<2x512xf32>
      %15 = arith.addf %12, %14 : vector<2x512xf32>
      %cst_13 = arith.constant 0.000000e+00 : f32
      %16 = vector.broadcast %cst_13 : f32 to vector<2x512xf32>
      %17 = arith.maximumf %15, %16 : vector<2x512xf32>
      %c0_14 = arith.constant 0 : index
      %c0_15 = arith.constant 0 : index
      %18 = vector.load %arg4[%c0_14, %c0_15] : memref<2x512xf32, #tpu.memory_space<vmem>>, vector<2x512xf32>
      tpu.vector_store %arg4[%c0_14, %c0_15], %17 {strides = array<i32>} : memref<2x512xf32, #tpu.memory_space<vmem>>, vector<2x512xf32>,
    } else {
    }
    return
  }
  func.func @transform_0(%arg0: i32) -> (i32, i32) {
    %c0_i32 = arith.constant 0 : i32
    %c0_i32_0 = arith.constant 0 : i32
    return %c0_i32, %arg0 : i32, i32
  }
  func.func @transform_1(%arg0: i32) -> (i32, i32) {
    %c0_i32 = arith.constant 0 : i32
    %c0_i32_0 = arith.constant 0 : i32
    return %arg0, %c0_i32 : i32, i32
  }
  func.func @transform_2(%arg0: i32) -> (i32, i32) {
    %c0_i32 = arith.constant 0 : i32
    %c0_i32_0 = arith.constant 0 : i32
    %c0_i32_1 = arith.constant 0 : i32
    return %c0_i32, %c0_i32_0 : i32, i32
  }
  func.func @transform_3(%arg0: i32) -> (i32, i32) {
    %c0_i32 = arith.constant 0 : i32
    %c0_i32_0 = arith.constant 0 : i32
    %c0_i32_1 = arith.constant 0 : i32
    return %c0_i32, %c0_i32_0 : i32, i32
  }
}

module attributes {stable_mosaic.version = 11 : i64} {
  func.func @_linear_kernel(%arg0: i32, %arg1: memref<2x512xbf16, #tpu.memory_space<vmem>>, %arg2: memref<512x256xbf16, #tpu.memory_space<vmem>>, %arg3: memref<1x256xf32, #tpu.memory_space<vmem>>, %arg4: memref<2x256xf32, #tpu.memory_space<vmem>>, %arg5: memref<2x256xf32, #tpu.memory_space<vmem>>) attributes {dimension_semantics = [#tpu.dimension_semantics<arbitrary>], iteration_bounds = array<i64: 1>, scalar_prefetch = 0 : i64, scratch_operands = 1 : i64, tpu.core_type = #tpu.core_type<tc>, window_params = [{transform_indices = @transform_0, window_bounds = array<i64: 2, 512>}, {transform_indices = @transform_1, window_bounds = array<i64: 512, 256>}, {pipeline_mode = #tpu.pipeline_mode<synchronous>, transform_indices = @transform_2, window_bounds = array<i64: 1, 256>}, {pipeline_mode = #tpu.pipeline_mode<synchronous>, transform_indices = @transform_3, window_bounds = array<i64: 2, 256>}]} {
    %c0_i32 = arith.constant 0 : i32
    %0 = arith.cmpi eq, %arg0, %c0_i32 : i32
    %1 = arith.extui %0 : i1 to i32
    %c0_i32_0 = arith.constant 0 : i32
    %2 = arith.cmpi ne, %1, %c0_i32_0 : i32
    scf.if %2 {
      %cst_10 = arith.constant 0.000000e+00 : f32
      %12 = vector.broadcast %cst_10 : f32 to vector<2x256xf32>
      %c0_11 = arith.constant 0 : index
      %c0_12 = arith.constant 0 : index
      %13 = vector.load %arg5[%c0_11, %c0_12] : memref<2x256xf32, #tpu.memory_space<vmem>>, vector<2x256xf32>
      tpu.vector_store %arg5[%c0_11, %c0_12], %12 {strides = array<i32>} : memref<2x256xf32, #tpu.memory_space<vmem>>, vector<2x256xf32>,
    } else {
    }
    %c0 = arith.constant 0 : index
    %c0_1 = arith.constant 0 : index
    %3 = vector.load %arg5[%c0, %c0_1] : memref<2x256xf32, #tpu.memory_space<vmem>>, vector<2x256xf32>
    %c0_2 = arith.constant 0 : index
    %c0_3 = arith.constant 0 : index
    %4 = vector.load %arg1[%c0_2, %c0_3] : memref<2x512xbf16, #tpu.memory_space<vmem>>, vector<2x512xbf16>
    %c0_4 = arith.constant 0 : index
    %c0_5 = arith.constant 0 : index
    %5 = vector.load %arg2[%c0_4, %c0_5] : memref<512x256xbf16, #tpu.memory_space<vmem>>, vector<512x256xbf16>
    %cst = arith.constant dense<0.000000e+00> : vector<2x256xf32>
    %6 = tpu.matmul %4, %5, %cst {dimension_numbers = #tpu.dot_dimension_numbers<[1], [0], [0], [1], [0, 0, 1, 1], [], []>} : vector<2x512xbf16>, vector<512x256xbf16>, vector<2x256xf32> -> vector<2x256xf32>
    %7 = arith.addf %3, %6 : vector<2x256xf32>
    %c0_6 = arith.constant 0 : index
    %c0_7 = arith.constant 0 : index
    %8 = vector.load %arg5[%c0_6, %c0_7] : memref<2x256xf32, #tpu.memory_space<vmem>>, vector<2x256xf32>
    tpu.vector_store %arg5[%c0_6, %c0_7], %7 {strides = array<i32>} : memref<2x256xf32, #tpu.memory_space<vmem>>, vector<2x256xf32>,
    %c0_i32_8 = arith.constant 0 : i32
    %9 = arith.cmpi eq, %arg0, %c0_i32_8 : i32
    %10 = arith.extui %9 : i1 to i32
    %c0_i32_9 = arith.constant 0 : i32
    %11 = arith.cmpi ne, %10, %c0_i32_9 : i32
    scf.if %11 {
      %c0_10 = arith.constant 0 : index
      %c0_11 = arith.constant 0 : index
      %12 = vector.load %arg5[%c0_10, %c0_11] : memref<2x256xf32, #tpu.memory_space<vmem>>, vector<2x256xf32>
      %c0_12 = arith.constant 0 : index
      %c0_13 = arith.constant 0 : index
      %13 = vector.load %arg3[%c0_12, %c0_13] : memref<1x256xf32, #tpu.memory_space<vmem>>, vector<1x256xf32>
      %14 = vector.broadcast %13 : vector<1x256xf32> to vector<2x256xf32>
      %15 = arith.addf %12, %14 : vector<2x256xf32>
      %cst_14 = arith.constant 0.000000e+00 : f32
      %16 = vector.broadcast %cst_14 : f32 to vector<2x256xf32>
      %17 = arith.maximumf %15, %16 : vector<2x256xf32>
      %c0_15 = arith.constant 0 : index
      %c0_16 = arith.constant 0 : index
      %18 = vector.load %arg4[%c0_15, %c0_16] : memref<2x256xf32, #tpu.memory_space<vmem>>, vector<2x256xf32>
      tpu.vector_store %arg4[%c0_15, %c0_16], %17 {strides = array<i32>} : memref<2x256xf32, #tpu.memory_space<vmem>>, vector<2x256xf32>,
    } else {
    }
    return
  }
  func.func @transform_0(%arg0: i32) -> (i32, i32) {
    %c0_i32 = arith.constant 0 : i32
    %c0_i32_0 = arith.constant 0 : i32
    return %c0_i32, %arg0 : i32, i32
  }
  func.func @transform_1(%arg0: i32) -> (i32, i32) {
    %c0_i32 = arith.constant 0 : i32
    %c0_i32_0 = arith.constant 0 : i32
    return %arg0, %c0_i32 : i32, i32
  }
  func.func @transform_2(%arg0: i32) -> (i32, i32) {
    %c0_i32 = arith.constant 0 : i32
    %c0_i32_0 = arith.constant 0 : i32
    %c0_i32_1 = arith.constant 0 : i32
    return %c0_i32, %c0_i32_0 : i32, i32
  }
  func.func @transform_3(%arg0: i32) -> (i32, i32) {
    %c0_i32 = arith.constant 0 : i32
    %c0_i32_0 = arith.constant 0 : i32
    %c0_i32_1 = arith.constant 0 : i32
    return %c0_i32, %c0_i32_0 : i32, i32
  }
}

module attributes {stable_mosaic.version = 11 : i64} {
  func.func @_linear_kernel(%arg0: i32, %arg1: memref<2x256xf32, #tpu.memory_space<vmem>>, %arg2: memref<256x2xf32, #tpu.memory_space<vmem>>, %arg3: memref<1x2xf32, #tpu.memory_space<vmem>>, %arg4: memref<2x2xf32, #tpu.memory_space<vmem>>, %arg5: memref<2x2xf32, #tpu.memory_space<vmem>>) attributes {dimension_semantics = [#tpu.dimension_semantics<arbitrary>], iteration_bounds = array<i64: 1>, scalar_prefetch = 0 : i64, scratch_operands = 1 : i64, tpu.core_type = #tpu.core_type<tc>, window_params = [{transform_indices = @transform_0, window_bounds = array<i64: 2, 256>}, {transform_indices = @transform_1, window_bounds = array<i64: 256, 2>}, {pipeline_mode = #tpu.pipeline_mode<synchronous>, transform_indices = @transform_2, window_bounds = array<i64: 1, 2>}, {pipeline_mode = #tpu.pipeline_mode<synchronous>, transform_indices = @transform_3, window_bounds = array<i64: 2, 2>}]} {
    %c0_i32 = arith.constant 0 : i32
    %0 = arith.cmpi eq, %arg0, %c0_i32 : i32
    %1 = arith.extui %0 : i1 to i32
    %c0_i32_0 = arith.constant 0 : i32
    %2 = arith.cmpi ne, %1, %c0_i32_0 : i32
    scf.if %2 {
      %cst_10 = arith.constant 0.000000e+00 : f32
      %12 = vector.broadcast %cst_10 : f32 to vector<2x2xf32>
      %c0_11 = arith.constant 0 : index
      %c0_12 = arith.constant 0 : index
      %13 = vector.load %arg5[%c0_11, %c0_12] : memref<2x2xf32, #tpu.memory_space<vmem>>, vector<2x2xf32>
      tpu.vector_store %arg5[%c0_11, %c0_12], %12 {strides = array<i32>} : memref<2x2xf32, #tpu.memory_space<vmem>>, vector<2x2xf32>,
    } else {
    }
    %c0 = arith.constant 0 : index
    %c0_1 = arith.constant 0 : index
    %3 = vector.load %arg5[%c0, %c0_1] : memref<2x2xf32, #tpu.memory_space<vmem>>, vector<2x2xf32>
    %c0_2 = arith.constant 0 : index
    %c0_3 = arith.constant 0 : index
    %4 = vector.load %arg1[%c0_2, %c0_3] : memref<2x256xf32, #tpu.memory_space<vmem>>, vector<2x256xf32>
    %c0_4 = arith.constant 0 : index
    %c0_5 = arith.constant 0 : index
    %5 = vector.load %arg2[%c0_4, %c0_5] : memref<256x2xf32, #tpu.memory_space<vmem>>, vector<256x2xf32>
    %cst = arith.constant dense<0.000000e+00> : vector<2x2xf32>
    %6 = tpu.matmul %4, %5, %cst {dimension_numbers = #tpu.dot_dimension_numbers<[1], [0], [0], [1], [0, 0, 1, 1], [], []>} : vector<2x256xf32>, vector<256x2xf32>, vector<2x2xf32> -> vector<2x2xf32>
    %7 = arith.addf %3, %6 : vector<2x2xf32>
    %c0_6 = arith.constant 0 : index
    %c0_7 = arith.constant 0 : index
    %8 = vector.load %arg5[%c0_6, %c0_7] : memref<2x2xf32, #tpu.memory_space<vmem>>, vector<2x2xf32>
    tpu.vector_store %arg5[%c0_6, %c0_7], %7 {strides = array<i32>} : memref<2x2xf32, #tpu.memory_space<vmem>>, vector<2x2xf32>,
    %c0_i32_8 = arith.constant 0 : i32
    %9 = arith.cmpi eq, %arg0, %c0_i32_8 : i32
    %10 = arith.extui %9 : i1 to i32
    %c0_i32_9 = arith.constant 0 : i32
    %11 = arith.cmpi ne, %10, %c0_i32_9 : i32
    scf.if %11 {
      %c0_10 = arith.constant 0 : index
      %c0_11 = arith.constant 0 : index
      %12 = vector.load %arg5[%c0_10, %c0_11] : memref<2x2xf32, #tpu.memory_space<vmem>>, vector<2x2xf32>
      %c0_12 = arith.constant 0 : index
      %c0_13 = arith.constant 0 : index
      %13 = vector.load %arg3[%c0_12, %c0_13] : memref<1x2xf32, #tpu.memory_space<vmem>>, vector<1x2xf32>
      %14 = vector.broadcast %13 : vector<1x2xf32> to vector<2x2xf32>
      %15 = arith.addf %12, %14 : vector<2x2xf32>
      %c0_14 = arith.constant 0 : index
      %c0_15 = arith.constant 0 : index
      %16 = vector.load %arg4[%c0_14, %c0_15] : memref<2x2xf32, #tpu.memory_space<vmem>>, vector<2x2xf32>
      tpu.vector_store %arg4[%c0_14, %c0_15], %15 {strides = array<i32>} : memref<2x2xf32, #tpu.memory_space<vmem>>, vector<2x2xf32>,
    } else {
    }
    return
  }
  func.func @transform_0(%arg0: i32) -> (i32, i32) {
    %c0_i32 = arith.constant 0 : i32
    %c0_i32_0 = arith.constant 0 : i32
    return %c0_i32, %arg0 : i32, i32
  }
  func.func @transform_1(%arg0: i32) -> (i32, i32) {
    %c0_i32 = arith.constant 0 : i32
    %c0_i32_0 = arith.constant 0 : i32
    return %arg0, %c0_i32 : i32, i32
  }
  func.func @transform_2(%arg0: i32) -> (i32, i32) {
    %c0_i32 = arith.constant 0 : i32
    %c0_i32_0 = arith.constant 0 : i32
    %c0_i32_1 = arith.constant 0 : i32
    return %c0_i32, %c0_i32_0 : i32, i32
  }
  func.func @transform_3(%arg0: i32) -> (i32, i32) {
    %c0_i32 = arith.constant 0 : i32
    %c0_i32_0 = arith.constant 0 : i32
    %c0_i32_1 = arith.constant 0 : i32
    return %c0_i32, %c0_i32_0 : i32, i32
  }
}

</mosaic_0001>

<llo_original>
// kernel: vgg_forward.6
$region0: #{vgg_forward.6}
  #allocation0 [shape = 'u32[]', space=smem, size = 0x4, offset = 0x4, fixed_abs, tag = 'smem constant byte address 0x4 - core index']
  #allocation1 [shape = 'u32[72,128]{1,0:T(1,128)}', space=vmem, size = 0x9000, scoped, tag = 'internal scratch']
  %s0 = inlined_call_operand.vmem [shape: f32[4,128,72], index: 0, kind: input, shape index: {}]
  %s1 = inlined_call_operand.vmem [shape: f32[72,64], index: 1, kind: input, shape index: {}]
  %s2 = inlined_call_operand.vmem [shape: f32[1,64], index: 2, kind: input, shape index: {}]
  %s3 = inlined_call_operand.vmem [shape: f32[128,64], index: 3, kind: output, shape index: {}]
  %s4 = sld [smem:[#allocation0]]
  $region22: #{vgg_forward.6} parent=0
    _
  %s6 = ssub.s32 1, %s4
  %s7 = scalar_select 0, %s6, %s4
  // Predicated region
  $region2: #{vgg_forward.6} parent=0 // pred_check
    _
  $region3: #{vgg_forward.6} parent=0 // pred_check_branch
    %9 = sbr.rel (0) target = $region5
  $region4: #{vgg_forward.6} parent=0 // pred_region
    _
  $region5: #{vgg_forward.6} parent=0 // pred_fallthru
    _
  // Predicated region
  $region6: #{vgg_forward.6} parent=0 // pred_check
    _
  $region7: #{vgg_forward.6} parent=0 // pred_check_branch
    %11 = sbr.rel (0) target = $region9
  $region8: #{vgg_forward.6} parent=0 // pred_region
    _
  $region9: #{vgg_forward.6} parent=0 // pred_fallthru
    _
  // Predicated region
  $region10: #{vgg_forward.6} parent=0 // pred_check
    _
  $region11: #{vgg_forward.6} parent=0 // pred_check_branch
    %13 = sbr.rel (0) target = $region13
  $region12: #{vgg_forward.6} parent=0 // pred_region
    _
  $region13: #{vgg_forward.6} parent=0 // pred_fallthru
    _
  %v14 = vld [vmem:[%s1] sm:$0xff]
  %v15 = vld [vmem:[%s1 + $0x8] sm:$0xff]
  %v16 = vld [vmem:[%s1 + $0x10] sm:$0xff]
  %v17 = vld [vmem:[%s1 + $0x18] sm:$0xff]
  %v18 = vld [vmem:[%s1 + $0x20] sm:$0xff]
  %v19 = vld [vmem:[%s1 + $0x28] sm:$0xff]
  %v20 = vld [vmem:[%s1 + $0x30] sm:$0xff]
  %v21 = vld [vmem:[%s1 + $0x38] sm:$0xff]
  %v22 = vld [vmem:[%s1 + $0x40] sm:$0xff]
  %v23 = vld [vmem:[%s2] sm:$0x1]
  %v24 = vld [vmem:[%s0] sm:$0xff]
  %v25 = vld [vmem:[%s0 + $0x8] sm:$0xff]
  %v26 = vld [vmem:[%s0 + $0x10] sm:$0xff]
  %v27 = vld [vmem:[%s0 + $0x18] sm:$0xff]
  %v28 = vld [vmem:[%s0 + $0x20] sm:$0xff]
  %v29 = vld [vmem:[%s0 + $0x28] sm:$0xff]
  %v30 = vld [vmem:[%s0 + $0x30] sm:$0xff]
  %v31 = vld [vmem:[%s0 + $0x38] sm:$0xff]
  %v32 = vld [vmem:[%s0 + $0x40] sm:$0xff]
  %v33 = vld [vmem:[%s0 + $0x48] sm:$0xff]
  %v34 = vld [vmem:[%s0 + $0x50] sm:$0xff]
  %v35 = vld [vmem:[%s0 + $0x58] sm:$0xff]
  %v36 = vld [vmem:[%s0 + $0x60] sm:$0xff]
  %v37 = vld [vmem:[%s0 + $0x68] sm:$0xff]
  %v38 = vld [vmem:[%s0 + $0x70] sm:$0xff]
  %v39 = vld [vmem:[%s0 + $0x78] sm:$0xff]
  %v41 = vperm.slane %v23, 0
  %vm43 = vcmask 588800
  %v45 = vsel %vm43, %v24, 0
  %v48 = vsel %vm43, %v25, 0
  %v51 = vsel %vm43, %v26, 0
  %v54 = vsel %vm43, %v27, 0
  %v57 = vsel %vm43, %v28, 0
  %v60 = vsel %vm43, %v29, 0
  %v63 = vsel %vm43, %v30, 0
  %v66 = vsel %vm43, %v31, 0
  %v69 = vsel %vm43, %v32, 0
  %v72 = vsel %vm43, %v33, 0
  %v75 = vsel %vm43, %v34, 0
  %v78 = vsel %vm43, %v35, 0
  %v81 = vsel %vm43, %v36, 0
  %v84 = vsel %vm43, %v37, 0
  %v87 = vsel %vm43, %v38, 0
  %v90 = vsel %vm43, %v39, 0
  %92 = vmatpush.msra.mxu0 0.0
  %93 = vmatpush.msra.mxu0 0.0
  %94 = vmatpush.msra.mxu0 0.0
  %95 = vmatpush.msra.mxu0 0.0
  %96 = vmatpush.msra.mxu0 0.0
  %97 = vmatpush.msra.mxu0 0.0
  %98 = vmatpush.msra.mxu0 0.0
  %99 = vmatpush.msra.mxu0 %v22
  %100 = vmatpush.msra.mxu0 %v21
  %101 = vmatpush.msra.mxu0 %v20
  %102 = vmatpush.msra.mxu0 %v19
  %103 = vmatpush.msra.mxu0 %v18
  %104 = vmatpush.msra.mxu0 %v17
  %105 = vmatpush.msra.mxu0 %v16
  %106 = vmatpush.msra.mxu0 %v15
  %107 = vmatpush.msra.mxu0 %v14
  %108 = vmatmul.f32.gmra.mxu0 %v45
  %v109 = vpop.f32.mrf.mxu0
  %v110 = vadd.f32 %v41, %v109
  %111 = vmatmul.f32.gmra.mxu0 %v48
  %v112 = vpop.f32.mrf.mxu0
  %v113 = vadd.f32 %v41, %v112
  %114 = vmatmul.f32.gmra.mxu0 %v51
  %v115 = vpop.f32.mrf.mxu0
  %v116 = vadd.f32 %v41, %v115
  %117 = vmatmul.f32.gmra.mxu0 %v54
  %v118 = vpop.f32.mrf.mxu0
  %v119 = vadd.f32 %v41, %v118
  %120 = vmatmul.f32.gmra.mxu0 %v57
  %v121 = vpop.f32.mrf.mxu0
  %v122 = vadd.f32 %v41, %v121
  %123 = vmatmul.f32.gmra.mxu0 %v60
  %v124 = vpop.f32.mrf.mxu0
  %v125 = vadd.f32 %v41, %v124
  %126 = vmatmul.f32.gmra.mxu0 %v63
  %v127 = vpop.f32.mrf.mxu0
  %v128 = vadd.f32 %v41, %v127
  %129 = vmatmul.f32.gmra.mxu0 %v66
  %v130 = vpop.f32.mrf.mxu0
  %v131 = vadd.f32 %v41, %v130
  %132 = vmatmul.f32.gmra.mxu0 %v69
  %v133 = vpop.f32.mrf.mxu0
  %v134 = vadd.f32 %v41, %v133
  %135 = vmatmul.f32.gmra.mxu0 %v72
  %v136 = vpop.f32.mrf.mxu0
  %v137 = vadd.f32 %v41, %v136
  %138 = vmatmul.f32.gmra.mxu0 %v75
  %v139 = vpop.f32.mrf.mxu0
  %v140 = vadd.f32 %v41, %v139
  %141 = vmatmul.f32.gmra.mxu0 %v78
  %v142 = vpop.f32.mrf.mxu0
  %v143 = vadd.f32 %v41, %v142
  %144 = vmatmul.f32.gmra.mxu0 %v81
  %v145 = vpop.f32.mrf.mxu0
  %v146 = vadd.f32 %v41, %v145
  %147 = vmatmul.f32.gmra.mxu0 %v84
  %v148 = vpop.f32.mrf.mxu0
  %v149 = vadd.f32 %v41, %v148
  %150 = vmatmul.f32.gmra.mxu0 %v87
  %v151 = vpop.f32.mrf.mxu0
  %v152 = vadd.f32 %v41, %v151
  %153 = vmatmul.f32.gmra.mxu0 %v90
  %v154 = vpop.f32.mrf.mxu0
  %v155 = vadd.f32 %v41, %v154
  %156 = vdwg.mxu0
  %v157 = vmax.f32 %v110, 0.0
  %v158 = vmax.f32 %v113, 0.0
  %v159 = vmax.f32 %v116, 0.0
  %v160 = vmax.f32 %v119, 0.0
  %v161 = vmax.f32 %v122, 0.0
  %v162 = vmax.f32 %v125, 0.0
  %v163 = vmax.f32 %v128, 0.0
  %v164 = vmax.f32 %v131, 0.0
  %v165 = vmax.f32 %v134, 0.0
  %v166 = vmax.f32 %v137, 0.0
  %v167 = vmax.f32 %v140, 0.0
  %v168 = vmax.f32 %v143, 0.0
  %v169 = vmax.f32 %v146, 0.0
  %v170 = vmax.f32 %v149, 0.0
  %v171 = vmax.f32 %v152, 0.0
  %v172 = vmax.f32 %v155, 0.0
  %s173 = scalar_lea.vmem %s0, 128
  %v174 = vld [vmem:[%s173] sm:$0xff]
  %v175 = vld [vmem:[%s173 + $0x8] sm:$0xff]
  %v176 = vld [vmem:[%s173 + $0x10] sm:$0xff]
  %v177 = vld [vmem:[%s173 + $0x18] sm:$0xff]
  %v178 = vld [vmem:[%s173 + $0x20] sm:$0xff]
  %v179 = vld [vmem:[%s173 + $0x28] sm:$0xff]
  %v180 = vld [vmem:[%s173 + $0x30] sm:$0xff]
  %v181 = vld [vmem:[%s173 + $0x38] sm:$0xff]
  %v182 = vld [vmem:[%s173 + $0x40] sm:$0xff]
  %v183 = vld [vmem:[%s173 + $0x48] sm:$0xff]
  %v184 = vld [vmem:[%s173 + $0x50] sm:$0xff]
  %v185 = vld [vmem:[%s173 + $0x58] sm:$0xff]
  %v186 = vld [vmem:[%s173 + $0x60] sm:$0xff]
  %v187 = vld [vmem:[%s173 + $0x68] sm:$0xff]
  %v188 = vld [vmem:[%s173 + $0x70] sm:$0xff]
  %v189 = vld [vmem:[%s173 + $0x78] sm:$0xff]
  %v191 = vsel %vm43, %v174, 0
  %v194 = vsel %vm43, %v175, 0
  %v197 = vsel %vm43, %v176, 0
  %v200 = vsel %vm43, %v177, 0
  %v203 = vsel %vm43, %v178, 0
  %v206 = vsel %vm43, %v179, 0
  %v209 = vsel %vm43, %v180, 0
  %v212 = vsel %vm43, %v181, 0
  %v215 = vsel %vm43, %v182, 0
  %v218 = vsel %vm43, %v183, 0
  %v221 = vsel %vm43, %v184, 0
  %v224 = vsel %vm43, %v185, 0
  %v227 = vsel %vm43, %v186, 0
  %v230 = vsel %vm43, %v187, 0
  %v233 = vsel %vm43, %v188, 0
  %v236 = vsel %vm43, %v189, 0
  %238 = vmatpush.msra.mxu0 0.0
  %239 = vmatpush.msra.mxu0 0.0
  %240 = vmatpush.msra.mxu0 0.0
  %241 = vmatpush.msra.mxu0 0.0
  %242 = vmatpush.msra.mxu0 0.0
  %243 = vmatpush.msra.mxu0 0.0
  %244 = vmatpush.msra.mxu0 0.0
  %245 = vmatpush.msra.mxu0 %v22
  %246 = vmatpush.msra.mxu0 %v21
  %247 = vmatpush.msra.mxu0 %v20
  %248 = vmatpush.msra.mxu0 %v19
  %249 = vmatpush.msra.mxu0 %v18
  %250 = vmatpush.msra.mxu0 %v17
  %251 = vmatpush.msra.mxu0 %v16
  %252 = vmatpush.msra.mxu0 %v15
  %253 = vmatpush.msra.mxu0 %v14
  %254 = vmatmul.f32.gmra.mxu0 %v191
  %v255 = vpop.f32.mrf.mxu0
  %v256 = vadd.f32 %v41, %v255
  %257 = vmatmul.f32.gmra.mxu0 %v194
  %v258 = vpop.f32.mrf.mxu0
  %v259 = vadd.f32 %v41, %v258
  %260 = vmatmul.f32.gmra.mxu0 %v197
  %v261 = vpop.f32.mrf.mxu0
  %v262 = vadd.f32 %v41, %v261
  %263 = vmatmul.f32.gmra.mxu0 %v200
  %v264 = vpop.f32.mrf.mxu0
  %v265 = vadd.f32 %v41, %v264
  %266 = vmatmul.f32.gmra.mxu0 %v203
  %v267 = vpop.f32.mrf.mxu0
  %v268 = vadd.f32 %v41, %v267
  %269 = vmatmul.f32.gmra.mxu0 %v206
  %v270 = vpop.f32.mrf.mxu0
  %v271 = vadd.f32 %v41, %v270
  %272 = vmatmul.f32.gmra.mxu0 %v209
  %v273 = vpop.f32.mrf.mxu0
  %v274 = vadd.f32 %v41, %v273
  %275 = vmatmul.f32.gmra.mxu0 %v212
  %v276 = vpop.f32.mrf.mxu0
  %v277 = vadd.f32 %v41, %v276
  %278 = vmatmul.f32.gmra.mxu0 %v215
  %v279 = vpop.f32.mrf.mxu0
  %v280 = vadd.f32 %v41, %v279
  %281 = vmatmul.f32.gmra.mxu0 %v218
  %v282 = vpop.f32.mrf.mxu0
  %v283 = vadd.f32 %v41, %v282
  %284 = vmatmul.f32.gmra.mxu0 %v221
  %v285 = vpop.f32.mrf.mxu0
  %v286 = vadd.f32 %v41, %v285
  %287 = vmatmul.f32.gmra.mxu0 %v224
  %v288 = vpop.f32.mrf.mxu0
  %v289 = vadd.f32 %v41, %v288
  %290 = vmatmul.f32.gmra.mxu0 %v227
  %v291 = vpop.f32.mrf.mxu0
  %v292 = vadd.f32 %v41, %v291
  %293 = vmatmul.f32.gmra.mxu0 %v230
  %v294 = vpop.f32.mrf.mxu0
  %v295 = vadd.f32 %v41, %v294
  %296 = vmatmul.f32.gmra.mxu0 %v233
  %v297 = vpop.f32.mrf.mxu0
  %v298 = vadd.f32 %v41, %v297
  %299 = vmatmul.f32.gmra.mxu0 %v236
  %v300 = vpop.f32.mrf.mxu0
  %v301 = vadd.f32 %v41, %v300
  %302 = vdwg.mxu0
  %v303 = vmax.f32 %v256, 0.0
  %v304 = vmax.f32 %v259, 0.0
  %v305 = vmax.f32 %v262, 0.0
  %v306 = vmax.f32 %v265, 0.0
  %v307 = vmax.f32 %v268, 0.0
  %v308 = vmax.f32 %v271, 0.0
  %v309 = vmax.f32 %v274, 0.0
  %v310 = vmax.f32 %v277, 0.0
  %v311 = vmax.f32 %v280, 0.0
  %v312 = vmax.f32 %v283, 0.0
  %v313 = vmax.f32 %v286, 0.0
  %v314 = vmax.f32 %v289, 0.0
  %v315 = vmax.f32 %v292, 0.0
  %v316 = vmax.f32 %v295, 0.0
  %v317 = vmax.f32 %v298, 0.0
  %v318 = vmax.f32 %v301, 0.0
  %v319 = vmax.f32 %v157, %v303
  %v320 = vmax.f32 %v158, %v304
  %v321 = vmax.f32 %v159, %v305
  %v322 = vmax.f32 %v160, %v306
  %v323 = vmax.f32 %v161, %v307
  %v324 = vmax.f32 %v162, %v308
  %v325 = vmax.f32 %v163, %v309
  %v326 = vmax.f32 %v164, %v310
  %v327 = vmax.f32 %v165, %v311
  %v328 = vmax.f32 %v166, %v312
  %v329 = vmax.f32 %v167, %v313
  %v330 = vmax.f32 %v168, %v314
  %v331 = vmax.f32 %v169, %v315
  %v332 = vmax.f32 %v170, %v316
  %v333 = vmax.f32 %v171, %v317
  %v334 = vmax.f32 %v172, %v318
  %s335 = scalar_lea.vmem %s0, 256
  %v336 = vld [vmem:[%s335] sm:$0xff]
  %v337 = vld [vmem:[%s335 + $0x8] sm:$0xff]
  %v338 = vld [vmem:[%s335 + $0x10] sm:$0xff]
  %v339 = vld [vmem:[%s335 + $0x18] sm:$0xff]
  %v340 = vld [vmem:[%s335 + $0x20] sm:$0xff]
  %v341 = vld [vmem:[%s335 + $0x28] sm:$0xff]
  %v342 = vld [vmem:[%s335 + $0x30] sm:$0xff]
  %v343 = vld [vmem:[%s335 + $0x38] sm:$0xff]
  %v344 = vld [vmem:[%s335 + $0x40] sm:$0xff]
  %v345 = vld [vmem:[%s335 + $0x48] sm:$0xff]
  %v346 = vld [vmem:[%s335 + $0x50] sm:$0xff]
  %v347 = vld [vmem:[%s335 + $0x58] sm:$0xff]
  %v348 = vld [vmem:[%s335 + $0x60] sm:$0xff]
  %v349 = vld [vmem:[%s335 + $0x68] sm:$0xff]
  %v350 = vld [vmem:[%s335 + $0x70] sm:$0xff]
  %v351 = vld [vmem:[%s335 + $0x78] sm:$0xff]
  %v353 = vsel %vm43, %v336, 0
  %v356 = vsel %vm43, %v337, 0
  %v359 = vsel %vm43, %v338, 0
  %v362 = vsel %vm43, %v339, 0
  %v365 = vsel %vm43, %v340, 0
  %v368 = vsel %vm43, %v341, 0
  %v371 = vsel %vm43, %v342, 0
  %v374 = vsel %vm43, %v343, 0
  %v377 = vsel %vm43, %v344, 0
  %v380 = vsel %vm43, %v345, 0
  %v383 = vsel %vm43, %v346, 0
  %v386 = vsel %vm43, %v347, 0
  %v389 = vsel %vm43, %v348, 0
  %v392 = vsel %vm43, %v349, 0
  %v395 = vsel %vm43, %v350, 0
  %v398 = vsel %vm43, %v351, 0
  %400 = vmatpush.msra.mxu0 0.0
  %401 = vmatpush.msra.mxu0 0.0
  %402 = vmatpush.msra.mxu0 0.0
  %403 = vmatpush.msra.mxu0 0.0
  %404 = vmatpush.msra.mxu0 0.0
  %405 = vmatpush.msra.mxu0 0.0
  %406 = vmatpush.msra.mxu0 0.0
  %407 = vmatpush.msra.mxu0 %v22
  %408 = vmatpush.msra.mxu0 %v21
  %409 = vmatpush.msra.mxu0 %v20
  %410 = vmatpush.msra.mxu0 %v19
  %411 = vmatpush.msra.mxu0 %v18
  %412 = vmatpush.msra.mxu0 %v17
  %413 = vmatpush.msra.mxu0 %v16
  %414 = vmatpush.msra.mxu0 %v15
  %415 = vmatpush.msra.mxu0 %v14
  %416 = vmatmul.f32.gmra.mxu0 %v353
  %v417 = vpop.f32.mrf.mxu0
  %v418 = vadd.f32 %v41, %v417
  %419 = vmatmul.f32.gmra.mxu0 %v356
  %v420 = vpop.f32.mrf.mxu0
  %v421 = vadd.f32 %v41, %v420
  %422 = vmatmul.f32.gmra.mxu0 %v359
  %v423 = vpop.f32.mrf.mxu0
  %v424 = vadd.f32 %v41, %v423
  %425 = vmatmul.f32.gmra.mxu0 %v362
  %v426 = vpop.f32.mrf.mxu0
  %v427 = vadd.f32 %v41, %v426
  %428 = vmatmul.f32.gmra.mxu0 %v365
  %v429 = vpop.f32.mrf.mxu0
  %v430 = vadd.f32 %v41, %v429
  %431 = vmatmul.f32.gmra.mxu0 %v368
  %v432 = vpop.f32.mrf.mxu0
  %v433 = vadd.f32 %v41, %v432
  %434 = vmatmul.f32.gmra.mxu0 %v371
  %v435 = vpop.f32.mrf.mxu0
  %v436 = vadd.f32 %v41, %v435
  %437 = vmatmul.f32.gmra.mxu0 %v374
  %v438 = vpop.f32.mrf.mxu0
  %v439 = vadd.f32 %v41, %v438
  %440 = vmatmul.f32.gmra.mxu0 %v377
  %v441 = vpop.f32.mrf.mxu0
  %v442 = vadd.f32 %v41, %v441
  %443 = vmatmul.f32.gmra.mxu0 %v380
  %v444 = vpop.f32.mrf.mxu0
  %v445 = vadd.f32 %v41, %v444
  %446 = vmatmul.f32.gmra.mxu0 %v383
  %v447 = vpop.f32.mrf.mxu0
  %v448 = vadd.f32 %v41, %v447
  %449 = vmatmul.f32.gmra.mxu0 %v386
  %v450 = vpop.f32.mrf.mxu0
  %v451 = vadd.f32 %v41, %v450
  %452 = vmatmul.f32.gmra.mxu0 %v389
  %v453 = vpop.f32.mrf.mxu0
  %v454 = vadd.f32 %v41, %v453
  %455 = vmatmul.f32.gmra.mxu0 %v392
  %v456 = vpop.f32.mrf.mxu0
  %v457 = vadd.f32 %v41, %v456
  %458 = vmatmul.f32.gmra.mxu0 %v395
  %v459 = vpop.f32.mrf.mxu0
  %v460 = vadd.f32 %v41, %v459
  %461 = vmatmul.f32.gmra.mxu0 %v398
  %v462 = vpop.f32.mrf.mxu0
  %v463 = vadd.f32 %v41, %v462
  %464 = vdwg.mxu0
  %v465 = vmax.f32 %v418, 0.0
  %v466 = vmax.f32 %v421, 0.0
  %v467 = vmax.f32 %v424, 0.0
  %v468 = vmax.f32 %v427, 0.0
  %v469 = vmax.f32 %v430, 0.0
  %v470 = vmax.f32 %v433, 0.0
  %v471 = vmax.f32 %v436, 0.0
  %v472 = vmax.f32 %v439, 0.0
  %v473 = vmax.f32 %v442, 0.0
  %v474 = vmax.f32 %v445, 0.0
  %v475 = vmax.f32 %v448, 0.0
  %v476 = vmax.f32 %v451, 0.0
  %v477 = vmax.f32 %v454, 0.0
  %v478 = vmax.f32 %v457, 0.0
  %v479 = vmax.f32 %v460, 0.0
  %v480 = vmax.f32 %v463, 0.0
  %v481 = vmax.f32 %v319, %v465
  %v482 = vmax.f32 %v320, %v466
  %v483 = vmax.f32 %v321, %v467
  %v484 = vmax.f32 %v322, %v468
  %v485 = vmax.f32 %v323, %v469
  %v486 = vmax.f32 %v324, %v470
  %v487 = vmax.f32 %v325, %v471
  %v488 = vmax.f32 %v326, %v472
  %v489 = vmax.f32 %v327, %v473
  %v490 = vmax.f32 %v328, %v474
  %v491 = vmax.f32 %v329, %v475
  %v492 = vmax.f32 %v330, %v476
  %v493 = vmax.f32 %v331, %v477
  %v494 = vmax.f32 %v332, %v478
  %v495 = vmax.f32 %v333, %v479
  %v496 = vmax.f32 %v334, %v480
  %s497 = scalar_lea.vmem %s0, 384
  %v498 = vld [vmem:[%s497] sm:$0xff]
  %v499 = vld [vmem:[%s497 + $0x8] sm:$0xff]
  %v500 = vld [vmem:[%s497 + $0x10] sm:$0xff]
  %v501 = vld [vmem:[%s497 + $0x18] sm:$0xff]
  %v502 = vld [vmem:[%s497 + $0x20] sm:$0xff]
  %v503 = vld [vmem:[%s497 + $0x28] sm:$0xff]
  %v504 = vld [vmem:[%s497 + $0x30] sm:$0xff]
  %v505 = vld [vmem:[%s497 + $0x38] sm:$0xff]
  %v506 = vld [vmem:[%s497 + $0x40] sm:$0xff]
  %v507 = vld [vmem:[%s497 + $0x48] sm:$0xff]
  %v508 = vld [vmem:[%s497 + $0x50] sm:$0xff]
  %v509 = vld [vmem:[%s497 + $0x58] sm:$0xff]
  %v510 = vld [vmem:[%s497 + $0x60] sm:$0xff]
  %v511 = vld [vmem:[%s497 + $0x68] sm:$0xff]
  %v512 = vld [vmem:[%s497 + $0x70] sm:$0xff]
  %v513 = vld [vmem:[%s497 + $0x78] sm:$0xff]
  %v515 = vsel %vm43, %v498, 0
  %v518 = vsel %vm43, %v499, 0
  %v521 = vsel %vm43, %v500, 0
  %v524 = vsel %vm43, %v501, 0
  %v527 = vsel %vm43, %v502, 0
  %v530 = vsel %vm43, %v503, 0
  %v533 = vsel %vm43, %v504, 0
  %v536 = vsel %vm43, %v505, 0
  %v539 = vsel %vm43, %v506, 0
  %v542 = vsel %vm43, %v507, 0
  %v545 = vsel %vm43, %v508, 0
  %v548 = vsel %vm43, %v509, 0
  %v551 = vsel %vm43, %v510, 0
  %v554 = vsel %vm43, %v511, 0
  %v557 = vsel %vm43, %v512, 0
  %v560 = vsel %vm43, %v513, 0
  %562 = vmatpush.msra.mxu0 0.0
  %563 = vmatpush.msra.mxu0 0.0
  %564 = vmatpush.msra.mxu0 0.0
  %565 = vmatpush.msra.mxu0 0.0
  %566 = vmatpush.msra.mxu0 0.0
  %567 = vmatpush.msra.mxu0 0.0
  %568 = vmatpush.msra.mxu0 0.0
  %569 = vmatpush.msra.mxu0 %v22
  %570 = vmatpush.msra.mxu0 %v21
  %571 = vmatpush.msra.mxu0 %v20
  %572 = vmatpush.msra.mxu0 %v19
  %573 = vmatpush.msra.mxu0 %v18
  %574 = vmatpush.msra.mxu0 %v17
  %575 = vmatpush.msra.mxu0 %v16
  %576 = vmatpush.msra.mxu0 %v15
  %577 = vmatpush.msra.mxu0 %v14
  %578 = vmatmul.f32.gmra.mxu0 %v515
  %v579 = vpop.f32.mrf.mxu0
  %v580 = vadd.f32 %v41, %v579
  %581 = vmatmul.f32.gmra.mxu0 %v518
  %v582 = vpop.f32.mrf.mxu0
  %v583 = vadd.f32 %v41, %v582
  %584 = vmatmul.f32.gmra.mxu0 %v521
  %v585 = vpop.f32.mrf.mxu0
  %v586 = vadd.f32 %v41, %v585
  %587 = vmatmul.f32.gmra.mxu0 %v524
  %v588 = vpop.f32.mrf.mxu0
  %v589 = vadd.f32 %v41, %v588
  %590 = vmatmul.f32.gmra.mxu0 %v527
  %v591 = vpop.f32.mrf.mxu0
  %v592 = vadd.f32 %v41, %v591
  %593 = vmatmul.f32.gmra.mxu0 %v530
  %v594 = vpop.f32.mrf.mxu0
  %v595 = vadd.f32 %v41, %v594
  %596 = vmatmul.f32.gmra.mxu0 %v533
  %v597 = vpop.f32.mrf.mxu0
  %v598 = vadd.f32 %v41, %v597
  %599 = vmatmul.f32.gmra.mxu0 %v536
  %v600 = vpop.f32.mrf.mxu0
  %v601 = vadd.f32 %v41, %v600
  %602 = vmatmul.f32.gmra.mxu0 %v539
  %v603 = vpop.f32.mrf.mxu0
  %v604 = vadd.f32 %v41, %v603
  %605 = vmatmul.f32.gmra.mxu0 %v542
  %v606 = vpop.f32.mrf.mxu0
  %v607 = vadd.f32 %v41, %v606
  %608 = vmatmul.f32.gmra.mxu0 %v545
  %v609 = vpop.f32.mrf.mxu0
  %v610 = vadd.f32 %v41, %v609
  %611 = vmatmul.f32.gmra.mxu0 %v548
  %v612 = vpop.f32.mrf.mxu0
  %v613 = vadd.f32 %v41, %v612
  %614 = vmatmul.f32.gmra.mxu0 %v551
  %v615 = vpop.f32.mrf.mxu0
  %v616 = vadd.f32 %v41, %v615
  %617 = vmatmul.f32.gmra.mxu0 %v554
  %v618 = vpop.f32.mrf.mxu0
  %v619 = vadd.f32 %v41, %v618
  %620 = vmatmul.f32.gmra.mxu0 %v557
  %v621 = vpop.f32.mrf.mxu0
  %v622 = vadd.f32 %v41, %v621
  %623 = vmatmul.f32.gmra.mxu0 %v560
  %v624 = vpop.f32.mrf.mxu0
  %v625 = vadd.f32 %v41, %v624
  %626 = vdwg.mxu0
  %v627 = vmax.f32 %v580, 0.0
  %v628 = vmax.f32 %v583, 0.0
  %v629 = vmax.f32 %v586, 0.0
  %v630 = vmax.f32 %v589, 0.0
  %v631 = vmax.f32 %v592, 0.0
  %v632 = vmax.f32 %v595, 0.0
  %v633 = vmax.f32 %v598, 0.0
  %v634 = vmax.f32 %v601, 0.0
  %v635 = vmax.f32 %v604, 0.0
  %v636 = vmax.f32 %v607, 0.0
  %v637 = vmax.f32 %v610, 0.0
  %v638 = vmax.f32 %v613, 0.0
  %v639 = vmax.f32 %v616, 0.0
  %v640 = vmax.f32 %v619, 0.0
  %v641 = vmax.f32 %v622, 0.0
  %v642 = vmax.f32 %v625, 0.0
  %v643 = vmax.f32 %v481, %v627
  %v644 = vmax.f32 %v482, %v628
  %v645 = vmax.f32 %v483, %v629
  %v646 = vmax.f32 %v484, %v630
  %v647 = vmax.f32 %v485, %v631
  %v648 = vmax.f32 %v486, %v632
  %v649 = vmax.f32 %v487, %v633
  %v650 = vmax.f32 %v488, %v634
  %v651 = vmax.f32 %v489, %v635
  %v652 = vmax.f32 %v490, %v636
  %v653 = vmax.f32 %v491, %v637
  %v654 = vmax.f32 %v492, %v638
  %v655 = vmax.f32 %v493, %v639
  %v656 = vmax.f32 %v494, %v640
  %v657 = vmax.f32 %v495, %v641
  %v658 = vmax.f32 %v496, %v642
  %vm659 = vcmask 523264
  %660 = vst.msk [vmem:[%s3] sm:$0xff] %vm659, %v643
  %661 = vst.msk [vmem:[%s3 + $0x8] sm:$0xff] %vm659, %v644
  %662 = vst.msk [vmem:[%s3 + $0x10] sm:$0xff] %vm659, %v645
  %663 = vst.msk [vmem:[%s3 + $0x18] sm:$0xff] %vm659, %v646
  %664 = vst.msk [vmem:[%s3 + $0x20] sm:$0xff] %vm659, %v647
  %665 = vst.msk [vmem:[%s3 + $0x28] sm:$0xff] %vm659, %v648
  %666 = vst.msk [vmem:[%s3 + $0x30] sm:$0xff] %vm659, %v649
  %667 = vst.msk [vmem:[%s3 + $0x38] sm:$0xff] %vm659, %v650
  %668 = vst.msk [vmem:[%s3 + $0x40] sm:$0xff] %vm659, %v651
  %669 = vst.msk [vmem:[%s3 + $0x48] sm:$0xff] %vm659, %v652
  %670 = vst.msk [vmem:[%s3 + $0x50] sm:$0xff] %vm659, %v653
  %671 = vst.msk [vmem:[%s3 + $0x58] sm:$0xff] %vm659, %v654
  %672 = vst.msk [vmem:[%s3 + $0x60] sm:$0xff] %vm659, %v655
  %673 = vst.msk [vmem:[%s3 + $0x68] sm:$0xff] %vm659, %v656
  %674 = vst.msk [vmem:[%s3 + $0x70] sm:$0xff] %vm659, %v657
  %675 = vst.msk [vmem:[%s3 + $0x78] sm:$0xff] %vm659, %v658
  // Predicated region
  $region14: #{vgg_forward.6} parent=0 // pred_check
    _
  $region15: #{vgg_forward.6} parent=0 // pred_check_branch
    %677 = sbr.rel (0) target = $region17
  $region16: #{vgg_forward.6} parent=0 // pred_region
    _
  $region17: #{vgg_forward.6} parent=0 // pred_fallthru
    _
  // Predicated region
  $region18: #{vgg_forward.6} parent=0 // pred_check
    _
  $region19: #{vgg_forward.6} parent=0 // pred_check_branch
    %679 = sbr.rel (0) target = $region21
  $region20: #{vgg_forward.6} parent=0 // pred_region
    _
  $region21: #{vgg_forward.6} parent=0 // pred_fallthru
    _

// kernel: vgg_forward.8
$region0: #{vgg_forward.8}
  #allocation0 [shape = 'u32[]', space=smem, size = 0x4, offset = 0x4, fixed_abs, tag = 'smem constant byte address 0x4 - core index']
  #allocation1 [shape = 'u32[72,128]{1,0:T(1,128)}', space=vmem, size = 0x9000, scoped, tag = 'internal scratch']
  %s0 = inlined_call_operand.vmem [shape: f32[2,49,16], index: 0, kind: input, shape index: {}]
  %s1 = inlined_call_operand.vmem [shape: f32[2,16,512], index: 1, kind: input, shape index: {}]
  %s2 = inlined_call_operand.vmem [shape: f32[2,49,512], index: 2, kind: output, shape index: {}]
  %s3 = sld [smem:[#allocation0]]
  $region18: #{vgg_forward.8} parent=0
    _
  %s5 = ssub.s32 1, %s3
  %s6 = scalar_select 0, %s5, %s3
  // Predicated region
  $region2: #{vgg_forward.8} parent=0 // pred_check
    _
  $region3: #{vgg_forward.8} parent=0 // pred_check_branch
    %8 = sbr.rel (0) target = $region5
  $region4: #{vgg_forward.8} parent=0 // pred_region
    _
  $region5: #{vgg_forward.8} parent=0 // pred_fallthru
    _
  // Predicated region
  $region6: #{vgg_forward.8} parent=0 // pred_check
    _
  $region7: #{vgg_forward.8} parent=0 // pred_check_branch
    %10 = sbr.rel (0) target = $region9
  $region8: #{vgg_forward.8} parent=0 // pred_region
    _
  $region9: #{vgg_forward.8} parent=0 // pred_fallthru
    _
  %v11 = vld [vmem:[%s0] sm:$0xff]
  %v12 = vld [vmem:[%s0 + $0x8] sm:$0xff]
  %v13 = vld [vmem:[%s0 + $0x10] sm:$0xff]
  %v14 = vld [vmem:[%s0 + $0x18] sm:$0xff]
  %v15 = vld [vmem:[%s0 + $0x20] sm:$0xff]
  %v16 = vld [vmem:[%s0 + $0x28] sm:$0xff]
  %v17 = vld [vmem:[%s0 + $0x30] sm:$0x1]
  %v18 = vld [vmem:[%s0 + $0x38] sm:$0xff]
  %v19 = vld [vmem:[%s0 + $0x40] sm:$0xff]
  %v20 = vld [vmem:[%s0 + $0x48] sm:$0xff]
  %v21 = vld [vmem:[%s0 + $0x50] sm:$0xff]
  %v22 = vld [vmem:[%s0 + $0x58] sm:$0xff]
  %v23 = vld [vmem:[%s0 + $0x60] sm:$0xff]
  %v24 = vld [vmem:[%s0 + $0x68] sm:$0x1]
  %v25 = vld [vmem:[%s1] sm:$0xff]
  %v26 = vld [vmem:[%s1 + $0x8] sm:$0xff]
  %v27 = vld [vmem:[%s1 + $0x10] sm:$0xff]
  %v28 = vld [vmem:[%s1 + $0x18] sm:$0xff]
  %v29 = vld [vmem:[%s1 + $0x20] sm:$0xff]
  %v30 = vld [vmem:[%s1 + $0x28] sm:$0xff]
  %v31 = vld [vmem:[%s1 + $0x30] sm:$0xff]
  %v32 = vld [vmem:[%s1 + $0x38] sm:$0xff]
  %v33 = vld [vmem:[%s1 + $0x40] sm:$0xff]
  %v34 = vld [vmem:[%s1 + $0x48] sm:$0xff]
  %v35 = vld [vmem:[%s1 + $0x50] sm:$0xff]
  %v36 = vld [vmem:[%s1 + $0x58] sm:$0xff]
  %v37 = vld [vmem:[%s1 + $0x60] sm:$0xff]
  %v38 = vld [vmem:[%s1 + $0x68] sm:$0xff]
  %v39 = vld [vmem:[%s1 + $0x70] sm:$0xff]
  %v40 = vld [vmem:[%s1 + $0x78] sm:$0xff]
  %vm41 = vcmask 130048
  %v43 = vsel %vm41, %v11, 0
  %v46 = vsel %vm41, %v12, 0
  %v49 = vsel %vm41, %v13, 0
  %v52 = vsel %vm41, %v14, 0
  %v55 = vsel %vm41, %v15, 0
  %v58 = vsel %vm41, %v16, 0
  %v61 = vsel %vm41, %v17, 0
  %63 = vmatpush.msra.mxu0 0.0
  %64 = vmatpush.msra.mxu0 0.0
  %65 = vmatpush.msra.mxu0 0.0
  %66 = vmatpush.msra.mxu0 0.0
  %67 = vmatpush.msra.mxu0 0.0
  %68 = vmatpush.msra.mxu0 0.0
  %69 = vmatpush.msra.mxu0 0.0
  %70 = vmatpush.msra.mxu0 0.0
  %71 = vmatpush.msra.mxu0 0.0
  %72 = vmatpush.msra.mxu0 0.0
  %73 = vmatpush.msra.mxu0 0.0
  %74 = vmatpush.msra.mxu0 0.0
  %75 = vmatpush.msra.mxu0 0.0
  %76 = vmatpush.msra.mxu0 0.0
  %77 = vmatpush.msra.mxu0 %v29
  %78 = vmatpush.msra.mxu0 %v25
  %79 = vmatmul.f32.gmra.mxu0 %v43
  %v80 = vpop.f32.mrf.mxu0
  %v81 = vadd.f32 0.0, %v80
  %82 = vmatmul.f32.gmra.mxu0 %v46
  %v83 = vpop.f32.mrf.mxu0
  %v84 = vadd.f32 0.0, %v83
  %85 = vmatmul.f32.gmra.mxu0 %v49
  %v86 = vpop.f32.mrf.mxu0
  %v87 = vadd.f32 0.0, %v86
  %88 = vmatmul.f32.gmra.mxu0 %v52
  %v89 = vpop.f32.mrf.mxu0
  %v90 = vadd.f32 0.0, %v89
  %91 = vmatmul.f32.gmra.mxu0 %v55
  %v92 = vpop.f32.mrf.mxu0
  %v93 = vadd.f32 0.0, %v92
  %94 = vmatmul.f32.gmra.mxu0 %v58
  %v95 = vpop.f32.mrf.mxu0
  %v96 = vadd.f32 0.0, %v95
  %97 = vmatmul.f32.gmra.mxu0 %v61
  %v98 = vpop.f32.mrf.mxu0
  %v99 = vadd.f32 0.0, %v98
  %100 = vdwg.mxu0
  %101 = vmatpush.msra.mxu0 0.0
  %102 = vmatpush.msra.mxu0 0.0
  %103 = vmatpush.msra.mxu0 0.0
  %104 = vmatpush.msra.mxu0 0.0
  %105 = vmatpush.msra.mxu0 0.0
  %106 = vmatpush.msra.mxu0 0.0
  %107 = vmatpush.msra.mxu0 0.0
  %108 = vmatpush.msra.mxu0 0.0
  %109 = vmatpush.msra.mxu0 0.0
  %110 = vmatpush.msra.mxu0 0.0
  %111 = vmatpush.msra.mxu0 0.0
  %112 = vmatpush.msra.mxu0 0.0
  %113 = vmatpush.msra.mxu0 0.0
  %114 = vmatpush.msra.mxu0 0.0
  %115 = vmatpush.msra.mxu0 %v30
  %116 = vmatpush.msra.mxu0 %v26
  %117 = vmatmul.f32.gmra.mxu0 %v43
  %v118 = vpop.f32.mrf.mxu0
  %v119 = vadd.f32 0.0, %v118
  %120 = vmatmul.f32.gmra.mxu0 %v46
  %v121 = vpop.f32.mrf.mxu0
  %v122 = vadd.f32 0.0, %v121
  %123 = vmatmul.f32.gmra.mxu0 %v49
  %v124 = vpop.f32.mrf.mxu0
  %v125 = vadd.f32 0.0, %v124
  %126 = vmatmul.f32.gmra.mxu0 %v52
  %v127 = vpop.f32.mrf.mxu0
  %v128 = vadd.f32 0.0, %v127
  %129 = vmatmul.f32.gmra.mxu0 %v55
  %v130 = vpop.f32.mrf.mxu0
  %v131 = vadd.f32 0.0, %v130
  %132 = vmatmul.f32.gmra.mxu0 %v58
  %v133 = vpop.f32.mrf.mxu0
  %v134 = vadd.f32 0.0, %v133
  %135 = vmatmul.f32.gmra.mxu0 %v61
  %v136 = vpop.f32.mrf.mxu0
  %v137 = vadd.f32 0.0, %v136
  %138 = vdwg.mxu0
  %139 = vmatpush.msra.mxu0 0.0
  %140 = vmatpush.msra.mxu0 0.0
  %141 = vmatpush.msra.mxu0 0.0
  %142 = vmatpush.msra.mxu0 0.0
  %143 = vmatpush.msra.mxu0 0.0
  %144 = vmatpush.msra.mxu0 0.0
  %145 = vmatpush.msra.mxu0 0.0
  %146 = vmatpush.msra.mxu0 0.0
  %147 = vmatpush.msra.mxu0 0.0
  %148 = vmatpush.msra.mxu0 0.0
  %149 = vmatpush.msra.mxu0 0.0
  %150 = vmatpush.msra.mxu0 0.0
  %151 = vmatpush.msra.mxu0 0.0
  %152 = vmatpush.msra.mxu0 0.0
  %153 = vmatpush.msra.mxu0 %v31
  %154 = vmatpush.msra.mxu0 %v27
  %155 = vmatmul.f32.gmra.mxu0 %v43
  %v156 = vpop.f32.mrf.mxu0
  %v157 = vadd.f32 0.0, %v156
  %158 = vmatmul.f32.gmra.mxu0 %v46
  %v159 = vpop.f32.mrf.mxu0
  %v160 = vadd.f32 0.0, %v159
  %161 = vmatmul.f32.gmra.mxu0 %v49
  %v162 = vpop.f32.mrf.mxu0
  %v163 = vadd.f32 0.0, %v162
  %164 = vmatmul.f32.gmra.mxu0 %v52
  %v165 = vpop.f32.mrf.mxu0
  %v166 = vadd.f32 0.0, %v165
  %167 = vmatmul.f32.gmra.mxu0 %v55
  %v168 = vpop.f32.mrf.mxu0
  %v169 = vadd.f32 0.0, %v168
  %170 = vmatmul.f32.gmra.mxu0 %v58
  %v171 = vpop.f32.mrf.mxu0
  %v172 = vadd.f32 0.0, %v171
  %173 = vmatmul.f32.gmra.mxu0 %v61
  %v174 = vpop.f32.mrf.mxu0
  %v175 = vadd.f32 0.0, %v174
  %176 = vdwg.mxu0
  %177 = vmatpush.msra.mxu0 0.0
  %178 = vmatpush.msra.mxu0 0.0
  %179 = vmatpush.msra.mxu0 0.0
  %180 = vmatpush.msra.mxu0 0.0
  %181 = vmatpush.msra.mxu0 0.0
  %182 = vmatpush.msra.mxu0 0.0
  %183 = vmatpush.msra.mxu0 0.0
  %184 = vmatpush.msra.mxu0 0.0
  %185 = vmatpush.msra.mxu0 0.0
  %186 = vmatpush.msra.mxu0 0.0
  %187 = vmatpush.msra.mxu0 0.0
  %188 = vmatpush.msra.mxu0 0.0
  %189 = vmatpush.msra.mxu0 0.0
  %190 = vmatpush.msra.mxu0 0.0
  %191 = vmatpush.msra.mxu0 %v32
  %192 = vmatpush.msra.mxu0 %v28
  %193 = vmatmul.f32.gmra.mxu0 %v43
  %v194 = vpop.f32.mrf.mxu0
  %v195 = vadd.f32 0.0, %v194
  %196 = vmatmul.f32.gmra.mxu0 %v46
  %v197 = vpop.f32.mrf.mxu0
  %v198 = vadd.f32 0.0, %v197
  %199 = vmatmul.f32.gmra.mxu0 %v49
  %v200 = vpop.f32.mrf.mxu0
  %v201 = vadd.f32 0.0, %v200
  %202 = vmatmul.f32.gmra.mxu0 %v52
  %v203 = vpop.f32.mrf.mxu0
  %v204 = vadd.f32 0.0, %v203
  %205 = vmatmul.f32.gmra.mxu0 %v55
  %v206 = vpop.f32.mrf.mxu0
  %v207 = vadd.f32 0.0, %v206
  %208 = vmatmul.f32.gmra.mxu0 %v58
  %v209 = vpop.f32.mrf.mxu0
  %v210 = vadd.f32 0.0, %v209
  %211 = vmatmul.f32.gmra.mxu0 %v61
  %v212 = vpop.f32.mrf.mxu0
  %v213 = vadd.f32 0.0, %v212
  %214 = vdwg.mxu0
  %v216 = vsel %vm41, %v18, 0
  %v219 = vsel %vm41, %v19, 0
  %v222 = vsel %vm41, %v20, 0
  %v225 = vsel %vm41, %v21, 0
  %v228 = vsel %vm41, %v22, 0
  %v231 = vsel %vm41, %v23, 0
  %v234 = vsel %vm41, %v24, 0
  %236 = vmatpush.msra.mxu0 0.0
  %237 = vmatpush.msra.mxu0 0.0
  %238 = vmatpush.msra.mxu0 0.0
  %239 = vmatpush.msra.mxu0 0.0
  %240 = vmatpush.msra.mxu0 0.0
  %241 = vmatpush.msra.mxu0 0.0
  %242 = vmatpush.msra.mxu0 0.0
  %243 = vmatpush.msra.mxu0 0.0
  %244 = vmatpush.msra.mxu0 0.0
  %245 = vmatpush.msra.mxu0 0.0
  %246 = vmatpush.msra.mxu0 0.0
  %247 = vmatpush.msra.mxu0 0.0
  %248 = vmatpush.msra.mxu0 0.0
  %249 = vmatpush.msra.mxu0 0.0
  %250 = vmatpush.msra.mxu0 %v37
  %251 = vmatpush.msra.mxu0 %v33
  %252 = vmatmul.f32.gmra.mxu0 %v216
  %v253 = vpop.f32.mrf.mxu0
  %v254 = vadd.f32 0.0, %v253
  %255 = vmatmul.f32.gmra.mxu0 %v219
  %v256 = vpop.f32.mrf.mxu0
  %v257 = vadd.f32 0.0, %v256
  %258 = vmatmul.f32.gmra.mxu0 %v222
  %v259 = vpop.f32.mrf.mxu0
  %v260 = vadd.f32 0.0, %v259
  %261 = vmatmul.f32.gmra.mxu0 %v225
  %v262 = vpop.f32.mrf.mxu0
  %v263 = vadd.f32 0.0, %v262
  %264 = vmatmul.f32.gmra.mxu0 %v228
  %v265 = vpop.f32.mrf.mxu0
  %v266 = vadd.f32 0.0, %v265
  %267 = vmatmul.f32.gmra.mxu0 %v231
  %v268 = vpop.f32.mrf.mxu0
  %v269 = vadd.f32 0.0, %v268
  %270 = vmatmul.f32.gmra.mxu0 %v234
  %v271 = vpop.f32.mrf.mxu0
  %v272 = vadd.f32 0.0, %v271
  %273 = vdwg.mxu0
  %274 = vmatpush.msra.mxu0 0.0
  %275 = vmatpush.msra.mxu0 0.0
  %276 = vmatpush.msra.mxu0 0.0
  %277 = vmatpush.msra.mxu0 0.0
  %278 = vmatpush.msra.mxu0 0.0
  %279 = vmatpush.msra.mxu0 0.0
  %280 = vmatpush.msra.mxu0 0.0
  %281 = vmatpush.msra.mxu0 0.0
  %282 = vmatpush.msra.mxu0 0.0
  %283 = vmatpush.msra.mxu0 0.0
  %284 = vmatpush.msra.mxu0 0.0
  %285 = vmatpush.msra.mxu0 0.0
  %286 = vmatpush.msra.mxu0 0.0
  %287 = vmatpush.msra.mxu0 0.0
  %288 = vmatpush.msra.mxu0 %v38
  %289 = vmatpush.msra.mxu0 %v34
  %290 = vmatmul.f32.gmra.mxu0 %v216
  %v291 = vpop.f32.mrf.mxu0
  %v292 = vadd.f32 0.0, %v291
  %293 = vmatmul.f32.gmra.mxu0 %v219
  %v294 = vpop.f32.mrf.mxu0
  %v295 = vadd.f32 0.0, %v294
  %296 = vmatmul.f32.gmra.mxu0 %v222
  %v297 = vpop.f32.mrf.mxu0
  %v298 = vadd.f32 0.0, %v297
  %299 = vmatmul.f32.gmra.mxu0 %v225
  %v300 = vpop.f32.mrf.mxu0
  %v301 = vadd.f32 0.0, %v300
  %302 = vmatmul.f32.gmra.mxu0 %v228
  %v303 = vpop.f32.mrf.mxu0
  %v304 = vadd.f32 0.0, %v303
  %305 = vmatmul.f32.gmra.mxu0 %v231
  %v306 = vpop.f32.mrf.mxu0
  %v307 = vadd.f32 0.0, %v306
  %308 = vmatmul.f32.gmra.mxu0 %v234
  %v309 = vpop.f32.mrf.mxu0
  %v310 = vadd.f32 0.0, %v309
  %311 = vdwg.mxu0
  %312 = vmatpush.msra.mxu0 0.0
  %313 = vmatpush.msra.mxu0 0.0
  %314 = vmatpush.msra.mxu0 0.0
  %315 = vmatpush.msra.mxu0 0.0
  %316 = vmatpush.msra.mxu0 0.0
  %317 = vmatpush.msra.mxu0 0.0
  %318 = vmatpush.msra.mxu0 0.0
  %319 = vmatpush.msra.mxu0 0.0
  %320 = vmatpush.msra.mxu0 0.0
  %321 = vmatpush.msra.mxu0 0.0
  %322 = vmatpush.msra.mxu0 0.0
  %323 = vmatpush.msra.mxu0 0.0
  %324 = vmatpush.msra.mxu0 0.0
  %325 = vmatpush.msra.mxu0 0.0
  %326 = vmatpush.msra.mxu0 %v39
  %327 = vmatpush.msra.mxu0 %v35
  %328 = vmatmul.f32.gmra.mxu0 %v216
  %v329 = vpop.f32.mrf.mxu0
  %v330 = vadd.f32 0.0, %v329
  %331 = vmatmul.f32.gmra.mxu0 %v219
  %v332 = vpop.f32.mrf.mxu0
  %v333 = vadd.f32 0.0, %v332
  %334 = vmatmul.f32.gmra.mxu0 %v222
  %v335 = vpop.f32.mrf.mxu0
  %v336 = vadd.f32 0.0, %v335
  %337 = vmatmul.f32.gmra.mxu0 %v225
  %v338 = vpop.f32.mrf.mxu0
  %v339 = vadd.f32 0.0, %v338
  %340 = vmatmul.f32.gmra.mxu0 %v228
  %v341 = vpop.f32.mrf.mxu0
  %v342 = vadd.f32 0.0, %v341
  %343 = vmatmul.f32.gmra.mxu0 %v231
  %v344 = vpop.f32.mrf.mxu0
  %v345 = vadd.f32 0.0, %v344
  %346 = vmatmul.f32.gmra.mxu0 %v234
  %v347 = vpop.f32.mrf.mxu0
  %v348 = vadd.f32 0.0, %v347
  %349 = vdwg.mxu0
  %350 = vmatpush.msra.mxu0 0.0
  %351 = vmatpush.msra.mxu0 0.0
  %352 = vmatpush.msra.mxu0 0.0
  %353 = vmatpush.msra.mxu0 0.0
  %354 = vmatpush.msra.mxu0 0.0
  %355 = vmatpush.msra.mxu0 0.0
  %356 = vmatpush.msra.mxu0 0.0
  %357 = vmatpush.msra.mxu0 0.0
  %358 = vmatpush.msra.mxu0 0.0
  %359 = vmatpush.msra.mxu0 0.0
  %360 = vmatpush.msra.mxu0 0.0
  %361 = vmatpush.msra.mxu0 0.0
  %362 = vmatpush.msra.mxu0 0.0
  %363 = vmatpush.msra.mxu0 0.0
  %364 = vmatpush.msra.mxu0 %v40
  %365 = vmatpush.msra.mxu0 %v36
  %366 = vmatmul.f32.gmra.mxu0 %v216
  %v367 = vpop.f32.mrf.mxu0
  %v368 = vadd.f32 0.0, %v367
  %369 = vmatmul.f32.gmra.mxu0 %v219
  %v370 = vpop.f32.mrf.mxu0
  %v371 = vadd.f32 0.0, %v370
  %372 = vmatmul.f32.gmra.mxu0 %v222
  %v373 = vpop.f32.mrf.mxu0
  %v374 = vadd.f32 0.0, %v373
  %375 = vmatmul.f32.gmra.mxu0 %v225
  %v376 = vpop.f32.mrf.mxu0
  %v377 = vadd.f32 0.0, %v376
  %378 = vmatmul.f32.gmra.mxu0 %v228
  %v379 = vpop.f32.mrf.mxu0
  %v380 = vadd.f32 0.0, %v379
  %381 = vmatmul.f32.gmra.mxu0 %v231
  %v382 = vpop.f32.mrf.mxu0
  %v383 = vadd.f32 0.0, %v382
  %384 = vmatmul.f32.gmra.mxu0 %v234
  %v385 = vpop.f32.mrf.mxu0
  %v386 = vadd.f32 0.0, %v385
  %387 = vdwg.mxu0
  %388 = vst [vmem:[%s2] sm:$0xff] %v81
  %389 = vst [vmem:[%s2 + $0x8] sm:$0xff] %v119
  %390 = vst [vmem:[%s2 + $0x10] sm:$0xff] %v157
  %391 = vst [vmem:[%s2 + $0x18] sm:$0xff] %v195
  %392 = vst [vmem:[%s2 + $0x20] sm:$0xff] %v84
  %393 = vst [vmem:[%s2 + $0x28] sm:$0xff] %v122
  %394 = vst [vmem:[%s2 + $0x30] sm:$0xff] %v160
  %395 = vst [vmem:[%s2 + $0x38] sm:$0xff] %v198
  %396 = vst [vmem:[%s2 + $0x40] sm:$0xff] %v87
  %397 = vst [vmem:[%s2 + $0x48] sm:$0xff] %v125
  %398 = vst [vmem:[%s2 + $0x50] sm:$0xff] %v163
  %399 = vst [vmem:[%s2 + $0x58] sm:$0xff] %v201
  %400 = vst [vmem:[%s2 + $0x60] sm:$0xff] %v90
  %401 = vst [vmem:[%s2 + $0x68] sm:$0xff] %v128
  %402 = vst [vmem:[%s2 + $0x70] sm:$0xff] %v166
  %403 = vst [vmem:[%s2 + $0x78] sm:$0xff] %v204
  %404 = vst [vmem:[%s2 + $0x80] sm:$0xff] %v93
  %405 = vst [vmem:[%s2 + $0x88] sm:$0xff] %v131
  %406 = vst [vmem:[%s2 + $0x90] sm:$0xff] %v169
  %407 = vst [vmem:[%s2 + $0x98] sm:$0xff] %v207
  %408 = vst [vmem:[%s2 + $0xa0] sm:$0xff] %v96
  %409 = vst [vmem:[%s2 + $0xa8] sm:$0xff] %v134
  %410 = vst [vmem:[%s2 + $0xb0] sm:$0xff] %v172
  %411 = vst [vmem:[%s2 + $0xb8] sm:$0xff] %v210
  %412 = vst [vmem:[%s2 + $0xc0] sm:$0x1] %v99
  %413 = vst [vmem:[%s2 + $0xc8] sm:$0x1] %v137
  %414 = vst [vmem:[%s2 + $0xd0] sm:$0x1] %v175
  %415 = vst [vmem:[%s2 + $0xd8] sm:$0x1] %v213
  %416 = vst [vmem:[%s2 + $0xe0] sm:$0xff] %v254
  %417 = vst [vmem:[%s2 + $0xe8] sm:$0xff] %v292
  %418 = vst [vmem:[%s2 + $0xf0] sm:$0xff] %v330
  %419 = vst [vmem:[%s2 + $0xf8] sm:$0xff] %v368
  %420 = vst [vmem:[%s2 + $0x100] sm:$0xff] %v257
  %421 = vst [vmem:[%s2 + $0x108] sm:$0xff] %v295
  %422 = vst [vmem:[%s2 + $0x110] sm:$0xff] %v333
  %423 = vst [vmem:[%s2 + $0x118] sm:$0xff] %v371
  %424 = vst [vmem:[%s2 + $0x120] sm:$0xff] %v260
  %425 = vst [vmem:[%s2 + $0x128] sm:$0xff] %v298
  %426 = vst [vmem:[%s2 + $0x130] sm:$0xff] %v336
  %427 = vst [vmem:[%s2 + $0x138] sm:$0xff] %v374
  %428 = vst [vmem:[%s2 + $0x140] sm:$0xff] %v263
  %429 = vst [vmem:[%s2 + $0x148] sm:$0xff] %v301
  %430 = vst [vmem:[%s2 + $0x150] sm:$0xff] %v339
  %431 = vst [vmem:[%s2 + $0x158] sm:$0xff] %v377
  %432 = vst [vmem:[%s2 + $0x160] sm:$0xff] %v266
  %433 = vst [vmem:[%s2 + $0x168] sm:$0xff] %v304
  %434 = vst [vmem:[%s2 + $0x170] sm:$0xff] %v342
  %435 = vst [vmem:[%s2 + $0x178] sm:$0xff] %v380
  %436 = vst [vmem:[%s2 + $0x180] sm:$0xff] %v269
  %437 = vst [vmem:[%s2 + $0x188] sm:$0xff] %v307
  %438 = vst [vmem:[%s2 + $0x190] sm:$0xff] %v345
  %439 = vst [vmem:[%s2 + $0x198] sm:$0xff] %v383
  %440 = vst [vmem:[%s2 + $0x1a0] sm:$0x1] %v272
  %441 = vst [vmem:[%s2 + $0x1a8] sm:$0x1] %v310
  %442 = vst [vmem:[%s2 + $0x1b0] sm:$0x1] %v348
  %443 = vst [vmem:[%s2 + $0x1b8] sm:$0x1] %v386
  // Predicated region
  $region10: #{vgg_forward.8} parent=0 // pred_check
    _
  $region11: #{vgg_forward.8} parent=0 // pred_check_branch
    %445 = sbr.rel (0) target = $region13
  $region12: #{vgg_forward.8} parent=0 // pred_region
    _
  $region13: #{vgg_forward.8} parent=0 // pred_fallthru
    _
  // Predicated region
  $region14: #{vgg_forward.8} parent=0 // pred_check
    _
  $region15: #{vgg_forward.8} parent=0 // pred_check_branch
    %447 = sbr.rel (0) target = $region17
  $region16: #{vgg_forward.8} parent=0 // pred_region
    _
  $region17: #{vgg_forward.8} parent=0 // pred_fallthru
    _

// kernel: vgg_forward.10
$region0: #{vgg_forward.10}
  #allocation0 [shape = 'u32[]', space=smem, size = 0x4, offset = 0x4, fixed_abs, tag = 'smem constant byte address 0x4 - core index']
  #allocation1 [shape = 'u32[72,128]{1,0:T(1,128)}', space=vmem, size = 0x9000, scoped, tag = 'internal scratch']
  #allocation2 [shape = 'f32[2,256]{1,0:T(2,128)}', space=vmem, size = 0x800, scoped, tag = 'scratch operand']
  %s0 = inlined_call_operand.vmem [shape: bf16[2,512], index: 0, kind: input, shape index: {}]
  %s1 = inlined_call_operand.vmem [shape: bf16[512,256], index: 1, kind: input, shape index: {}]
  %s2 = inlined_call_operand.vmem [shape: f32[1,256], index: 2, kind: input, shape index: {}]
  %s3 = inlined_call_operand.vmem [shape: f32[2,256], index: 3, kind: output, shape index: {}]
  %s4 = sld [smem:[#allocation0]]
  $region30: #{vgg_forward.10} parent=0
    _
  %s6 = ssub.s32 1, %s4
  %s7 = scalar_select 0, %s6, %s4
  // Predicated region
  $region2: #{vgg_forward.10} parent=0 // pred_check
    _
  $region3: #{vgg_forward.10} parent=0 // pred_check_branch
    %9 = sbr.rel (0) target = $region5
  $region4: #{vgg_forward.10} parent=0 // pred_region
    _
  $region5: #{vgg_forward.10} parent=0 // pred_fallthru
    _
  // Predicated region
  $region6: #{vgg_forward.10} parent=0 // pred_check
    _
  $region7: #{vgg_forward.10} parent=0 // pred_check_branch
    %11 = sbr.rel (0) target = $region9
  $region8: #{vgg_forward.10} parent=0 // pred_region
    _
  $region9: #{vgg_forward.10} parent=0 // pred_fallthru
    _
  // Predicated region
  $region10: #{vgg_forward.10} parent=0 // pred_check
    _
  $region11: #{vgg_forward.10} parent=0 // pred_check_branch
    %13 = sbr.rel (0) target = $region13
  $region12: #{vgg_forward.10} parent=0 // pred_region
    _
  $region13: #{vgg_forward.10} parent=0 // pred_fallthru
    _
  %p14 = scmp.eq.s32.totalorder 0, 0
  // Predicated region
  $region14: #{vgg_forward.10} parent=0 // pred_check
    %p15 = pneg %p14
  $region15: #{vgg_forward.10} parent=0 // pred_check_branch
    %17 = sbr.rel (%p15) target = $region17
  $region16: #{vgg_forward.10} parent=0 // pred_region
    %18 = vst [vmem:[#allocation2] sm:$0xf] 0.0
  $region17: #{vgg_forward.10} parent=0 // pred_fallthru
    _
  %v19 = vld [vmem:[#allocation2] sm:$0xf]
  %v20 = vld [vmem:[%s0] sm:$0xf]
  %v21 = vld [vmem:[%s1] sm:$0xff]
  %v22 = vld [vmem:[%s1 + $0x8] sm:$0xff]
  %v23 = vld [vmem:[%s1 + $0x10] sm:$0xff]
  %v24 = vld [vmem:[%s1 + $0x18] sm:$0xff]
  %v25 = vld [vmem:[%s1 + $0x20] sm:$0xff]
  %v26 = vld [vmem:[%s1 + $0x28] sm:$0xff]
  %v27 = vld [vmem:[%s1 + $0x30] sm:$0xff]
  %v28 = vld [vmem:[%s1 + $0x38] sm:$0xff]
  %v29 = vld [vmem:[%s1 + $0x40] sm:$0xff]
  %v30 = vld [vmem:[%s1 + $0x48] sm:$0xff]
  %v31 = vld [vmem:[%s1 + $0x50] sm:$0xff]
  %v32 = vld [vmem:[%s1 + $0x58] sm:$0xff]
  %v33 = vld [vmem:[%s1 + $0x60] sm:$0xff]
  %v34 = vld [vmem:[%s1 + $0x68] sm:$0xff]
  %v35 = vld [vmem:[%s1 + $0x70] sm:$0xff]
  %v36 = vld [vmem:[%s1 + $0x78] sm:$0xff]
  %v37 = vld [vmem:[%s1 + $0x80] sm:$0xff]
  %v38 = vld [vmem:[%s1 + $0x88] sm:$0xff]
  %v39 = vld [vmem:[%s1 + $0x90] sm:$0xff]
  %v40 = vld [vmem:[%s1 + $0x98] sm:$0xff]
  %v41 = vld [vmem:[%s1 + $0xa0] sm:$0xff]
  %v42 = vld [vmem:[%s1 + $0xa8] sm:$0xff]
  %v43 = vld [vmem:[%s1 + $0xb0] sm:$0xff]
  %v44 = vld [vmem:[%s1 + $0xb8] sm:$0xff]
  %v45 = vld [vmem:[%s1 + $0xc0] sm:$0xff]
  %v46 = vld [vmem:[%s1 + $0xc8] sm:$0xff]
  %v47 = vld [vmem:[%s1 + $0xd0] sm:$0xff]
  %v48 = vld [vmem:[%s1 + $0xd8] sm:$0xff]
  %v49 = vld [vmem:[%s1 + $0xe0] sm:$0xff]
  %v50 = vld [vmem:[%s1 + $0xe8] sm:$0xff]
  %v51 = vld [vmem:[%s1 + $0xf0] sm:$0xff]
  %v52 = vld [vmem:[%s1 + $0xf8] sm:$0xff]
  %v53 = vld [vmem:[%s1 + $0x100] sm:$0xff]
  %v54 = vld [vmem:[%s1 + $0x108] sm:$0xff]
  %v55 = vld [vmem:[%s1 + $0x110] sm:$0xff]
  %v56 = vld [vmem:[%s1 + $0x118] sm:$0xff]
  %v57 = vld [vmem:[%s1 + $0x120] sm:$0xff]
  %v58 = vld [vmem:[%s1 + $0x128] sm:$0xff]
  %v59 = vld [vmem:[%s1 + $0x130] sm:$0xff]
  %v60 = vld [vmem:[%s1 + $0x138] sm:$0xff]
  %v61 = vld [vmem:[%s1 + $0x140] sm:$0xff]
  %v62 = vld [vmem:[%s1 + $0x148] sm:$0xff]
  %v63 = vld [vmem:[%s1 + $0x150] sm:$0xff]
  %v64 = vld [vmem:[%s1 + $0x158] sm:$0xff]
  %v65 = vld [vmem:[%s1 + $0x160] sm:$0xff]
  %v66 = vld [vmem:[%s1 + $0x168] sm:$0xff]
  %v67 = vld [vmem:[%s1 + $0x170] sm:$0xff]
  %v68 = vld [vmem:[%s1 + $0x178] sm:$0xff]
  %v69 = vld [vmem:[%s1 + $0x180] sm:$0xff]
  %v70 = vld [vmem:[%s1 + $0x188] sm:$0xff]
  %v71 = vld [vmem:[%s1 + $0x190] sm:$0xff]
  %v72 = vld [vmem:[%s1 + $0x198] sm:$0xff]
  %v73 = vld [vmem:[%s1 + $0x1a0] sm:$0xff]
  %v74 = vld [vmem:[%s1 + $0x1a8] sm:$0xff]
  %v75 = vld [vmem:[%s1 + $0x1b0] sm:$0xff]
  %v76 = vld [vmem:[%s1 + $0x1b8] sm:$0xff]
  %v77 = vld [vmem:[%s1 + $0x1c0] sm:$0xff]
  %v78 = vld [vmem:[%s1 + $0x1c8] sm:$0xff]
  %v79 = vld [vmem:[%s1 + $0x1d0] sm:$0xff]
  %v80 = vld [vmem:[%s1 + $0x1d8] sm:$0xff]
  %v81 = vld [vmem:[%s1 + $0x1e0] sm:$0xff]
  %v82 = vld [vmem:[%s1 + $0x1e8] sm:$0xff]
  %v83 = vld [vmem:[%s1 + $0x1f0] sm:$0xff]
  %v84 = vld [vmem:[%s1 + $0x1f8] sm:$0xff]
  %86 = vst [vmem:[#allocation1] ss:$9 sm:$0xff] %v20
  %v87 = vld [vmem:[#allocation1] sm:$0xff]
  %v88 = vld [vmem:[#allocation1 + $0x9] sm:$0xff]
  %v89 = vld [vmem:[#allocation1 + $0x12] sm:$0xff]
  %v90 = vld [vmem:[#allocation1 + $0x1b] sm:$0xff]
  %v159 = vunpack.c.l.b16 %v21
  %v160 = vunpack.c.h.b16 %v21
  %v161 = vunpack.c.l.b16 %v22
  %v162 = vunpack.c.h.b16 %v22
  %v163 = vunpack.c.l.b16 %v23
  %v164 = vunpack.c.h.b16 %v23
  %v165 = vunpack.c.l.b16 %v24
  %v166 = vunpack.c.h.b16 %v24
  %v167 = vunpack.c.l.b16 %v25
  %v168 = vunpack.c.h.b16 %v25
  %v169 = vunpack.c.l.b16 %v26
  %v170 = vunpack.c.h.b16 %v26
  %v171 = vunpack.c.l.b16 %v27
  %v172 = vunpack.c.h.b16 %v27
  %v173 = vunpack.c.l.b16 %v28
  %v174 = vunpack.c.h.b16 %v28
  %v175 = vunpack.c.l.b16 %v29
  %v176 = vunpack.c.h.b16 %v29
  %v177 = vunpack.c.l.b16 %v30
  %v178 = vunpack.c.h.b16 %v30
  %v179 = vunpack.c.l.b16 %v31
  %v180 = vunpack.c.h.b16 %v31
  %v181 = vunpack.c.l.b16 %v32
  %v182 = vunpack.c.h.b16 %v32
  %v183 = vunpack.c.l.b16 %v33
  %v184 = vunpack.c.h.b16 %v33
  %v185 = vunpack.c.l.b16 %v34
  %v186 = vunpack.c.h.b16 %v34
  %v187 = vunpack.c.l.b16 %v35
  %v188 = vunpack.c.h.b16 %v35
  %v189 = vunpack.c.l.b16 %v36
  %v190 = vunpack.c.h.b16 %v36
  %v191 = vunpack.c.l.b16 %v37
  %v192 = vunpack.c.h.b16 %v37
  %v193 = vunpack.c.l.b16 %v38
  %v194 = vunpack.c.h.b16 %v38
  %v195 = vunpack.c.l.b16 %v39
  %v196 = vunpack.c.h.b16 %v39
  %v197 = vunpack.c.l.b16 %v40
  %v198 = vunpack.c.h.b16 %v40
  %v199 = vunpack.c.l.b16 %v41
  %v200 = vunpack.c.h.b16 %v41
  %v201 = vunpack.c.l.b16 %v42
  %v202 = vunpack.c.h.b16 %v42
  %v203 = vunpack.c.l.b16 %v43
  %v204 = vunpack.c.h.b16 %v43
  %v205 = vunpack.c.l.b16 %v44
  %v206 = vunpack.c.h.b16 %v44
  %v207 = vunpack.c.l.b16 %v45
  %v208 = vunpack.c.h.b16 %v45
  %v209 = vunpack.c.l.b16 %v46
  %v210 = vunpack.c.h.b16 %v46
  %v211 = vunpack.c.l.b16 %v47
  %v212 = vunpack.c.h.b16 %v47
  %v213 = vunpack.c.l.b16 %v48
  %v214 = vunpack.c.h.b16 %v48
  %v215 = vunpack.c.l.b16 %v49
  %v216 = vunpack.c.h.b16 %v49
  %v217 = vunpack.c.l.b16 %v50
  %v218 = vunpack.c.h.b16 %v50
  %v219 = vunpack.c.l.b16 %v51
  %v220 = vunpack.c.h.b16 %v51
  %v221 = vunpack.c.l.b16 %v52
  %v222 = vunpack.c.h.b16 %v52
  %v223 = vunpack.c.l.b16 %v53
  %v224 = vunpack.c.h.b16 %v53
  %v225 = vunpack.c.l.b16 %v54
  %v226 = vunpack.c.h.b16 %v54
  %v227 = vunpack.c.l.b16 %v55
  %v228 = vunpack.c.h.b16 %v55
  %v229 = vunpack.c.l.b16 %v56
  %v230 = vunpack.c.h.b16 %v56
  %v231 = vunpack.c.l.b16 %v57
  %v232 = vunpack.c.h.b16 %v57
  %v233 = vunpack.c.l.b16 %v58
  %v234 = vunpack.c.h.b16 %v58
  %v235 = vunpack.c.l.b16 %v59
  %v236 = vunpack.c.h.b16 %v59
  %v237 = vunpack.c.l.b16 %v60
  %v238 = vunpack.c.h.b16 %v60
  %v239 = vunpack.c.l.b16 %v61
  %v240 = vunpack.c.h.b16 %v61
  %v241 = vunpack.c.l.b16 %v62
  %v242 = vunpack.c.h.b16 %v62
  %v243 = vunpack.c.l.b16 %v63
  %v244 = vunpack.c.h.b16 %v63
  %v245 = vunpack.c.l.b16 %v64
  %v246 = vunpack.c.h.b16 %v64
  %v247 = vunpack.c.l.b16 %v65
  %v248 = vunpack.c.h.b16 %v65
  %v249 = vunpack.c.l.b16 %v66
  %v250 = vunpack.c.h.b16 %v66
  %v251 = vunpack.c.l.b16 %v67
  %v252 = vunpack.c.h.b16 %v67
  %v253 = vunpack.c.l.b16 %v68
  %v254 = vunpack.c.h.b16 %v68
  %v255 = vunpack.c.l.b16 %v69
  %v256 = vunpack.c.h.b16 %v69
  %v257 = vunpack.c.l.b16 %v70
  %v258 = vunpack.c.h.b16 %v70
  %v259 = vunpack.c.l.b16 %v71
  %v260 = vunpack.c.h.b16 %v71
  %v261 = vunpack.c.l.b16 %v72
  %v262 = vunpack.c.h.b16 %v72
  %v263 = vunpack.c.l.b16 %v73
  %v264 = vunpack.c.h.b16 %v73
  %v265 = vunpack.c.l.b16 %v74
  %v266 = vunpack.c.h.b16 %v74
  %v267 = vunpack.c.l.b16 %v75
  %v268 = vunpack.c.h.b16 %v75
  %v269 = vunpack.c.l.b16 %v76
  %v270 = vunpack.c.h.b16 %v76
  %v271 = vunpack.c.l.b16 %v77
  %v272 = vunpack.c.h.b16 %v77
  %v273 = vunpack.c.l.b16 %v78
  %v274 = vunpack.c.h.b16 %v78
  %v275 = vunpack.c.l.b16 %v79
  %v276 = vunpack.c.h.b16 %v79
  %v277 = vunpack.c.l.b16 %v80
  %v278 = vunpack.c.h.b16 %v80
  %v279 = vunpack.c.l.b16 %v81
  %v280 = vunpack.c.h.b16 %v81
  %v281 = vunpack.c.l.b16 %v82
  %v282 = vunpack.c.h.b16 %v82
  %v283 = vunpack.c.l.b16 %v83
  %v284 = vunpack.c.h.b16 %v83
  %v285 = vunpack.c.l.b16 %v84
  %v286 = vunpack.c.h.b16 %v84
  %v287 = vpack.c.b16 %v161, %v159
  %v288 = vpack.c.b16 %v162, %v160
  %v289 = vpack.c.b16 %v165, %v163
  %v290 = vpack.c.b16 %v166, %v164
  %v291 = vpack.c.b16 %v169, %v167
  %v292 = vpack.c.b16 %v170, %v168
  %v293 = vpack.c.b16 %v173, %v171
  %v294 = vpack.c.b16 %v174, %v172
  %v295 = vpack.c.b16 %v177, %v175
  %v296 = vpack.c.b16 %v178, %v176
  %v297 = vpack.c.b16 %v181, %v179
  %v298 = vpack.c.b16 %v182, %v180
  %v299 = vpack.c.b16 %v185, %v183
  %v300 = vpack.c.b16 %v186, %v184
  %v301 = vpack.c.b16 %v189, %v187
  %v302 = vpack.c.b16 %v190, %v188
  %v303 = vpack.c.b16 %v193, %v191
  %v304 = vpack.c.b16 %v194, %v192
  %v305 = vpack.c.b16 %v197, %v195
  %v306 = vpack.c.b16 %v198, %v196
  %v307 = vpack.c.b16 %v201, %v199
  %v308 = vpack.c.b16 %v202, %v200
  %v309 = vpack.c.b16 %v205, %v203
  %v310 = vpack.c.b16 %v206, %v204
  %v311 = vpack.c.b16 %v209, %v207
  %v312 = vpack.c.b16 %v210, %v208
  %v313 = vpack.c.b16 %v213, %v211
  %v314 = vpack.c.b16 %v214, %v212
  %v315 = vpack.c.b16 %v217, %v215
  %v316 = vpack.c.b16 %v218, %v216
  %v317 = vpack.c.b16 %v221, %v219
  %v318 = vpack.c.b16 %v222, %v220
  %v319 = vpack.c.b16 %v225, %v223
  %v320 = vpack.c.b16 %v226, %v224
  %v321 = vpack.c.b16 %v229, %v227
  %v322 = vpack.c.b16 %v230, %v228
  %v323 = vpack.c.b16 %v233, %v231
  %v324 = vpack.c.b16 %v234, %v232
  %v325 = vpack.c.b16 %v237, %v235
  %v326 = vpack.c.b16 %v238, %v236
  %v327 = vpack.c.b16 %v241, %v239
  %v328 = vpack.c.b16 %v242, %v240
  %v329 = vpack.c.b16 %v245, %v243
  %v330 = vpack.c.b16 %v246, %v244
  %v331 = vpack.c.b16 %v249, %v247
  %v332 = vpack.c.b16 %v250, %v248
  %v333 = vpack.c.b16 %v253, %v251
  %v334 = vpack.c.b16 %v254, %v252
  %v335 = vpack.c.b16 %v257, %v255
  %v336 = vpack.c.b16 %v258, %v256
  %v337 = vpack.c.b16 %v261, %v259
  %v338 = vpack.c.b16 %v262, %v260
  %v339 = vpack.c.b16 %v265, %v263
  %v340 = vpack.c.b16 %v266, %v264
  %v341 = vpack.c.b16 %v269, %v267
  %v342 = vpack.c.b16 %v270, %v268
  %v343 = vpack.c.b16 %v273, %v271
  %v344 = vpack.c.b16 %v274, %v272
  %v345 = vpack.c.b16 %v277, %v275
  %v346 = vpack.c.b16 %v278, %v276
  %v347 = vpack.c.b16 %v281, %v279
  %v348 = vpack.c.b16 %v282, %v280
  %v349 = vpack.c.b16 %v285, %v283
  %v350 = vpack.c.b16 %v286, %v284
  %415 = vmatpush.bf16.msra.mxu0 %v301
  %416 = vmatpush.bf16.msra.mxu0 %v299
  %417 = vmatpush.bf16.msra.mxu0 %v297
  %418 = vmatpush.bf16.msra.mxu0 %v295
  %419 = vmatpush.bf16.msra.mxu0 %v293
  %420 = vmatpush.bf16.msra.mxu0 %v291
  %421 = vmatpush.bf16.msra.mxu0 %v289
  %422 = vmatpush.bf16.msra.mxu0 %v287
  %423 = vmatmul.bf16.gmra.mxu0 %v87
  %v424 = vpop.f32.mrf.mxu0
  %v425 = vadd.f32 0.0, %v424
  %v426 = vpop.f32.mrf.mxu0
  %427 = vdwg.mxu0
  %428 = vmatpush.bf16.msra.mxu0 %v317
  %429 = vmatpush.bf16.msra.mxu0 %v315
  %430 = vmatpush.bf16.msra.mxu0 %v313
  %431 = vmatpush.bf16.msra.mxu0 %v311
  %432 = vmatpush.bf16.msra.mxu0 %v309
  %433 = vmatpush.bf16.msra.mxu0 %v307
  %434 = vmatpush.bf16.msra.mxu0 %v305
  %435 = vmatpush.bf16.msra.mxu0 %v303
  %436 = vmatmul.bf16.gmra.mxu0 %v88
  %v437 = vpop.f32.mrf.mxu0
  %v438 = vadd.f32 %v425, %v437
  %v439 = vpop.f32.mrf.mxu0
  %440 = vdwg.mxu0
  %441 = vmatpush.bf16.msra.mxu0 %v333
  %442 = vmatpush.bf16.msra.mxu0 %v331
  %443 = vmatpush.bf16.msra.mxu0 %v329
  %444 = vmatpush.bf16.msra.mxu0 %v327
  %445 = vmatpush.bf16.msra.mxu0 %v325
  %446 = vmatpush.bf16.msra.mxu0 %v323
  %447 = vmatpush.bf16.msra.mxu0 %v321
  %448 = vmatpush.bf16.msra.mxu0 %v319
  %449 = vmatmul.bf16.gmra.mxu0 %v89
  %v450 = vpop.f32.mrf.mxu0
  %v451 = vadd.f32 %v438, %v450
  %v452 = vpop.f32.mrf.mxu0
  %453 = vdwg.mxu0
  %454 = vmatpush.bf16.msra.mxu0 %v349
  %455 = vmatpush.bf16.msra.mxu0 %v347
  %456 = vmatpush.bf16.msra.mxu0 %v345
  %457 = vmatpush.bf16.msra.mxu0 %v343
  %458 = vmatpush.bf16.msra.mxu0 %v341
  %459 = vmatpush.bf16.msra.mxu0 %v339
  %460 = vmatpush.bf16.msra.mxu0 %v337
  %461 = vmatpush.bf16.msra.mxu0 %v335
  %462 = vmatmul.bf16.gmra.mxu0 %v90
  %v463 = vpop.f32.mrf.mxu0
  %v464 = vadd.f32 %v451, %v463
  %v465 = vpop.f32.mrf.mxu0
  %466 = vdwg.mxu0
  %467 = vmatpush.bf16.msra.mxu0 %v302
  %468 = vmatpush.bf16.msra.mxu0 %v300
  %469 = vmatpush.bf16.msra.mxu0 %v298
  %470 = vmatpush.bf16.msra.mxu0 %v296
  %471 = vmatpush.bf16.msra.mxu0 %v294
  %472 = vmatpush.bf16.msra.mxu0 %v292
  %473 = vmatpush.bf16.msra.mxu0 %v290
  %474 = vmatpush.bf16.msra.mxu0 %v288
  %475 = vmatmul.bf16.gmra.mxu0 %v87
  %v476 = vpop.f32.mrf.mxu0
  %v477 = vadd.f32 0.0, %v476
  %v478 = vpop.f32.mrf.mxu0
  %479 = vdwg.mxu0
  %480 = vmatpush.bf16.msra.mxu0 %v318
  %481 = vmatpush.bf16.msra.mxu0 %v316
  %482 = vmatpush.bf16.msra.mxu0 %v314
  %483 = vmatpush.bf16.msra.mxu0 %v312
  %484 = vmatpush.bf16.msra.mxu0 %v310
  %485 = vmatpush.bf16.msra.mxu0 %v308
  %486 = vmatpush.bf16.msra.mxu0 %v306
  %487 = vmatpush.bf16.msra.mxu0 %v304
  %488 = vmatmul.bf16.gmra.mxu0 %v88
  %v489 = vpop.f32.mrf.mxu0
  %v490 = vadd.f32 %v477, %v489
  %v491 = vpop.f32.mrf.mxu0
  %492 = vdwg.mxu0
  %493 = vmatpush.bf16.msra.mxu0 %v334
  %494 = vmatpush.bf16.msra.mxu0 %v332
  %495 = vmatpush.bf16.msra.mxu0 %v330
  %496 = vmatpush.bf16.msra.mxu0 %v328
  %497 = vmatpush.bf16.msra.mxu0 %v326
  %498 = vmatpush.bf16.msra.mxu0 %v324
  %499 = vmatpush.bf16.msra.mxu0 %v322
  %500 = vmatpush.bf16.msra.mxu0 %v320
  %501 = vmatmul.bf16.gmra.mxu0 %v89
  %v502 = vpop.f32.mrf.mxu0
  %v503 = vadd.f32 %v490, %v502
  %v504 = vpop.f32.mrf.mxu0
  %505 = vdwg.mxu0
  %506 = vmatpush.bf16.msra.mxu0 %v350
  %507 = vmatpush.bf16.msra.mxu0 %v348
  %508 = vmatpush.bf16.msra.mxu0 %v346
  %509 = vmatpush.bf16.msra.mxu0 %v344
  %510 = vmatpush.bf16.msra.mxu0 %v342
  %511 = vmatpush.bf16.msra.mxu0 %v340
  %512 = vmatpush.bf16.msra.mxu0 %v338
  %513 = vmatpush.bf16.msra.mxu0 %v336
  %514 = vmatmul.bf16.gmra.mxu0 %v90
  %v515 = vpop.f32.mrf.mxu0
  %v516 = vadd.f32 %v503, %v515
  %v517 = vpop.f32.mrf.mxu0
  %518 = vdwg.mxu0
  %v521 = vrot.slane %v516, 6
  %vm522 = vcmask 1041408
  %v523 = vsel %vm522, %v464, %v521
  %v525 = vadd.f32 %v19, %v523
  %526 = vst [vmem:[#allocation2] sm:$0xf] %v525
  // Predicated region
  $region18: #{vgg_forward.10} parent=0 // pred_check
    %p527 = pneg %p14
  $region19: #{vgg_forward.10} parent=0 // pred_check_branch
    %529 = sbr.rel (%p527) target = $region21
  $region20: #{vgg_forward.10} parent=0 // pred_region
    %v530 = vld [vmem:[#allocation2] sm:$0xf]
    %v531 = vld [vmem:[%s2] sm:$0x3]
    %v533 = vperm.slane %v531, 0
    %v534 = vperm.slane %v531, 1
    %v535 = vrot.slane %v534, 6
    %v536 = vsel %vm522, %v533, %v535
    %v538 = vadd.f32 %v530, %v536
    %v539 = vmax.f32 %v538, 0.0
    %540 = vst [vmem:[%s3] sm:$0xf] %v539
  $region21: #{vgg_forward.10} parent=0 // pred_fallthru
    _
  // Predicated region
  $region22: #{vgg_forward.10} parent=0 // pred_check
    _
  $region23: #{vgg_forward.10} parent=0 // pred_check_branch
    %542 = sbr.rel (0) target = $region25
  $region24: #{vgg_forward.10} parent=0 // pred_region
    _
  $region25: #{vgg_forward.10} parent=0 // pred_fallthru
    _
  // Predicated region
  $region26: #{vgg_forward.10} parent=0 // pred_check
    _
  $region27: #{vgg_forward.10} parent=0 // pred_check_branch
    %544 = sbr.rel (0) target = $region29
  $region28: #{vgg_forward.10} parent=0 // pred_region
    _
  $region29: #{vgg_forward.10} parent=0 // pred_fallthru
    _

// kernel: vgg_forward.7
$region0: #{vgg_forward.7}
  #allocation0 [shape = 'u32[]', space=smem, size = 0x4, offset = 0x4, fixed_abs, tag = 'smem constant byte address 0x4 - core index']
  #allocation1 [shape = 'u32[72,128]{1,0:T(1,128)}', space=vmem, size = 0x9000, scoped, tag = 'internal scratch']
  %s0 = inlined_call_operand.vmem [shape: f32[4,32,576], index: 0, kind: input, shape index: {}]
  %s1 = inlined_call_operand.vmem [shape: f32[576,512], index: 1, kind: input, shape index: {}]
  %s2 = inlined_call_operand.vmem [shape: f32[1,512], index: 2, kind: input, shape index: {}]
  %s3 = inlined_call_operand.vmem [shape: f32[32,512], index: 3, kind: output, shape index: {}]
  %s4 = sld [smem:[#allocation0]]
  $region22: #{vgg_forward.7} parent=0
    _
  %s6 = ssub.s32 1, %s4
  %s7 = scalar_select 0, %s6, %s4
  // Predicated region
  $region2: #{vgg_forward.7} parent=0 // pred_check
    _
  $region3: #{vgg_forward.7} parent=0 // pred_check_branch
    %9 = sbr.rel (0) target = $region5
  $region4: #{vgg_forward.7} parent=0 // pred_region
    _
  $region5: #{vgg_forward.7} parent=0 // pred_fallthru
    _
  // Predicated region
  $region6: #{vgg_forward.7} parent=0 // pred_check
    _
  $region7: #{vgg_forward.7} parent=0 // pred_check_branch
    %11 = sbr.rel (0) target = $region9
  $region8: #{vgg_forward.7} parent=0 // pred_region
    _
  $region9: #{vgg_forward.7} parent=0 // pred_fallthru
    _
  // Predicated region
  $region10: #{vgg_forward.7} parent=0 // pred_check
    _
  $region11: #{vgg_forward.7} parent=0 // pred_check_branch
    %13 = sbr.rel (0) target = $region13
  $region12: #{vgg_forward.7} parent=0 // pred_region
    _
  $region13: #{vgg_forward.7} parent=0 // pred_fallthru
    _
  %v14 = vld [vmem:[%s1] sm:$0xff]
  %v15 = vld [vmem:[%s1 + $0x8] sm:$0xff]
  %v16 = vld [vmem:[%s1 + $0x10] sm:$0xff]
  %v17 = vld [vmem:[%s1 + $0x18] sm:$0xff]
  %v18 = vld [vmem:[%s1 + $0x20] sm:$0xff]
  %v19 = vld [vmem:[%s1 + $0x28] sm:$0xff]
  %v20 = vld [vmem:[%s1 + $0x30] sm:$0xff]
  %v21 = vld [vmem:[%s1 + $0x38] sm:$0xff]
  %v22 = vld [vmem:[%s1 + $0x40] sm:$0xff]
  %v23 = vld [vmem:[%s1 + $0x48] sm:$0xff]
  %v24 = vld [vmem:[%s1 + $0x50] sm:$0xff]
  %v25 = vld [vmem:[%s1 + $0x58] sm:$0xff]
  %v26 = vld [vmem:[%s1 + $0x60] sm:$0xff]
  %v27 = vld [vmem:[%s1 + $0x68] sm:$0xff]
  %v28 = vld [vmem:[%s1 + $0x70] sm:$0xff]
  %v29 = vld [vmem:[%s1 + $0x78] sm:$0xff]
  %v30 = vld [vmem:[%s1 + $0x80] sm:$0xff]
  %v31 = vld [vmem:[%s1 + $0x88] sm:$0xff]
  %v32 = vld [vmem:[%s1 + $0x90] sm:$0xff]
  %v33 = vld [vmem:[%s1 + $0x98] sm:$0xff]
  %v34 = vld [vmem:[%s1 + $0xa0] sm:$0xff]
  %v35 = vld [vmem:[%s1 + $0xa8] sm:$0xff]
  %v36 = vld [vmem:[%s1 + $0xb0] sm:$0xff]
  %v37 = vld [vmem:[%s1 + $0xb8] sm:$0xff]
  %v38 = vld [vmem:[%s1 + $0xc0] sm:$0xff]
  %v39 = vld [vmem:[%s1 + $0xc8] sm:$0xff]
  %v40 = vld [vmem:[%s1 + $0xd0] sm:$0xff]
  %v41 = vld [vmem:[%s1 + $0xd8] sm:$0xff]
  %v42 = vld [vmem:[%s1 + $0xe0] sm:$0xff]
  %v43 = vld [vmem:[%s1 + $0xe8] sm:$0xff]
  %v44 = vld [vmem:[%s1 + $0xf0] sm:$0xff]
  %v45 = vld [vmem:[%s1 + $0xf8] sm:$0xff]
  %v46 = vld [vmem:[%s1 + $0x100] sm:$0xff]
  %v47 = vld [vmem:[%s1 + $0x108] sm:$0xff]
  %v48 = vld [vmem:[%s1 + $0x110] sm:$0xff]
  %v49 = vld [vmem:[%s1 + $0x118] sm:$0xff]
  %v50 = vld [vmem:[%s1 + $0x120] sm:$0xff]
  %v51 = vld [vmem:[%s1 + $0x128] sm:$0xff]
  %v52 = vld [vmem:[%s1 + $0x130] sm:$0xff]
  %v53 = vld [vmem:[%s1 + $0x138] sm:$0xff]
  %v54 = vld [vmem:[%s1 + $0x140] sm:$0xff]
  %v55 = vld [vmem:[%s1 + $0x148] sm:$0xff]
  %v56 = vld [vmem:[%s1 + $0x150] sm:$0xff]
  %v57 = vld [vmem:[%s1 + $0x158] sm:$0xff]
  %v58 = vld [vmem:[%s1 + $0x160] sm:$0xff]
  %v59 = vld [vmem:[%s1 + $0x168] sm:$0xff]
  %v60 = vld [vmem:[%s1 + $0x170] sm:$0xff]
  %v61 = vld [vmem:[%s1 + $0x178] sm:$0xff]
  %v62 = vld [vmem:[%s1 + $0x180] sm:$0xff]
  %v63 = vld [vmem:[%s1 + $0x188] sm:$0xff]
  %v64 = vld [vmem:[%s1 + $0x190] sm:$0xff]
  %v65 = vld [vmem:[%s1 + $0x198] sm:$0xff]
  %v66 = vld [vmem:[%s1 + $0x1a0] sm:$0xff]
  %v67 = vld [vmem:[%s1 + $0x1a8] sm:$0xff]
  %v68 = vld [vmem:[%s1 + $0x1b0] sm:$0xff]
  %v69 = vld [vmem:[%s1 + $0x1b8] sm:$0xff]
  %v70 = vld [vmem:[%s1 + $0x1c0] sm:$0xff]
  %v71 = vld [vmem:[%s1 + $0x1c8] sm:$0xff]
  %v72 = vld [vmem:[%s1 + $0x1d0] sm:$0xff]
  %v73 = vld [vmem:[%s1 + $0x1d8] sm:$0xff]
  %v74 = vld [vmem:[%s1 + $0x1e0] sm:$0xff]
  %v75 = vld [vmem:[%s1 + $0x1e8] sm:$0xff]
  %v76 = vld [vmem:[%s1 + $0x1f0] sm:$0xff]
  %v77 = vld [vmem:[%s1 + $0x1f8] sm:$0xff]
  %v78 = vld [vmem:[%s1 + $0x200] sm:$0xff]
  %v79 = vld [vmem:[%s1 + $0x208] sm:$0xff]
  %v80 = vld [vmem:[%s1 + $0x210] sm:$0xff]
  %v81 = vld [vmem:[%s1 + $0x218] sm:$0xff]
  %v82 = vld [vmem:[%s1 + $0x220] sm:$0xff]
  %v83 = vld [vmem:[%s1 + $0x228] sm:$0xff]
  %v84 = vld [vmem:[%s1 + $0x230] sm:$0xff]
  %v85 = vld [vmem:[%s1 + $0x238] sm:$0xff]
  %v86 = vld [vmem:[%s1 + $0x240] sm:$0xff]
  %v87 = vld [vmem:[%s1 + $0x248] sm:$0xff]
  %v88 = vld [vmem:[%s1 + $0x250] sm:$0xff]
  %v89 = vld [vmem:[%s1 + $0x258] sm:$0xff]
  %v90 = vld [vmem:[%s1 + $0x260] sm:$0xff]
  %v91 = vld [vmem:[%s1 + $0x268] sm:$0xff]
  %v92 = vld [vmem:[%s1 + $0x270] sm:$0xff]
  %v93 = vld [vmem:[%s1 + $0x278] sm:$0xff]
  %v94 = vld [vmem:[%s1 + $0x280] sm:$0xff]
  %v95 = vld [vmem:[%s1 + $0x288] sm:$0xff]
  %v96 = vld [vmem:[%s1 + $0x290] sm:$0xff]
  %v97 = vld [vmem:[%s1 + $0x298] sm:$0xff]
  %v98 = vld [vmem:[%s1 + $0x2a0] sm:$0xff]
  %v99 = vld [vmem:[%s1 + $0x2a8] sm:$0xff]
  %v100 = vld [vmem:[%s1 + $0x2b0] sm:$0xff]
  %v101 = vld [vmem:[%s1 + $0x2b8] sm:$0xff]
  %v102 = vld [vmem:[%s1 + $0x2c0] sm:$0xff]
  %v103 = vld [vmem:[%s1 + $0x2c8] sm:$0xff]
  %v104 = vld [vmem:[%s1 + $0x2d0] sm:$0xff]
  %v105 = vld [vmem:[%s1 + $0x2d8] sm:$0xff]
  %v106 = vld [vmem:[%s1 + $0x2e0] sm:$0xff]
  %v107 = vld [vmem:[%s1 + $0x2e8] sm:$0xff]
  %v108 = vld [vmem:[%s1 + $0x2f0] sm:$0xff]
  %v109 = vld [vmem:[%s1 + $0x2f8] sm:$0xff]
  %v110 = vld [vmem:[%s1 + $0x300] sm:$0xff]
  %v111 = vld [vmem:[%s1 + $0x308] sm:$0xff]
  %v112 = vld [vmem:[%s1 + $0x310] sm:$0xff]
  %v113 = vld [vmem:[%s1 + $0x318] sm:$0xff]
  %v114 = vld [vmem:[%s1 + $0x320] sm:$0xff]
  %v115 = vld [vmem:[%s1 + $0x328] sm:$0xff]
  %v116 = vld [vmem:[%s1 + $0x330] sm:$0xff]
  %v117 = vld [vmem:[%s1 + $0x338] sm:$0xff]
  %v118 = vld [vmem:[%s1 + $0x340] sm:$0xff]
  %v119 = vld [vmem:[%s1 + $0x348] sm:$0xff]
  %v120 = vld [vmem:[%s1 + $0x350] sm:$0xff]
  %v121 = vld [vmem:[%s1 + $0x358] sm:$0xff]
  %v122 = vld [vmem:[%s1 + $0x360] sm:$0xff]
  %v123 = vld [vmem:[%s1 + $0x368] sm:$0xff]
  %v124 = vld [vmem:[%s1 + $0x370] sm:$0xff]
  %v125 = vld [vmem:[%s1 + $0x378] sm:$0xff]
  %v126 = vld [vmem:[%s1 + $0x380] sm:$0xff]
  %v127 = vld [vmem:[%s1 + $0x388] sm:$0xff]
  %v128 = vld [vmem:[%s1 + $0x390] sm:$0xff]
  %v129 = vld [vmem:[%s1 + $0x398] sm:$0xff]
  %v130 = vld [vmem:[%s1 + $0x3a0] sm:$0xff]
  %v131 = vld [vmem:[%s1 + $0x3a8] sm:$0xff]
  %v132 = vld [vmem:[%s1 + $0x3b0] sm:$0xff]
  %v133 = vld [vmem:[%s1 + $0x3b8] sm:$0xff]
  %v134 = vld [vmem:[%s1 + $0x3c0] sm:$0xff]
  %v135 = vld [vmem:[%s1 + $0x3c8] sm:$0xff]
  %v136 = vld [vmem:[%s1 + $0x3d0] sm:$0xff]
  %v137 = vld [vmem:[%s1 + $0x3d8] sm:$0xff]
  %v138 = vld [vmem:[%s1 + $0x3e0] sm:$0xff]
  %v139 = vld [vmem:[%s1 + $0x3e8] sm:$0xff]
  %v140 = vld [vmem:[%s1 + $0x3f0] sm:$0xff]
  %v141 = vld [vmem:[%s1 + $0x3f8] sm:$0xff]
  %v142 = vld [vmem:[%s1 + $0x400] sm:$0xff]
  %v143 = vld [vmem:[%s1 + $0x408] sm:$0xff]
  %v144 = vld [vmem:[%s1 + $0x410] sm:$0xff]
  %v145 = vld [vmem:[%s1 + $0x418] sm:$0xff]
  %v146 = vld [vmem:[%s1 + $0x420] sm:$0xff]
  %v147 = vld [vmem:[%s1 + $0x428] sm:$0xff]
  %v148 = vld [vmem:[%s1 + $0x430] sm:$0xff]
  %v149 = vld [vmem:[%s1 + $0x438] sm:$0xff]
  %v150 = vld [vmem:[%s1 + $0x440] sm:$0xff]
  %v151 = vld [vmem:[%s1 + $0x448] sm:$0xff]
  %v152 = vld [vmem:[%s1 + $0x450] sm:$0xff]
  %v153 = vld [vmem:[%s1 + $0x458] sm:$0xff]
  %v154 = vld [vmem:[%s1 + $0x460] sm:$0xff]
  %v155 = vld [vmem:[%s1 + $0x468] sm:$0xff]
  %v156 = vld [vmem:[%s1 + $0x470] sm:$0xff]
  %v157 = vld [vmem:[%s1 + $0x478] sm:$0xff]
  %v158 = vld [vmem:[%s1 + $0x480] sm:$0xff]
  %v159 = vld [vmem:[%s1 + $0x488] sm:$0xff]
  %v160 = vld [vmem:[%s1 + $0x490] sm:$0xff]
  %v161 = vld [vmem:[%s1 + $0x498] sm:$0xff]
  %v162 = vld [vmem:[%s1 + $0x4a0] sm:$0xff]
  %v163 = vld [vmem:[%s1 + $0x4a8] sm:$0xff]
  %v164 = vld [vmem:[%s1 + $0x4b0] sm:$0xff]
  %v165 = vld [vmem:[%s1 + $0x4b8] sm:$0xff]
  %v166 = vld [vmem:[%s1 + $0x4c0] sm:$0xff]
  %v167 = vld [vmem:[%s1 + $0x4c8] sm:$0xff]
  %v168 = vld [vmem:[%s1 + $0x4d0] sm:$0xff]
  %v169 = vld [vmem:[%s1 + $0x4d8] sm:$0xff]
  %v170 = vld [vmem:[%s1 + $0x4e0] sm:$0xff]
  %v171 = vld [vmem:[%s1 + $0x4e8] sm:$0xff]
  %v172 = vld [vmem:[%s1 + $0x4f0] sm:$0xff]
  %v173 = vld [vmem:[%s1 + $0x4f8] sm:$0xff]
  %v174 = vld [vmem:[%s1 + $0x500] sm:$0xff]
  %v175 = vld [vmem:[%s1 + $0x508] sm:$0xff]
  %v176 = vld [vmem:[%s1 + $0x510] sm:$0xff]
  %v177 = vld [vmem:[%s1 + $0x518] sm:$0xff]
  %v178 = vld [vmem:[%s1 + $0x520] sm:$0xff]
  %v179 = vld [vmem:[%s1 + $0x528] sm:$0xff]
  %v180 = vld [vmem:[%s1 + $0x530] sm:$0xff]
  %v181 = vld [vmem:[%s1 + $0x538] sm:$0xff]
  %v182 = vld [vmem:[%s1 + $0x540] sm:$0xff]
  %v183 = vld [vmem:[%s1 + $0x548] sm:$0xff]
  %v184 = vld [vmem:[%s1 + $0x550] sm:$0xff]
  %v185 = vld [vmem:[%s1 + $0x558] sm:$0xff]
  %v186 = vld [vmem:[%s1 + $0x560] sm:$0xff]
  %v187 = vld [vmem:[%s1 + $0x568] sm:$0xff]
  %v188 = vld [vmem:[%s1 + $0x570] sm:$0xff]
  %v189 = vld [vmem:[%s1 + $0x578] sm:$0xff]
  %v190 = vld [vmem:[%s1 + $0x580] sm:$0xff]
  %v191 = vld [vmem:[%s1 + $0x588] sm:$0xff]
  %v192 = vld [vmem:[%s1 + $0x590] sm:$0xff]
  %v193 = vld [vmem:[%s1 + $0x598] sm:$0xff]
  %v194 = vld [vmem:[%s1 + $0x5a0] sm:$0xff]
  %v195 = vld [vmem:[%s1 + $0x5a8] sm:$0xff]
  %v196 = vld [vmem:[%s1 + $0x5b0] sm:$0xff]
  %v197 = vld [vmem:[%s1 + $0x5b8] sm:$0xff]
  %v198 = vld [vmem:[%s1 + $0x5c0] sm:$0xff]
  %v199 = vld [vmem:[%s1 + $0x5c8] sm:$0xff]
  %v200 = vld [vmem:[%s1 + $0x5d0] sm:$0xff]
  %v201 = vld [vmem:[%s1 + $0x5d8] sm:$0xff]
  %v202 = vld [vmem:[%s1 + $0x5e0] sm:$0xff]
  %v203 = vld [vmem:[%s1 + $0x5e8] sm:$0xff]
  %v204 = vld [vmem:[%s1 + $0x5f0] sm:$0xff]
  %v205 = vld [vmem:[%s1 + $0x5f8] sm:$0xff]
  %v206 = vld [vmem:[%s1 + $0x600] sm:$0xff]
  %v207 = vld [vmem:[%s1 + $0x608] sm:$0xff]
  %v208 = vld [vmem:[%s1 + $0x610] sm:$0xff]
  %v209 = vld [vmem:[%s1 + $0x618] sm:$0xff]
  %v210 = vld [vmem:[%s1 + $0x620] sm:$0xff]
  %v211 = vld [vmem:[%s1 + $0x628] sm:$0xff]
  %v212 = vld [vmem:[%s1 + $0x630] sm:$0xff]
  %v213 = vld [vmem:[%s1 + $0x638] sm:$0xff]
  %v214 = vld [vmem:[%s1 + $0x640] sm:$0xff]
  %v215 = vld [vmem:[%s1 + $0x648] sm:$0xff]
  %v216 = vld [vmem:[%s1 + $0x650] sm:$0xff]
  %v217 = vld [vmem:[%s1 + $0x658] sm:$0xff]
  %v218 = vld [vmem:[%s1 + $0x660] sm:$0xff]
  %v219 = vld [vmem:[%s1 + $0x668] sm:$0xff]
  %v220 = vld [vmem:[%s1 + $0x670] sm:$0xff]
  %v221 = vld [vmem:[%s1 + $0x678] sm:$0xff]
  %v222 = vld [vmem:[%s1 + $0x680] sm:$0xff]
  %v223 = vld [vmem:[%s1 + $0x688] sm:$0xff]
  %v224 = vld [vmem:[%s1 + $0x690] sm:$0xff]
  %v225 = vld [vmem:[%s1 + $0x698] sm:$0xff]
  %v226 = vld [vmem:[%s1 + $0x6a0] sm:$0xff]
  %v227 = vld [vmem:[%s1 + $0x6a8] sm:$0xff]
  %v228 = vld [vmem:[%s1 + $0x6b0] sm:$0xff]
  %v229 = vld [vmem:[%s1 + $0x6b8] sm:$0xff]
  %v230 = vld [vmem:[%s1 + $0x6c0] sm:$0xff]
  %v231 = vld [vmem:[%s1 + $0x6c8] sm:$0xff]
  %v232 = vld [vmem:[%s1 + $0x6d0] sm:$0xff]
  %v233 = vld [vmem:[%s1 + $0x6d8] sm:$0xff]
  %v234 = vld [vmem:[%s1 + $0x6e0] sm:$0xff]
  %v235 = vld [vmem:[%s1 + $0x6e8] sm:$0xff]
  %v236 = vld [vmem:[%s1 + $0x6f0] sm:$0xff]
  %v237 = vld [vmem:[%s1 + $0x6f8] sm:$0xff]
  %v238 = vld [vmem:[%s1 + $0x700] sm:$0xff]
  %v239 = vld [vmem:[%s1 + $0x708] sm:$0xff]
  %v240 = vld [vmem:[%s1 + $0x710] sm:$0xff]
  %v241 = vld [vmem:[%s1 + $0x718] sm:$0xff]
  %v242 = vld [vmem:[%s1 + $0x720] sm:$0xff]
  %v243 = vld [vmem:[%s1 + $0x728] sm:$0xff]
  %v244 = vld [vmem:[%s1 + $0x730] sm:$0xff]
  %v245 = vld [vmem:[%s1 + $0x738] sm:$0xff]
  %v246 = vld [vmem:[%s1 + $0x740] sm:$0xff]
  %v247 = vld [vmem:[%s1 + $0x748] sm:$0xff]
  %v248 = vld [vmem:[%s1 + $0x750] sm:$0xff]
  %v249 = vld [vmem:[%s1 + $0x758] sm:$0xff]
  %v250 = vld [vmem:[%s1 + $0x760] sm:$0xff]
  %v251 = vld [vmem:[%s1 + $0x768] sm:$0xff]
  %v252 = vld [vmem:[%s1 + $0x770] sm:$0xff]
  %v253 = vld [vmem:[%s1 + $0x778] sm:$0xff]
  %v254 = vld [vmem:[%s1 + $0x780] sm:$0xff]
  %v255 = vld [vmem:[%s1 + $0x788] sm:$0xff]
  %v256 = vld [vmem:[%s1 + $0x790] sm:$0xff]
  %v257 = vld [vmem:[%s1 + $0x798] sm:$0xff]
  %v258 = vld [vmem:[%s1 + $0x7a0] sm:$0xff]
  %v259 = vld [vmem:[%s1 + $0x7a8] sm:$0xff]
  %v260 = vld [vmem:[%s1 + $0x7b0] sm:$0xff]
  %v261 = vld [vmem:[%s1 + $0x7b8] sm:$0xff]
  %v262 = vld [vmem:[%s1 + $0x7c0] sm:$0xff]
  %v263 = vld [vmem:[%s1 + $0x7c8] sm:$0xff]
  %v264 = vld [vmem:[%s1 + $0x7d0] sm:$0xff]
  %v265 = vld [vmem:[%s1 + $0x7d8] sm:$0xff]
  %v266 = vld [vmem:[%s1 + $0x7e0] sm:$0xff]
  %v267 = vld [vmem:[%s1 + $0x7e8] sm:$0xff]
  %v268 = vld [vmem:[%s1 + $0x7f0] sm:$0xff]
  %v269 = vld [vmem:[%s1 + $0x7f8] sm:$0xff]
  %v270 = vld [vmem:[%s1 + $0x800] sm:$0xff]
  %v271 = vld [vmem:[%s1 + $0x808] sm:$0xff]
  %v272 = vld [vmem:[%s1 + $0x810] sm:$0xff]
  %v273 = vld [vmem:[%s1 + $0x818] sm:$0xff]
  %v274 = vld [vmem:[%s1 + $0x820] sm:$0xff]
  %v275 = vld [vmem:[%s1 + $0x828] sm:$0xff]
  %v276 = vld [vmem:[%s1 + $0x830] sm:$0xff]
  %v277 = vld [vmem:[%s1 + $0x838] sm:$0xff]
  %v278 = vld [vmem:[%s1 + $0x840] sm:$0xff]
  %v279 = vld [vmem:[%s1 + $0x848] sm:$0xff]
  %v280 = vld [vmem:[%s1 + $0x850] sm:$0xff]
  %v281 = vld [vmem:[%s1 + $0x858] sm:$0xff]
  %v282 = vld [vmem:[%s1 + $0x860] sm:$0xff]
  %v283 = vld [vmem:[%s1 + $0x868] sm:$0xff]
  %v284 = vld [vmem:[%s1 + $0x870] sm:$0xff]
  %v285 = vld [vmem:[%s1 + $0x878] sm:$0xff]
  %v286 = vld [vmem:[%s1 + $0x880] sm:$0xff]
  %v287 = vld [vmem:[%s1 + $0x888] sm:$0xff]
  %v288 = vld [vmem:[%s1 + $0x890] sm:$0xff]
  %v289 = vld [vmem:[%s1 + $0x898] sm:$0xff]
  %v290 = vld [vmem:[%s1 + $0x8a0] sm:$0xff]
  %v291 = vld [vmem:[%s1 + $0x8a8] sm:$0xff]
  %v292 = vld [vmem:[%s1 + $0x8b0] sm:$0xff]
  %v293 = vld [vmem:[%s1 + $0x8b8] sm:$0xff]
  %v294 = vld [vmem:[%s1 + $0x8c0] sm:$0xff]
  %v295 = vld [vmem:[%s1 + $0x8c8] sm:$0xff]
  %v296 = vld [vmem:[%s1 + $0x8d0] sm:$0xff]
  %v297 = vld [vmem:[%s1 + $0x8d8] sm:$0xff]
  %v298 = vld [vmem:[%s1 + $0x8e0] sm:$0xff]
  %v299 = vld [vmem:[%s1 + $0x8e8] sm:$0xff]
  %v300 = vld [vmem:[%s1 + $0x8f0] sm:$0xff]
  %v301 = vld [vmem:[%s1 + $0x8f8] sm:$0xff]
  %v302 = vld [vmem:[%s2] sm:$0xf]
  %v303 = vld [vmem:[%s0] sm:$0xff]
  %v304 = vld [vmem:[%s0 + $0x8] sm:$0xff]
  %v305 = vld [vmem:[%s0 + $0x10] sm:$0xff]
  %v306 = vld [vmem:[%s0 + $0x18] sm:$0xff]
  %v307 = vld [vmem:[%s0 + $0x20] sm:$0xff]
  %v308 = vld [vmem:[%s0 + $0x28] sm:$0xff]
  %v309 = vld [vmem:[%s0 + $0x30] sm:$0xff]
  %v310 = vld [vmem:[%s0 + $0x38] sm:$0xff]
  %v311 = vld [vmem:[%s0 + $0x40] sm:$0xff]
  %v312 = vld [vmem:[%s0 + $0x48] sm:$0xff]
  %v313 = vld [vmem:[%s0 + $0x50] sm:$0xff]
  %v314 = vld [vmem:[%s0 + $0x58] sm:$0xff]
  %v315 = vld [vmem:[%s0 + $0x60] sm:$0xff]
  %v316 = vld [vmem:[%s0 + $0x68] sm:$0xff]
  %v317 = vld [vmem:[%s0 + $0x70] sm:$0xff]
  %v318 = vld [vmem:[%s0 + $0x78] sm:$0xff]
  %v319 = vld [vmem:[%s0 + $0x80] sm:$0xff]
  %v320 = vld [vmem:[%s0 + $0x88] sm:$0xff]
  %v321 = vld [vmem:[%s0 + $0x90] sm:$0xff]
  %v322 = vld [vmem:[%s0 + $0x98] sm:$0xff]
  %v324 = vperm.slane %v302, 0
  %v325 = vperm.slane %v302, 1
  %v326 = vperm.slane %v302, 2
  %v327 = vperm.slane %v302, 3
  %vm332 = vcmask 523264
  %v334 = vsel %vm332, %v307, 0
  %v337 = vsel %vm332, %v312, 0
  %v340 = vsel %vm332, %v317, 0
  %v343 = vsel %vm332, %v322, 0
  %345 = vmatpush.msra.mxu0 %v74
  %346 = vmatpush.msra.mxu0 %v70
  %347 = vmatpush.msra.mxu0 %v66
  %348 = vmatpush.msra.mxu0 %v62
  %349 = vmatpush.msra.mxu0 %v58
  %350 = vmatpush.msra.mxu0 %v54
  %351 = vmatpush.msra.mxu0 %v50
  %352 = vmatpush.msra.mxu0 %v46
  %353 = vmatpush.msra.mxu0 %v42
  %354 = vmatpush.msra.mxu0 %v38
  %355 = vmatpush.msra.mxu0 %v34
  %356 = vmatpush.msra.mxu0 %v30
  %357 = vmatpush.msra.mxu0 %v26
  %358 = vmatpush.msra.mxu0 %v22
  %359 = vmatpush.msra.mxu0 %v18
  %360 = vmatpush.msra.mxu0 %v14
  %361 = vmatmul.f32.gmra.mxu0 %v303
  %v362 = vpop.f32.mrf.mxu0
  %v363 = vadd.f32 %v324, %v362
  %364 = vmatmul.f32.gmra.mxu0 %v308
  %v365 = vpop.f32.mrf.mxu0
  %v366 = vadd.f32 %v324, %v365
  %367 = vmatmul.f32.gmra.mxu0 %v313
  %v368 = vpop.f32.mrf.mxu0
  %v369 = vadd.f32 %v324, %v368
  %370 = vmatmul.f32.gmra.mxu0 %v318
  %v371 = vpop.f32.mrf.mxu0
  %v372 = vadd.f32 %v324, %v371
  %373 = vdwg.mxu0
  %374 = vmatpush.msra.mxu0 %v138
  %375 = vmatpush.msra.mxu0 %v134
  %376 = vmatpush.msra.mxu0 %v130
  %377 = vmatpush.msra.mxu0 %v126
  %378 = vmatpush.msra.mxu0 %v122
  %379 = vmatpush.msra.mxu0 %v118
  %380 = vmatpush.msra.mxu0 %v114
  %381 = vmatpush.msra.mxu0 %v110
  %382 = vmatpush.msra.mxu0 %v106
  %383 = vmatpush.msra.mxu0 %v102
  %384 = vmatpush.msra.mxu0 %v98
  %385 = vmatpush.msra.mxu0 %v94
  %386 = vmatpush.msra.mxu0 %v90
  %387 = vmatpush.msra.mxu0 %v86
  %388 = vmatpush.msra.mxu0 %v82
  %389 = vmatpush.msra.mxu0 %v78
  %390 = vmatmul.f32.gmra.mxu0 %v304
  %v391 = vpop.f32.mrf.mxu0
  %v392 = vadd.f32 %v363, %v391
  %393 = vmatmul.f32.gmra.mxu0 %v309
  %v394 = vpop.f32.mrf.mxu0
  %v395 = vadd.f32 %v366, %v394
  %396 = vmatmul.f32.gmra.mxu0 %v314
  %v397 = vpop.f32.mrf.mxu0
  %v398 = vadd.f32 %v369, %v397
  %399 = vmatmul.f32.gmra.mxu0 %v319
  %v400 = vpop.f32.mrf.mxu0
  %v401 = vadd.f32 %v372, %v400
  %402 = vdwg.mxu0
  %403 = vmatpush.msra.mxu0 %v202
  %404 = vmatpush.msra.mxu0 %v198
  %405 = vmatpush.msra.mxu0 %v194
  %406 = vmatpush.msra.mxu0 %v190
  %407 = vmatpush.msra.mxu0 %v186
  %408 = vmatpush.msra.mxu0 %v182
  %409 = vmatpush.msra.mxu0 %v178
  %410 = vmatpush.msra.mxu0 %v174
  %411 = vmatpush.msra.mxu0 %v170
  %412 = vmatpush.msra.mxu0 %v166
  %413 = vmatpush.msra.mxu0 %v162
  %414 = vmatpush.msra.mxu0 %v158
  %415 = vmatpush.msra.mxu0 %v154
  %416 = vmatpush.msra.mxu0 %v150
  %417 = vmatpush.msra.mxu0 %v146
  %418 = vmatpush.msra.mxu0 %v142
  %419 = vmatmul.f32.gmra.mxu0 %v305
  %v420 = vpop.f32.mrf.mxu0
  %v421 = vadd.f32 %v392, %v420
  %422 = vmatmul.f32.gmra.mxu0 %v310
  %v423 = vpop.f32.mrf.mxu0
  %v424 = vadd.f32 %v395, %v423
  %425 = vmatmul.f32.gmra.mxu0 %v315
  %v426 = vpop.f32.mrf.mxu0
  %v427 = vadd.f32 %v398, %v426
  %428 = vmatmul.f32.gmra.mxu0 %v320
  %v429 = vpop.f32.mrf.mxu0
  %v430 = vadd.f32 %v401, %v429
  %431 = vdwg.mxu0
  %432 = vmatpush.msra.mxu0 %v266
  %433 = vmatpush.msra.mxu0 %v262
  %434 = vmatpush.msra.mxu0 %v258
  %435 = vmatpush.msra.mxu0 %v254
  %436 = vmatpush.msra.mxu0 %v250
  %437 = vmatpush.msra.mxu0 %v246
  %438 = vmatpush.msra.mxu0 %v242
  %439 = vmatpush.msra.mxu0 %v238
  %440 = vmatpush.msra.mxu0 %v234
  %441 = vmatpush.msra.mxu0 %v230
  %442 = vmatpush.msra.mxu0 %v226
  %443 = vmatpush.msra.mxu0 %v222
  %444 = vmatpush.msra.mxu0 %v218
  %445 = vmatpush.msra.mxu0 %v214
  %446 = vmatpush.msra.mxu0 %v210
  %447 = vmatpush.msra.mxu0 %v206
  %448 = vmatmul.f32.gmra.mxu0 %v306
  %v449 = vpop.f32.mrf.mxu0
  %v450 = vadd.f32 %v421, %v449
  %451 = vmatmul.f32.gmra.mxu0 %v311
  %v452 = vpop.f32.mrf.mxu0
  %v453 = vadd.f32 %v424, %v452
  %454 = vmatmul.f32.gmra.mxu0 %v316
  %v455 = vpop.f32.mrf.mxu0
  %v456 = vadd.f32 %v427, %v455
  %457 = vmatmul.f32.gmra.mxu0 %v321
  %v458 = vpop.f32.mrf.mxu0
  %v459 = vadd.f32 %v430, %v458
  %460 = vdwg.mxu0
  %461 = vmatpush.msra.mxu0 0.0
  %462 = vmatpush.msra.mxu0 0.0
  %463 = vmatpush.msra.mxu0 0.0
  %464 = vmatpush.msra.mxu0 0.0
  %465 = vmatpush.msra.mxu0 0.0
  %466 = vmatpush.msra.mxu0 0.0
  %467 = vmatpush.msra.mxu0 0.0
  %468 = vmatpush.msra.mxu0 0.0
  %469 = vmatpush.msra.mxu0 %v298
  %470 = vmatpush.msra.mxu0 %v294
  %471 = vmatpush.msra.mxu0 %v290
  %472 = vmatpush.msra.mxu0 %v286
  %473 = vmatpush.msra.mxu0 %v282
  %474 = vmatpush.msra.mxu0 %v278
  %475 = vmatpush.msra.mxu0 %v274
  %476 = vmatpush.msra.mxu0 %v270
  %477 = vmatmul.f32.gmra.mxu0 %v334
  %v478 = vpop.f32.mrf.mxu0
  %v479 = vadd.f32 %v450, %v478
  %480 = vmatmul.f32.gmra.mxu0 %v337
  %v481 = vpop.f32.mrf.mxu0
  %v482 = vadd.f32 %v453, %v481
  %483 = vmatmul.f32.gmra.mxu0 %v340
  %v484 = vpop.f32.mrf.mxu0
  %v485 = vadd.f32 %v456, %v484
  %486 = vmatmul.f32.gmra.mxu0 %v343
  %v487 = vpop.f32.mrf.mxu0
  %v488 = vadd.f32 %v459, %v487
  %489 = vdwg.mxu0
  %490 = vmatpush.msra.mxu0 %v75
  %491 = vmatpush.msra.mxu0 %v71
  %492 = vmatpush.msra.mxu0 %v67
  %493 = vmatpush.msra.mxu0 %v63
  %494 = vmatpush.msra.mxu0 %v59
  %495 = vmatpush.msra.mxu0 %v55
  %496 = vmatpush.msra.mxu0 %v51
  %497 = vmatpush.msra.mxu0 %v47
  %498 = vmatpush.msra.mxu0 %v43
  %499 = vmatpush.msra.mxu0 %v39
  %500 = vmatpush.msra.mxu0 %v35
  %501 = vmatpush.msra.mxu0 %v31
  %502 = vmatpush.msra.mxu0 %v27
  %503 = vmatpush.msra.mxu0 %v23
  %504 = vmatpush.msra.mxu0 %v19
  %505 = vmatpush.msra.mxu0 %v15
  %506 = vmatmul.f32.gmra.mxu0 %v303
  %v507 = vpop.f32.mrf.mxu0
  %v508 = vadd.f32 %v325, %v507
  %509 = vmatmul.f32.gmra.mxu0 %v308
  %v510 = vpop.f32.mrf.mxu0
  %v511 = vadd.f32 %v325, %v510
  %512 = vmatmul.f32.gmra.mxu0 %v313
  %v513 = vpop.f32.mrf.mxu0
  %v514 = vadd.f32 %v325, %v513
  %515 = vmatmul.f32.gmra.mxu0 %v318
  %v516 = vpop.f32.mrf.mxu0
  %v517 = vadd.f32 %v325, %v516
  %518 = vdwg.mxu0
  %519 = vmatpush.msra.mxu0 %v139
  %520 = vmatpush.msra.mxu0 %v135
  %521 = vmatpush.msra.mxu0 %v131
  %522 = vmatpush.msra.mxu0 %v127
  %523 = vmatpush.msra.mxu0 %v123
  %524 = vmatpush.msra.mxu0 %v119
  %525 = vmatpush.msra.mxu0 %v115
  %526 = vmatpush.msra.mxu0 %v111
  %527 = vmatpush.msra.mxu0 %v107
  %528 = vmatpush.msra.mxu0 %v103
  %529 = vmatpush.msra.mxu0 %v99
  %530 = vmatpush.msra.mxu0 %v95
  %531 = vmatpush.msra.mxu0 %v91
  %532 = vmatpush.msra.mxu0 %v87
  %533 = vmatpush.msra.mxu0 %v83
  %534 = vmatpush.msra.mxu0 %v79
  %535 = vmatmul.f32.gmra.mxu0 %v304
  %v536 = vpop.f32.mrf.mxu0
  %v537 = vadd.f32 %v508, %v536
  %538 = vmatmul.f32.gmra.mxu0 %v309
  %v539 = vpop.f32.mrf.mxu0
  %v540 = vadd.f32 %v511, %v539
  %541 = vmatmul.f32.gmra.mxu0 %v314
  %v542 = vpop.f32.mrf.mxu0
  %v543 = vadd.f32 %v514, %v542
  %544 = vmatmul.f32.gmra.mxu0 %v319
  %v545 = vpop.f32.mrf.mxu0
  %v546 = vadd.f32 %v517, %v545
  %547 = vdwg.mxu0
  %548 = vmatpush.msra.mxu0 %v203
  %549 = vmatpush.msra.mxu0 %v199
  %550 = vmatpush.msra.mxu0 %v195
  %551 = vmatpush.msra.mxu0 %v191
  %552 = vmatpush.msra.mxu0 %v187
  %553 = vmatpush.msra.mxu0 %v183
  %554 = vmatpush.msra.mxu0 %v179
  %555 = vmatpush.msra.mxu0 %v175
  %556 = vmatpush.msra.mxu0 %v171
  %557 = vmatpush.msra.mxu0 %v167
  %558 = vmatpush.msra.mxu0 %v163
  %559 = vmatpush.msra.mxu0 %v159
  %560 = vmatpush.msra.mxu0 %v155
  %561 = vmatpush.msra.mxu0 %v151
  %562 = vmatpush.msra.mxu0 %v147
  %563 = vmatpush.msra.mxu0 %v143
  %564 = vmatmul.f32.gmra.mxu0 %v305
  %v565 = vpop.f32.mrf.mxu0
  %v566 = vadd.f32 %v537, %v565
  %567 = vmatmul.f32.gmra.mxu0 %v310
  %v568 = vpop.f32.mrf.mxu0
  %v569 = vadd.f32 %v540, %v568
  %570 = vmatmul.f32.gmra.mxu0 %v315
  %v571 = vpop.f32.mrf.mxu0
  %v572 = vadd.f32 %v543, %v571
  %573 = vmatmul.f32.gmra.mxu0 %v320
  %v574 = vpop.f32.mrf.mxu0
  %v575 = vadd.f32 %v546, %v574
  %576 = vdwg.mxu0
  %577 = vmatpush.msra.mxu0 %v267
  %578 = vmatpush.msra.mxu0 %v263
  %579 = vmatpush.msra.mxu0 %v259
  %580 = vmatpush.msra.mxu0 %v255
  %581 = vmatpush.msra.mxu0 %v251
  %582 = vmatpush.msra.mxu0 %v247
  %583 = vmatpush.msra.mxu0 %v243
  %584 = vmatpush.msra.mxu0 %v239
  %585 = vmatpush.msra.mxu0 %v235
  %586 = vmatpush.msra.mxu0 %v231
  %587 = vmatpush.msra.mxu0 %v227
  %588 = vmatpush.msra.mxu0 %v223
  %589 = vmatpush.msra.mxu0 %v219
  %590 = vmatpush.msra.mxu0 %v215
  %591 = vmatpush.msra.mxu0 %v211
  %592 = vmatpush.msra.mxu0 %v207
  %593 = vmatmul.f32.gmra.mxu0 %v306
  %v594 = vpop.f32.mrf.mxu0
  %v595 = vadd.f32 %v566, %v594
  %596 = vmatmul.f32.gmra.mxu0 %v311
  %v597 = vpop.f32.mrf.mxu0
  %v598 = vadd.f32 %v569, %v597
  %599 = vmatmul.f32.gmra.mxu0 %v316
  %v600 = vpop.f32.mrf.mxu0
  %v601 = vadd.f32 %v572, %v600
  %602 = vmatmul.f32.gmra.mxu0 %v321
  %v603 = vpop.f32.mrf.mxu0
  %v604 = vadd.f32 %v575, %v603
  %605 = vdwg.mxu0
  %606 = vmatpush.msra.mxu0 0.0
  %607 = vmatpush.msra.mxu0 0.0
  %608 = vmatpush.msra.mxu0 0.0
  %609 = vmatpush.msra.mxu0 0.0
  %610 = vmatpush.msra.mxu0 0.0
  %611 = vmatpush.msra.mxu0 0.0
  %612 = vmatpush.msra.mxu0 0.0
  %613 = vmatpush.msra.mxu0 0.0
  %614 = vmatpush.msra.mxu0 %v299
  %615 = vmatpush.msra.mxu0 %v295
  %616 = vmatpush.msra.mxu0 %v291
  %617 = vmatpush.msra.mxu0 %v287
  %618 = vmatpush.msra.mxu0 %v283
  %619 = vmatpush.msra.mxu0 %v279
  %620 = vmatpush.msra.mxu0 %v275
  %621 = vmatpush.msra.mxu0 %v271
  %622 = vmatmul.f32.gmra.mxu0 %v334
  %v623 = vpop.f32.mrf.mxu0
  %v624 = vadd.f32 %v595, %v623
  %625 = vmatmul.f32.gmra.mxu0 %v337
  %v626 = vpop.f32.mrf.mxu0
  %v627 = vadd.f32 %v598, %v626
  %628 = vmatmul.f32.gmra.mxu0 %v340
  %v629 = vpop.f32.mrf.mxu0
  %v630 = vadd.f32 %v601, %v629
  %631 = vmatmul.f32.gmra.mxu0 %v343
  %v632 = vpop.f32.mrf.mxu0
  %v633 = vadd.f32 %v604, %v632
  %634 = vdwg.mxu0
  %635 = vmatpush.msra.mxu0 %v76
  %636 = vmatpush.msra.mxu0 %v72
  %637 = vmatpush.msra.mxu0 %v68
  %638 = vmatpush.msra.mxu0 %v64
  %639 = vmatpush.msra.mxu0 %v60
  %640 = vmatpush.msra.mxu0 %v56
  %641 = vmatpush.msra.mxu0 %v52
  %642 = vmatpush.msra.mxu0 %v48
  %643 = vmatpush.msra.mxu0 %v44
  %644 = vmatpush.msra.mxu0 %v40
  %645 = vmatpush.msra.mxu0 %v36
  %646 = vmatpush.msra.mxu0 %v32
  %647 = vmatpush.msra.mxu0 %v28
  %648 = vmatpush.msra.mxu0 %v24
  %649 = vmatpush.msra.mxu0 %v20
  %650 = vmatpush.msra.mxu0 %v16
  %651 = vmatmul.f32.gmra.mxu0 %v303
  %v652 = vpop.f32.mrf.mxu0
  %v653 = vadd.f32 %v326, %v652
  %654 = vmatmul.f32.gmra.mxu0 %v308
  %v655 = vpop.f32.mrf.mxu0
  %v656 = vadd.f32 %v326, %v655
  %657 = vmatmul.f32.gmra.mxu0 %v313
  %v658 = vpop.f32.mrf.mxu0
  %v659 = vadd.f32 %v326, %v658
  %660 = vmatmul.f32.gmra.mxu0 %v318
  %v661 = vpop.f32.mrf.mxu0
  %v662 = vadd.f32 %v326, %v661
  %663 = vdwg.mxu0
  %664 = vmatpush.msra.mxu0 %v140
  %665 = vmatpush.msra.mxu0 %v136
  %666 = vmatpush.msra.mxu0 %v132
  %667 = vmatpush.msra.mxu0 %v128
  %668 = vmatpush.msra.mxu0 %v124
  %669 = vmatpush.msra.mxu0 %v120
  %670 = vmatpush.msra.mxu0 %v116
  %671 = vmatpush.msra.mxu0 %v112
  %672 = vmatpush.msra.mxu0 %v108
  %673 = vmatpush.msra.mxu0 %v104
  %674 = vmatpush.msra.mxu0 %v100
  %675 = vmatpush.msra.mxu0 %v96
  %676 = vmatpush.msra.mxu0 %v92
  %677 = vmatpush.msra.mxu0 %v88
  %678 = vmatpush.msra.mxu0 %v84
  %679 = vmatpush.msra.mxu0 %v80
  %680 = vmatmul.f32.gmra.mxu0 %v304
  %v681 = vpop.f32.mrf.mxu0
  %v682 = vadd.f32 %v653, %v681
  %683 = vmatmul.f32.gmra.mxu0 %v309
  %v684 = vpop.f32.mrf.mxu0
  %v685 = vadd.f32 %v656, %v684
  %686 = vmatmul.f32.gmra.mxu0 %v314
  %v687 = vpop.f32.mrf.mxu0
  %v688 = vadd.f32 %v659, %v687
  %689 = vmatmul.f32.gmra.mxu0 %v319
  %v690 = vpop.f32.mrf.mxu0
  %v691 = vadd.f32 %v662, %v690
  %692 = vdwg.mxu0
  %693 = vmatpush.msra.mxu0 %v204
  %694 = vmatpush.msra.mxu0 %v200
  %695 = vmatpush.msra.mxu0 %v196
  %696 = vmatpush.msra.mxu0 %v192
  %697 = vmatpush.msra.mxu0 %v188
  %698 = vmatpush.msra.mxu0 %v184
  %699 = vmatpush.msra.mxu0 %v180
  %700 = vmatpush.msra.mxu0 %v176
  %701 = vmatpush.msra.mxu0 %v172
  %702 = vmatpush.msra.mxu0 %v168
  %703 = vmatpush.msra.mxu0 %v164
  %704 = vmatpush.msra.mxu0 %v160
  %705 = vmatpush.msra.mxu0 %v156
  %706 = vmatpush.msra.mxu0 %v152
  %707 = vmatpush.msra.mxu0 %v148
  %708 = vmatpush.msra.mxu0 %v144
  %709 = vmatmul.f32.gmra.mxu0 %v305
  %v710 = vpop.f32.mrf.mxu0
  %v711 = vadd.f32 %v682, %v710
  %712 = vmatmul.f32.gmra.mxu0 %v310
  %v713 = vpop.f32.mrf.mxu0
  %v714 = vadd.f32 %v685, %v713
  %715 = vmatmul.f32.gmra.mxu0 %v315
  %v716 = vpop.f32.mrf.mxu0
  %v717 = vadd.f32 %v688, %v716
  %718 = vmatmul.f32.gmra.mxu0 %v320
  %v719 = vpop.f32.mrf.mxu0
  %v720 = vadd.f32 %v691, %v719
  %721 = vdwg.mxu0
  %722 = vmatpush.msra.mxu0 %v268
  %723 = vmatpush.msra.mxu0 %v264
  %724 = vmatpush.msra.mxu0 %v260
  %725 = vmatpush.msra.mxu0 %v256
  %726 = vmatpush.msra.mxu0 %v252
  %727 = vmatpush.msra.mxu0 %v248
  %728 = vmatpush.msra.mxu0 %v244
  %729 = vmatpush.msra.mxu0 %v240
  %730 = vmatpush.msra.mxu0 %v236
  %731 = vmatpush.msra.mxu0 %v232
  %732 = vmatpush.msra.mxu0 %v228
  %733 = vmatpush.msra.mxu0 %v224
  %734 = vmatpush.msra.mxu0 %v220
  %735 = vmatpush.msra.mxu0 %v216
  %736 = vmatpush.msra.mxu0 %v212
  %737 = vmatpush.msra.mxu0 %v208
  %738 = vmatmul.f32.gmra.mxu0 %v306
  %v739 = vpop.f32.mrf.mxu0
  %v740 = vadd.f32 %v711, %v739
  %741 = vmatmul.f32.gmra.mxu0 %v311
  %v742 = vpop.f32.mrf.mxu0
  %v743 = vadd.f32 %v714, %v742
  %744 = vmatmul.f32.gmra.mxu0 %v316
  %v745 = vpop.f32.mrf.mxu0
  %v746 = vadd.f32 %v717, %v745
  %747 = vmatmul.f32.gmra.mxu0 %v321
  %v748 = vpop.f32.mrf.mxu0
  %v749 = vadd.f32 %v720, %v748
  %750 = vdwg.mxu0
  %751 = vmatpush.msra.mxu0 0.0
  %752 = vmatpush.msra.mxu0 0.0
  %753 = vmatpush.msra.mxu0 0.0
  %754 = vmatpush.msra.mxu0 0.0
  %755 = vmatpush.msra.mxu0 0.0
  %756 = vmatpush.msra.mxu0 0.0
  %757 = vmatpush.msra.mxu0 0.0
  %758 = vmatpush.msra.mxu0 0.0
  %759 = vmatpush.msra.mxu0 %v300
  %760 = vmatpush.msra.mxu0 %v296
  %761 = vmatpush.msra.mxu0 %v292
  %762 = vmatpush.msra.mxu0 %v288
  %763 = vmatpush.msra.mxu0 %v284
  %764 = vmatpush.msra.mxu0 %v280
  %765 = vmatpush.msra.mxu0 %v276
  %766 = vmatpush.msra.mxu0 %v272
  %767 = vmatmul.f32.gmra.mxu0 %v334
  %v768 = vpop.f32.mrf.mxu0
  %v769 = vadd.f32 %v740, %v768
  %770 = vmatmul.f32.gmra.mxu0 %v337
  %v771 = vpop.f32.mrf.mxu0
  %v772 = vadd.f32 %v743, %v771
  %773 = vmatmul.f32.gmra.mxu0 %v340
  %v774 = vpop.f32.mrf.mxu0
  %v775 = vadd.f32 %v746, %v774
  %776 = vmatmul.f32.gmra.mxu0 %v343
  %v777 = vpop.f32.mrf.mxu0
  %v778 = vadd.f32 %v749, %v777
  %779 = vdwg.mxu0
  %780 = vmatpush.msra.mxu0 %v77
  %781 = vmatpush.msra.mxu0 %v73
  %782 = vmatpush.msra.mxu0 %v69
  %783 = vmatpush.msra.mxu0 %v65
  %784 = vmatpush.msra.mxu0 %v61
  %785 = vmatpush.msra.mxu0 %v57
  %786 = vmatpush.msra.mxu0 %v53
  %787 = vmatpush.msra.mxu0 %v49
  %788 = vmatpush.msra.mxu0 %v45
  %789 = vmatpush.msra.mxu0 %v41
  %790 = vmatpush.msra.mxu0 %v37
  %791 = vmatpush.msra.mxu0 %v33
  %792 = vmatpush.msra.mxu0 %v29
  %793 = vmatpush.msra.mxu0 %v25
  %794 = vmatpush.msra.mxu0 %v21
  %795 = vmatpush.msra.mxu0 %v17
  %796 = vmatmul.f32.gmra.mxu0 %v303
  %v797 = vpop.f32.mrf.mxu0
  %v798 = vadd.f32 %v327, %v797
  %799 = vmatmul.f32.gmra.mxu0 %v308
  %v800 = vpop.f32.mrf.mxu0
  %v801 = vadd.f32 %v327, %v800
  %802 = vmatmul.f32.gmra.mxu0 %v313
  %v803 = vpop.f32.mrf.mxu0
  %v804 = vadd.f32 %v327, %v803
  %805 = vmatmul.f32.gmra.mxu0 %v318
  %v806 = vpop.f32.mrf.mxu0
  %v807 = vadd.f32 %v327, %v806
  %808 = vdwg.mxu0
  %809 = vmatpush.msra.mxu0 %v141
  %810 = vmatpush.msra.mxu0 %v137
  %811 = vmatpush.msra.mxu0 %v133
  %812 = vmatpush.msra.mxu0 %v129
  %813 = vmatpush.msra.mxu0 %v125
  %814 = vmatpush.msra.mxu0 %v121
  %815 = vmatpush.msra.mxu0 %v117
  %816 = vmatpush.msra.mxu0 %v113
  %817 = vmatpush.msra.mxu0 %v109
  %818 = vmatpush.msra.mxu0 %v105
  %819 = vmatpush.msra.mxu0 %v101
  %820 = vmatpush.msra.mxu0 %v97
  %821 = vmatpush.msra.mxu0 %v93
  %822 = vmatpush.msra.mxu0 %v89
  %823 = vmatpush.msra.mxu0 %v85
  %824 = vmatpush.msra.mxu0 %v81
  %825 = vmatmul.f32.gmra.mxu0 %v304
  %v826 = vpop.f32.mrf.mxu0
  %v827 = vadd.f32 %v798, %v826
  %828 = vmatmul.f32.gmra.mxu0 %v309
  %v829 = vpop.f32.mrf.mxu0
  %v830 = vadd.f32 %v801, %v829
  %831 = vmatmul.f32.gmra.mxu0 %v314
  %v832 = vpop.f32.mrf.mxu0
  %v833 = vadd.f32 %v804, %v832
  %834 = vmatmul.f32.gmra.mxu0 %v319
  %v835 = vpop.f32.mrf.mxu0
  %v836 = vadd.f32 %v807, %v835
  %837 = vdwg.mxu0
  %838 = vmatpush.msra.mxu0 %v205
  %839 = vmatpush.msra.mxu0 %v201
  %840 = vmatpush.msra.mxu0 %v197
  %841 = vmatpush.msra.mxu0 %v193
  %842 = vmatpush.msra.mxu0 %v189
  %843 = vmatpush.msra.mxu0 %v185
  %844 = vmatpush.msra.mxu0 %v181
  %845 = vmatpush.msra.mxu0 %v177
  %846 = vmatpush.msra.mxu0 %v173
  %847 = vmatpush.msra.mxu0 %v169
  %848 = vmatpush.msra.mxu0 %v165
  %849 = vmatpush.msra.mxu0 %v161
  %850 = vmatpush.msra.mxu0 %v157
  %851 = vmatpush.msra.mxu0 %v153
  %852 = vmatpush.msra.mxu0 %v149
  %853 = vmatpush.msra.mxu0 %v145
  %854 = vmatmul.f32.gmra.mxu0 %v305
  %v855 = vpop.f32.mrf.mxu0
  %v856 = vadd.f32 %v827, %v855
  %857 = vmatmul.f32.gmra.mxu0 %v310
  %v858 = vpop.f32.mrf.mxu0
  %v859 = vadd.f32 %v830, %v858
  %860 = vmatmul.f32.gmra.mxu0 %v315
  %v861 = vpop.f32.mrf.mxu0
  %v862 = vadd.f32 %v833, %v861
  %863 = vmatmul.f32.gmra.mxu0 %v320
  %v864 = vpop.f32.mrf.mxu0
  %v865 = vadd.f32 %v836, %v864
  %866 = vdwg.mxu0
  %867 = vmatpush.msra.mxu0 %v269
  %868 = vmatpush.msra.mxu0 %v265
  %869 = vmatpush.msra.mxu0 %v261
  %870 = vmatpush.msra.mxu0 %v257
  %871 = vmatpush.msra.mxu0 %v253
  %872 = vmatpush.msra.mxu0 %v249
  %873 = vmatpush.msra.mxu0 %v245
  %874 = vmatpush.msra.mxu0 %v241
  %875 = vmatpush.msra.mxu0 %v237
  %876 = vmatpush.msra.mxu0 %v233
  %877 = vmatpush.msra.mxu0 %v229
  %878 = vmatpush.msra.mxu0 %v225
  %879 = vmatpush.msra.mxu0 %v221
  %880 = vmatpush.msra.mxu0 %v217
  %881 = vmatpush.msra.mxu0 %v213
  %882 = vmatpush.msra.mxu0 %v209
  %883 = vmatmul.f32.gmra.mxu0 %v306
  %v884 = vpop.f32.mrf.mxu0
  %v885 = vadd.f32 %v856, %v884
  %886 = vmatmul.f32.gmra.mxu0 %v311
  %v887 = vpop.f32.mrf.mxu0
  %v888 = vadd.f32 %v859, %v887
  %889 = vmatmul.f32.gmra.mxu0 %v316
  %v890 = vpop.f32.mrf.mxu0
  %v891 = vadd.f32 %v862, %v890
  %892 = vmatmul.f32.gmra.mxu0 %v321
  %v893 = vpop.f32.mrf.mxu0
  %v894 = vadd.f32 %v865, %v893
  %895 = vdwg.mxu0
  %896 = vmatpush.msra.mxu0 0.0
  %897 = vmatpush.msra.mxu0 0.0
  %898 = vmatpush.msra.mxu0 0.0
  %899 = vmatpush.msra.mxu0 0.0
  %900 = vmatpush.msra.mxu0 0.0
  %901 = vmatpush.msra.mxu0 0.0
  %902 = vmatpush.msra.mxu0 0.0
  %903 = vmatpush.msra.mxu0 0.0
  %904 = vmatpush.msra.mxu0 %v301
  %905 = vmatpush.msra.mxu0 %v297
  %906 = vmatpush.msra.mxu0 %v293
  %907 = vmatpush.msra.mxu0 %v289
  %908 = vmatpush.msra.mxu0 %v285
  %909 = vmatpush.msra.mxu0 %v281
  %910 = vmatpush.msra.mxu0 %v277
  %911 = vmatpush.msra.mxu0 %v273
  %912 = vmatmul.f32.gmra.mxu0 %v334
  %v913 = vpop.f32.mrf.mxu0
  %v914 = vadd.f32 %v885, %v913
  %915 = vmatmul.f32.gmra.mxu0 %v337
  %v916 = vpop.f32.mrf.mxu0
  %v917 = vadd.f32 %v888, %v916
  %918 = vmatmul.f32.gmra.mxu0 %v340
  %v919 = vpop.f32.mrf.mxu0
  %v920 = vadd.f32 %v891, %v919
  %921 = vmatmul.f32.gmra.mxu0 %v343
  %v922 = vpop.f32.mrf.mxu0
  %v923 = vadd.f32 %v894, %v922
  %924 = vdwg.mxu0
  %v925 = vmax.f32 %v479, 0.0
  %v926 = vmax.f32 %v624, 0.0
  %v927 = vmax.f32 %v769, 0.0
  %v928 = vmax.f32 %v914, 0.0
  %v929 = vmax.f32 %v482, 0.0
  %v930 = vmax.f32 %v627, 0.0
  %v931 = vmax.f32 %v772, 0.0
  %v932 = vmax.f32 %v917, 0.0
  %v933 = vmax.f32 %v485, 0.0
  %v934 = vmax.f32 %v630, 0.0
  %v935 = vmax.f32 %v775, 0.0
  %v936 = vmax.f32 %v920, 0.0
  %v937 = vmax.f32 %v488, 0.0
  %v938 = vmax.f32 %v633, 0.0
  %v939 = vmax.f32 %v778, 0.0
  %v940 = vmax.f32 %v923, 0.0
  %s941 = scalar_lea.vmem %s0, 160
  %v942 = vld [vmem:[%s941] sm:$0xff]
  %v943 = vld [vmem:[%s941 + $0x8] sm:$0xff]
  %v944 = vld [vmem:[%s941 + $0x10] sm:$0xff]
  %v945 = vld [vmem:[%s941 + $0x18] sm:$0xff]
  %v946 = vld [vmem:[%s941 + $0x20] sm:$0xff]
  %v947 = vld [vmem:[%s941 + $0x28] sm:$0xff]
  %v948 = vld [vmem:[%s941 + $0x30] sm:$0xff]
  %v949 = vld [vmem:[%s941 + $0x38] sm:$0xff]
  %v950 = vld [vmem:[%s941 + $0x40] sm:$0xff]
  %v951 = vld [vmem:[%s941 + $0x48] sm:$0xff]
  %v952 = vld [vmem:[%s941 + $0x50] sm:$0xff]
  %v953 = vld [vmem:[%s941 + $0x58] sm:$0xff]
  %v954 = vld [vmem:[%s941 + $0x60] sm:$0xff]
  %v955 = vld [vmem:[%s941 + $0x68] sm:$0xff]
  %v956 = vld [vmem:[%s941 + $0x70] sm:$0xff]
  %v957 = vld [vmem:[%s941 + $0x78] sm:$0xff]
  %v958 = vld [vmem:[%s941 + $0x80] sm:$0xff]
  %v959 = vld [vmem:[%s941 + $0x88] sm:$0xff]
  %v960 = vld [vmem:[%s941 + $0x90] sm:$0xff]
  %v961 = vld [vmem:[%s941 + $0x98] sm:$0xff]
  %v963 = vsel %vm332, %v946, 0
  %v966 = vsel %vm332, %v951, 0
  %v969 = vsel %vm332, %v956, 0
  %v972 = vsel %vm332, %v961, 0
  %974 = vmatpush.msra.mxu0 %v74
  %975 = vmatpush.msra.mxu0 %v70
  %976 = vmatpush.msra.mxu0 %v66
  %977 = vmatpush.msra.mxu0 %v62
  %978 = vmatpush.msra.mxu0 %v58
  %979 = vmatpush.msra.mxu0 %v54
  %980 = vmatpush.msra.mxu0 %v50
  %981 = vmatpush.msra.mxu0 %v46
  %982 = vmatpush.msra.mxu0 %v42
  %983 = vmatpush.msra.mxu0 %v38
  %984 = vmatpush.msra.mxu0 %v34
  %985 = vmatpush.msra.mxu0 %v30
  %986 = vmatpush.msra.mxu0 %v26
  %987 = vmatpush.msra.mxu0 %v22
  %988 = vmatpush.msra.mxu0 %v18
  %989 = vmatpush.msra.mxu0 %v14
  %990 = vmatmul.f32.gmra.mxu0 %v942
  %v991 = vpop.f32.mrf.mxu0
  %v992 = vadd.f32 %v324, %v991
  %993 = vmatmul.f32.gmra.mxu0 %v947
  %v994 = vpop.f32.mrf.mxu0
  %v995 = vadd.f32 %v324, %v994
  %996 = vmatmul.f32.gmra.mxu0 %v952
  %v997 = vpop.f32.mrf.mxu0
  %v998 = vadd.f32 %v324, %v997
  %999 = vmatmul.f32.gmra.mxu0 %v957
  %v1000 = vpop.f32.mrf.mxu0
  %v1001 = vadd.f32 %v324, %v1000
  %1002 = vdwg.mxu0
  %1003 = vmatpush.msra.mxu0 %v138
  %1004 = vmatpush.msra.mxu0 %v134
  %1005 = vmatpush.msra.mxu0 %v130
  %1006 = vmatpush.msra.mxu0 %v126
  %1007 = vmatpush.msra.mxu0 %v122
  %1008 = vmatpush.msra.mxu0 %v118
  %1009 = vmatpush.msra.mxu0 %v114
  %1010 = vmatpush.msra.mxu0 %v110
  %1011 = vmatpush.msra.mxu0 %v106
  %1012 = vmatpush.msra.mxu0 %v102
  %1013 = vmatpush.msra.mxu0 %v98
  %1014 = vmatpush.msra.mxu0 %v94
  %1015 = vmatpush.msra.mxu0 %v90
  %1016 = vmatpush.msra.mxu0 %v86
  %1017 = vmatpush.msra.mxu0 %v82
  %1018 = vmatpush.msra.mxu0 %v78
  %1019 = vmatmul.f32.gmra.mxu0 %v943
  %v1020 = vpop.f32.mrf.mxu0
  %v1021 = vadd.f32 %v992, %v1020
  %1022 = vmatmul.f32.gmra.mxu0 %v948
  %v1023 = vpop.f32.mrf.mxu0
  %v1024 = vadd.f32 %v995, %v1023
  %1025 = vmatmul.f32.gmra.mxu0 %v953
  %v1026 = vpop.f32.mrf.mxu0
  %v1027 = vadd.f32 %v998, %v1026
  %1028 = vmatmul.f32.gmra.mxu0 %v958
  %v1029 = vpop.f32.mrf.mxu0
  %v1030 = vadd.f32 %v1001, %v1029
  %1031 = vdwg.mxu0
  %1032 = vmatpush.msra.mxu0 %v202
  %1033 = vmatpush.msra.mxu0 %v198
  %1034 = vmatpush.msra.mxu0 %v194
  %1035 = vmatpush.msra.mxu0 %v190
  %1036 = vmatpush.msra.mxu0 %v186
  %1037 = vmatpush.msra.mxu0 %v182
  %1038 = vmatpush.msra.mxu0 %v178
  %1039 = vmatpush.msra.mxu0 %v174
  %1040 = vmatpush.msra.mxu0 %v170
  %1041 = vmatpush.msra.mxu0 %v166
  %1042 = vmatpush.msra.mxu0 %v162
  %1043 = vmatpush.msra.mxu0 %v158
  %1044 = vmatpush.msra.mxu0 %v154
  %1045 = vmatpush.msra.mxu0 %v150
  %1046 = vmatpush.msra.mxu0 %v146
  %1047 = vmatpush.msra.mxu0 %v142
  %1048 = vmatmul.f32.gmra.mxu0 %v944
  %v1049 = vpop.f32.mrf.mxu0
  %v1050 = vadd.f32 %v1021, %v1049
  %1051 = vmatmul.f32.gmra.mxu0 %v949
  %v1052 = vpop.f32.mrf.mxu0
  %v1053 = vadd.f32 %v1024, %v1052
  %1054 = vmatmul.f32.gmra.mxu0 %v954
  %v1055 = vpop.f32.mrf.mxu0
  %v1056 = vadd.f32 %v1027, %v1055
  %1057 = vmatmul.f32.gmra.mxu0 %v959
  %v1058 = vpop.f32.mrf.mxu0
  %v1059 = vadd.f32 %v1030, %v1058
  %1060 = vdwg.mxu0
  %1061 = vmatpush.msra.mxu0 %v266
  %1062 = vmatpush.msra.mxu0 %v262
  %1063 = vmatpush.msra.mxu0 %v258
  %1064 = vmatpush.msra.mxu0 %v254
  %1065 = vmatpush.msra.mxu0 %v250
  %1066 = vmatpush.msra.mxu0 %v246
  %1067 = vmatpush.msra.mxu0 %v242
  %1068 = vmatpush.msra.mxu0 %v238
  %1069 = vmatpush.msra.mxu0 %v234
  %1070 = vmatpush.msra.mxu0 %v230
  %1071 = vmatpush.msra.mxu0 %v226
  %1072 = vmatpush.msra.mxu0 %v222
  %1073 = vmatpush.msra.mxu0 %v218
  %1074 = vmatpush.msra.mxu0 %v214
  %1075 = vmatpush.msra.mxu0 %v210
  %1076 = vmatpush.msra.mxu0 %v206
  %1077 = vmatmul.f32.gmra.mxu0 %v945
  %v1078 = vpop.f32.mrf.mxu0
  %v1079 = vadd.f32 %v1050, %v1078
  %1080 = vmatmul.f32.gmra.mxu0 %v950
  %v1081 = vpop.f32.mrf.mxu0
  %v1082 = vadd.f32 %v1053, %v1081
  %1083 = vmatmul.f32.gmra.mxu0 %v955
  %v1084 = vpop.f32.mrf.mxu0
  %v1085 = vadd.f32 %v1056, %v1084
  %1086 = vmatmul.f32.gmra.mxu0 %v960
  %v1087 = vpop.f32.mrf.mxu0
  %v1088 = vadd.f32 %v1059, %v1087
  %1089 = vdwg.mxu0
  %1090 = vmatpush.msra.mxu0 0.0
  %1091 = vmatpush.msra.mxu0 0.0
  %1092 = vmatpush.msra.mxu0 0.0
  %1093 = vmatpush.msra.mxu0 0.0
  %1094 = vmatpush.msra.mxu0 0.0
  %1095 = vmatpush.msra.mxu0 0.0
  %1096 = vmatpush.msra.mxu0 0.0
  %1097 = vmatpush.msra.mxu0 0.0
  %1098 = vmatpush.msra.mxu0 %v298
  %1099 = vmatpush.msra.mxu0 %v294
  %1100 = vmatpush.msra.mxu0 %v290
  %1101 = vmatpush.msra.mxu0 %v286
  %1102 = vmatpush.msra.mxu0 %v282
  %1103 = vmatpush.msra.mxu0 %v278
  %1104 = vmatpush.msra.mxu0 %v274
  %1105 = vmatpush.msra.mxu0 %v270
  %1106 = vmatmul.f32.gmra.mxu0 %v963
  %v1107 = vpop.f32.mrf.mxu0
  %v1108 = vadd.f32 %v1079, %v1107
  %1109 = vmatmul.f32.gmra.mxu0 %v966
  %v1110 = vpop.f32.mrf.mxu0
  %v1111 = vadd.f32 %v1082, %v1110
  %1112 = vmatmul.f32.gmra.mxu0 %v969
  %v1113 = vpop.f32.mrf.mxu0
  %v1114 = vadd.f32 %v1085, %v1113
  %1115 = vmatmul.f32.gmra.mxu0 %v972
  %v1116 = vpop.f32.mrf.mxu0
  %v1117 = vadd.f32 %v1088, %v1116
  %1118 = vdwg.mxu0
  %1119 = vmatpush.msra.mxu0 %v75
  %1120 = vmatpush.msra.mxu0 %v71
  %1121 = vmatpush.msra.mxu0 %v67
  %1122 = vmatpush.msra.mxu0 %v63
  %1123 = vmatpush.msra.mxu0 %v59
  %1124 = vmatpush.msra.mxu0 %v55
  %1125 = vmatpush.msra.mxu0 %v51
  %1126 = vmatpush.msra.mxu0 %v47
  %1127 = vmatpush.msra.mxu0 %v43
  %1128 = vmatpush.msra.mxu0 %v39
  %1129 = vmatpush.msra.mxu0 %v35
  %1130 = vmatpush.msra.mxu0 %v31
  %1131 = vmatpush.msra.mxu0 %v27
  %1132 = vmatpush.msra.mxu0 %v23
  %1133 = vmatpush.msra.mxu0 %v19
  %1134 = vmatpush.msra.mxu0 %v15
  %1135 = vmatmul.f32.gmra.mxu0 %v942
  %v1136 = vpop.f32.mrf.mxu0
  %v1137 = vadd.f32 %v325, %v1136
  %1138 = vmatmul.f32.gmra.mxu0 %v947
  %v1139 = vpop.f32.mrf.mxu0
  %v1140 = vadd.f32 %v325, %v1139
  %1141 = vmatmul.f32.gmra.mxu0 %v952
  %v1142 = vpop.f32.mrf.mxu0
  %v1143 = vadd.f32 %v325, %v1142
  %1144 = vmatmul.f32.gmra.mxu0 %v957
  %v1145 = vpop.f32.mrf.mxu0
  %v1146 = vadd.f32 %v325, %v1145
  %1147 = vdwg.mxu0
  %1148 = vmatpush.msra.mxu0 %v139
  %1149 = vmatpush.msra.mxu0 %v135
  %1150 = vmatpush.msra.mxu0 %v131
  %1151 = vmatpush.msra.mxu0 %v127
  %1152 = vmatpush.msra.mxu0 %v123
  %1153 = vmatpush.msra.mxu0 %v119
  %1154 = vmatpush.msra.mxu0 %v115
  %1155 = vmatpush.msra.mxu0 %v111
  %1156 = vmatpush.msra.mxu0 %v107
  %1157 = vmatpush.msra.mxu0 %v103
  %1158 = vmatpush.msra.mxu0 %v99
  %1159 = vmatpush.msra.mxu0 %v95
  %1160 = vmatpush.msra.mxu0 %v91
  %1161 = vmatpush.msra.mxu0 %v87
  %1162 = vmatpush.msra.mxu0 %v83
  %1163 = vmatpush.msra.mxu0 %v79
  %1164 = vmatmul.f32.gmra.mxu0 %v943
  %v1165 = vpop.f32.mrf.mxu0
  %v1166 = vadd.f32 %v1137, %v1165
  %1167 = vmatmul.f32.gmra.mxu0 %v948
  %v1168 = vpop.f32.mrf.mxu0
  %v1169 = vadd.f32 %v1140, %v1168
  %1170 = vmatmul.f32.gmra.mxu0 %v953
  %v1171 = vpop.f32.mrf.mxu0
  %v1172 = vadd.f32 %v1143, %v1171
  %1173 = vmatmul.f32.gmra.mxu0 %v958
  %v1174 = vpop.f32.mrf.mxu0
  %v1175 = vadd.f32 %v1146, %v1174
  %1176 = vdwg.mxu0
  %1177 = vmatpush.msra.mxu0 %v203
  %1178 = vmatpush.msra.mxu0 %v199
  %1179 = vmatpush.msra.mxu0 %v195
  %1180 = vmatpush.msra.mxu0 %v191
  %1181 = vmatpush.msra.mxu0 %v187
  %1182 = vmatpush.msra.mxu0 %v183
  %1183 = vmatpush.msra.mxu0 %v179
  %1184 = vmatpush.msra.mxu0 %v175
  %1185 = vmatpush.msra.mxu0 %v171
  %1186 = vmatpush.msra.mxu0 %v167
  %1187 = vmatpush.msra.mxu0 %v163
  %1188 = vmatpush.msra.mxu0 %v159
  %1189 = vmatpush.msra.mxu0 %v155
  %1190 = vmatpush.msra.mxu0 %v151
  %1191 = vmatpush.msra.mxu0 %v147
  %1192 = vmatpush.msra.mxu0 %v143
  %1193 = vmatmul.f32.gmra.mxu0 %v944
  %v1194 = vpop.f32.mrf.mxu0
  %v1195 = vadd.f32 %v1166, %v1194
  %1196 = vmatmul.f32.gmra.mxu0 %v949
  %v1197 = vpop.f32.mrf.mxu0
  %v1198 = vadd.f32 %v1169, %v1197
  %1199 = vmatmul.f32.gmra.mxu0 %v954
  %v1200 = vpop.f32.mrf.mxu0
  %v1201 = vadd.f32 %v1172, %v1200
  %1202 = vmatmul.f32.gmra.mxu0 %v959
  %v1203 = vpop.f32.mrf.mxu0
  %v1204 = vadd.f32 %v1175, %v1203
  %1205 = vdwg.mxu0
  %1206 = vmatpush.msra.mxu0 %v267
  %1207 = vmatpush.msra.mxu0 %v263
  %1208 = vmatpush.msra.mxu0 %v259
  %1209 = vmatpush.msra.mxu0 %v255
  %1210 = vmatpush.msra.mxu0 %v251
  %1211 = vmatpush.msra.mxu0 %v247
  %1212 = vmatpush.msra.mxu0 %v243
  %1213 = vmatpush.msra.mxu0 %v239
  %1214 = vmatpush.msra.mxu0 %v235
  %1215 = vmatpush.msra.mxu0 %v231
  %1216 = vmatpush.msra.mxu0 %v227
  %1217 = vmatpush.msra.mxu0 %v223
  %1218 = vmatpush.msra.mxu0 %v219
  %1219 = vmatpush.msra.mxu0 %v215
  %1220 = vmatpush.msra.mxu0 %v211
  %1221 = vmatpush.msra.mxu0 %v207
  %1222 = vmatmul.f32.gmra.mxu0 %v945
  %v1223 = vpop.f32.mrf.mxu0
  %v1224 = vadd.f32 %v1195, %v1223
  %1225 = vmatmul.f32.gmra.mxu0 %v950
  %v1226 = vpop.f32.mrf.mxu0
  %v1227 = vadd.f32 %v1198, %v1226
  %1228 = vmatmul.f32.gmra.mxu0 %v955
  %v1229 = vpop.f32.mrf.mxu0
  %v1230 = vadd.f32 %v1201, %v1229
  %1231 = vmatmul.f32.gmra.mxu0 %v960
  %v1232 = vpop.f32.mrf.mxu0
  %v1233 = vadd.f32 %v1204, %v1232
  %1234 = vdwg.mxu0
  %1235 = vmatpush.msra.mxu0 0.0
  %1236 = vmatpush.msra.mxu0 0.0
  %1237 = vmatpush.msra.mxu0 0.0
  %1238 = vmatpush.msra.mxu0 0.0
  %1239 = vmatpush.msra.mxu0 0.0
  %1240 = vmatpush.msra.mxu0 0.0
  %1241 = vmatpush.msra.mxu0 0.0
  %1242 = vmatpush.msra.mxu0 0.0
  %1243 = vmatpush.msra.mxu0 %v299
  %1244 = vmatpush.msra.mxu0 %v295
  %1245 = vmatpush.msra.mxu0 %v291
  %1246 = vmatpush.msra.mxu0 %v287
  %1247 = vmatpush.msra.mxu0 %v283
  %1248 = vmatpush.msra.mxu0 %v279
  %1249 = vmatpush.msra.mxu0 %v275
  %1250 = vmatpush.msra.mxu0 %v271
  %1251 = vmatmul.f32.gmra.mxu0 %v963
  %v1252 = vpop.f32.mrf.mxu0
  %v1253 = vadd.f32 %v1224, %v1252
  %1254 = vmatmul.f32.gmra.mxu0 %v966
  %v1255 = vpop.f32.mrf.mxu0
  %v1256 = vadd.f32 %v1227, %v1255
  %1257 = vmatmul.f32.gmra.mxu0 %v969
  %v1258 = vpop.f32.mrf.mxu0
  %v1259 = vadd.f32 %v1230, %v1258
  %1260 = vmatmul.f32.gmra.mxu0 %v972
  %v1261 = vpop.f32.mrf.mxu0
  %v1262 = vadd.f32 %v1233, %v1261
  %1263 = vdwg.mxu0
  %1264 = vmatpush.msra.mxu0 %v76
  %1265 = vmatpush.msra.mxu0 %v72
  %1266 = vmatpush.msra.mxu0 %v68
  %1267 = vmatpush.msra.mxu0 %v64
  %1268 = vmatpush.msra.mxu0 %v60
  %1269 = vmatpush.msra.mxu0 %v56
  %1270 = vmatpush.msra.mxu0 %v52
  %1271 = vmatpush.msra.mxu0 %v48
  %1272 = vmatpush.msra.mxu0 %v44
  %1273 = vmatpush.msra.mxu0 %v40
  %1274 = vmatpush.msra.mxu0 %v36
  %1275 = vmatpush.msra.mxu0 %v32
  %1276 = vmatpush.msra.mxu0 %v28
  %1277 = vmatpush.msra.mxu0 %v24
  %1278 = vmatpush.msra.mxu0 %v20
  %1279 = vmatpush.msra.mxu0 %v16
  %1280 = vmatmul.f32.gmra.mxu0 %v942
  %v1281 = vpop.f32.mrf.mxu0
  %v1282 = vadd.f32 %v326, %v1281
  %1283 = vmatmul.f32.gmra.mxu0 %v947
  %v1284 = vpop.f32.mrf.mxu0
  %v1285 = vadd.f32 %v326, %v1284
  %1286 = vmatmul.f32.gmra.mxu0 %v952
  %v1287 = vpop.f32.mrf.mxu0
  %v1288 = vadd.f32 %v326, %v1287
  %1289 = vmatmul.f32.gmra.mxu0 %v957
  %v1290 = vpop.f32.mrf.mxu0
  %v1291 = vadd.f32 %v326, %v1290
  %1292 = vdwg.mxu0
  %1293 = vmatpush.msra.mxu0 %v140
  %1294 = vmatpush.msra.mxu0 %v136
  %1295 = vmatpush.msra.mxu0 %v132
  %1296 = vmatpush.msra.mxu0 %v128
  %1297 = vmatpush.msra.mxu0 %v124
  %1298 = vmatpush.msra.mxu0 %v120
  %1299 = vmatpush.msra.mxu0 %v116
  %1300 = vmatpush.msra.mxu0 %v112
  %1301 = vmatpush.msra.mxu0 %v108
  %1302 = vmatpush.msra.mxu0 %v104
  %1303 = vmatpush.msra.mxu0 %v100
  %1304 = vmatpush.msra.mxu0 %v96
  %1305 = vmatpush.msra.mxu0 %v92
  %1306 = vmatpush.msra.mxu0 %v88
  %1307 = vmatpush.msra.mxu0 %v84
  %1308 = vmatpush.msra.mxu0 %v80
  %1309 = vmatmul.f32.gmra.mxu0 %v943
  %v1310 = vpop.f32.mrf.mxu0
  %v1311 = vadd.f32 %v1282, %v1310
  %1312 = vmatmul.f32.gmra.mxu0 %v948
  %v1313 = vpop.f32.mrf.mxu0
  %v1314 = vadd.f32 %v1285, %v1313
  %1315 = vmatmul.f32.gmra.mxu0 %v953
  %v1316 = vpop.f32.mrf.mxu0
  %v1317 = vadd.f32 %v1288, %v1316
  %1318 = vmatmul.f32.gmra.mxu0 %v958
  %v1319 = vpop.f32.mrf.mxu0
  %v1320 = vadd.f32 %v1291, %v1319
  %1321 = vdwg.mxu0
  %1322 = vmatpush.msra.mxu0 %v204
  %1323 = vmatpush.msra.mxu0 %v200
  %1324 = vmatpush.msra.mxu0 %v196
  %1325 = vmatpush.msra.mxu0 %v192
  %1326 = vmatpush.msra.mxu0 %v188
  %1327 = vmatpush.msra.mxu0 %v184
  %1328 = vmatpush.msra.mxu0 %v180
  %1329 = vmatpush.msra.mxu0 %v176
  %1330 = vmatpush.msra.mxu0 %v172
  %1331 = vmatpush.msra.mxu0 %v168
  %1332 = vmatpush.msra.mxu0 %v164
  %1333 = vmatpush.msra.mxu0 %v160
  %1334 = vmatpush.msra.mxu0 %v156
  %1335 = vmatpush.msra.mxu0 %v152
  %1336 = vmatpush.msra.mxu0 %v148
  %1337 = vmatpush.msra.mxu0 %v144
  %1338 = vmatmul.f32.gmra.mxu0 %v944
  %v1339 = vpop.f32.mrf.mxu0
  %v1340 = vadd.f32 %v1311, %v1339
  %1341 = vmatmul.f32.gmra.mxu0 %v949
  %v1342 = vpop.f32.mrf.mxu0
  %v1343 = vadd.f32 %v1314, %v1342
  %1344 = vmatmul.f32.gmra.mxu0 %v954
  %v1345 = vpop.f32.mrf.mxu0
  %v1346 = vadd.f32 %v1317, %v1345
  %1347 = vmatmul.f32.gmra.mxu0 %v959
  %v1348 = vpop.f32.mrf.mxu0
  %v1349 = vadd.f32 %v1320, %v1348
  %1350 = vdwg.mxu0
  %1351 = vmatpush.msra.mxu0 %v268
  %1352 = vmatpush.msra.mxu0 %v264
  %1353 = vmatpush.msra.mxu0 %v260
  %1354 = vmatpush.msra.mxu0 %v256
  %1355 = vmatpush.msra.mxu0 %v252
  %1356 = vmatpush.msra.mxu0 %v248
  %1357 = vmatpush.msra.mxu0 %v244
  %1358 = vmatpush.msra.mxu0 %v240
  %1359 = vmatpush.msra.mxu0 %v236
  %1360 = vmatpush.msra.mxu0 %v232
  %1361 = vmatpush.msra.mxu0 %v228
  %1362 = vmatpush.msra.mxu0 %v224
  %1363 = vmatpush.msra.mxu0 %v220
  %1364 = vmatpush.msra.mxu0 %v216
  %1365 = vmatpush.msra.mxu0 %v212
  %1366 = vmatpush.msra.mxu0 %v208
  %1367 = vmatmul.f32.gmra.mxu0 %v945
  %v1368 = vpop.f32.mrf.mxu0
  %v1369 = vadd.f32 %v1340, %v1368
  %1370 = vmatmul.f32.gmra.mxu0 %v950
  %v1371 = vpop.f32.mrf.mxu0
  %v1372 = vadd.f32 %v1343, %v1371
  %1373 = vmatmul.f32.gmra.mxu0 %v955
  %v1374 = vpop.f32.mrf.mxu0
  %v1375 = vadd.f32 %v1346, %v1374
  %1376 = vmatmul.f32.gmra.mxu0 %v960
  %v1377 = vpop.f32.mrf.mxu0
  %v1378 = vadd.f32 %v1349, %v1377
  %1379 = vdwg.mxu0
  %1380 = vmatpush.msra.mxu0 0.0
  %1381 = vmatpush.msra.mxu0 0.0
  %1382 = vmatpush.msra.mxu0 0.0
  %1383 = vmatpush.msra.mxu0 0.0
  %1384 = vmatpush.msra.mxu0 0.0
  %1385 = vmatpush.msra.mxu0 0.0
  %1386 = vmatpush.msra.mxu0 0.0
  %1387 = vmatpush.msra.mxu0 0.0
  %1388 = vmatpush.msra.mxu0 %v300
  %1389 = vmatpush.msra.mxu0 %v296
  %1390 = vmatpush.msra.mxu0 %v292
  %1391 = vmatpush.msra.mxu0 %v288
  %1392 = vmatpush.msra.mxu0 %v284
  %1393 = vmatpush.msra.mxu0 %v280
  %1394 = vmatpush.msra.mxu0 %v276
  %1395 = vmatpush.msra.mxu0 %v272
  %1396 = vmatmul.f32.gmra.mxu0 %v963
  %v1397 = vpop.f32.mrf.mxu0
  %v1398 = vadd.f32 %v1369, %v1397
  %1399 = vmatmul.f32.gmra.mxu0 %v966
  %v1400 = vpop.f32.mrf.mxu0
  %v1401 = vadd.f32 %v1372, %v1400
  %1402 = vmatmul.f32.gmra.mxu0 %v969
  %v1403 = vpop.f32.mrf.mxu0
  %v1404 = vadd.f32 %v1375, %v1403
  %1405 = vmatmul.f32.gmra.mxu0 %v972
  %v1406 = vpop.f32.mrf.mxu0
  %v1407 = vadd.f32 %v1378, %v1406
  %1408 = vdwg.mxu0
  %1409 = vmatpush.msra.mxu0 %v77
  %1410 = vmatpush.msra.mxu0 %v73
  %1411 = vmatpush.msra.mxu0 %v69
  %1412 = vmatpush.msra.mxu0 %v65
  %1413 = vmatpush.msra.mxu0 %v61
  %1414 = vmatpush.msra.mxu0 %v57
  %1415 = vmatpush.msra.mxu0 %v53
  %1416 = vmatpush.msra.mxu0 %v49
  %1417 = vmatpush.msra.mxu0 %v45
  %1418 = vmatpush.msra.mxu0 %v41
  %1419 = vmatpush.msra.mxu0 %v37
  %1420 = vmatpush.msra.mxu0 %v33
  %1421 = vmatpush.msra.mxu0 %v29
  %1422 = vmatpush.msra.mxu0 %v25
  %1423 = vmatpush.msra.mxu0 %v21
  %1424 = vmatpush.msra.mxu0 %v17
  %1425 = vmatmul.f32.gmra.mxu0 %v942
  %v1426 = vpop.f32.mrf.mxu0
  %v1427 = vadd.f32 %v327, %v1426
  %1428 = vmatmul.f32.gmra.mxu0 %v947
  %v1429 = vpop.f32.mrf.mxu0
  %v1430 = vadd.f32 %v327, %v1429
  %1431 = vmatmul.f32.gmra.mxu0 %v952
  %v1432 = vpop.f32.mrf.mxu0
  %v1433 = vadd.f32 %v327, %v1432
  %1434 = vmatmul.f32.gmra.mxu0 %v957
  %v1435 = vpop.f32.mrf.mxu0
  %v1436 = vadd.f32 %v327, %v1435
  %1437 = vdwg.mxu0
  %1438 = vmatpush.msra.mxu0 %v141
  %1439 = vmatpush.msra.mxu0 %v137
  %1440 = vmatpush.msra.mxu0 %v133
  %1441 = vmatpush.msra.mxu0 %v129
  %1442 = vmatpush.msra.mxu0 %v125
  %1443 = vmatpush.msra.mxu0 %v121
  %1444 = vmatpush.msra.mxu0 %v117
  %1445 = vmatpush.msra.mxu0 %v113
  %1446 = vmatpush.msra.mxu0 %v109
  %1447 = vmatpush.msra.mxu0 %v105
  %1448 = vmatpush.msra.mxu0 %v101
  %1449 = vmatpush.msra.mxu0 %v97
  %1450 = vmatpush.msra.mxu0 %v93
  %1451 = vmatpush.msra.mxu0 %v89
  %1452 = vmatpush.msra.mxu0 %v85
  %1453 = vmatpush.msra.mxu0 %v81
  %1454 = vmatmul.f32.gmra.mxu0 %v943
  %v1455 = vpop.f32.mrf.mxu0
  %v1456 = vadd.f32 %v1427, %v1455
  %1457 = vmatmul.f32.gmra.mxu0 %v948
  %v1458 = vpop.f32.mrf.mxu0
  %v1459 = vadd.f32 %v1430, %v1458
  %1460 = vmatmul.f32.gmra.mxu0 %v953
  %v1461 = vpop.f32.mrf.mxu0
  %v1462 = vadd.f32 %v1433, %v1461
  %1463 = vmatmul.f32.gmra.mxu0 %v958
  %v1464 = vpop.f32.mrf.mxu0
  %v1465 = vadd.f32 %v1436, %v1464
  %1466 = vdwg.mxu0
  %1467 = vmatpush.msra.mxu0 %v205
  %1468 = vmatpush.msra.mxu0 %v201
  %1469 = vmatpush.msra.mxu0 %v197
  %1470 = vmatpush.msra.mxu0 %v193
  %1471 = vmatpush.msra.mxu0 %v189
  %1472 = vmatpush.msra.mxu0 %v185
  %1473 = vmatpush.msra.mxu0 %v181
  %1474 = vmatpush.msra.mxu0 %v177
  %1475 = vmatpush.msra.mxu0 %v173
  %1476 = vmatpush.msra.mxu0 %v169
  %1477 = vmatpush.msra.mxu0 %v165
  %1478 = vmatpush.msra.mxu0 %v161
  %1479 = vmatpush.msra.mxu0 %v157
  %1480 = vmatpush.msra.mxu0 %v153
  %1481 = vmatpush.msra.mxu0 %v149
  %1482 = vmatpush.msra.mxu0 %v145
  %1483 = vmatmul.f32.gmra.mxu0 %v944
  %v1484 = vpop.f32.mrf.mxu0
  %v1485 = vadd.f32 %v1456, %v1484
  %1486 = vmatmul.f32.gmra.mxu0 %v949
  %v1487 = vpop.f32.mrf.mxu0
  %v1488 = vadd.f32 %v1459, %v1487
  %1489 = vmatmul.f32.gmra.mxu0 %v954
  %v1490 = vpop.f32.mrf.mxu0
  %v1491 = vadd.f32 %v1462, %v1490
  %1492 = vmatmul.f32.gmra.mxu0 %v959
  %v1493 = vpop.f32.mrf.mxu0
  %v1494 = vadd.f32 %v1465, %v1493
  %1495 = vdwg.mxu0
  %1496 = vmatpush.msra.mxu0 %v269
  %1497 = vmatpush.msra.mxu0 %v265
  %1498 = vmatpush.msra.mxu0 %v261
  %1499 = vmatpush.msra.mxu0 %v257
  %1500 = vmatpush.msra.mxu0 %v253
  %1501 = vmatpush.msra.mxu0 %v249
  %1502 = vmatpush.msra.mxu0 %v245
  %1503 = vmatpush.msra.mxu0 %v241
  %1504 = vmatpush.msra.mxu0 %v237
  %1505 = vmatpush.msra.mxu0 %v233
  %1506 = vmatpush.msra.mxu0 %v229
  %1507 = vmatpush.msra.mxu0 %v225
  %1508 = vmatpush.msra.mxu0 %v221
  %1509 = vmatpush.msra.mxu0 %v217
  %1510 = vmatpush.msra.mxu0 %v213
  %1511 = vmatpush.msra.mxu0 %v209
  %1512 = vmatmul.f32.gmra.mxu0 %v945
  %v1513 = vpop.f32.mrf.mxu0
  %v1514 = vadd.f32 %v1485, %v1513
  %1515 = vmatmul.f32.gmra.mxu0 %v950
  %v1516 = vpop.f32.mrf.mxu0
  %v1517 = vadd.f32 %v1488, %v1516
  %1518 = vmatmul.f32.gmra.mxu0 %v955
  %v1519 = vpop.f32.mrf.mxu0
  %v1520 = vadd.f32 %v1491, %v1519
  %1521 = vmatmul.f32.gmra.mxu0 %v960
  %v1522 = vpop.f32.mrf.mxu0
  %v1523 = vadd.f32 %v1494, %v1522
  %1524 = vdwg.mxu0
  %1525 = vmatpush.msra.mxu0 0.0
  %1526 = vmatpush.msra.mxu0 0.0
  %1527 = vmatpush.msra.mxu0 0.0
  %1528 = vmatpush.msra.mxu0 0.0
  %1529 = vmatpush.msra.mxu0 0.0
  %1530 = vmatpush.msra.mxu0 0.0
  %1531 = vmatpush.msra.mxu0 0.0
  %1532 = vmatpush.msra.mxu0 0.0
  %1533 = vmatpush.msra.mxu0 %v301
  %1534 = vmatpush.msra.mxu0 %v297
  %1535 = vmatpush.msra.mxu0 %v293
  %1536 = vmatpush.msra.mxu0 %v289
  %1537 = vmatpush.msra.mxu0 %v285
  %1538 = vmatpush.msra.mxu0 %v281
  %1539 = vmatpush.msra.mxu0 %v277
  %1540 = vmatpush.msra.mxu0 %v273
  %1541 = vmatmul.f32.gmra.mxu0 %v963
  %v1542 = vpop.f32.mrf.mxu0
  %v1543 = vadd.f32 %v1514, %v1542
  %1544 = vmatmul.f32.gmra.mxu0 %v966
  %v1545 = vpop.f32.mrf.mxu0
  %v1546 = vadd.f32 %v1517, %v1545
  %1547 = vmatmul.f32.gmra.mxu0 %v969
  %v1548 = vpop.f32.mrf.mxu0
  %v1549 = vadd.f32 %v1520, %v1548
  %1550 = vmatmul.f32.gmra.mxu0 %v972
  %v1551 = vpop.f32.mrf.mxu0
  %v1552 = vadd.f32 %v1523, %v1551
  %1553 = vdwg.mxu0
  %v1554 = vmax.f32 %v1108, 0.0
  %v1555 = vmax.f32 %v1253, 0.0
  %v1556 = vmax.f32 %v1398, 0.0
  %v1557 = vmax.f32 %v1543, 0.0
  %v1558 = vmax.f32 %v1111, 0.0
  %v1559 = vmax.f32 %v1256, 0.0
  %v1560 = vmax.f32 %v1401, 0.0
  %v1561 = vmax.f32 %v1546, 0.0
  %v1562 = vmax.f32 %v1114, 0.0
  %v1563 = vmax.f32 %v1259, 0.0
  %v1564 = vmax.f32 %v1404, 0.0
  %v1565 = vmax.f32 %v1549, 0.0
  %v1566 = vmax.f32 %v1117, 0.0
  %v1567 = vmax.f32 %v1262, 0.0
  %v1568 = vmax.f32 %v1407, 0.0
  %v1569 = vmax.f32 %v1552, 0.0
  %v1570 = vmax.f32 %v925, %v1554
  %v1571 = vmax.f32 %v926, %v1555
  %v1572 = vmax.f32 %v927, %v1556
  %v1573 = vmax.f32 %v928, %v1557
  %v1574 = vmax.f32 %v929, %v1558
  %v1575 = vmax.f32 %v930, %v1559
  %v1576 = vmax.f32 %v931, %v1560
  %v1577 = vmax.f32 %v932, %v1561
  %v1578 = vmax.f32 %v933, %v1562
  %v1579 = vmax.f32 %v934, %v1563
  %v1580 = vmax.f32 %v935, %v1564
  %v1581 = vmax.f32 %v936, %v1565
  %v1582 = vmax.f32 %v937, %v1566
  %v1583 = vmax.f32 %v938, %v1567
  %v1584 = vmax.f32 %v939, %v1568
  %v1585 = vmax.f32 %v940, %v1569
  %s1586 = scalar_lea.vmem %s0, 320
  %v1587 = vld [vmem:[%s1586] sm:$0xff]
  %v1588 = vld [vmem:[%s1586 + $0x8] sm:$0xff]
  %v1589 = vld [vmem:[%s1586 + $0x10] sm:$0xff]
  %v1590 = vld [vmem:[%s1586 + $0x18] sm:$0xff]
  %v1591 = vld [vmem:[%s1586 + $0x20] sm:$0xff]
  %v1592 = vld [vmem:[%s1586 + $0x28] sm:$0xff]
  %v1593 = vld [vmem:[%s1586 + $0x30] sm:$0xff]
  %v1594 = vld [vmem:[%s1586 + $0x38] sm:$0xff]
  %v1595 = vld [vmem:[%s1586 + $0x40] sm:$0xff]
  %v1596 = vld [vmem:[%s1586 + $0x48] sm:$0xff]
  %v1597 = vld [vmem:[%s1586 + $0x50] sm:$0xff]
  %v1598 = vld [vmem:[%s1586 + $0x58] sm:$0xff]
  %v1599 = vld [vmem:[%s1586 + $0x60] sm:$0xff]
  %v1600 = vld [vmem:[%s1586 + $0x68] sm:$0xff]
  %v1601 = vld [vmem:[%s1586 + $0x70] sm:$0xff]
  %v1602 = vld [vmem:[%s1586 + $0x78] sm:$0xff]
  %v1603 = vld [vmem:[%s1586 + $0x80] sm:$0xff]
  %v1604 = vld [vmem:[%s1586 + $0x88] sm:$0xff]
  %v1605 = vld [vmem:[%s1586 + $0x90] sm:$0xff]
  %v1606 = vld [vmem:[%s1586 + $0x98] sm:$0xff]
  %v1608 = vsel %vm332, %v1591, 0
  %v1611 = vsel %vm332, %v1596, 0
  %v1614 = vsel %vm332, %v1601, 0
  %v1617 = vsel %vm332, %v1606, 0
  %1619 = vmatpush.msra.mxu0 %v74
  %1620 = vmatpush.msra.mxu0 %v70
  %1621 = vmatpush.msra.mxu0 %v66
  %1622 = vmatpush.msra.mxu0 %v62
  %1623 = vmatpush.msra.mxu0 %v58
  %1624 = vmatpush.msra.mxu0 %v54
  %1625 = vmatpush.msra.mxu0 %v50
  %1626 = vmatpush.msra.mxu0 %v46
  %1627 = vmatpush.msra.mxu0 %v42
  %1628 = vmatpush.msra.mxu0 %v38
  %1629 = vmatpush.msra.mxu0 %v34
  %1630 = vmatpush.msra.mxu0 %v30
  %1631 = vmatpush.msra.mxu0 %v26
  %1632 = vmatpush.msra.mxu0 %v22
  %1633 = vmatpush.msra.mxu0 %v18
  %1634 = vmatpush.msra.mxu0 %v14
  %1635 = vmatmul.f32.gmra.mxu0 %v1587
  %v1636 = vpop.f32.mrf.mxu0
  %v1637 = vadd.f32 %v324, %v1636
  %1638 = vmatmul.f32.gmra.mxu0 %v1592
  %v1639 = vpop.f32.mrf.mxu0
  %v1640 = vadd.f32 %v324, %v1639
  %1641 = vmatmul.f32.gmra.mxu0 %v1597
  %v1642 = vpop.f32.mrf.mxu0
  %v1643 = vadd.f32 %v324, %v1642
  %1644 = vmatmul.f32.gmra.mxu0 %v1602
  %v1645 = vpop.f32.mrf.mxu0
  %v1646 = vadd.f32 %v324, %v1645
  %1647 = vdwg.mxu0
  %1648 = vmatpush.msra.mxu0 %v138
  %1649 = vmatpush.msra.mxu0 %v134
  %1650 = vmatpush.msra.mxu0 %v130
  %1651 = vmatpush.msra.mxu0 %v126
  %1652 = vmatpush.msra.mxu0 %v122
  %1653 = vmatpush.msra.mxu0 %v118
  %1654 = vmatpush.msra.mxu0 %v114
  %1655 = vmatpush.msra.mxu0 %v110
  %1656 = vmatpush.msra.mxu0 %v106
  %1657 = vmatpush.msra.mxu0 %v102
  %1658 = vmatpush.msra.mxu0 %v98
  %1659 = vmatpush.msra.mxu0 %v94
  %1660 = vmatpush.msra.mxu0 %v90
  %1661 = vmatpush.msra.mxu0 %v86
  %1662 = vmatpush.msra.mxu0 %v82
  %1663 = vmatpush.msra.mxu0 %v78
  %1664 = vmatmul.f32.gmra.mxu0 %v1588
  %v1665 = vpop.f32.mrf.mxu0
  %v1666 = vadd.f32 %v1637, %v1665
  %1667 = vmatmul.f32.gmra.mxu0 %v1593
  %v1668 = vpop.f32.mrf.mxu0
  %v1669 = vadd.f32 %v1640, %v1668
  %1670 = vmatmul.f32.gmra.mxu0 %v1598
  %v1671 = vpop.f32.mrf.mxu0
  %v1672 = vadd.f32 %v1643, %v1671
  %1673 = vmatmul.f32.gmra.mxu0 %v1603
  %v1674 = vpop.f32.mrf.mxu0
  %v1675 = vadd.f32 %v1646, %v1674
  %1676 = vdwg.mxu0
  %1677 = vmatpush.msra.mxu0 %v202
  %1678 = vmatpush.msra.mxu0 %v198
  %1679 = vmatpush.msra.mxu0 %v194
  %1680 = vmatpush.msra.mxu0 %v190
  %1681 = vmatpush.msra.mxu0 %v186
  %1682 = vmatpush.msra.mxu0 %v182
  %1683 = vmatpush.msra.mxu0 %v178
  %1684 = vmatpush.msra.mxu0 %v174
  %1685 = vmatpush.msra.mxu0 %v170
  %1686 = vmatpush.msra.mxu0 %v166
  %1687 = vmatpush.msra.mxu0 %v162
  %1688 = vmatpush.msra.mxu0 %v158
  %1689 = vmatpush.msra.mxu0 %v154
  %1690 = vmatpush.msra.mxu0 %v150
  %1691 = vmatpush.msra.mxu0 %v146
  %1692 = vmatpush.msra.mxu0 %v142
  %1693 = vmatmul.f32.gmra.mxu0 %v1589
  %v1694 = vpop.f32.mrf.mxu0
  %v1695 = vadd.f32 %v1666, %v1694
  %1696 = vmatmul.f32.gmra.mxu0 %v1594
  %v1697 = vpop.f32.mrf.mxu0
  %v1698 = vadd.f32 %v1669, %v1697
  %1699 = vmatmul.f32.gmra.mxu0 %v1599
  %v1700 = vpop.f32.mrf.mxu0
  %v1701 = vadd.f32 %v1672, %v1700
  %1702 = vmatmul.f32.gmra.mxu0 %v1604
  %v1703 = vpop.f32.mrf.mxu0
  %v1704 = vadd.f32 %v1675, %v1703
  %1705 = vdwg.mxu0
  %1706 = vmatpush.msra.mxu0 %v266
  %1707 = vmatpush.msra.mxu0 %v262
  %1708 = vmatpush.msra.mxu0 %v258
  %1709 = vmatpush.msra.mxu0 %v254
  %1710 = vmatpush.msra.mxu0 %v250
  %1711 = vmatpush.msra.mxu0 %v246
  %1712 = vmatpush.msra.mxu0 %v242
  %1713 = vmatpush.msra.mxu0 %v238
  %1714 = vmatpush.msra.mxu0 %v234
  %1715 = vmatpush.msra.mxu0 %v230
  %1716 = vmatpush.msra.mxu0 %v226
  %1717 = vmatpush.msra.mxu0 %v222
  %1718 = vmatpush.msra.mxu0 %v218
  %1719 = vmatpush.msra.mxu0 %v214
  %1720 = vmatpush.msra.mxu0 %v210
  %1721 = vmatpush.msra.mxu0 %v206
  %1722 = vmatmul.f32.gmra.mxu0 %v1590
  %v1723 = vpop.f32.mrf.mxu0
  %v1724 = vadd.f32 %v1695, %v1723
  %1725 = vmatmul.f32.gmra.mxu0 %v1595
  %v1726 = vpop.f32.mrf.mxu0
  %v1727 = vadd.f32 %v1698, %v1726
  %1728 = vmatmul.f32.gmra.mxu0 %v1600
  %v1729 = vpop.f32.mrf.mxu0
  %v1730 = vadd.f32 %v1701, %v1729
  %1731 = vmatmul.f32.gmra.mxu0 %v1605
  %v1732 = vpop.f32.mrf.mxu0
  %v1733 = vadd.f32 %v1704, %v1732
  %1734 = vdwg.mxu0
  %1735 = vmatpush.msra.mxu0 0.0
  %1736 = vmatpush.msra.mxu0 0.0
  %1737 = vmatpush.msra.mxu0 0.0
  %1738 = vmatpush.msra.mxu0 0.0
  %1739 = vmatpush.msra.mxu0 0.0
  %1740 = vmatpush.msra.mxu0 0.0
  %1741 = vmatpush.msra.mxu0 0.0
  %1742 = vmatpush.msra.mxu0 0.0
  %1743 = vmatpush.msra.mxu0 %v298
  %1744 = vmatpush.msra.mxu0 %v294
  %1745 = vmatpush.msra.mxu0 %v290
  %1746 = vmatpush.msra.mxu0 %v286
  %1747 = vmatpush.msra.mxu0 %v282
  %1748 = vmatpush.msra.mxu0 %v278
  %1749 = vmatpush.msra.mxu0 %v274
  %1750 = vmatpush.msra.mxu0 %v270
  %1751 = vmatmul.f32.gmra.mxu0 %v1608
  %v1752 = vpop.f32.mrf.mxu0
  %v1753 = vadd.f32 %v1724, %v1752
  %1754 = vmatmul.f32.gmra.mxu0 %v1611
  %v1755 = vpop.f32.mrf.mxu0
  %v1756 = vadd.f32 %v1727, %v1755
  %1757 = vmatmul.f32.gmra.mxu0 %v1614
  %v1758 = vpop.f32.mrf.mxu0
  %v1759 = vadd.f32 %v1730, %v1758
  %1760 = vmatmul.f32.gmra.mxu0 %v1617
  %v1761 = vpop.f32.mrf.mxu0
  %v1762 = vadd.f32 %v1733, %v1761
  %1763 = vdwg.mxu0
  %1764 = vmatpush.msra.mxu0 %v75
  %1765 = vmatpush.msra.mxu0 %v71
  %1766 = vmatpush.msra.mxu0 %v67
  %1767 = vmatpush.msra.mxu0 %v63
  %1768 = vmatpush.msra.mxu0 %v59
  %1769 = vmatpush.msra.mxu0 %v55
  %1770 = vmatpush.msra.mxu0 %v51
  %1771 = vmatpush.msra.mxu0 %v47
  %1772 = vmatpush.msra.mxu0 %v43
  %1773 = vmatpush.msra.mxu0 %v39
  %1774 = vmatpush.msra.mxu0 %v35
  %1775 = vmatpush.msra.mxu0 %v31
  %1776 = vmatpush.msra.mxu0 %v27
  %1777 = vmatpush.msra.mxu0 %v23
  %1778 = vmatpush.msra.mxu0 %v19
  %1779 = vmatpush.msra.mxu0 %v15
  %1780 = vmatmul.f32.gmra.mxu0 %v1587
  %v1781 = vpop.f32.mrf.mxu0
  %v1782 = vadd.f32 %v325, %v1781
  %1783 = vmatmul.f32.gmra.mxu0 %v1592
  %v1784 = vpop.f32.mrf.mxu0
  %v1785 = vadd.f32 %v325, %v1784
  %1786 = vmatmul.f32.gmra.mxu0 %v1597
  %v1787 = vpop.f32.mrf.mxu0
  %v1788 = vadd.f32 %v325, %v1787
  %1789 = vmatmul.f32.gmra.mxu0 %v1602
  %v1790 = vpop.f32.mrf.mxu0
  %v1791 = vadd.f32 %v325, %v1790
  %1792 = vdwg.mxu0
  %1793 = vmatpush.msra.mxu0 %v139
  %1794 = vmatpush.msra.mxu0 %v135
  %1795 = vmatpush.msra.mxu0 %v131
  %1796 = vmatpush.msra.mxu0 %v127
  %1797 = vmatpush.msra.mxu0 %v123
  %1798 = vmatpush.msra.mxu0 %v119
  %1799 = vmatpush.msra.mxu0 %v115
  %1800 = vmatpush.msra.mxu0 %v111
  %1801 = vmatpush.msra.mxu0 %v107
  %1802 = vmatpush.msra.mxu0 %v103
  %1803 = vmatpush.msra.mxu0 %v99
  %1804 = vmatpush.msra.mxu0 %v95
  %1805 = vmatpush.msra.mxu0 %v91
  %1806 = vmatpush.msra.mxu0 %v87
  %1807 = vmatpush.msra.mxu0 %v83
  %1808 = vmatpush.msra.mxu0 %v79
  %1809 = vmatmul.f32.gmra.mxu0 %v1588
  %v1810 = vpop.f32.mrf.mxu0
  %v1811 = vadd.f32 %v1782, %v1810
  %1812 = vmatmul.f32.gmra.mxu0 %v1593
  %v1813 = vpop.f32.mrf.mxu0
  %v1814 = vadd.f32 %v1785, %v1813
  %1815 = vmatmul.f32.gmra.mxu0 %v1598
  %v1816 = vpop.f32.mrf.mxu0
  %v1817 = vadd.f32 %v1788, %v1816
  %1818 = vmatmul.f32.gmra.mxu0 %v1603
  %v1819 = vpop.f32.mrf.mxu0
  %v1820 = vadd.f32 %v1791, %v1819
  %1821 = vdwg.mxu0
  %1822 = vmatpush.msra.mxu0 %v203
  %1823 = vmatpush.msra.mxu0 %v199
  %1824 = vmatpush.msra.mxu0 %v195
  %1825 = vmatpush.msra.mxu0 %v191
  %1826 = vmatpush.msra.mxu0 %v187
  %1827 = vmatpush.msra.mxu0 %v183
  %1828 = vmatpush.msra.mxu0 %v179
  %1829 = vmatpush.msra.mxu0 %v175
  %1830 = vmatpush.msra.mxu0 %v171
  %1831 = vmatpush.msra.mxu0 %v167
  %1832 = vmatpush.msra.mxu0 %v163
  %1833 = vmatpush.msra.mxu0 %v159
  %1834 = vmatpush.msra.mxu0 %v155
  %1835 = vmatpush.msra.mxu0 %v151
  %1836 = vmatpush.msra.mxu0 %v147
  %1837 = vmatpush.msra.mxu0 %v143
  %1838 = vmatmul.f32.gmra.mxu0 %v1589
  %v1839 = vpop.f32.mrf.mxu0
  %v1840 = vadd.f32 %v1811, %v1839
  %1841 = vmatmul.f32.gmra.mxu0 %v1594
  %v1842 = vpop.f32.mrf.mxu0
  %v1843 = vadd.f32 %v1814, %v1842
  %1844 = vmatmul.f32.gmra.mxu0 %v1599
  %v1845 = vpop.f32.mrf.mxu0
  %v1846 = vadd.f32 %v1817, %v1845
  %1847 = vmatmul.f32.gmra.mxu0 %v1604
  %v1848 = vpop.f32.mrf.mxu0
  %v1849 = vadd.f32 %v1820, %v1848
  %1850 = vdwg.mxu0
  %1851 = vmatpush.msra.mxu0 %v267
  %1852 = vmatpush.msra.mxu0 %v263
  %1853 = vmatpush.msra.mxu0 %v259
  %1854 = vmatpush.msra.mxu0 %v255
  %1855 = vmatpush.msra.mxu0 %v251
  %1856 = vmatpush.msra.mxu0 %v247
  %1857 = vmatpush.msra.mxu0 %v243
  %1858 = vmatpush.msra.mxu0 %v239
  %1859 = vmatpush.msra.mxu0 %v235
  %1860 = vmatpush.msra.mxu0 %v231
  %1861 = vmatpush.msra.mxu0 %v227
  %1862 = vmatpush.msra.mxu0 %v223
  %1863 = vmatpush.msra.mxu0 %v219
  %1864 = vmatpush.msra.mxu0 %v215
  %1865 = vmatpush.msra.mxu0 %v211
  %1866 = vmatpush.msra.mxu0 %v207
  %1867 = vmatmul.f32.gmra.mxu0 %v1590
  %v1868 = vpop.f32.mrf.mxu0
  %v1869 = vadd.f32 %v1840, %v1868
  %1870 = vmatmul.f32.gmra.mxu0 %v1595
  %v1871 = vpop.f32.mrf.mxu0
  %v1872 = vadd.f32 %v1843, %v1871
  %1873 = vmatmul.f32.gmra.mxu0 %v1600
  %v1874 = vpop.f32.mrf.mxu0
  %v1875 = vadd.f32 %v1846, %v1874
  %1876 = vmatmul.f32.gmra.mxu0 %v1605
  %v1877 = vpop.f32.mrf.mxu0
  %v1878 = vadd.f32 %v1849, %v1877
  %1879 = vdwg.mxu0
  %1880 = vmatpush.msra.mxu0 0.0
  %1881 = vmatpush.msra.mxu0 0.0
  %1882 = vmatpush.msra.mxu0 0.0
  %1883 = vmatpush.msra.mxu0 0.0
  %1884 = vmatpush.msra.mxu0 0.0
  %1885 = vmatpush.msra.mxu0 0.0
  %1886 = vmatpush.msra.mxu0 0.0
  %1887 = vmatpush.msra.mxu0 0.0
  %1888 = vmatpush.msra.mxu0 %v299
  %1889 = vmatpush.msra.mxu0 %v295
  %1890 = vmatpush.msra.mxu0 %v291
  %1891 = vmatpush.msra.mxu0 %v287
  %1892 = vmatpush.msra.mxu0 %v283
  %1893 = vmatpush.msra.mxu0 %v279
  %1894 = vmatpush.msra.mxu0 %v275
  %1895 = vmatpush.msra.mxu0 %v271
  %1896 = vmatmul.f32.gmra.mxu0 %v1608
  %v1897 = vpop.f32.mrf.mxu0
  %v1898 = vadd.f32 %v1869, %v1897
  %1899 = vmatmul.f32.gmra.mxu0 %v1611
  %v1900 = vpop.f32.mrf.mxu0
  %v1901 = vadd.f32 %v1872, %v1900
  %1902 = vmatmul.f32.gmra.mxu0 %v1614
  %v1903 = vpop.f32.mrf.mxu0
  %v1904 = vadd.f32 %v1875, %v1903
  %1905 = vmatmul.f32.gmra.mxu0 %v1617
  %v1906 = vpop.f32.mrf.mxu0
  %v1907 = vadd.f32 %v1878, %v1906
  %1908 = vdwg.mxu0
  %1909 = vmatpush.msra.mxu0 %v76
  %1910 = vmatpush.msra.mxu0 %v72
  %1911 = vmatpush.msra.mxu0 %v68
  %1912 = vmatpush.msra.mxu0 %v64
  %1913 = vmatpush.msra.mxu0 %v60
  %1914 = vmatpush.msra.mxu0 %v56
  %1915 = vmatpush.msra.mxu0 %v52
  %1916 = vmatpush.msra.mxu0 %v48
  %1917 = vmatpush.msra.mxu0 %v44
  %1918 = vmatpush.msra.mxu0 %v40
  %1919 = vmatpush.msra.mxu0 %v36
  %1920 = vmatpush.msra.mxu0 %v32
  %1921 = vmatpush.msra.mxu0 %v28
  %1922 = vmatpush.msra.mxu0 %v24
  %1923 = vmatpush.msra.mxu0 %v20
  %1924 = vmatpush.msra.mxu0 %v16
  %1925 = vmatmul.f32.gmra.mxu0 %v1587
  %v1926 = vpop.f32.mrf.mxu0
  %v1927 = vadd.f32 %v326, %v1926
  %1928 = vmatmul.f32.gmra.mxu0 %v1592
  %v1929 = vpop.f32.mrf.mxu0
  %v1930 = vadd.f32 %v326, %v1929
  %1931 = vmatmul.f32.gmra.mxu0 %v1597
  %v1932 = vpop.f32.mrf.mxu0
  %v1933 = vadd.f32 %v326, %v1932
  %1934 = vmatmul.f32.gmra.mxu0 %v1602
  %v1935 = vpop.f32.mrf.mxu0
  %v1936 = vadd.f32 %v326, %v1935
  %1937 = vdwg.mxu0
  %1938 = vmatpush.msra.mxu0 %v140
  %1939 = vmatpush.msra.mxu0 %v136
  %1940 = vmatpush.msra.mxu0 %v132
  %1941 = vmatpush.msra.mxu0 %v128
  %1942 = vmatpush.msra.mxu0 %v124
  %1943 = vmatpush.msra.mxu0 %v120
  %1944 = vmatpush.msra.mxu0 %v116
  %1945 = vmatpush.msra.mxu0 %v112
  %1946 = vmatpush.msra.mxu0 %v108
  %1947 = vmatpush.msra.mxu0 %v104
  %1948 = vmatpush.msra.mxu0 %v100
  %1949 = vmatpush.msra.mxu0 %v96
  %1950 = vmatpush.msra.mxu0 %v92
  %1951 = vmatpush.msra.mxu0 %v88
  %1952 = vmatpush.msra.mxu0 %v84
  %1953 = vmatpush.msra.mxu0 %v80
  %1954 = vmatmul.f32.gmra.mxu0 %v1588
  %v1955 = vpop.f32.mrf.mxu0
  %v1956 = vadd.f32 %v1927, %v1955
  %1957 = vmatmul.f32.gmra.mxu0 %v1593
  %v1958 = vpop.f32.mrf.mxu0
  %v1959 = vadd.f32 %v1930, %v1958
  %1960 = vmatmul.f32.gmra.mxu0 %v1598
  %v1961 = vpop.f32.mrf.mxu0
  %v1962 = vadd.f32 %v1933, %v1961
  %1963 = vmatmul.f32.gmra.mxu0 %v1603
  %v1964 = vpop.f32.mrf.mxu0
  %v1965 = vadd.f32 %v1936, %v1964
  %1966 = vdwg.mxu0
  %1967 = vmatpush.msra.mxu0 %v204
  %1968 = vmatpush.msra.mxu0 %v200
  %1969 = vmatpush.msra.mxu0 %v196
  %1970 = vmatpush.msra.mxu0 %v192
  %1971 = vmatpush.msra.mxu0 %v188
  %1972 = vmatpush.msra.mxu0 %v184
  %1973 = vmatpush.msra.mxu0 %v180
  %1974 = vmatpush.msra.mxu0 %v176
  %1975 = vmatpush.msra.mxu0 %v172
  %1976 = vmatpush.msra.mxu0 %v168
  %1977 = vmatpush.msra.mxu0 %v164
  %1978 = vmatpush.msra.mxu0 %v160
  %1979 = vmatpush.msra.mxu0 %v156
  %1980 = vmatpush.msra.mxu0 %v152
  %1981 = vmatpush.msra.mxu0 %v148
  %1982 = vmatpush.msra.mxu0 %v144
  %1983 = vmatmul.f32.gmra.mxu0 %v1589
  %v1984 = vpop.f32.mrf.mxu0
  %v1985 = vadd.f32 %v1956, %v1984
  %1986 = vmatmul.f32.gmra.mxu0 %v1594
  %v1987 = vpop.f32.mrf.mxu0
  %v1988 = vadd.f32 %v1959, %v1987
  %1989 = vmatmul.f32.gmra.mxu0 %v1599
  %v1990 = vpop.f32.mrf.mxu0
  %v1991 = vadd.f32 %v1962, %v1990
  %1992 = vmatmul.f32.gmra.mxu0 %v1604
  %v1993 = vpop.f32.mrf.mxu0
  %v1994 = vadd.f32 %v1965, %v1993
  %1995 = vdwg.mxu0
  %1996 = vmatpush.msra.mxu0 %v268
  %1997 = vmatpush.msra.mxu0 %v264
  %1998 = vmatpush.msra.mxu0 %v260
  %1999 = vmatpush.msra.mxu0 %v256
  %2000 = vmatpush.msra.mxu0 %v252
  %2001 = vmatpush.msra.mxu0 %v248
  %2002 = vmatpush.msra.mxu0 %v244
  %2003 = vmatpush.msra.mxu0 %v240
  %2004 = vmatpush.msra.mxu0 %v236
  %2005 = vmatpush.msra.mxu0 %v232
  %2006 = vmatpush.msra.mxu0 %v228
  %2007 = vmatpush.msra.mxu0 %v224
  %2008 = vmatpush.msra.mxu0 %v220
  %2009 = vmatpush.msra.mxu0 %v216
  %2010 = vmatpush.msra.mxu0 %v212
  %2011 = vmatpush.msra.mxu0 %v208
  %2012 = vmatmul.f32.gmra.mxu0 %v1590
  %v2013 = vpop.f32.mrf.mxu0
  %v2014 = vadd.f32 %v1985, %v2013
  %2015 = vmatmul.f32.gmra.mxu0 %v1595
  %v2016 = vpop.f32.mrf.mxu0
  %v2017 = vadd.f32 %v1988, %v2016
  %2018 = vmatmul.f32.gmra.mxu0 %v1600
  %v2019 = vpop.f32.mrf.mxu0
  %v2020 = vadd.f32 %v1991, %v2019
  %2021 = vmatmul.f32.gmra.mxu0 %v1605
  %v2022 = vpop.f32.mrf.mxu0
  %v2023 = vadd.f32 %v1994, %v2022
  %2024 = vdwg.mxu0
  %2025 = vmatpush.msra.mxu0 0.0
  %2026 = vmatpush.msra.mxu0 0.0
  %2027 = vmatpush.msra.mxu0 0.0
  %2028 = vmatpush.msra.mxu0 0.0
  %2029 = vmatpush.msra.mxu0 0.0
  %2030 = vmatpush.msra.mxu0 0.0
  %2031 = vmatpush.msra.mxu0 0.0
  %2032 = vmatpush.msra.mxu0 0.0
  %2033 = vmatpush.msra.mxu0 %v300
  %2034 = vmatpush.msra.mxu0 %v296
  %2035 = vmatpush.msra.mxu0 %v292
  %2036 = vmatpush.msra.mxu0 %v288
  %2037 = vmatpush.msra.mxu0 %v284
  %2038 = vmatpush.msra.mxu0 %v280
  %2039 = vmatpush.msra.mxu0 %v276
  %2040 = vmatpush.msra.mxu0 %v272
  %2041 = vmatmul.f32.gmra.mxu0 %v1608
  %v2042 = vpop.f32.mrf.mxu0
  %v2043 = vadd.f32 %v2014, %v2042
  %2044 = vmatmul.f32.gmra.mxu0 %v1611
  %v2045 = vpop.f32.mrf.mxu0
  %v2046 = vadd.f32 %v2017, %v2045
  %2047 = vmatmul.f32.gmra.mxu0 %v1614
  %v2048 = vpop.f32.mrf.mxu0
  %v2049 = vadd.f32 %v2020, %v2048
  %2050 = vmatmul.f32.gmra.mxu0 %v1617
  %v2051 = vpop.f32.mrf.mxu0
  %v2052 = vadd.f32 %v2023, %v2051
  %2053 = vdwg.mxu0
  %2054 = vmatpush.msra.mxu0 %v77
  %2055 = vmatpush.msra.mxu0 %v73
  %2056 = vmatpush.msra.mxu0 %v69
  %2057 = vmatpush.msra.mxu0 %v65
  %2058 = vmatpush.msra.mxu0 %v61
  %2059 = vmatpush.msra.mxu0 %v57
  %2060 = vmatpush.msra.mxu0 %v53
  %2061 = vmatpush.msra.mxu0 %v49
  %2062 = vmatpush.msra.mxu0 %v45
  %2063 = vmatpush.msra.mxu0 %v41
  %2064 = vmatpush.msra.mxu0 %v37
  %2065 = vmatpush.msra.mxu0 %v33
  %2066 = vmatpush.msra.mxu0 %v29
  %2067 = vmatpush.msra.mxu0 %v25
  %2068 = vmatpush.msra.mxu0 %v21
  %2069 = vmatpush.msra.mxu0 %v17
  %2070 = vmatmul.f32.gmra.mxu0 %v1587
  %v2071 = vpop.f32.mrf.mxu0
  %v2072 = vadd.f32 %v327, %v2071
  %2073 = vmatmul.f32.gmra.mxu0 %v1592
  %v2074 = vpop.f32.mrf.mxu0
  %v2075 = vadd.f32 %v327, %v2074
  %2076 = vmatmul.f32.gmra.mxu0 %v1597
  %v2077 = vpop.f32.mrf.mxu0
  %v2078 = vadd.f32 %v327, %v2077
  %2079 = vmatmul.f32.gmra.mxu0 %v1602
  %v2080 = vpop.f32.mrf.mxu0
  %v2081 = vadd.f32 %v327, %v2080
  %2082 = vdwg.mxu0
  %2083 = vmatpush.msra.mxu0 %v141
  %2084 = vmatpush.msra.mxu0 %v137
  %2085 = vmatpush.msra.mxu0 %v133
  %2086 = vmatpush.msra.mxu0 %v129
  %2087 = vmatpush.msra.mxu0 %v125
  %2088 = vmatpush.msra.mxu0 %v121
  %2089 = vmatpush.msra.mxu0 %v117
  %2090 = vmatpush.msra.mxu0 %v113
  %2091 = vmatpush.msra.mxu0 %v109
  %2092 = vmatpush.msra.mxu0 %v105
  %2093 = vmatpush.msra.mxu0 %v101
  %2094 = vmatpush.msra.mxu0 %v97
  %2095 = vmatpush.msra.mxu0 %v93
  %2096 = vmatpush.msra.mxu0 %v89
  %2097 = vmatpush.msra.mxu0 %v85
  %2098 = vmatpush.msra.mxu0 %v81
  %2099 = vmatmul.f32.gmra.mxu0 %v1588
  %v2100 = vpop.f32.mrf.mxu0
  %v2101 = vadd.f32 %v2072, %v2100
  %2102 = vmatmul.f32.gmra.mxu0 %v1593
  %v2103 = vpop.f32.mrf.mxu0
  %v2104 = vadd.f32 %v2075, %v2103
  %2105 = vmatmul.f32.gmra.mxu0 %v1598
  %v2106 = vpop.f32.mrf.mxu0
  %v2107 = vadd.f32 %v2078, %v2106
  %2108 = vmatmul.f32.gmra.mxu0 %v1603
  %v2109 = vpop.f32.mrf.mxu0
  %v2110 = vadd.f32 %v2081, %v2109
  %2111 = vdwg.mxu0
  %2112 = vmatpush.msra.mxu0 %v205
  %2113 = vmatpush.msra.mxu0 %v201
  %2114 = vmatpush.msra.mxu0 %v197
  %2115 = vmatpush.msra.mxu0 %v193
  %2116 = vmatpush.msra.mxu0 %v189
  %2117 = vmatpush.msra.mxu0 %v185
  %2118 = vmatpush.msra.mxu0 %v181
  %2119 = vmatpush.msra.mxu0 %v177
  %2120 = vmatpush.msra.mxu0 %v173
  %2121 = vmatpush.msra.mxu0 %v169
  %2122 = vmatpush.msra.mxu0 %v165
  %2123 = vmatpush.msra.mxu0 %v161
  %2124 = vmatpush.msra.mxu0 %v157
  %2125 = vmatpush.msra.mxu0 %v153
  %2126 = vmatpush.msra.mxu0 %v149
  %2127 = vmatpush.msra.mxu0 %v145
  %2128 = vmatmul.f32.gmra.mxu0 %v1589
  %v2129 = vpop.f32.mrf.mxu0
  %v2130 = vadd.f32 %v2101, %v2129
  %2131 = vmatmul.f32.gmra.mxu0 %v1594
  %v2132 = vpop.f32.mrf.mxu0
  %v2133 = vadd.f32 %v2104, %v2132
  %2134 = vmatmul.f32.gmra.mxu0 %v1599
  %v2135 = vpop.f32.mrf.mxu0
  %v2136 = vadd.f32 %v2107, %v2135
  %2137 = vmatmul.f32.gmra.mxu0 %v1604
  %v2138 = vpop.f32.mrf.mxu0
  %v2139 = vadd.f32 %v2110, %v2138
  %2140 = vdwg.mxu0
  %2141 = vmatpush.msra.mxu0 %v269
  %2142 = vmatpush.msra.mxu0 %v265
  %2143 = vmatpush.msra.mxu0 %v261
  %2144 = vmatpush.msra.mxu0 %v257
  %2145 = vmatpush.msra.mxu0 %v253
  %2146 = vmatpush.msra.mxu0 %v249
  %2147 = vmatpush.msra.mxu0 %v245
  %2148 = vmatpush.msra.mxu0 %v241
  %2149 = vmatpush.msra.mxu0 %v237
  %2150 = vmatpush.msra.mxu0 %v233
  %2151 = vmatpush.msra.mxu0 %v229
  %2152 = vmatpush.msra.mxu0 %v225
  %2153 = vmatpush.msra.mxu0 %v221
  %2154 = vmatpush.msra.mxu0 %v217
  %2155 = vmatpush.msra.mxu0 %v213
  %2156 = vmatpush.msra.mxu0 %v209
  %2157 = vmatmul.f32.gmra.mxu0 %v1590
  %v2158 = vpop.f32.mrf.mxu0
  %v2159 = vadd.f32 %v2130, %v2158
  %2160 = vmatmul.f32.gmra.mxu0 %v1595
  %v2161 = vpop.f32.mrf.mxu0
  %v2162 = vadd.f32 %v2133, %v2161
  %2163 = vmatmul.f32.gmra.mxu0 %v1600
  %v2164 = vpop.f32.mrf.mxu0
  %v2165 = vadd.f32 %v2136, %v2164
  %2166 = vmatmul.f32.gmra.mxu0 %v1605
  %v2167 = vpop.f32.mrf.mxu0
  %v2168 = vadd.f32 %v2139, %v2167
  %2169 = vdwg.mxu0
  %2170 = vmatpush.msra.mxu0 0.0
  %2171 = vmatpush.msra.mxu0 0.0
  %2172 = vmatpush.msra.mxu0 0.0
  %2173 = vmatpush.msra.mxu0 0.0
  %2174 = vmatpush.msra.mxu0 0.0
  %2175 = vmatpush.msra.mxu0 0.0
  %2176 = vmatpush.msra.mxu0 0.0
  %2177 = vmatpush.msra.mxu0 0.0
  %2178 = vmatpush.msra.mxu0 %v301
  %2179 = vmatpush.msra.mxu0 %v297
  %2180 = vmatpush.msra.mxu0 %v293
  %2181 = vmatpush.msra.mxu0 %v289
  %2182 = vmatpush.msra.mxu0 %v285
  %2183 = vmatpush.msra.mxu0 %v281
  %2184 = vmatpush.msra.mxu0 %v277
  %2185 = vmatpush.msra.mxu0 %v273
  %2186 = vmatmul.f32.gmra.mxu0 %v1608
  %v2187 = vpop.f32.mrf.mxu0
  %v2188 = vadd.f32 %v2159, %v2187
  %2189 = vmatmul.f32.gmra.mxu0 %v1611
  %v2190 = vpop.f32.mrf.mxu0
  %v2191 = vadd.f32 %v2162, %v2190
  %2192 = vmatmul.f32.gmra.mxu0 %v1614
  %v2193 = vpop.f32.mrf.mxu0
  %v2194 = vadd.f32 %v2165, %v2193
  %2195 = vmatmul.f32.gmra.mxu0 %v1617
  %v2196 = vpop.f32.mrf.mxu0
  %v2197 = vadd.f32 %v2168, %v2196
  %2198 = vdwg.mxu0
  %v2199 = vmax.f32 %v1753, 0.0
  %v2200 = vmax.f32 %v1898, 0.0
  %v2201 = vmax.f32 %v2043, 0.0
  %v2202 = vmax.f32 %v2188, 0.0
  %v2203 = vmax.f32 %v1756, 0.0
  %v2204 = vmax.f32 %v1901, 0.0
  %v2205 = vmax.f32 %v2046, 0.0
  %v2206 = vmax.f32 %v2191, 0.0
  %v2207 = vmax.f32 %v1759, 0.0
  %v2208 = vmax.f32 %v1904, 0.0
  %v2209 = vmax.f32 %v2049, 0.0
  %v2210 = vmax.f32 %v2194, 0.0
  %v2211 = vmax.f32 %v1762, 0.0
  %v2212 = vmax.f32 %v1907, 0.0
  %v2213 = vmax.f32 %v2052, 0.0
  %v2214 = vmax.f32 %v2197, 0.0
  %v2215 = vmax.f32 %v1570, %v2199
  %v2216 = vmax.f32 %v1571, %v2200
  %v2217 = vmax.f32 %v1572, %v2201
  %v2218 = vmax.f32 %v1573, %v2202
  %v2219 = vmax.f32 %v1574, %v2203
  %v2220 = vmax.f32 %v1575, %v2204
  %v2221 = vmax.f32 %v1576, %v2205
  %v2222 = vmax.f32 %v1577, %v2206
  %v2223 = vmax.f32 %v1578, %v2207
  %v2224 = vmax.f32 %v1579, %v2208
  %v2225 = vmax.f32 %v1580, %v2209
  %v2226 = vmax.f32 %v1581, %v2210
  %v2227 = vmax.f32 %v1582, %v2211
  %v2228 = vmax.f32 %v1583, %v2212
  %v2229 = vmax.f32 %v1584, %v2213
  %v2230 = vmax.f32 %v1585, %v2214
  %s2231 = scalar_lea.vmem %s0, 480
  %v2232 = vld [vmem:[%s2231] sm:$0xff]
  %v2233 = vld [vmem:[%s2231 + $0x8] sm:$0xff]
  %v2234 = vld [vmem:[%s2231 + $0x10] sm:$0xff]
  %v2235 = vld [vmem:[%s2231 + $0x18] sm:$0xff]
  %v2236 = vld [vmem:[%s2231 + $0x20] sm:$0xff]
  %v2237 = vld [vmem:[%s2231 + $0x28] sm:$0xff]
  %v2238 = vld [vmem:[%s2231 + $0x30] sm:$0xff]
  %v2239 = vld [vmem:[%s2231 + $0x38] sm:$0xff]
  %v2240 = vld [vmem:[%s2231 + $0x40] sm:$0xff]
  %v2241 = vld [vmem:[%s2231 + $0x48] sm:$0xff]
  %v2242 = vld [vmem:[%s2231 + $0x50] sm:$0xff]
  %v2243 = vld [vmem:[%s2231 + $0x58] sm:$0xff]
  %v2244 = vld [vmem:[%s2231 + $0x60] sm:$0xff]
  %v2245 = vld [vmem:[%s2231 + $0x68] sm:$0xff]
  %v2246 = vld [vmem:[%s2231 + $0x70] sm:$0xff]
  %v2247 = vld [vmem:[%s2231 + $0x78] sm:$0xff]
  %v2248 = vld [vmem:[%s2231 + $0x80] sm:$0xff]
  %v2249 = vld [vmem:[%s2231 + $0x88] sm:$0xff]
  %v2250 = vld [vmem:[%s2231 + $0x90] sm:$0xff]
  %v2251 = vld [vmem:[%s2231 + $0x98] sm:$0xff]
  %v2253 = vsel %vm332, %v2236, 0
  %v2256 = vsel %vm332, %v2241, 0
  %v2259 = vsel %vm332, %v2246, 0
  %v2262 = vsel %vm332, %v2251, 0
  %2264 = vmatpush.msra.mxu0 %v74
  %2265 = vmatpush.msra.mxu0 %v70
  %2266 = vmatpush.msra.mxu0 %v66
  %2267 = vmatpush.msra.mxu0 %v62
  %2268 = vmatpush.msra.mxu0 %v58
  %2269 = vmatpush.msra.mxu0 %v54
  %2270 = vmatpush.msra.mxu0 %v50
  %2271 = vmatpush.msra.mxu0 %v46
  %2272 = vmatpush.msra.mxu0 %v42
  %2273 = vmatpush.msra.mxu0 %v38
  %2274 = vmatpush.msra.mxu0 %v34
  %2275 = vmatpush.msra.mxu0 %v30
  %2276 = vmatpush.msra.mxu0 %v26
  %2277 = vmatpush.msra.mxu0 %v22
  %2278 = vmatpush.msra.mxu0 %v18
  %2279 = vmatpush.msra.mxu0 %v14
  %2280 = vmatmul.f32.gmra.mxu0 %v2232
  %v2281 = vpop.f32.mrf.mxu0
  %v2282 = vadd.f32 %v324, %v2281
  %2283 = vmatmul.f32.gmra.mxu0 %v2237
  %v2284 = vpop.f32.mrf.mxu0
  %v2285 = vadd.f32 %v324, %v2284
  %2286 = vmatmul.f32.gmra.mxu0 %v2242
  %v2287 = vpop.f32.mrf.mxu0
  %v2288 = vadd.f32 %v324, %v2287
  %2289 = vmatmul.f32.gmra.mxu0 %v2247
  %v2290 = vpop.f32.mrf.mxu0
  %v2291 = vadd.f32 %v324, %v2290
  %2292 = vdwg.mxu0
  %2293 = vmatpush.msra.mxu0 %v138
  %2294 = vmatpush.msra.mxu0 %v134
  %2295 = vmatpush.msra.mxu0 %v130
  %2296 = vmatpush.msra.mxu0 %v126
  %2297 = vmatpush.msra.mxu0 %v122
  %2298 = vmatpush.msra.mxu0 %v118
  %2299 = vmatpush.msra.mxu0 %v114
  %2300 = vmatpush.msra.mxu0 %v110
  %2301 = vmatpush.msra.mxu0 %v106
  %2302 = vmatpush.msra.mxu0 %v102
  %2303 = vmatpush.msra.mxu0 %v98
  %2304 = vmatpush.msra.mxu0 %v94
  %2305 = vmatpush.msra.mxu0 %v90
  %2306 = vmatpush.msra.mxu0 %v86
  %2307 = vmatpush.msra.mxu0 %v82
  %2308 = vmatpush.msra.mxu0 %v78
  %2309 = vmatmul.f32.gmra.mxu0 %v2233
  %v2310 = vpop.f32.mrf.mxu0
  %v2311 = vadd.f32 %v2282, %v2310
  %2312 = vmatmul.f32.gmra.mxu0 %v2238
  %v2313 = vpop.f32.mrf.mxu0
  %v2314 = vadd.f32 %v2285, %v2313
  %2315 = vmatmul.f32.gmra.mxu0 %v2243
  %v2316 = vpop.f32.mrf.mxu0
  %v2317 = vadd.f32 %v2288, %v2316
  %2318 = vmatmul.f32.gmra.mxu0 %v2248
  %v2319 = vpop.f32.mrf.mxu0
  %v2320 = vadd.f32 %v2291, %v2319
  %2321 = vdwg.mxu0
  %2322 = vmatpush.msra.mxu0 %v202
  %2323 = vmatpush.msra.mxu0 %v198
  %2324 = vmatpush.msra.mxu0 %v194
  %2325 = vmatpush.msra.mxu0 %v190
  %2326 = vmatpush.msra.mxu0 %v186
  %2327 = vmatpush.msra.mxu0 %v182
  %2328 = vmatpush.msra.mxu0 %v178
  %2329 = vmatpush.msra.mxu0 %v174
  %2330 = vmatpush.msra.mxu0 %v170
  %2331 = vmatpush.msra.mxu0 %v166
  %2332 = vmatpush.msra.mxu0 %v162
  %2333 = vmatpush.msra.mxu0 %v158
  %2334 = vmatpush.msra.mxu0 %v154
  %2335 = vmatpush.msra.mxu0 %v150
  %2336 = vmatpush.msra.mxu0 %v146
  %2337 = vmatpush.msra.mxu0 %v142
  %2338 = vmatmul.f32.gmra.mxu0 %v2234
  %v2339 = vpop.f32.mrf.mxu0
  %v2340 = vadd.f32 %v2311, %v2339
  %2341 = vmatmul.f32.gmra.mxu0 %v2239
  %v2342 = vpop.f32.mrf.mxu0
  %v2343 = vadd.f32 %v2314, %v2342
  %2344 = vmatmul.f32.gmra.mxu0 %v2244
  %v2345 = vpop.f32.mrf.mxu0
  %v2346 = vadd.f32 %v2317, %v2345
  %2347 = vmatmul.f32.gmra.mxu0 %v2249
  %v2348 = vpop.f32.mrf.mxu0
  %v2349 = vadd.f32 %v2320, %v2348
  %2350 = vdwg.mxu0
  %2351 = vmatpush.msra.mxu0 %v266
  %2352 = vmatpush.msra.mxu0 %v262
  %2353 = vmatpush.msra.mxu0 %v258
  %2354 = vmatpush.msra.mxu0 %v254
  %2355 = vmatpush.msra.mxu0 %v250
  %2356 = vmatpush.msra.mxu0 %v246
  %2357 = vmatpush.msra.mxu0 %v242
  %2358 = vmatpush.msra.mxu0 %v238
  %2359 = vmatpush.msra.mxu0 %v234
  %2360 = vmatpush.msra.mxu0 %v230
  %2361 = vmatpush.msra.mxu0 %v226
  %2362 = vmatpush.msra.mxu0 %v222
  %2363 = vmatpush.msra.mxu0 %v218
  %2364 = vmatpush.msra.mxu0 %v214
  %2365 = vmatpush.msra.mxu0 %v210
  %2366 = vmatpush.msra.mxu0 %v206
  %2367 = vmatmul.f32.gmra.mxu0 %v2235
  %v2368 = vpop.f32.mrf.mxu0
  %v2369 = vadd.f32 %v2340, %v2368
  %2370 = vmatmul.f32.gmra.mxu0 %v2240
  %v2371 = vpop.f32.mrf.mxu0
  %v2372 = vadd.f32 %v2343, %v2371
  %2373 = vmatmul.f32.gmra.mxu0 %v2245
  %v2374 = vpop.f32.mrf.mxu0
  %v2375 = vadd.f32 %v2346, %v2374
  %2376 = vmatmul.f32.gmra.mxu0 %v2250
  %v2377 = vpop.f32.mrf.mxu0
  %v2378 = vadd.f32 %v2349, %v2377
  %2379 = vdwg.mxu0
  %2380 = vmatpush.msra.mxu0 0.0
  %2381 = vmatpush.msra.mxu0 0.0
  %2382 = vmatpush.msra.mxu0 0.0
  %2383 = vmatpush.msra.mxu0 0.0
  %2384 = vmatpush.msra.mxu0 0.0
  %2385 = vmatpush.msra.mxu0 0.0
  %2386 = vmatpush.msra.mxu0 0.0
  %2387 = vmatpush.msra.mxu0 0.0
  %2388 = vmatpush.msra.mxu0 %v298
  %2389 = vmatpush.msra.mxu0 %v294
  %2390 = vmatpush.msra.mxu0 %v290
  %2391 = vmatpush.msra.mxu0 %v286
  %2392 = vmatpush.msra.mxu0 %v282
  %2393 = vmatpush.msra.mxu0 %v278
  %2394 = vmatpush.msra.mxu0 %v274
  %2395 = vmatpush.msra.mxu0 %v270
  %2396 = vmatmul.f32.gmra.mxu0 %v2253
  %v2397 = vpop.f32.mrf.mxu0
  %v2398 = vadd.f32 %v2369, %v2397
  %2399 = vmatmul.f32.gmra.mxu0 %v2256
  %v2400 = vpop.f32.mrf.mxu0
  %v2401 = vadd.f32 %v2372, %v2400
  %2402 = vmatmul.f32.gmra.mxu0 %v2259
  %v2403 = vpop.f32.mrf.mxu0
  %v2404 = vadd.f32 %v2375, %v2403
  %2405 = vmatmul.f32.gmra.mxu0 %v2262
  %v2406 = vpop.f32.mrf.mxu0
  %v2407 = vadd.f32 %v2378, %v2406
  %2408 = vdwg.mxu0
  %2409 = vmatpush.msra.mxu0 %v75
  %2410 = vmatpush.msra.mxu0 %v71
  %2411 = vmatpush.msra.mxu0 %v67
  %2412 = vmatpush.msra.mxu0 %v63
  %2413 = vmatpush.msra.mxu0 %v59
  %2414 = vmatpush.msra.mxu0 %v55
  %2415 = vmatpush.msra.mxu0 %v51
  %2416 = vmatpush.msra.mxu0 %v47
  %2417 = vmatpush.msra.mxu0 %v43
  %2418 = vmatpush.msra.mxu0 %v39
  %2419 = vmatpush.msra.mxu0 %v35
  %2420 = vmatpush.msra.mxu0 %v31
  %2421 = vmatpush.msra.mxu0 %v27
  %2422 = vmatpush.msra.mxu0 %v23
  %2423 = vmatpush.msra.mxu0 %v19
  %2424 = vmatpush.msra.mxu0 %v15
  %2425 = vmatmul.f32.gmra.mxu0 %v2232
  %v2426 = vpop.f32.mrf.mxu0
  %v2427 = vadd.f32 %v325, %v2426
  %2428 = vmatmul.f32.gmra.mxu0 %v2237
  %v2429 = vpop.f32.mrf.mxu0
  %v2430 = vadd.f32 %v325, %v2429
  %2431 = vmatmul.f32.gmra.mxu0 %v2242
  %v2432 = vpop.f32.mrf.mxu0
  %v2433 = vadd.f32 %v325, %v2432
  %2434 = vmatmul.f32.gmra.mxu0 %v2247
  %v2435 = vpop.f32.mrf.mxu0
  %v2436 = vadd.f32 %v325, %v2435
  %2437 = vdwg.mxu0
  %2438 = vmatpush.msra.mxu0 %v139
  %2439 = vmatpush.msra.mxu0 %v135
  %2440 = vmatpush.msra.mxu0 %v131
  %2441 = vmatpush.msra.mxu0 %v127
  %2442 = vmatpush.msra.mxu0 %v123
  %2443 = vmatpush.msra.mxu0 %v119
  %2444 = vmatpush.msra.mxu0 %v115
  %2445 = vmatpush.msra.mxu0 %v111
  %2446 = vmatpush.msra.mxu0 %v107
  %2447 = vmatpush.msra.mxu0 %v103
  %2448 = vmatpush.msra.mxu0 %v99
  %2449 = vmatpush.msra.mxu0 %v95
  %2450 = vmatpush.msra.mxu0 %v91
  %2451 = vmatpush.msra.mxu0 %v87
  %2452 = vmatpush.msra.mxu0 %v83
  %2453 = vmatpush.msra.mxu0 %v79
  %2454 = vmatmul.f32.gmra.mxu0 %v2233
  %v2455 = vpop.f32.mrf.mxu0
  %v2456 = vadd.f32 %v2427, %v2455
  %2457 = vmatmul.f32.gmra.mxu0 %v2238
  %v2458 = vpop.f32.mrf.mxu0
  %v2459 = vadd.f32 %v2430, %v2458
  %2460 = vmatmul.f32.gmra.mxu0 %v2243
  %v2461 = vpop.f32.mrf.mxu0
  %v2462 = vadd.f32 %v2433, %v2461
  %2463 = vmatmul.f32.gmra.mxu0 %v2248
  %v2464 = vpop.f32.mrf.mxu0
  %v2465 = vadd.f32 %v2436, %v2464
  %2466 = vdwg.mxu0
  %2467 = vmatpush.msra.mxu0 %v203
  %2468 = vmatpush.msra.mxu0 %v199
  %2469 = vmatpush.msra.mxu0 %v195
  %2470 = vmatpush.msra.mxu0 %v191
  %2471 = vmatpush.msra.mxu0 %v187
  %2472 = vmatpush.msra.mxu0 %v183
  %2473 = vmatpush.msra.mxu0 %v179
  %2474 = vmatpush.msra.mxu0 %v175
  %2475 = vmatpush.msra.mxu0 %v171
  %2476 = vmatpush.msra.mxu0 %v167
  %2477 = vmatpush.msra.mxu0 %v163
  %2478 = vmatpush.msra.mxu0 %v159
  %2479 = vmatpush.msra.mxu0 %v155
  %2480 = vmatpush.msra.mxu0 %v151
  %2481 = vmatpush.msra.mxu0 %v147
  %2482 = vmatpush.msra.mxu0 %v143
  %2483 = vmatmul.f32.gmra.mxu0 %v2234
  %v2484 = vpop.f32.mrf.mxu0
  %v2485 = vadd.f32 %v2456, %v2484
  %2486 = vmatmul.f32.gmra.mxu0 %v2239
  %v2487 = vpop.f32.mrf.mxu0
  %v2488 = vadd.f32 %v2459, %v2487
  %2489 = vmatmul.f32.gmra.mxu0 %v2244
  %v2490 = vpop.f32.mrf.mxu0
  %v2491 = vadd.f32 %v2462, %v2490
  %2492 = vmatmul.f32.gmra.mxu0 %v2249
  %v2493 = vpop.f32.mrf.mxu0
  %v2494 = vadd.f32 %v2465, %v2493
  %2495 = vdwg.mxu0
  %2496 = vmatpush.msra.mxu0 %v267
  %2497 = vmatpush.msra.mxu0 %v263
  %2498 = vmatpush.msra.mxu0 %v259
  %2499 = vmatpush.msra.mxu0 %v255
  %2500 = vmatpush.msra.mxu0 %v251
  %2501 = vmatpush.msra.mxu0 %v247
  %2502 = vmatpush.msra.mxu0 %v243
  %2503 = vmatpush.msra.mxu0 %v239
  %2504 = vmatpush.msra.mxu0 %v235
  %2505 = vmatpush.msra.mxu0 %v231
  %2506 = vmatpush.msra.mxu0 %v227
  %2507 = vmatpush.msra.mxu0 %v223
  %2508 = vmatpush.msra.mxu0 %v219
  %2509 = vmatpush.msra.mxu0 %v215
  %2510 = vmatpush.msra.mxu0 %v211
  %2511 = vmatpush.msra.mxu0 %v207
  %2512 = vmatmul.f32.gmra.mxu0 %v2235
  %v2513 = vpop.f32.mrf.mxu0
  %v2514 = vadd.f32 %v2485, %v2513
  %2515 = vmatmul.f32.gmra.mxu0 %v2240
  %v2516 = vpop.f32.mrf.mxu0
  %v2517 = vadd.f32 %v2488, %v2516
  %2518 = vmatmul.f32.gmra.mxu0 %v2245
  %v2519 = vpop.f32.mrf.mxu0
  %v2520 = vadd.f32 %v2491, %v2519
  %2521 = vmatmul.f32.gmra.mxu0 %v2250
  %v2522 = vpop.f32.mrf.mxu0
  %v2523 = vadd.f32 %v2494, %v2522
  %2524 = vdwg.mxu0
  %2525 = vmatpush.msra.mxu0 0.0
  %2526 = vmatpush.msra.mxu0 0.0
  %2527 = vmatpush.msra.mxu0 0.0
  %2528 = vmatpush.msra.mxu0 0.0
  %2529 = vmatpush.msra.mxu0 0.0
  %2530 = vmatpush.msra.mxu0 0.0
  %2531 = vmatpush.msra.mxu0 0.0
  %2532 = vmatpush.msra.mxu0 0.0
  %2533 = vmatpush.msra.mxu0 %v299
  %2534 = vmatpush.msra.mxu0 %v295
  %2535 = vmatpush.msra.mxu0 %v291
  %2536 = vmatpush.msra.mxu0 %v287
  %2537 = vmatpush.msra.mxu0 %v283
  %2538 = vmatpush.msra.mxu0 %v279
  %2539 = vmatpush.msra.mxu0 %v275
  %2540 = vmatpush.msra.mxu0 %v271
  %2541 = vmatmul.f32.gmra.mxu0 %v2253
  %v2542 = vpop.f32.mrf.mxu0
  %v2543 = vadd.f32 %v2514, %v2542
  %2544 = vmatmul.f32.gmra.mxu0 %v2256
  %v2545 = vpop.f32.mrf.mxu0
  %v2546 = vadd.f32 %v2517, %v2545
  %2547 = vmatmul.f32.gmra.mxu0 %v2259
  %v2548 = vpop.f32.mrf.mxu0
  %v2549 = vadd.f32 %v2520, %v2548
  %2550 = vmatmul.f32.gmra.mxu0 %v2262
  %v2551 = vpop.f32.mrf.mxu0
  %v2552 = vadd.f32 %v2523, %v2551
  %2553 = vdwg.mxu0
  %2554 = vmatpush.msra.mxu0 %v76
  %2555 = vmatpush.msra.mxu0 %v72
  %2556 = vmatpush.msra.mxu0 %v68
  %2557 = vmatpush.msra.mxu0 %v64
  %2558 = vmatpush.msra.mxu0 %v60
  %2559 = vmatpush.msra.mxu0 %v56
  %2560 = vmatpush.msra.mxu0 %v52
  %2561 = vmatpush.msra.mxu0 %v48
  %2562 = vmatpush.msra.mxu0 %v44
  %2563 = vmatpush.msra.mxu0 %v40
  %2564 = vmatpush.msra.mxu0 %v36
  %2565 = vmatpush.msra.mxu0 %v32
  %2566 = vmatpush.msra.mxu0 %v28
  %2567 = vmatpush.msra.mxu0 %v24
  %2568 = vmatpush.msra.mxu0 %v20
  %2569 = vmatpush.msra.mxu0 %v16
  %2570 = vmatmul.f32.gmra.mxu0 %v2232
  %v2571 = vpop.f32.mrf.mxu0
  %v2572 = vadd.f32 %v326, %v2571
  %2573 = vmatmul.f32.gmra.mxu0 %v2237
  %v2574 = vpop.f32.mrf.mxu0
  %v2575 = vadd.f32 %v326, %v2574
  %2576 = vmatmul.f32.gmra.mxu0 %v2242
  %v2577 = vpop.f32.mrf.mxu0
  %v2578 = vadd.f32 %v326, %v2577
  %2579 = vmatmul.f32.gmra.mxu0 %v2247
  %v2580 = vpop.f32.mrf.mxu0
  %v2581 = vadd.f32 %v326, %v2580
  %2582 = vdwg.mxu0
  %2583 = vmatpush.msra.mxu0 %v140
  %2584 = vmatpush.msra.mxu0 %v136
  %2585 = vmatpush.msra.mxu0 %v132
  %2586 = vmatpush.msra.mxu0 %v128
  %2587 = vmatpush.msra.mxu0 %v124
  %2588 = vmatpush.msra.mxu0 %v120
  %2589 = vmatpush.msra.mxu0 %v116
  %2590 = vmatpush.msra.mxu0 %v112
  %2591 = vmatpush.msra.mxu0 %v108
  %2592 = vmatpush.msra.mxu0 %v104
  %2593 = vmatpush.msra.mxu0 %v100
  %2594 = vmatpush.msra.mxu0 %v96
  %2595 = vmatpush.msra.mxu0 %v92
  %2596 = vmatpush.msra.mxu0 %v88
  %2597 = vmatpush.msra.mxu0 %v84
  %2598 = vmatpush.msra.mxu0 %v80
  %2599 = vmatmul.f32.gmra.mxu0 %v2233
  %v2600 = vpop.f32.mrf.mxu0
  %v2601 = vadd.f32 %v2572, %v2600
  %2602 = vmatmul.f32.gmra.mxu0 %v2238
  %v2603 = vpop.f32.mrf.mxu0
  %v2604 = vadd.f32 %v2575, %v2603
  %2605 = vmatmul.f32.gmra.mxu0 %v2243
  %v2606 = vpop.f32.mrf.mxu0
  %v2607 = vadd.f32 %v2578, %v2606
  %2608 = vmatmul.f32.gmra.mxu0 %v2248
  %v2609 = vpop.f32.mrf.mxu0
  %v2610 = vadd.f32 %v2581, %v2609
  %2611 = vdwg.mxu0
  %2612 = vmatpush.msra.mxu0 %v204
  %2613 = vmatpush.msra.mxu0 %v200
  %2614 = vmatpush.msra.mxu0 %v196
  %2615 = vmatpush.msra.mxu0 %v192
  %2616 = vmatpush.msra.mxu0 %v188
  %2617 = vmatpush.msra.mxu0 %v184
  %2618 = vmatpush.msra.mxu0 %v180
  %2619 = vmatpush.msra.mxu0 %v176
  %2620 = vmatpush.msra.mxu0 %v172
  %2621 = vmatpush.msra.mxu0 %v168
  %2622 = vmatpush.msra.mxu0 %v164
  %2623 = vmatpush.msra.mxu0 %v160
  %2624 = vmatpush.msra.mxu0 %v156
  %2625 = vmatpush.msra.mxu0 %v152
  %2626 = vmatpush.msra.mxu0 %v148
  %2627 = vmatpush.msra.mxu0 %v144
  %2628 = vmatmul.f32.gmra.mxu0 %v2234
  %v2629 = vpop.f32.mrf.mxu0
  %v2630 = vadd.f32 %v2601, %v2629
  %2631 = vmatmul.f32.gmra.mxu0 %v2239
  %v2632 = vpop.f32.mrf.mxu0
  %v2633 = vadd.f32 %v2604, %v2632
  %2634 = vmatmul.f32.gmra.mxu0 %v2244
  %v2635 = vpop.f32.mrf.mxu0
  %v2636 = vadd.f32 %v2607, %v2635
  %2637 = vmatmul.f32.gmra.mxu0 %v2249
  %v2638 = vpop.f32.mrf.mxu0
  %v2639 = vadd.f32 %v2610, %v2638
  %2640 = vdwg.mxu0
  %2641 = vmatpush.msra.mxu0 %v268
  %2642 = vmatpush.msra.mxu0 %v264
  %2643 = vmatpush.msra.mxu0 %v260
  %2644 = vmatpush.msra.mxu0 %v256
  %2645 = vmatpush.msra.mxu0 %v252
  %2646 = vmatpush.msra.mxu0 %v248
  %2647 = vmatpush.msra.mxu0 %v244
  %2648 = vmatpush.msra.mxu0 %v240
  %2649 = vmatpush.msra.mxu0 %v236
  %2650 = vmatpush.msra.mxu0 %v232
  %2651 = vmatpush.msra.mxu0 %v228
  %2652 = vmatpush.msra.mxu0 %v224
  %2653 = vmatpush.msra.mxu0 %v220
  %2654 = vmatpush.msra.mxu0 %v216
  %2655 = vmatpush.msra.mxu0 %v212
  %2656 = vmatpush.msra.mxu0 %v208
  %2657 = vmatmul.f32.gmra.mxu0 %v2235
  %v2658 = vpop.f32.mrf.mxu0
  %v2659 = vadd.f32 %v2630, %v2658
  %2660 = vmatmul.f32.gmra.mxu0 %v2240
  %v2661 = vpop.f32.mrf.mxu0
  %v2662 = vadd.f32 %v2633, %v2661
  %2663 = vmatmul.f32.gmra.mxu0 %v2245
  %v2664 = vpop.f32.mrf.mxu0
  %v2665 = vadd.f32 %v2636, %v2664
  %2666 = vmatmul.f32.gmra.mxu0 %v2250
  %v2667 = vpop.f32.mrf.mxu0
  %v2668 = vadd.f32 %v2639, %v2667
  %2669 = vdwg.mxu0
  %2670 = vmatpush.msra.mxu0 0.0
  %2671 = vmatpush.msra.mxu0 0.0
  %2672 = vmatpush.msra.mxu0 0.0
  %2673 = vmatpush.msra.mxu0 0.0
  %2674 = vmatpush.msra.mxu0 0.0
  %2675 = vmatpush.msra.mxu0 0.0
  %2676 = vmatpush.msra.mxu0 0.0
  %2677 = vmatpush.msra.mxu0 0.0
  %2678 = vmatpush.msra.mxu0 %v300
  %2679 = vmatpush.msra.mxu0 %v296
  %2680 = vmatpush.msra.mxu0 %v292
  %2681 = vmatpush.msra.mxu0 %v288
  %2682 = vmatpush.msra.mxu0 %v284
  %2683 = vmatpush.msra.mxu0 %v280
  %2684 = vmatpush.msra.mxu0 %v276
  %2685 = vmatpush.msra.mxu0 %v272
  %2686 = vmatmul.f32.gmra.mxu0 %v2253
  %v2687 = vpop.f32.mrf.mxu0
  %v2688 = vadd.f32 %v2659, %v2687
  %2689 = vmatmul.f32.gmra.mxu0 %v2256
  %v2690 = vpop.f32.mrf.mxu0
  %v2691 = vadd.f32 %v2662, %v2690
  %2692 = vmatmul.f32.gmra.mxu0 %v2259
  %v2693 = vpop.f32.mrf.mxu0
  %v2694 = vadd.f32 %v2665, %v2693
  %2695 = vmatmul.f32.gmra.mxu0 %v2262
  %v2696 = vpop.f32.mrf.mxu0
  %v2697 = vadd.f32 %v2668, %v2696
  %2698 = vdwg.mxu0
  %2699 = vmatpush.msra.mxu0 %v77
  %2700 = vmatpush.msra.mxu0 %v73
  %2701 = vmatpush.msra.mxu0 %v69
  %2702 = vmatpush.msra.mxu0 %v65
  %2703 = vmatpush.msra.mxu0 %v61
  %2704 = vmatpush.msra.mxu0 %v57
  %2705 = vmatpush.msra.mxu0 %v53
  %2706 = vmatpush.msra.mxu0 %v49
  %2707 = vmatpush.msra.mxu0 %v45
  %2708 = vmatpush.msra.mxu0 %v41
  %2709 = vmatpush.msra.mxu0 %v37
  %2710 = vmatpush.msra.mxu0 %v33
  %2711 = vmatpush.msra.mxu0 %v29
  %2712 = vmatpush.msra.mxu0 %v25
  %2713 = vmatpush.msra.mxu0 %v21
  %2714 = vmatpush.msra.mxu0 %v17
  %2715 = vmatmul.f32.gmra.mxu0 %v2232
  %v2716 = vpop.f32.mrf.mxu0
  %v2717 = vadd.f32 %v327, %v2716
  %2718 = vmatmul.f32.gmra.mxu0 %v2237
  %v2719 = vpop.f32.mrf.mxu0
  %v2720 = vadd.f32 %v327, %v2719
  %2721 = vmatmul.f32.gmra.mxu0 %v2242
  %v2722 = vpop.f32.mrf.mxu0
  %v2723 = vadd.f32 %v327, %v2722
  %2724 = vmatmul.f32.gmra.mxu0 %v2247
  %v2725 = vpop.f32.mrf.mxu0
  %v2726 = vadd.f32 %v327, %v2725
  %2727 = vdwg.mxu0
  %2728 = vmatpush.msra.mxu0 %v141
  %2729 = vmatpush.msra.mxu0 %v137
  %2730 = vmatpush.msra.mxu0 %v133
  %2731 = vmatpush.msra.mxu0 %v129
  %2732 = vmatpush.msra.mxu0 %v125
  %2733 = vmatpush.msra.mxu0 %v121
  %2734 = vmatpush.msra.mxu0 %v117
  %2735 = vmatpush.msra.mxu0 %v113
  %2736 = vmatpush.msra.mxu0 %v109
  %2737 = vmatpush.msra.mxu0 %v105
  %2738 = vmatpush.msra.mxu0 %v101
  %2739 = vmatpush.msra.mxu0 %v97
  %2740 = vmatpush.msra.mxu0 %v93
  %2741 = vmatpush.msra.mxu0 %v89
  %2742 = vmatpush.msra.mxu0 %v85
  %2743 = vmatpush.msra.mxu0 %v81
  %2744 = vmatmul.f32.gmra.mxu0 %v2233
  %v2745 = vpop.f32.mrf.mxu0
  %v2746 = vadd.f32 %v2717, %v2745
  %2747 = vmatmul.f32.gmra.mxu0 %v2238
  %v2748 = vpop.f32.mrf.mxu0
  %v2749 = vadd.f32 %v2720, %v2748
  %2750 = vmatmul.f32.gmra.mxu0 %v2243
  %v2751 = vpop.f32.mrf.mxu0
  %v2752 = vadd.f32 %v2723, %v2751
  %2753 = vmatmul.f32.gmra.mxu0 %v2248
  %v2754 = vpop.f32.mrf.mxu0
  %v2755 = vadd.f32 %v2726, %v2754
  %2756 = vdwg.mxu0
  %2757 = vmatpush.msra.mxu0 %v205
  %2758 = vmatpush.msra.mxu0 %v201
  %2759 = vmatpush.msra.mxu0 %v197
  %2760 = vmatpush.msra.mxu0 %v193
  %2761 = vmatpush.msra.mxu0 %v189
  %2762 = vmatpush.msra.mxu0 %v185
  %2763 = vmatpush.msra.mxu0 %v181
  %2764 = vmatpush.msra.mxu0 %v177
  %2765 = vmatpush.msra.mxu0 %v173
  %2766 = vmatpush.msra.mxu0 %v169
  %2767 = vmatpush.msra.mxu0 %v165
  %2768 = vmatpush.msra.mxu0 %v161
  %2769 = vmatpush.msra.mxu0 %v157
  %2770 = vmatpush.msra.mxu0 %v153
  %2771 = vmatpush.msra.mxu0 %v149
  %2772 = vmatpush.msra.mxu0 %v145
  %2773 = vmatmul.f32.gmra.mxu0 %v2234
  %v2774 = vpop.f32.mrf.mxu0
  %v2775 = vadd.f32 %v2746, %v2774
  %2776 = vmatmul.f32.gmra.mxu0 %v2239
  %v2777 = vpop.f32.mrf.mxu0
  %v2778 = vadd.f32 %v2749, %v2777
  %2779 = vmatmul.f32.gmra.mxu0 %v2244
  %v2780 = vpop.f32.mrf.mxu0
  %v2781 = vadd.f32 %v2752, %v2780
  %2782 = vmatmul.f32.gmra.mxu0 %v2249
  %v2783 = vpop.f32.mrf.mxu0
  %v2784 = vadd.f32 %v2755, %v2783
  %2785 = vdwg.mxu0
  %2786 = vmatpush.msra.mxu0 %v269
  %2787 = vmatpush.msra.mxu0 %v265
  %2788 = vmatpush.msra.mxu0 %v261
  %2789 = vmatpush.msra.mxu0 %v257
  %2790 = vmatpush.msra.mxu0 %v253
  %2791 = vmatpush.msra.mxu0 %v249
  %2792 = vmatpush.msra.mxu0 %v245
  %2793 = vmatpush.msra.mxu0 %v241
  %2794 = vmatpush.msra.mxu0 %v237
  %2795 = vmatpush.msra.mxu0 %v233
  %2796 = vmatpush.msra.mxu0 %v229
  %2797 = vmatpush.msra.mxu0 %v225
  %2798 = vmatpush.msra.mxu0 %v221
  %2799 = vmatpush.msra.mxu0 %v217
  %2800 = vmatpush.msra.mxu0 %v213
  %2801 = vmatpush.msra.mxu0 %v209
  %2802 = vmatmul.f32.gmra.mxu0 %v2235
  %v2803 = vpop.f32.mrf.mxu0
  %v2804 = vadd.f32 %v2775, %v2803
  %2805 = vmatmul.f32.gmra.mxu0 %v2240
  %v2806 = vpop.f32.mrf.mxu0
  %v2807 = vadd.f32 %v2778, %v2806
  %2808 = vmatmul.f32.gmra.mxu0 %v2245
  %v2809 = vpop.f32.mrf.mxu0
  %v2810 = vadd.f32 %v2781, %v2809
  %2811 = vmatmul.f32.gmra.mxu0 %v2250
  %v2812 = vpop.f32.mrf.mxu0
  %v2813 = vadd.f32 %v2784, %v2812
  %2814 = vdwg.mxu0
  %2815 = vmatpush.msra.mxu0 0.0
  %2816 = vmatpush.msra.mxu0 0.0
  %2817 = vmatpush.msra.mxu0 0.0
  %2818 = vmatpush.msra.mxu0 0.0
  %2819 = vmatpush.msra.mxu0 0.0
  %2820 = vmatpush.msra.mxu0 0.0
  %2821 = vmatpush.msra.mxu0 0.0
  %2822 = vmatpush.msra.mxu0 0.0
  %2823 = vmatpush.msra.mxu0 %v301
  %2824 = vmatpush.msra.mxu0 %v297
  %2825 = vmatpush.msra.mxu0 %v293
  %2826 = vmatpush.msra.mxu0 %v289
  %2827 = vmatpush.msra.mxu0 %v285
  %2828 = vmatpush.msra.mxu0 %v281
  %2829 = vmatpush.msra.mxu0 %v277
  %2830 = vmatpush.msra.mxu0 %v273
  %2831 = vmatmul.f32.gmra.mxu0 %v2253
  %v2832 = vpop.f32.mrf.mxu0
  %v2833 = vadd.f32 %v2804, %v2832
  %2834 = vmatmul.f32.gmra.mxu0 %v2256
  %v2835 = vpop.f32.mrf.mxu0
  %v2836 = vadd.f32 %v2807, %v2835
  %2837 = vmatmul.f32.gmra.mxu0 %v2259
  %v2838 = vpop.f32.mrf.mxu0
  %v2839 = vadd.f32 %v2810, %v2838
  %2840 = vmatmul.f32.gmra.mxu0 %v2262
  %v2841 = vpop.f32.mrf.mxu0
  %v2842 = vadd.f32 %v2813, %v2841
  %2843 = vdwg.mxu0
  %v2844 = vmax.f32 %v2398, 0.0
  %v2845 = vmax.f32 %v2543, 0.0
  %v2846 = vmax.f32 %v2688, 0.0
  %v2847 = vmax.f32 %v2833, 0.0
  %v2848 = vmax.f32 %v2401, 0.0
  %v2849 = vmax.f32 %v2546, 0.0
  %v2850 = vmax.f32 %v2691, 0.0
  %v2851 = vmax.f32 %v2836, 0.0
  %v2852 = vmax.f32 %v2404, 0.0
  %v2853 = vmax.f32 %v2549, 0.0
  %v2854 = vmax.f32 %v2694, 0.0
  %v2855 = vmax.f32 %v2839, 0.0
  %v2856 = vmax.f32 %v2407, 0.0
  %v2857 = vmax.f32 %v2552, 0.0
  %v2858 = vmax.f32 %v2697, 0.0
  %v2859 = vmax.f32 %v2842, 0.0
  %v2860 = vmax.f32 %v2215, %v2844
  %v2861 = vmax.f32 %v2216, %v2845
  %v2862 = vmax.f32 %v2217, %v2846
  %v2863 = vmax.f32 %v2218, %v2847
  %v2864 = vmax.f32 %v2219, %v2848
  %v2865 = vmax.f32 %v2220, %v2849
  %v2866 = vmax.f32 %v2221, %v2850
  %v2867 = vmax.f32 %v2222, %v2851
  %v2868 = vmax.f32 %v2223, %v2852
  %v2869 = vmax.f32 %v2224, %v2853
  %v2870 = vmax.f32 %v2225, %v2854
  %v2871 = vmax.f32 %v2226, %v2855
  %v2872 = vmax.f32 %v2227, %v2856
  %v2873 = vmax.f32 %v2228, %v2857
  %v2874 = vmax.f32 %v2229, %v2858
  %v2875 = vmax.f32 %v2230, %v2859
  %2876 = vst [vmem:[%s3] sm:$0xff] %v2860
  %2877 = vst [vmem:[%s3 + $0x8] sm:$0xff] %v2861
  %2878 = vst [vmem:[%s3 + $0x10] sm:$0xff] %v2862
  %2879 = vst [vmem:[%s3 + $0x18] sm:$0xff] %v2863
  %2880 = vst [vmem:[%s3 + $0x20] sm:$0xff] %v2864
  %2881 = vst [vmem:[%s3 + $0x28] sm:$0xff] %v2865
  %2882 = vst [vmem:[%s3 + $0x30] sm:$0xff] %v2866
  %2883 = vst [vmem:[%s3 + $0x38] sm:$0xff] %v2867
  %2884 = vst [vmem:[%s3 + $0x40] sm:$0xff] %v2868
  %2885 = vst [vmem:[%s3 + $0x48] sm:$0xff] %v2869
  %2886 = vst [vmem:[%s3 + $0x50] sm:$0xff] %v2870
  %2887 = vst [vmem:[%s3 + $0x58] sm:$0xff] %v2871
  %2888 = vst [vmem:[%s3 + $0x60] sm:$0xff] %v2872
  %2889 = vst [vmem:[%s3 + $0x68] sm:$0xff] %v2873
  %2890 = vst [vmem:[%s3 + $0x70] sm:$0xff] %v2874
  %2891 = vst [vmem:[%s3 + $0x78] sm:$0xff] %v2875
  // Predicated region
  $region14: #{vgg_forward.7} parent=0 // pred_check
    _
  $region15: #{vgg_forward.7} parent=0 // pred_check_branch
    %2893 = sbr.rel (0) target = $region17
  $region16: #{vgg_forward.7} parent=0 // pred_region
    _
  $region17: #{vgg_forward.7} parent=0 // pred_fallthru
    _
  // Predicated region
  $region18: #{vgg_forward.7} parent=0 // pred_check
    _
  $region19: #{vgg_forward.7} parent=0 // pred_check_branch
    %2895 = sbr.rel (0) target = $region21
  $region20: #{vgg_forward.7} parent=0 // pred_region
    _
  $region21: #{vgg_forward.7} parent=0 // pred_fallthru
    _

// kernel: vgg_forward.11
$region0: #{vgg_forward.11}
  #allocation0 [shape = 'u32[]', space=smem, size = 0x4, offset = 0x4, fixed_abs, tag = 'smem constant byte address 0x4 - core index']
  #allocation1 [shape = 'u32[72,128]{1,0:T(1,128)}', space=vmem, size = 0x9000, scoped, tag = 'internal scratch']
  #allocation2 [shape = 'f32[2,2]{1,0:T(2,128)}', space=vmem, size = 0x400, scoped, tag = 'scratch operand']
  %s0 = inlined_call_operand.vmem [shape: f32[2,256], index: 0, kind: input, shape index: {}]
  %s1 = inlined_call_operand.vmem [shape: f32[256,2], index: 1, kind: input, shape index: {}]
  %s2 = inlined_call_operand.vmem [shape: f32[1,2], index: 2, kind: input, shape index: {}]
  %s3 = inlined_call_operand.hbm [shape: f32[2,2], index: 3, kind: output, shape index: {}]
  %s4 = sld [smem:[#allocation0]]
  $region30: #{vgg_forward.11} parent=0
    _
  %s6 = ssub.s32 1, %s4
  %s7 = scalar_select 0, %s6, %s4
  $region1: #{vgg_forward.11} parent=0
    #allocation3 [shape = 'u8[1024]{0}', space=vmem, size = 0x400, scoped, tag = 'output window, operand 0, single buffered']
    #allocation4 [shape = 's32[1]{0}', space=sflag, size = 0x4, scoped, tag = 'scoped memory for vgg_forward.11']
    %8 = vsyncpa [#allocation4], 0
    // Predicated region
    $region2: #{vgg_forward.11} parent=1 // pred_check
      _
    $region3: #{vgg_forward.11} parent=1 // pred_check_branch
      %10 = sbr.rel (0) target = $region5
    $region4: #{vgg_forward.11} parent=1 // pred_region
      _
    $region5: #{vgg_forward.11} parent=1 // pred_fallthru
      _
    // Predicated region
    $region6: #{vgg_forward.11} parent=1 // pred_check
      _
    $region7: #{vgg_forward.11} parent=1 // pred_check_branch
      %12 = sbr.rel (0) target = $region9
    $region8: #{vgg_forward.11} parent=1 // pred_region
      _
    $region9: #{vgg_forward.11} parent=1 // pred_fallthru
      _
    // Predicated region
    $region10: #{vgg_forward.11} parent=1 // pred_check
      _
    $region11: #{vgg_forward.11} parent=1 // pred_check_branch
      %14 = sbr.rel (0) target = $region13
    $region12: #{vgg_forward.11} parent=1 // pred_region
      _
    $region13: #{vgg_forward.11} parent=1 // pred_fallthru
      _
    %p15 = scmp.eq.s32.totalorder 0, 0
    // Predicated region
    $region14: #{vgg_forward.11} parent=1 // pred_check
      %p16 = pneg %p15
    $region15: #{vgg_forward.11} parent=1 // pred_check_branch
      %18 = sbr.rel (%p16) target = $region17
    $region16: #{vgg_forward.11} parent=1 // pred_region
      %vm19 = vcmask 9216
      %20 = vst.msk [vmem:[#allocation2] sm:$0x3] %vm19, 0.0
    $region17: #{vgg_forward.11} parent=1 // pred_fallthru
      _
    %v21 = vld [vmem:[#allocation2] sm:$0x3]
    %v22 = vld [vmem:[%s0] sm:$0xf]
    %v23 = vld [vmem:[%s1] sm:$0xff]
    %v24 = vld [vmem:[%s1 + $0x8] sm:$0xff]
    %v25 = vld [vmem:[%s1 + $0x10] sm:$0xff]
    %v26 = vld [vmem:[%s1 + $0x18] sm:$0xff]
    %v27 = vld [vmem:[%s1 + $0x20] sm:$0xff]
    %v28 = vld [vmem:[%s1 + $0x28] sm:$0xff]
    %v29 = vld [vmem:[%s1 + $0x30] sm:$0xff]
    %v30 = vld [vmem:[%s1 + $0x38] sm:$0xff]
    %v31 = vld [vmem:[%s1 + $0x40] sm:$0xff]
    %v32 = vld [vmem:[%s1 + $0x48] sm:$0xff]
    %v33 = vld [vmem:[%s1 + $0x50] sm:$0xff]
    %v34 = vld [vmem:[%s1 + $0x58] sm:$0xff]
    %v35 = vld [vmem:[%s1 + $0x60] sm:$0xff]
    %v36 = vld [vmem:[%s1 + $0x68] sm:$0xff]
    %v37 = vld [vmem:[%s1 + $0x70] sm:$0xff]
    %v38 = vld [vmem:[%s1 + $0x78] sm:$0xff]
    %v39 = vld [vmem:[%s1 + $0x80] sm:$0xff]
    %v40 = vld [vmem:[%s1 + $0x88] sm:$0xff]
    %v41 = vld [vmem:[%s1 + $0x90] sm:$0xff]
    %v42 = vld [vmem:[%s1 + $0x98] sm:$0xff]
    %v43 = vld [vmem:[%s1 + $0xa0] sm:$0xff]
    %v44 = vld [vmem:[%s1 + $0xa8] sm:$0xff]
    %v45 = vld [vmem:[%s1 + $0xb0] sm:$0xff]
    %v46 = vld [vmem:[%s1 + $0xb8] sm:$0xff]
    %v47 = vld [vmem:[%s1 + $0xc0] sm:$0xff]
    %v48 = vld [vmem:[%s1 + $0xc8] sm:$0xff]
    %v49 = vld [vmem:[%s1 + $0xd0] sm:$0xff]
    %v50 = vld [vmem:[%s1 + $0xd8] sm:$0xff]
    %v51 = vld [vmem:[%s1 + $0xe0] sm:$0xff]
    %v52 = vld [vmem:[%s1 + $0xe8] sm:$0xff]
    %v53 = vld [vmem:[%s1 + $0xf0] sm:$0xff]
    %v54 = vld [vmem:[%s1 + $0xf8] sm:$0xff]
    %56 = vst [vmem:[#allocation1] ss:$4 sm:$0xff] %v22
    %v57 = vld.sshfl [vmem:[#allocation1] sm:$0xff pattern:$0x73625140]
    %v58 = vld.sshfl [vmem:[#allocation1 + $0x8] sm:$0xff pattern:$0x73625140]
    %61 = vmatpush.msra.mxu0 %v38
    %62 = vmatpush.msra.mxu0 %v37
    %63 = vmatpush.msra.mxu0 %v36
    %64 = vmatpush.msra.mxu0 %v35
    %65 = vmatpush.msra.mxu0 %v34
    %66 = vmatpush.msra.mxu0 %v33
    %67 = vmatpush.msra.mxu0 %v32
    %68 = vmatpush.msra.mxu0 %v31
    %69 = vmatpush.msra.mxu0 %v30
    %70 = vmatpush.msra.mxu0 %v29
    %71 = vmatpush.msra.mxu0 %v28
    %72 = vmatpush.msra.mxu0 %v27
    %73 = vmatpush.msra.mxu0 %v26
    %74 = vmatpush.msra.mxu0 %v25
    %75 = vmatpush.msra.mxu0 %v24
    %76 = vmatpush.msra.mxu0 %v23
    %77 = vmatmul.f32.gmra.mxu0 %v57
    %v78 = vpop.f32.mrf.mxu0
    %v79 = vadd.f32 0.0, %v78
    %80 = vdwg.mxu0
    %81 = vmatpush.msra.mxu0 %v54
    %82 = vmatpush.msra.mxu0 %v53
    %83 = vmatpush.msra.mxu0 %v52
    %84 = vmatpush.msra.mxu0 %v51
    %85 = vmatpush.msra.mxu0 %v50
    %86 = vmatpush.msra.mxu0 %v49
    %87 = vmatpush.msra.mxu0 %v48
    %88 = vmatpush.msra.mxu0 %v47
    %89 = vmatpush.msra.mxu0 %v46
    %90 = vmatpush.msra.mxu0 %v45
    %91 = vmatpush.msra.mxu0 %v44
    %92 = vmatpush.msra.mxu0 %v43
    %93 = vmatpush.msra.mxu0 %v42
    %94 = vmatpush.msra.mxu0 %v41
    %95 = vmatpush.msra.mxu0 %v40
    %96 = vmatpush.msra.mxu0 %v39
    %97 = vmatmul.f32.gmra.mxu0 %v58
    %v98 = vpop.f32.mrf.mxu0
    %v99 = vadd.f32 %v79, %v98
    %100 = vdwg.mxu0
    %v101 = vadd.f32 %v21, %v99
    %vm102 = vcmask 9216
    %103 = vst.msk [vmem:[#allocation2] sm:$0x3] %vm102, %v101
    // Predicated region
    $region18: #{vgg_forward.11} parent=1 // pred_check
      %p104 = pneg %p15
    $region19: #{vgg_forward.11} parent=1 // pred_check_branch
      %106 = sbr.rel (%p104) target = $region21
    $region20: #{vgg_forward.11} parent=1 // pred_region
      %v107 = vld [vmem:[#allocation2] sm:$0x3]
      %v108 = vld [vmem:[%s2] sm:$0x1]
      %v110 = vperm.slane %v108, 0
      %v112 = vadd.f32 %v107, %v110
      %113 = vst.msk [vmem:[#allocation3] sm:$0x3] %vm102, %v112
    $region21: #{vgg_forward.11} parent=1 // pred_fallthru
      _
    // Predicated region
    $region22: #{vgg_forward.11} parent=1 // pred_check
      _
    $region23: #{vgg_forward.11} parent=1 // pred_check_branch
      %115 = sbr.rel (0) target = $region25
    $region24: #{vgg_forward.11} parent=1 // pred_region
      %117 = vsyncadd [#allocation4], 0
      %s119 = sshll.u32 [#allocation3], 4
      %s120 = int_to_ptr.vmem [resolvable:$true] %s119
      %s121 = sshll.u32 %s3, 4
      %s122 = int_to_ptr.hbm [resolvable:$true] %s121
      %124 = dma.vmem_to_hbm [thread:$0]  %s120, 32, %s122, [#allocation4]
    $region25: #{vgg_forward.11} parent=1 // pred_fallthru
      _
    // Predicated region
    $region26: #{vgg_forward.11} parent=1 // pred_check
      _
    $region27: #{vgg_forward.11} parent=1 // pred_check_branch
      %126 = sbr.rel (0) target = $region29
    $region28: #{vgg_forward.11} parent=1 // pred_region
      %128 = dma.done [#allocation4], 32
    $region29: #{vgg_forward.11} parent=1 // pred_fallthru
      _
    %129 = vsyncpa [#allocation4], 1

// kernel: vgg_forward.9
$region0: #{vgg_forward.9}
  #allocation0 [shape = 'u32[]', space=smem, size = 0x4, offset = 0x4, fixed_abs, tag = 'smem constant byte address 0x4 - core index']
  #allocation1 [shape = 'u32[72,128]{1,0:T(1,128)}', space=vmem, size = 0x9000, scoped, tag = 'internal scratch']
  #allocation2 [shape = 'f32[2,512]{1,0:T(2,128)}', space=vmem, size = 0x1000, scoped, tag = 'scratch operand']
  %s0 = inlined_call_operand.vmem [shape: bf16[2,25088], index: 0, kind: input, shape index: {}]
  %s1 = inlined_call_operand.hbm [shape: bf16[25088,512], index: 1, kind: input, shape index: {}]
  %s2 = inlined_call_operand.vmem [shape: f32[1,512], index: 2, kind: input, shape index: {}]
  %s3 = inlined_call_operand.vmem [shape: f32[2,512], index: 3, kind: output, shape index: {}]
  %s4 = sld [smem:[#allocation0]]
  $region57: #{vgg_forward.9} parent=0
    _
  %s6 = ssub.s32 1, %s4
  %s7 = scalar_select 0, %s6, %s4
  $region1: #{vgg_forward.9} parent=0
    #allocation3 [shape = 'u8[7340032]{0}', space=vmem, size = 0x700000, scoped, tag = 'input window, operand 1']
    #allocation4 [shape = 's32[2]{0}', space=sflag, size = 0x8, scoped, tag = 'scoped memory for vgg_forward.9']
    %8 = vsyncpa [#allocation4], 0
    %s9 = scalar_lea.sflag [#allocation4], 1
    %10 = vsyncpa %s9, 0
    loop: start=0, step=1, limit=9
    $region2: #{vgg_forward.9} parent=1 // loop_pre_header
      _
    $region3: #{vgg_forward.9} parent=1 // loop_header
      %s12 = sphi 0, %s16
      %p13 = scmp.ge.s32.totalorder %s12, 9
      %s22 = sphi 0, %s24
      %s25 = sphi 0, %s22
      %s26 = sphi 0, %s25
      %s42 = sphi 0, %s26
      %s48 = sphi 0, %s50
      %s51 = sphi 0, %s48
      %s52 = sphi 0, %s51
      %s68 = sphi 0, %s52
      %s72 = sphi 0, %s72
      %s74 = sphi 0, %s72
      %s75 = sphi 0, %s74
      %s89 = sphi 0, %s75
      %s93 = sphi 0, %s93
      %s95 = sphi 0, %s93
      %s96 = sphi 0, %s95
      %s110 = sphi 0, %s96
    $region4: #{vgg_forward.9} parent=1 // loop_header_branch
      %15 = sbr.rel (%p13) target = $region8
    $region5: #{vgg_forward.9} parent=1 // loop_body
      %s17 = ssub.s32 %s12, 1
      %s18 = ssub.s32 %s12, 2
      %s19 = sadd.s32 %s12, 1
      %s20 = ssub.s32 %s12, %s19
      %p21 = scmp.eq.s32.totalorder %s20, 0
      %s23 = sadd.s32 %s22, 1
      %s24 = scalar_select %p21, %s22, %s23
      %p27 = pneg %p21
      %p28 = scmp.eq.s32.totalorder %s12, 6
      %p29 = por %p27, %p28
      %p30 = scmp.ne.s32.totalorder %s22, %s25
      %p31 = scmp.eq.s32.totalorder %s12, 0
      %p32 = por %p30, %p31
      %p33 = scmp.ne.s32.totalorder %s22, %s25
      %p34 = scmp.eq.s32.totalorder %s17, 6
      %p35 = por %p33, %p34
      %p36 = scmp.ne.s32.totalorder %s25, %s26
      %p37 = scmp.eq.s32.totalorder %s17, 0
      %p38 = por %p36, %p37
      %p39 = scmp.ne.s32.totalorder %s25, %s26
      %p40 = scmp.eq.s32.totalorder %s18, 6
      %p41 = por %p39, %p40
      %p43 = scmp.ne.s32.totalorder %s26, %s42
      %p44 = scmp.eq.s32.totalorder %s18, 0
      %p45 = por %p43, %p44
      %s46 = ssub.s32 %s12, %s19
      %p47 = scmp.eq.s32.totalorder %s46, 0
      %s49 = sadd.s32 %s48, 1
      %s50 = scalar_select %p47, %s48, %s49
      %p53 = pneg %p47
      %p54 = scmp.eq.s32.totalorder %s12, 6
      %p55 = por %p53, %p54
      %p56 = scmp.ne.s32.totalorder %s48, %s51
      %p57 = scmp.eq.s32.totalorder %s12, 0
      %p58 = por %p56, %p57
      %p59 = scmp.ne.s32.totalorder %s48, %s51
      %p60 = scmp.eq.s32.totalorder %s17, 6
      %p61 = por %p59, %p60
      %p62 = scmp.ne.s32.totalorder %s51, %s52
      %p63 = scmp.eq.s32.totalorder %s17, 0
      %p64 = por %p62, %p63
      %p65 = scmp.ne.s32.totalorder %s51, %s52
      %p66 = scmp.eq.s32.totalorder %s18, 6
      %p67 = por %p65, %p66
      %p69 = scmp.ne.s32.totalorder %s52, %s68
      %p70 = scmp.eq.s32.totalorder %s18, 0
      %p71 = por %p69, %p70
      %s73 = sadd.s32 %s72, 1
      %p76 = scmp.eq.s32.totalorder %s12, 6
      %p77 = scmp.ne.s32.totalorder %s72, %s74
      %p78 = scmp.eq.s32.totalorder %s12, 0
      %p79 = por %p77, %p78
      %p80 = scmp.ne.s32.totalorder %s72, %s74
      %p81 = scmp.eq.s32.totalorder %s17, 6
      %p82 = por %p80, %p81
      %p83 = scmp.ne.s32.totalorder %s74, %s75
      %p84 = scmp.eq.s32.totalorder %s17, 0
      %p85 = por %p83, %p84
      %p86 = scmp.ne.s32.totalorder %s74, %s75
      %p87 = scmp.eq.s32.totalorder %s18, 6
      %p88 = por %p86, %p87
      %p90 = scmp.ne.s32.totalorder %s75, %s89
      %p91 = scmp.eq.s32.totalorder %s18, 0
      %p92 = por %p90, %p91
      %s94 = sadd.s32 %s93, 1
      %p97 = scmp.eq.s32.totalorder %s12, 6
      %p98 = scmp.ne.s32.totalorder %s93, %s95
      %p99 = scmp.eq.s32.totalorder %s12, 0
      %p100 = por %p98, %p99
      %p101 = scmp.ne.s32.totalorder %s93, %s95
      %p102 = scmp.eq.s32.totalorder %s17, 6
      %p103 = por %p101, %p102
      %p104 = scmp.ne.s32.totalorder %s95, %s96
      %p105 = scmp.eq.s32.totalorder %s17, 0
      %p106 = por %p104, %p105
      %p107 = scmp.ne.s32.totalorder %s95, %s96
      %p108 = scmp.eq.s32.totalorder %s18, 6
      %p109 = por %p107, %p108
      %p111 = scmp.ne.s32.totalorder %s96, %s110
      %p112 = scmp.eq.s32.totalorder %s18, 0
      %p113 = por %p111, %p112
      %p114 = scmp.le.s32.totalorder 1, %s12
      %p115 = scmp.lt.s32.totalorder %s12, 8
      %p116 = pnand %p114, %p115
      %p117 = pneg %p116
      // Predicated region
      $region9: #{vgg_forward.9} parent=5 // pred_check
        _
      $region10: #{vgg_forward.9} parent=5 // pred_check_branch
        %119 = sbr.rel (%p116) target = $region12
      $region11: #{vgg_forward.9} parent=5 // pred_region
        %s120 = ssub.s32 %s12, 1
        // Predicated region
        $region13: #{vgg_forward.9} parent=11 // pred_check
          %p121 = pneg %p85
        $region14: #{vgg_forward.9} parent=11 // pred_check_branch
          %123 = sbr.rel (%p121) target = $region16
        $region15: #{vgg_forward.9} parent=11 // pred_region
          _
        $region16: #{vgg_forward.9} parent=11 // pred_fallthru
          _
      $region12: #{vgg_forward.9} parent=5 // pred_fallthru
        _
      %p124 = scmp.lt.s32.totalorder %s12, 7
      // Predicated region
      $region17: #{vgg_forward.9} parent=5 // pred_check
        %p125 = pneg %p124
      $region18: #{vgg_forward.9} parent=5 // pred_check_branch
        %127 = sbr.rel (%p125) target = $region20
      $region19: #{vgg_forward.9} parent=5 // pred_region
        // Predicated region
        $region21: #{vgg_forward.9} parent=19 // pred_check
          %p128 = pneg %p32
        $region22: #{vgg_forward.9} parent=19 // pred_check_branch
          %130 = sbr.rel (%p128) target = $region24
        $region23: #{vgg_forward.9} parent=19 // pred_region
          %s131 = smul.u32 28, %s12
          %p132 = scmp.lt.s32.totalorder %s131, 195
          %s133 = scalar_select %p132, %s131, 195
          %s134 = scalar_lea.vmem %s0, %s133
          %s135 = smul.u32 28, %s12
        $region24: #{vgg_forward.9} parent=19 // pred_fallthru
          _
        // Predicated region
        $region25: #{vgg_forward.9} parent=19 // pred_check
          %p136 = pneg %p58
        $region26: #{vgg_forward.9} parent=19 // pred_check_branch
          %138 = sbr.rel (%p136) target = $region28
        $region27: #{vgg_forward.9} parent=19 // pred_region
          %s139 = sand.u32 %s48, 1
          %s140 = scalar_lea.sflag [#allocation4], %s139
          %s141 = sand.u32 %s48, 1
          %s142 = smul.addr %s141, 7168
          %s143 = scalar_lea.vmem [#allocation3], %s142
          %s144 = smul.u32 448, %s12
          %146 = vsyncadd %s140, 0
          %s147 = smul.addr %s144, 4
          %s148 = smul.addr %s147, 4
          %s149 = scalar_lea.hbm %s1, %s148
          %s150 = sshll.u32 %s149, 4
          %s151 = int_to_ptr.hbm [resolvable:$true] %s150
          %s152 = sshll.u32 %s143, 4
          %s153 = int_to_ptr.vmem [resolvable:$true] %s152
          %158 = dma.hbm_to_vmem [thread:$0]  %s151, 114688, %s153, %s140, 256, 256, 16
        $region28: #{vgg_forward.9} parent=19 // pred_fallthru
          _
      $region20: #{vgg_forward.9} parent=5 // pred_fallthru
        _
      %p159 = scmp.le.s32.totalorder 1, %s12
      %p160 = scmp.lt.s32.totalorder %s12, 8
      %p161 = pnand %p159, %p160
      %p162 = pneg %p161
      // Predicated region
      $region29: #{vgg_forward.9} parent=5 // pred_check
        _
      $region30: #{vgg_forward.9} parent=5 // pred_check_branch
        %164 = sbr.rel (%p161) target = $region32
      $region31: #{vgg_forward.9} parent=5 // pred_region
        %s165 = ssub.s32 %s12, 1
        %s166 = sand.u32 %s51, 1
        %s167 = scalar_lea.sflag [#allocation4], %s166
        %s168 = sand.u32 %s51, 1
        %s169 = smul.addr %s168, 7168
        %s170 = scalar_lea.vmem [#allocation3], %s169
        // Predicated region
        $region33: #{vgg_forward.9} parent=31 // pred_check
          %p171 = pneg %p64
        $region34: #{vgg_forward.9} parent=31 // pred_check_branch
          %173 = sbr.rel (%p171) target = $region36
        $region35: #{vgg_forward.9} parent=31 // pred_region
          %175 = dma.done %s167, 114688
        $region36: #{vgg_forward.9} parent=31 // pred_fallthru
          _
        %s176 = smul.u32 28, %s17
        %p177 = scmp.lt.s32.totalorder %s176, 195
        %s178 = scalar_select %p177, %s176, 195
        %s179 = scalar_lea.vmem %s0, %s178
        %p180 = pneg %p38
        %p181 = pneg %p35
        %s182 = sand.u32 %s51, 1
        %s183 = scalar_lea.sflag [#allocation4], %s182
        %s184 = sand.u32 %s51, 1
        %s185 = smul.addr %s184, 7168
        %s186 = scalar_lea.vmem [#allocation3], %s185
        %p187 = pneg %p64
        %p188 = pneg %p61
        %p189 = pneg %p85
        %p190 = pneg %p82
        %p191 = pneg %p106
        %p192 = pneg %p103
        %s193 = smul.u32 28, %s17
        %p194 = scmp.lt.s32.totalorder %s193, 195
        %s195 = scalar_select %p194, %s193, 195
        %s196 = scalar_lea.vmem %s0, %s195
        %s197 = smul.u32 28, %s17
        %s198 = smul.u32 448, %s17
        %p199 = scmp.eq.s32.totalorder %s17, 0
        // Predicated region
        $region37: #{vgg_forward.9} parent=31 // pred_check
          %p200 = pneg %p199
        $region38: #{vgg_forward.9} parent=31 // pred_check_branch
          %202 = sbr.rel (%p200) target = $region40
        $region39: #{vgg_forward.9} parent=31 // pred_region
          %203 = vst [vmem:[#allocation2] sm:$0xff] 0.0
        $region40: #{vgg_forward.9} parent=31 // pred_fallthru
          _
        %v204 = vld [vmem:[#allocation2] sm:$0xff]
        %v205 = vld [vmem:[%s196] sm:$0xff]
        %v206 = vld [vmem:[%s196 + $0x8] sm:$0xff]
        %v207 = vld [vmem:[%s196 + $0x10] sm:$0xff]
        %v208 = vld [vmem:[%s196 + $0x18] sm:$0xf]
        %v209 = vld [vmem:[%s170] sm:$0xff]
        %v210 = vld [vmem:[%s170 + $0x8] sm:$0xff]
        %v211 = vld [vmem:[%s170 + $0x10] sm:$0xff]
        %v212 = vld [vmem:[%s170 + $0x18] sm:$0xff]
        %v213 = vld [vmem:[%s170 + $0x20] sm:$0xff]
        %v214 = vld [vmem:[%s170 + $0x28] sm:$0xff]
        %v215 = vld [vmem:[%s170 + $0x30] sm:$0xff]
        %v216 = vld [vmem:[%s170 + $0x38] sm:$0xff]
        %v217 = vld [vmem:[%s170 + $0x40] sm:$0xff]
        %v218 = vld [vmem:[%s170 + $0x48] sm:$0xff]
        %v219 = vld [vmem:[%s170 + $0x50] sm:$0xff]
        %v220 = vld [vmem:[%s170 + $0x58] sm:$0xff]
        %v221 = vld [vmem:[%s170 + $0x60] sm:$0xff]
        %v222 = vld [vmem:[%s170 + $0x68] sm:$0xff]
        %v223 = vld [vmem:[%s170 + $0x70] sm:$0xff]
        %v224 = vld [vmem:[%s170 + $0x78] sm:$0xff]
        %v225 = vld [vmem:[%s170 + $0x80] sm:$0xff]
        %v226 = vld [vmem:[%s170 + $0x88] sm:$0xff]
        %v227 = vld [vmem:[%s170 + $0x90] sm:$0xff]
        %v228 = vld [vmem:[%s170 + $0x98] sm:$0xff]
        %v229 = vld [vmem:[%s170 + $0xa0] sm:$0xff]
        %v230 = vld [vmem:[%s170 + $0xa8] sm:$0xff]
        %v231 = vld [vmem:[%s170 + $0xb0] sm:$0xff]
        %v232 = vld [vmem:[%s170 + $0xb8] sm:$0xff]
        %v233 = vld [vmem:[%s170 + $0xc0] sm:$0xff]
        %v234 = vld [vmem:[%s170 + $0xc8] sm:$0xff]
        %v235 = vld [vmem:[%s170 + $0xd0] sm:$0xff]
        %v236 = vld [vmem:[%s170 + $0xd8] sm:$0xff]
        %v237 = vld [vmem:[%s170 + $0xe0] sm:$0xff]
        %v238 = vld [vmem:[%s170 + $0xe8] sm:$0xff]
        %v239 = vld [vmem:[%s170 + $0xf0] sm:$0xff]
        %v240 = vld [vmem:[%s170 + $0xf8] sm:$0xff]
        %v241 = vld [vmem:[%s170 + $0x100] sm:$0xff]
        %v242 = vld [vmem:[%s170 + $0x108] sm:$0xff]
        %v243 = vld [vmem:[%s170 + $0x110] sm:$0xff]
        %v244 = vld [vmem:[%s170 + $0x118] sm:$0xff]
        %v245 = vld [vmem:[%s170 + $0x120] sm:$0xff]
        %v246 = vld [vmem:[%s170 + $0x128] sm:$0xff]
        %v247 = vld [vmem:[%s170 + $0x130] sm:$0xff]
        %v248 = vld [vmem:[%s170 + $0x138] sm:$0xff]
        %v249 = vld [vmem:[%s170 + $0x140] sm:$0xff]
        %v250 = vld [vmem:[%s170 + $0x148] sm:$0xff]
        %v251 = vld [vmem:[%s170 + $0x150] sm:$0xff]
        %v252 = vld [vmem:[%s170 + $0x158] sm:$0xff]
        %v253 = vld [vmem:[%s170 + $0x160] sm:$0xff]
        %v254 = vld [vmem:[%s170 + $0x168] sm:$0xff]
        %v255 = vld [vmem:[%s170 + $0x170] sm:$0xff]
        %v256 = vld [vmem:[%s170 + $0x178] sm:$0xff]
        %v257 = vld [vmem:[%s170 + $0x180] sm:$0xff]
        %v258 = vld [vmem:[%s170 + $0x188] sm:$0xff]
        %v259 = vld [vmem:[%s170 + $0x190] sm:$0xff]
        %v260 = vld [vmem:[%s170 + $0x198] sm:$0xff]
        %v261 = vld [vmem:[%s170 + $0x1a0] sm:$0xff]
        %v262 = vld [vmem:[%s170 + $0x1a8] sm:$0xff]
        %v263 = vld [vmem:[%s170 + $0x1b0] sm:$0xff]
        %v264 = vld [vmem:[%s170 + $0x1b8] sm:$0xff]
        %v265 = vld [vmem:[%s170 + $0x1c0] sm:$0xff]
        %v266 = vld [vmem:[%s170 + $0x1c8] sm:$0xff]
        %v267 = vld [vmem:[%s170 + $0x1d0] sm:$0xff]
        %v268 = vld [vmem:[%s170 + $0x1d8] sm:$0xff]
        %v269 = vld [vmem:[%s170 + $0x1e0] sm:$0xff]
        %v270 = vld [vmem:[%s170 + $0x1e8] sm:$0xff]
        %v271 = vld [vmem:[%s170 + $0x1f0] sm:$0xff]
        %v272 = vld [vmem:[%s170 + $0x1f8] sm:$0xff]
        %v273 = vld [vmem:[%s170 + $0x200] sm:$0xff]
        %v274 = vld [vmem:[%s170 + $0x208] sm:$0xff]
        %v275 = vld [vmem:[%s170 + $0x210] sm:$0xff]
        %v276 = vld [vmem:[%s170 + $0x218] sm:$0xff]
        %v277 = vld [vmem:[%s170 + $0x220] sm:$0xff]
        %v278 = vld [vmem:[%s170 + $0x228] sm:$0xff]
        %v279 = vld [vmem:[%s170 + $0x230] sm:$0xff]
        %v280 = vld [vmem:[%s170 + $0x238] sm:$0xff]
        %v281 = vld [vmem:[%s170 + $0x240] sm:$0xff]
        %v282 = vld [vmem:[%s170 + $0x248] sm:$0xff]
        %v283 = vld [vmem:[%s170 + $0x250] sm:$0xff]
        %v284 = vld [vmem:[%s170 + $0x258] sm:$0xff]
        %v285 = vld [vmem:[%s170 + $0x260] sm:$0xff]
        %v286 = vld [vmem:[%s170 + $0x268] sm:$0xff]
        %v287 = vld [vmem:[%s170 + $0x270] sm:$0xff]
        %v288 = vld [vmem:[%s170 + $0x278] sm:$0xff]
        %v289 = vld [vmem:[%s170 + $0x280] sm:$0xff]
        %v290 = vld [vmem:[%s170 + $0x288] sm:$0xff]
        %v291 = vld [vmem:[%s170 + $0x290] sm:$0xff]
        %v292 = vld [vmem:[%s170 + $0x298] sm:$0xff]
        %v293 = vld [vmem:[%s170 + $0x2a0] sm:$0xff]
        %v294 = vld [vmem:[%s170 + $0x2a8] sm:$0xff]
        %v295 = vld [vmem:[%s170 + $0x2b0] sm:$0xff]
        %v296 = vld [vmem:[%s170 + $0x2b8] sm:$0xff]
        %v297 = vld [vmem:[%s170 + $0x2c0] sm:$0xff]
        %v298 = vld [vmem:[%s170 + $0x2c8] sm:$0xff]
        %v299 = vld [vmem:[%s170 + $0x2d0] sm:$0xff]
        %v300 = vld [vmem:[%s170 + $0x2d8] sm:$0xff]
        %v301 = vld [vmem:[%s170 + $0x2e0] sm:$0xff]
        %v302 = vld [vmem:[%s170 + $0x2e8] sm:$0xff]
        %v303 = vld [vmem:[%s170 + $0x2f0] sm:$0xff]
        %v304 = vld [vmem:[%s170 + $0x2f8] sm:$0xff]
        %v305 = vld [vmem:[%s170 + $0x300] sm:$0xff]
        %v306 = vld [vmem:[%s170 + $0x308] sm:$0xff]
        %v307 = vld [vmem:[%s170 + $0x310] sm:$0xff]
        %v308 = vld [vmem:[%s170 + $0x318] sm:$0xff]
        %v309 = vld [vmem:[%s170 + $0x320] sm:$0xff]
        %v310 = vld [vmem:[%s170 + $0x328] sm:$0xff]
        %v311 = vld [vmem:[%s170 + $0x330] sm:$0xff]
        %v312 = vld [vmem:[%s170 + $0x338] sm:$0xff]
        %v313 = vld [vmem:[%s170 + $0x340] sm:$0xff]
        %v314 = vld [vmem:[%s170 + $0x348] sm:$0xff]
        %v315 = vld [vmem:[%s170 + $0x350] sm:$0xff]
        %v316 = vld [vmem:[%s170 + $0x358] sm:$0xff]
        %v317 = vld [vmem:[%s170 + $0x360] sm:$0xff]
        %v318 = vld [vmem:[%s170 + $0x368] sm:$0xff]
        %v319 = vld [vmem:[%s170 + $0x370] sm:$0xff]
        %v320 = vld [vmem:[%s170 + $0x378] sm:$0xff]
        %v321 = vld [vmem:[%s170 + $0x380] sm:$0xff]
        %v322 = vld [vmem:[%s170 + $0x388] sm:$0xff]
        %v323 = vld [vmem:[%s170 + $0x390] sm:$0xff]
        %v324 = vld [vmem:[%s170 + $0x398] sm:$0xff]
        %v325 = vld [vmem:[%s170 + $0x3a0] sm:$0xff]
        %v326 = vld [vmem:[%s170 + $0x3a8] sm:$0xff]
        %v327 = vld [vmem:[%s170 + $0x3b0] sm:$0xff]
        %v328 = vld [vmem:[%s170 + $0x3b8] sm:$0xff]
        %v329 = vld [vmem:[%s170 + $0x3c0] sm:$0xff]
        %v330 = vld [vmem:[%s170 + $0x3c8] sm:$0xff]
        %v331 = vld [vmem:[%s170 + $0x3d0] sm:$0xff]
        %v332 = vld [vmem:[%s170 + $0x3d8] sm:$0xff]
        %v333 = vld [vmem:[%s170 + $0x3e0] sm:$0xff]
        %v334 = vld [vmem:[%s170 + $0x3e8] sm:$0xff]
        %v335 = vld [vmem:[%s170 + $0x3f0] sm:$0xff]
        %v336 = vld [vmem:[%s170 + $0x3f8] sm:$0xff]
        %v337 = vld [vmem:[%s170 + $0x400] sm:$0xff]
        %v338 = vld [vmem:[%s170 + $0x408] sm:$0xff]
        %v339 = vld [vmem:[%s170 + $0x410] sm:$0xff]
        %v340 = vld [vmem:[%s170 + $0x418] sm:$0xff]
        %v341 = vld [vmem:[%s170 + $0x420] sm:$0xff]
        %v342 = vld [vmem:[%s170 + $0x428] sm:$0xff]
        %v343 = vld [vmem:[%s170 + $0x430] sm:$0xff]
        %v344 = vld [vmem:[%s170 + $0x438] sm:$0xff]
        %v345 = vld [vmem:[%s170 + $0x440] sm:$0xff]
        %v346 = vld [vmem:[%s170 + $0x448] sm:$0xff]
        %v347 = vld [vmem:[%s170 + $0x450] sm:$0xff]
        %v348 = vld [vmem:[%s170 + $0x458] sm:$0xff]
        %v349 = vld [vmem:[%s170 + $0x460] sm:$0xff]
        %v350 = vld [vmem:[%s170 + $0x468] sm:$0xff]
        %v351 = vld [vmem:[%s170 + $0x470] sm:$0xff]
        %v352 = vld [vmem:[%s170 + $0x478] sm:$0xff]
        %v353 = vld [vmem:[%s170 + $0x480] sm:$0xff]
        %v354 = vld [vmem:[%s170 + $0x488] sm:$0xff]
        %v355 = vld [vmem:[%s170 + $0x490] sm:$0xff]
        %v356 = vld [vmem:[%s170 + $0x498] sm:$0xff]
        %v357 = vld [vmem:[%s170 + $0x4a0] sm:$0xff]
        %v358 = vld [vmem:[%s170 + $0x4a8] sm:$0xff]
        %v359 = vld [vmem:[%s170 + $0x4b0] sm:$0xff]
        %v360 = vld [vmem:[%s170 + $0x4b8] sm:$0xff]
        %v361 = vld [vmem:[%s170 + $0x4c0] sm:$0xff]
        %v362 = vld [vmem:[%s170 + $0x4c8] sm:$0xff]
        %v363 = vld [vmem:[%s170 + $0x4d0] sm:$0xff]
        %v364 = vld [vmem:[%s170 + $0x4d8] sm:$0xff]
        %v365 = vld [vmem:[%s170 + $0x4e0] sm:$0xff]
        %v366 = vld [vmem:[%s170 + $0x4e8] sm:$0xff]
        %v367 = vld [vmem:[%s170 + $0x4f0] sm:$0xff]
        %v368 = vld [vmem:[%s170 + $0x4f8] sm:$0xff]
        %v369 = vld [vmem:[%s170 + $0x500] sm:$0xff]
        %v370 = vld [vmem:[%s170 + $0x508] sm:$0xff]
        %v371 = vld [vmem:[%s170 + $0x510] sm:$0xff]
        %v372 = vld [vmem:[%s170 + $0x518] sm:$0xff]
        %v373 = vld [vmem:[%s170 + $0x520] sm:$0xff]
        %v374 = vld [vmem:[%s170 + $0x528] sm:$0xff]
        %v375 = vld [vmem:[%s170 + $0x530] sm:$0xff]
        %v376 = vld [vmem:[%s170 + $0x538] sm:$0xff]
        %v377 = vld [vmem:[%s170 + $0x540] sm:$0xff]
        %v378 = vld [vmem:[%s170 + $0x548] sm:$0xff]
        %v379 = vld [vmem:[%s170 + $0x550] sm:$0xff]
        %v380 = vld [vmem:[%s170 + $0x558] sm:$0xff]
        %v381 = vld [vmem:[%s170 + $0x560] sm:$0xff]
        %v382 = vld [vmem:[%s170 + $0x568] sm:$0xff]
        %v383 = vld [vmem:[%s170 + $0x570] sm:$0xff]
        %v384 = vld [vmem:[%s170 + $0x578] sm:$0xff]
        %v385 = vld [vmem:[%s170 + $0x580] sm:$0xff]
        %v386 = vld [vmem:[%s170 + $0x588] sm:$0xff]
        %v387 = vld [vmem:[%s170 + $0x590] sm:$0xff]
        %v388 = vld [vmem:[%s170 + $0x598] sm:$0xff]
        %v389 = vld [vmem:[%s170 + $0x5a0] sm:$0xff]
        %v390 = vld [vmem:[%s170 + $0x5a8] sm:$0xff]
        %v391 = vld [vmem:[%s170 + $0x5b0] sm:$0xff]
        %v392 = vld [vmem:[%s170 + $0x5b8] sm:$0xff]
        %v393 = vld [vmem:[%s170 + $0x5c0] sm:$0xff]
        %v394 = vld [vmem:[%s170 + $0x5c8] sm:$0xff]
        %v395 = vld [vmem:[%s170 + $0x5d0] sm:$0xff]
        %v396 = vld [vmem:[%s170 + $0x5d8] sm:$0xff]
        %v397 = vld [vmem:[%s170 + $0x5e0] sm:$0xff]
        %v398 = vld [vmem:[%s170 + $0x5e8] sm:$0xff]
        %v399 = vld [vmem:[%s170 + $0x5f0] sm:$0xff]
        %v400 = vld [vmem:[%s170 + $0x5f8] sm:$0xff]
        %v401 = vld [vmem:[%s170 + $0x600] sm:$0xff]
        %v402 = vld [vmem:[%s170 + $0x608] sm:$0xff]
        %v403 = vld [vmem:[%s170 + $0x610] sm:$0xff]
        %v404 = vld [vmem:[%s170 + $0x618] sm:$0xff]
        %v405 = vld [vmem:[%s170 + $0x620] sm:$0xff]
        %v406 = vld [vmem:[%s170 + $0x628] sm:$0xff]
        %v407 = vld [vmem:[%s170 + $0x630] sm:$0xff]
        %v408 = vld [vmem:[%s170 + $0x638] sm:$0xff]
        %v409 = vld [vmem:[%s170 + $0x640] sm:$0xff]
        %v410 = vld [vmem:[%s170 + $0x648] sm:$0xff]
        %v411 = vld [vmem:[%s170 + $0x650] sm:$0xff]
        %v412 = vld [vmem:[%s170 + $0x658] sm:$0xff]
        %v413 = vld [vmem:[%s170 + $0x660] sm:$0xff]
        %v414 = vld [vmem:[%s170 + $0x668] sm:$0xff]
        %v415 = vld [vmem:[%s170 + $0x670] sm:$0xff]
        %v416 = vld [vmem:[%s170 + $0x678] sm:$0xff]
        %v417 = vld [vmem:[%s170 + $0x680] sm:$0xff]
        %v418 = vld [vmem:[%s170 + $0x688] sm:$0xff]
        %v419 = vld [vmem:[%s170 + $0x690] sm:$0xff]
        %v420 = vld [vmem:[%s170 + $0x698] sm:$0xff]
        %v421 = vld [vmem:[%s170 + $0x6a0] sm:$0xff]
        %v422 = vld [vmem:[%s170 + $0x6a8] sm:$0xff]
        %v423 = vld [vmem:[%s170 + $0x6b0] sm:$0xff]
        %v424 = vld [vmem:[%s170 + $0x6b8] sm:$0xff]
        %v425 = vld [vmem:[%s170 + $0x6c0] sm:$0xff]
        %v426 = vld [vmem:[%s170 + $0x6c8] sm:$0xff]
        %v427 = vld [vmem:[%s170 + $0x6d0] sm:$0xff]
        %v428 = vld [vmem:[%s170 + $0x6d8] sm:$0xff]
        %v429 = vld [vmem:[%s170 + $0x6e0] sm:$0xff]
        %v430 = vld [vmem:[%s170 + $0x6e8] sm:$0xff]
        %v431 = vld [vmem:[%s170 + $0x6f0] sm:$0xff]
        %v432 = vld [vmem:[%s170 + $0x6f8] sm:$0xff]
        %v433 = vld [vmem:[%s170 + $0x700] sm:$0xff]
        %v434 = vld [vmem:[%s170 + $0x708] sm:$0xff]
        %v435 = vld [vmem:[%s170 + $0x710] sm:$0xff]
        %v436 = vld [vmem:[%s170 + $0x718] sm:$0xff]
        %v437 = vld [vmem:[%s170 + $0x720] sm:$0xff]
        %v438 = vld [vmem:[%s170 + $0x728] sm:$0xff]
        %v439 = vld [vmem:[%s170 + $0x730] sm:$0xff]
        %v440 = vld [vmem:[%s170 + $0x738] sm:$0xff]
        %v441 = vld [vmem:[%s170 + $0x740] sm:$0xff]
        %v442 = vld [vmem:[%s170 + $0x748] sm:$0xff]
        %v443 = vld [vmem:[%s170 + $0x750] sm:$0xff]
        %v444 = vld [vmem:[%s170 + $0x758] sm:$0xff]
        %v445 = vld [vmem:[%s170 + $0x760] sm:$0xff]
        %v446 = vld [vmem:[%s170 + $0x768] sm:$0xff]
        %v447 = vld [vmem:[%s170 + $0x770] sm:$0xff]
        %v448 = vld [vmem:[%s170 + $0x778] sm:$0xff]
        %v449 = vld [vmem:[%s170 + $0x780] sm:$0xff]
        %v450 = vld [vmem:[%s170 + $0x788] sm:$0xff]
        %v451 = vld [vmem:[%s170 + $0x790] sm:$0xff]
        %v452 = vld [vmem:[%s170 + $0x798] sm:$0xff]
        %v453 = vld [vmem:[%s170 + $0x7a0] sm:$0xff]
        %v454 = vld [vmem:[%s170 + $0x7a8] sm:$0xff]
        %v455 = vld [vmem:[%s170 + $0x7b0] sm:$0xff]
        %v456 = vld [vmem:[%s170 + $0x7b8] sm:$0xff]
        %v457 = vld [vmem:[%s170 + $0x7c0] sm:$0xff]
        %v458 = vld [vmem:[%s170 + $0x7c8] sm:$0xff]
        %v459 = vld [vmem:[%s170 + $0x7d0] sm:$0xff]
        %v460 = vld [vmem:[%s170 + $0x7d8] sm:$0xff]
        %v461 = vld [vmem:[%s170 + $0x7e0] sm:$0xff]
        %v462 = vld [vmem:[%s170 + $0x7e8] sm:$0xff]
        %v463 = vld [vmem:[%s170 + $0x7f0] sm:$0xff]
        %v464 = vld [vmem:[%s170 + $0x7f8] sm:$0xff]
        %v465 = vld [vmem:[%s170 + $0x800] sm:$0xff]
        %v466 = vld [vmem:[%s170 + $0x808] sm:$0xff]
        %v467 = vld [vmem:[%s170 + $0x810] sm:$0xff]
        %v468 = vld [vmem:[%s170 + $0x818] sm:$0xff]
        %v469 = vld [vmem:[%s170 + $0x820] sm:$0xff]
        %v470 = vld [vmem:[%s170 + $0x828] sm:$0xff]
        %v471 = vld [vmem:[%s170 + $0x830] sm:$0xff]
        %v472 = vld [vmem:[%s170 + $0x838] sm:$0xff]
        %v473 = vld [vmem:[%s170 + $0x840] sm:$0xff]
        %v474 = vld [vmem:[%s170 + $0x848] sm:$0xff]
        %v475 = vld [vmem:[%s170 + $0x850] sm:$0xff]
        %v476 = vld [vmem:[%s170 + $0x858] sm:$0xff]
        %v477 = vld [vmem:[%s170 + $0x860] sm:$0xff]
        %v478 = vld [vmem:[%s170 + $0x868] sm:$0xff]
        %v479 = vld [vmem:[%s170 + $0x870] sm:$0xff]
        %v480 = vld [vmem:[%s170 + $0x878] sm:$0xff]
        %v481 = vld [vmem:[%s170 + $0x880] sm:$0xff]
        %v482 = vld [vmem:[%s170 + $0x888] sm:$0xff]
        %v483 = vld [vmem:[%s170 + $0x890] sm:$0xff]
        %v484 = vld [vmem:[%s170 + $0x898] sm:$0xff]
        %v485 = vld [vmem:[%s170 + $0x8a0] sm:$0xff]
        %v486 = vld [vmem:[%s170 + $0x8a8] sm:$0xff]
        %v487 = vld [vmem:[%s170 + $0x8b0] sm:$0xff]
        %v488 = vld [vmem:[%s170 + $0x8b8] sm:$0xff]
        %v489 = vld [vmem:[%s170 + $0x8c0] sm:$0xff]
        %v490 = vld [vmem:[%s170 + $0x8c8] sm:$0xff]
        %v491 = vld [vmem:[%s170 + $0x8d0] sm:$0xff]
        %v492 = vld [vmem:[%s170 + $0x8d8] sm:$0xff]
        %v493 = vld [vmem:[%s170 + $0x8e0] sm:$0xff]
        %v494 = vld [vmem:[%s170 + $0x8e8] sm:$0xff]
        %v495 = vld [vmem:[%s170 + $0x8f0] sm:$0xff]
        %v496 = vld [vmem:[%s170 + $0x8f8] sm:$0xff]
        %v497 = vld [vmem:[%s170 + $0x900] sm:$0xff]
        %v498 = vld [vmem:[%s170 + $0x908] sm:$0xff]
        %v499 = vld [vmem:[%s170 + $0x910] sm:$0xff]
        %v500 = vld [vmem:[%s170 + $0x918] sm:$0xff]
        %v501 = vld [vmem:[%s170 + $0x920] sm:$0xff]
        %v502 = vld [vmem:[%s170 + $0x928] sm:$0xff]
        %v503 = vld [vmem:[%s170 + $0x930] sm:$0xff]
        %v504 = vld [vmem:[%s170 + $0x938] sm:$0xff]
        %v505 = vld [vmem:[%s170 + $0x940] sm:$0xff]
        %v506 = vld [vmem:[%s170 + $0x948] sm:$0xff]
        %v507 = vld [vmem:[%s170 + $0x950] sm:$0xff]
        %v508 = vld [vmem:[%s170 + $0x958] sm:$0xff]
        %v509 = vld [vmem:[%s170 + $0x960] sm:$0xff]
        %v510 = vld [vmem:[%s170 + $0x968] sm:$0xff]
        %v511 = vld [vmem:[%s170 + $0x970] sm:$0xff]
        %v512 = vld [vmem:[%s170 + $0x978] sm:$0xff]
        %v513 = vld [vmem:[%s170 + $0x980] sm:$0xff]
        %v514 = vld [vmem:[%s170 + $0x988] sm:$0xff]
        %v515 = vld [vmem:[%s170 + $0x990] sm:$0xff]
        %v516 = vld [vmem:[%s170 + $0x998] sm:$0xff]
        %v517 = vld [vmem:[%s170 + $0x9a0] sm:$0xff]
        %v518 = vld [vmem:[%s170 + $0x9a8] sm:$0xff]
        %v519 = vld [vmem:[%s170 + $0x9b0] sm:$0xff]
        %v520 = vld [vmem:[%s170 + $0x9b8] sm:$0xff]
        %v521 = vld [vmem:[%s170 + $0x9c0] sm:$0xff]
        %v522 = vld [vmem:[%s170 + $0x9c8] sm:$0xff]
        %v523 = vld [vmem:[%s170 + $0x9d0] sm:$0xff]
        %v524 = vld [vmem:[%s170 + $0x9d8] sm:$0xff]
        %v525 = vld [vmem:[%s170 + $0x9e0] sm:$0xff]
        %v526 = vld [vmem:[%s170 + $0x9e8] sm:$0xff]
        %v527 = vld [vmem:[%s170 + $0x9f0] sm:$0xff]
        %v528 = vld [vmem:[%s170 + $0x9f8] sm:$0xff]
        %v529 = vld [vmem:[%s170 + $0xa00] sm:$0xff]
        %v530 = vld [vmem:[%s170 + $0xa08] sm:$0xff]
        %v531 = vld [vmem:[%s170 + $0xa10] sm:$0xff]
        %v532 = vld [vmem:[%s170 + $0xa18] sm:$0xff]
        %v533 = vld [vmem:[%s170 + $0xa20] sm:$0xff]
        %v534 = vld [vmem:[%s170 + $0xa28] sm:$0xff]
        %v535 = vld [vmem:[%s170 + $0xa30] sm:$0xff]
        %v536 = vld [vmem:[%s170 + $0xa38] sm:$0xff]
        %v537 = vld [vmem:[%s170 + $0xa40] sm:$0xff]
        %v538 = vld [vmem:[%s170 + $0xa48] sm:$0xff]
        %v539 = vld [vmem:[%s170 + $0xa50] sm:$0xff]
        %v540 = vld [vmem:[%s170 + $0xa58] sm:$0xff]
        %v541 = vld [vmem:[%s170 + $0xa60] sm:$0xff]
        %v542 = vld [vmem:[%s170 + $0xa68] sm:$0xff]
        %v543 = vld [vmem:[%s170 + $0xa70] sm:$0xff]
        %v544 = vld [vmem:[%s170 + $0xa78] sm:$0xff]
        %v545 = vld [vmem:[%s170 + $0xa80] sm:$0xff]
        %v546 = vld [vmem:[%s170 + $0xa88] sm:$0xff]
        %v547 = vld [vmem:[%s170 + $0xa90] sm:$0xff]
        %v548 = vld [vmem:[%s170 + $0xa98] sm:$0xff]
        %v549 = vld [vmem:[%s170 + $0xaa0] sm:$0xff]
        %v550 = vld [vmem:[%s170 + $0xaa8] sm:$0xff]
        %v551 = vld [vmem:[%s170 + $0xab0] sm:$0xff]
        %v552 = vld [vmem:[%s170 + $0xab8] sm:$0xff]
        %v553 = vld [vmem:[%s170 + $0xac0] sm:$0xff]
        %v554 = vld [vmem:[%s170 + $0xac8] sm:$0xff]
        %v555 = vld [vmem:[%s170 + $0xad0] sm:$0xff]
        %v556 = vld [vmem:[%s170 + $0xad8] sm:$0xff]
        %v557 = vld [vmem:[%s170 + $0xae0] sm:$0xff]
        %v558 = vld [vmem:[%s170 + $0xae8] sm:$0xff]
        %v559 = vld [vmem:[%s170 + $0xaf0] sm:$0xff]
        %v560 = vld [vmem:[%s170 + $0xaf8] sm:$0xff]
        %v561 = vld [vmem:[%s170 + $0xb00] sm:$0xff]
        %v562 = vld [vmem:[%s170 + $0xb08] sm:$0xff]
        %v563 = vld [vmem:[%s170 + $0xb10] sm:$0xff]
        %v564 = vld [vmem:[%s170 + $0xb18] sm:$0xff]
        %v565 = vld [vmem:[%s170 + $0xb20] sm:$0xff]
        %v566 = vld [vmem:[%s170 + $0xb28] sm:$0xff]
        %v567 = vld [vmem:[%s170 + $0xb30] sm:$0xff]
        %v568 = vld [vmem:[%s170 + $0xb38] sm:$0xff]
        %v569 = vld [vmem:[%s170 + $0xb40] sm:$0xff]
        %v570 = vld [vmem:[%s170 + $0xb48] sm:$0xff]
        %v571 = vld [vmem:[%s170 + $0xb50] sm:$0xff]
        %v572 = vld [vmem:[%s170 + $0xb58] sm:$0xff]
        %v573 = vld [vmem:[%s170 + $0xb60] sm:$0xff]
        %v574 = vld [vmem:[%s170 + $0xb68] sm:$0xff]
        %v575 = vld [vmem:[%s170 + $0xb70] sm:$0xff]
        %v576 = vld [vmem:[%s170 + $0xb78] sm:$0xff]
        %v577 = vld [vmem:[%s170 + $0xb80] sm:$0xff]
        %v578 = vld [vmem:[%s170 + $0xb88] sm:$0xff]
        %v579 = vld [vmem:[%s170 + $0xb90] sm:$0xff]
        %v580 = vld [vmem:[%s170 + $0xb98] sm:$0xff]
        %v581 = vld [vmem:[%s170 + $0xba0] sm:$0xff]
        %v582 = vld [vmem:[%s170 + $0xba8] sm:$0xff]
        %v583 = vld [vmem:[%s170 + $0xbb0] sm:$0xff]
        %v584 = vld [vmem:[%s170 + $0xbb8] sm:$0xff]
        %v585 = vld [vmem:[%s170 + $0xbc0] sm:$0xff]
        %v586 = vld [vmem:[%s170 + $0xbc8] sm:$0xff]
        %v587 = vld [vmem:[%s170 + $0xbd0] sm:$0xff]
        %v588 = vld [vmem:[%s170 + $0xbd8] sm:$0xff]
        %v589 = vld [vmem:[%s170 + $0xbe0] sm:$0xff]
        %v590 = vld [vmem:[%s170 + $0xbe8] sm:$0xff]
        %v591 = vld [vmem:[%s170 + $0xbf0] sm:$0xff]
        %v592 = vld [vmem:[%s170 + $0xbf8] sm:$0xff]
        %v593 = vld [vmem:[%s170 + $0xc00] sm:$0xff]
        %v594 = vld [vmem:[%s170 + $0xc08] sm:$0xff]
        %v595 = vld [vmem:[%s170 + $0xc10] sm:$0xff]
        %v596 = vld [vmem:[%s170 + $0xc18] sm:$0xff]
        %v597 = vld [vmem:[%s170 + $0xc20] sm:$0xff]
        %v598 = vld [vmem:[%s170 + $0xc28] sm:$0xff]
        %v599 = vld [vmem:[%s170 + $0xc30] sm:$0xff]
        %v600 = vld [vmem:[%s170 + $0xc38] sm:$0xff]
        %v601 = vld [vmem:[%s170 + $0xc40] sm:$0xff]
        %v602 = vld [vmem:[%s170 + $0xc48] sm:$0xff]
        %v603 = vld [vmem:[%s170 + $0xc50] sm:$0xff]
        %v604 = vld [vmem:[%s170 + $0xc58] sm:$0xff]
        %v605 = vld [vmem:[%s170 + $0xc60] sm:$0xff]
        %v606 = vld [vmem:[%s170 + $0xc68] sm:$0xff]
        %v607 = vld [vmem:[%s170 + $0xc70] sm:$0xff]
        %v608 = vld [vmem:[%s170 + $0xc78] sm:$0xff]
        %v609 = vld [vmem:[%s170 + $0xc80] sm:$0xff]
        %v610 = vld [vmem:[%s170 + $0xc88] sm:$0xff]
        %v611 = vld [vmem:[%s170 + $0xc90] sm:$0xff]
        %v612 = vld [vmem:[%s170 + $0xc98] sm:$0xff]
        %v613 = vld [vmem:[%s170 + $0xca0] sm:$0xff]
        %v614 = vld [vmem:[%s170 + $0xca8] sm:$0xff]
        %v615 = vld [vmem:[%s170 + $0xcb0] sm:$0xff]
        %v616 = vld [vmem:[%s170 + $0xcb8] sm:$0xff]
        %v617 = vld [vmem:[%s170 + $0xcc0] sm:$0xff]
        %v618 = vld [vmem:[%s170 + $0xcc8] sm:$0xff]
        %v619 = vld [vmem:[%s170 + $0xcd0] sm:$0xff]
        %v620 = vld [vmem:[%s170 + $0xcd8] sm:$0xff]
        %v621 = vld [vmem:[%s170 + $0xce0] sm:$0xff]
        %v622 = vld [vmem:[%s170 + $0xce8] sm:$0xff]
        %v623 = vld [vmem:[%s170 + $0xcf0] sm:$0xff]
        %v624 = vld [vmem:[%s170 + $0xcf8] sm:$0xff]
        %v625 = vld [vmem:[%s170 + $0xd00] sm:$0xff]
        %v626 = vld [vmem:[%s170 + $0xd08] sm:$0xff]
        %v627 = vld [vmem:[%s170 + $0xd10] sm:$0xff]
        %v628 = vld [vmem:[%s170 + $0xd18] sm:$0xff]
        %v629 = vld [vmem:[%s170 + $0xd20] sm:$0xff]
        %v630 = vld [vmem:[%s170 + $0xd28] sm:$0xff]
        %v631 = vld [vmem:[%s170 + $0xd30] sm:$0xff]
        %v632 = vld [vmem:[%s170 + $0xd38] sm:$0xff]
        %v633 = vld [vmem:[%s170 + $0xd40] sm:$0xff]
        %v634 = vld [vmem:[%s170 + $0xd48] sm:$0xff]
        %v635 = vld [vmem:[%s170 + $0xd50] sm:$0xff]
        %v636 = vld [vmem:[%s170 + $0xd58] sm:$0xff]
        %v637 = vld [vmem:[%s170 + $0xd60] sm:$0xff]
        %v638 = vld [vmem:[%s170 + $0xd68] sm:$0xff]
        %v639 = vld [vmem:[%s170 + $0xd70] sm:$0xff]
        %v640 = vld [vmem:[%s170 + $0xd78] sm:$0xff]
        %v641 = vld [vmem:[%s170 + $0xd80] sm:$0xff]
        %v642 = vld [vmem:[%s170 + $0xd88] sm:$0xff]
        %v643 = vld [vmem:[%s170 + $0xd90] sm:$0xff]
        %v644 = vld [vmem:[%s170 + $0xd98] sm:$0xff]
        %v645 = vld [vmem:[%s170 + $0xda0] sm:$0xff]
        %v646 = vld [vmem:[%s170 + $0xda8] sm:$0xff]
        %v647 = vld [vmem:[%s170 + $0xdb0] sm:$0xff]
        %v648 = vld [vmem:[%s170 + $0xdb8] sm:$0xff]
        %v649 = vld [vmem:[%s170 + $0xdc0] sm:$0xff]
        %v650 = vld [vmem:[%s170 + $0xdc8] sm:$0xff]
        %v651 = vld [vmem:[%s170 + $0xdd0] sm:$0xff]
        %v652 = vld [vmem:[%s170 + $0xdd8] sm:$0xff]
        %v653 = vld [vmem:[%s170 + $0xde0] sm:$0xff]
        %v654 = vld [vmem:[%s170 + $0xde8] sm:$0xff]
        %v655 = vld [vmem:[%s170 + $0xdf0] sm:$0xff]
        %v656 = vld [vmem:[%s170 + $0xdf8] sm:$0xff]
        %v657 = vld [vmem:[%s170 + $0xe00] sm:$0xff]
        %v658 = vld [vmem:[%s170 + $0xe08] sm:$0xff]
        %v659 = vld [vmem:[%s170 + $0xe10] sm:$0xff]
        %v660 = vld [vmem:[%s170 + $0xe18] sm:$0xff]
        %v661 = vld [vmem:[%s170 + $0xe20] sm:$0xff]
        %v662 = vld [vmem:[%s170 + $0xe28] sm:$0xff]
        %v663 = vld [vmem:[%s170 + $0xe30] sm:$0xff]
        %v664 = vld [vmem:[%s170 + $0xe38] sm:$0xff]
        %v665 = vld [vmem:[%s170 + $0xe40] sm:$0xff]
        %v666 = vld [vmem:[%s170 + $0xe48] sm:$0xff]
        %v667 = vld [vmem:[%s170 + $0xe50] sm:$0xff]
        %v668 = vld [vmem:[%s170 + $0xe58] sm:$0xff]
        %v669 = vld [vmem:[%s170 + $0xe60] sm:$0xff]
        %v670 = vld [vmem:[%s170 + $0xe68] sm:$0xff]
        %v671 = vld [vmem:[%s170 + $0xe70] sm:$0xff]
        %v672 = vld [vmem:[%s170 + $0xe78] sm:$0xff]
        %v673 = vld [vmem:[%s170 + $0xe80] sm:$0xff]
        %v674 = vld [vmem:[%s170 + $0xe88] sm:$0xff]
        %v675 = vld [vmem:[%s170 + $0xe90] sm:$0xff]
        %v676 = vld [vmem:[%s170 + $0xe98] sm:$0xff]
        %v677 = vld [vmem:[%s170 + $0xea0] sm:$0xff]
        %v678 = vld [vmem:[%s170 + $0xea8] sm:$0xff]
        %v679 = vld [vmem:[%s170 + $0xeb0] sm:$0xff]
        %v680 = vld [vmem:[%s170 + $0xeb8] sm:$0xff]
        %v681 = vld [vmem:[%s170 + $0xec0] sm:$0xff]
        %v682 = vld [vmem:[%s170 + $0xec8] sm:$0xff]
        %v683 = vld [vmem:[%s170 + $0xed0] sm:$0xff]
        %v684 = vld [vmem:[%s170 + $0xed8] sm:$0xff]
        %v685 = vld [vmem:[%s170 + $0xee0] sm:$0xff]
        %v686 = vld [vmem:[%s170 + $0xee8] sm:$0xff]
        %v687 = vld [vmem:[%s170 + $0xef0] sm:$0xff]
        %v688 = vld [vmem:[%s170 + $0xef8] sm:$0xff]
        %v689 = vld [vmem:[%s170 + $0xf00] sm:$0xff]
        %v690 = vld [vmem:[%s170 + $0xf08] sm:$0xff]
        %v691 = vld [vmem:[%s170 + $0xf10] sm:$0xff]
        %v692 = vld [vmem:[%s170 + $0xf18] sm:$0xff]
        %v693 = vld [vmem:[%s170 + $0xf20] sm:$0xff]
        %v694 = vld [vmem:[%s170 + $0xf28] sm:$0xff]
        %v695 = vld [vmem:[%s170 + $0xf30] sm:$0xff]
        %v696 = vld [vmem:[%s170 + $0xf38] sm:$0xff]
        %v697 = vld [vmem:[%s170 + $0xf40] sm:$0xff]
        %v698 = vld [vmem:[%s170 + $0xf48] sm:$0xff]
        %v699 = vld [vmem:[%s170 + $0xf50] sm:$0xff]
        %v700 = vld [vmem:[%s170 + $0xf58] sm:$0xff]
        %v701 = vld [vmem:[%s170 + $0xf60] sm:$0xff]
        %v702 = vld [vmem:[%s170 + $0xf68] sm:$0xff]
        %v703 = vld [vmem:[%s170 + $0xf70] sm:$0xff]
        %v704 = vld [vmem:[%s170 + $0xf78] sm:$0xff]
        %v705 = vld [vmem:[%s170 + $0xf80] sm:$0xff]
        %v706 = vld [vmem:[%s170 + $0xf88] sm:$0xff]
        %v707 = vld [vmem:[%s170 + $0xf90] sm:$0xff]
        %v708 = vld [vmem:[%s170 + $0xf98] sm:$0xff]
        %v709 = vld [vmem:[%s170 + $0xfa0] sm:$0xff]
        %v710 = vld [vmem:[%s170 + $0xfa8] sm:$0xff]
        %v711 = vld [vmem:[%s170 + $0xfb0] sm:$0xff]
        %v712 = vld [vmem:[%s170 + $0xfb8] sm:$0xff]
        %v713 = vld [vmem:[%s170 + $0xfc0] sm:$0xff]
        %v714 = vld [vmem:[%s170 + $0xfc8] sm:$0xff]
        %v715 = vld [vmem:[%s170 + $0xfd0] sm:$0xff]
        %v716 = vld [vmem:[%s170 + $0xfd8] sm:$0xff]
        %v717 = vld [vmem:[%s170 + $0xfe0] sm:$0xff]
        %v718 = vld [vmem:[%s170 + $0xfe8] sm:$0xff]
        %v719 = vld [vmem:[%s170 + $0xff0] sm:$0xff]
        %v720 = vld [vmem:[%s170 + $0xff8] sm:$0xff]
        %v721 = vld [vmem:[%s170 + $0x1000] sm:$0xff]
        %v722 = vld [vmem:[%s170 + $0x1008] sm:$0xff]
        %v723 = vld [vmem:[%s170 + $0x1010] sm:$0xff]
        %v724 = vld [vmem:[%s170 + $0x1018] sm:$0xff]
        %v725 = vld [vmem:[%s170 + $0x1020] sm:$0xff]
        %v726 = vld [vmem:[%s170 + $0x1028] sm:$0xff]
        %v727 = vld [vmem:[%s170 + $0x1030] sm:$0xff]
        %v728 = vld [vmem:[%s170 + $0x1038] sm:$0xff]
        %v729 = vld [vmem:[%s170 + $0x1040] sm:$0xff]
        %v730 = vld [vmem:[%s170 + $0x1048] sm:$0xff]
        %v731 = vld [vmem:[%s170 + $0x1050] sm:$0xff]
        %v732 = vld [vmem:[%s170 + $0x1058] sm:$0xff]
        %v733 = vld [vmem:[%s170 + $0x1060] sm:$0xff]
        %v734 = vld [vmem:[%s170 + $0x1068] sm:$0xff]
        %v735 = vld [vmem:[%s170 + $0x1070] sm:$0xff]
        %v736 = vld [vmem:[%s170 + $0x1078] sm:$0xff]
        %v737 = vld [vmem:[%s170 + $0x1080] sm:$0xff]
        %v738 = vld [vmem:[%s170 + $0x1088] sm:$0xff]
        %v739 = vld [vmem:[%s170 + $0x1090] sm:$0xff]
        %v740 = vld [vmem:[%s170 + $0x1098] sm:$0xff]
        %v741 = vld [vmem:[%s170 + $0x10a0] sm:$0xff]
        %v742 = vld [vmem:[%s170 + $0x10a8] sm:$0xff]
        %v743 = vld [vmem:[%s170 + $0x10b0] sm:$0xff]
        %v744 = vld [vmem:[%s170 + $0x10b8] sm:$0xff]
        %v745 = vld [vmem:[%s170 + $0x10c0] sm:$0xff]
        %v746 = vld [vmem:[%s170 + $0x10c8] sm:$0xff]
        %v747 = vld [vmem:[%s170 + $0x10d0] sm:$0xff]
        %v748 = vld [vmem:[%s170 + $0x10d8] sm:$0xff]
        %v749 = vld [vmem:[%s170 + $0x10e0] sm:$0xff]
        %v750 = vld [vmem:[%s170 + $0x10e8] sm:$0xff]
        %v751 = vld [vmem:[%s170 + $0x10f0] sm:$0xff]
        %v752 = vld [vmem:[%s170 + $0x10f8] sm:$0xff]
        %v753 = vld [vmem:[%s170 + $0x1100] sm:$0xff]
        %v754 = vld [vmem:[%s170 + $0x1108] sm:$0xff]
        %v755 = vld [vmem:[%s170 + $0x1110] sm:$0xff]
        %v756 = vld [vmem:[%s170 + $0x1118] sm:$0xff]
        %v757 = vld [vmem:[%s170 + $0x1120] sm:$0xff]
        %v758 = vld [vmem:[%s170 + $0x1128] sm:$0xff]
        %v759 = vld [vmem:[%s170 + $0x1130] sm:$0xff]
        %v760 = vld [vmem:[%s170 + $0x1138] sm:$0xff]
        %v761 = vld [vmem:[%s170 + $0x1140] sm:$0xff]
        %v762 = vld [vmem:[%s170 + $0x1148] sm:$0xff]
        %v763 = vld [vmem:[%s170 + $0x1150] sm:$0xff]
        %v764 = vld [vmem:[%s170 + $0x1158] sm:$0xff]
        %v765 = vld [vmem:[%s170 + $0x1160] sm:$0xff]
        %v766 = vld [vmem:[%s170 + $0x1168] sm:$0xff]
        %v767 = vld [vmem:[%s170 + $0x1170] sm:$0xff]
        %v768 = vld [vmem:[%s170 + $0x1178] sm:$0xff]
        %v769 = vld [vmem:[%s170 + $0x1180] sm:$0xff]
        %v770 = vld [vmem:[%s170 + $0x1188] sm:$0xff]
        %v771 = vld [vmem:[%s170 + $0x1190] sm:$0xff]
        %v772 = vld [vmem:[%s170 + $0x1198] sm:$0xff]
        %v773 = vld [vmem:[%s170 + $0x11a0] sm:$0xff]
        %v774 = vld [vmem:[%s170 + $0x11a8] sm:$0xff]
        %v775 = vld [vmem:[%s170 + $0x11b0] sm:$0xff]
        %v776 = vld [vmem:[%s170 + $0x11b8] sm:$0xff]
        %v777 = vld [vmem:[%s170 + $0x11c0] sm:$0xff]
        %v778 = vld [vmem:[%s170 + $0x11c8] sm:$0xff]
        %v779 = vld [vmem:[%s170 + $0x11d0] sm:$0xff]
        %v780 = vld [vmem:[%s170 + $0x11d8] sm:$0xff]
        %v781 = vld [vmem:[%s170 + $0x11e0] sm:$0xff]
        %v782 = vld [vmem:[%s170 + $0x11e8] sm:$0xff]
        %v783 = vld [vmem:[%s170 + $0x11f0] sm:$0xff]
        %v784 = vld [vmem:[%s170 + $0x11f8] sm:$0xff]
        %v785 = vld [vmem:[%s170 + $0x1200] sm:$0xff]
        %v786 = vld [vmem:[%s170 + $0x1208] sm:$0xff]
        %v787 = vld [vmem:[%s170 + $0x1210] sm:$0xff]
        %v788 = vld [vmem:[%s170 + $0x1218] sm:$0xff]
        %v789 = vld [vmem:[%s170 + $0x1220] sm:$0xff]
        %v790 = vld [vmem:[%s170 + $0x1228] sm:$0xff]
        %v791 = vld [vmem:[%s170 + $0x1230] sm:$0xff]
        %v792 = vld [vmem:[%s170 + $0x1238] sm:$0xff]
        %v793 = vld [vmem:[%s170 + $0x1240] sm:$0xff]
        %v794 = vld [vmem:[%s170 + $0x1248] sm:$0xff]
        %v795 = vld [vmem:[%s170 + $0x1250] sm:$0xff]
        %v796 = vld [vmem:[%s170 + $0x1258] sm:$0xff]
        %v797 = vld [vmem:[%s170 + $0x1260] sm:$0xff]
        %v798 = vld [vmem:[%s170 + $0x1268] sm:$0xff]
        %v799 = vld [vmem:[%s170 + $0x1270] sm:$0xff]
        %v800 = vld [vmem:[%s170 + $0x1278] sm:$0xff]
        %v801 = vld [vmem:[%s170 + $0x1280] sm:$0xff]
        %v802 = vld [vmem:[%s170 + $0x1288] sm:$0xff]
        %v803 = vld [vmem:[%s170 + $0x1290] sm:$0xff]
        %v804 = vld [vmem:[%s170 + $0x1298] sm:$0xff]
        %v805 = vld [vmem:[%s170 + $0x12a0] sm:$0xff]
        %v806 = vld [vmem:[%s170 + $0x12a8] sm:$0xff]
        %v807 = vld [vmem:[%s170 + $0x12b0] sm:$0xff]
        %v808 = vld [vmem:[%s170 + $0x12b8] sm:$0xff]
        %v809 = vld [vmem:[%s170 + $0x12c0] sm:$0xff]
        %v810 = vld [vmem:[%s170 + $0x12c8] sm:$0xff]
        %v811 = vld [vmem:[%s170 + $0x12d0] sm:$0xff]
        %v812 = vld [vmem:[%s170 + $0x12d8] sm:$0xff]
        %v813 = vld [vmem:[%s170 + $0x12e0] sm:$0xff]
        %v814 = vld [vmem:[%s170 + $0x12e8] sm:$0xff]
        %v815 = vld [vmem:[%s170 + $0x12f0] sm:$0xff]
        %v816 = vld [vmem:[%s170 + $0x12f8] sm:$0xff]
        %v817 = vld [vmem:[%s170 + $0x1300] sm:$0xff]
        %v818 = vld [vmem:[%s170 + $0x1308] sm:$0xff]
        %v819 = vld [vmem:[%s170 + $0x1310] sm:$0xff]
        %v820 = vld [vmem:[%s170 + $0x1318] sm:$0xff]
        %v821 = vld [vmem:[%s170 + $0x1320] sm:$0xff]
        %v822 = vld [vmem:[%s170 + $0x1328] sm:$0xff]
        %v823 = vld [vmem:[%s170 + $0x1330] sm:$0xff]
        %v824 = vld [vmem:[%s170 + $0x1338] sm:$0xff]
        %v825 = vld [vmem:[%s170 + $0x1340] sm:$0xff]
        %v826 = vld [vmem:[%s170 + $0x1348] sm:$0xff]
        %v827 = vld [vmem:[%s170 + $0x1350] sm:$0xff]
        %v828 = vld [vmem:[%s170 + $0x1358] sm:$0xff]
        %v829 = vld [vmem:[%s170 + $0x1360] sm:$0xff]
        %v830 = vld [vmem:[%s170 + $0x1368] sm:$0xff]
        %v831 = vld [vmem:[%s170 + $0x1370] sm:$0xff]
        %v832 = vld [vmem:[%s170 + $0x1378] sm:$0xff]
        %v833 = vld [vmem:[%s170 + $0x1380] sm:$0xff]
        %v834 = vld [vmem:[%s170 + $0x1388] sm:$0xff]
        %v835 = vld [vmem:[%s170 + $0x1390] sm:$0xff]
        %v836 = vld [vmem:[%s170 + $0x1398] sm:$0xff]
        %v837 = vld [vmem:[%s170 + $0x13a0] sm:$0xff]
        %v838 = vld [vmem:[%s170 + $0x13a8] sm:$0xff]
        %v839 = vld [vmem:[%s170 + $0x13b0] sm:$0xff]
        %v840 = vld [vmem:[%s170 + $0x13b8] sm:$0xff]
        %v841 = vld [vmem:[%s170 + $0x13c0] sm:$0xff]
        %v842 = vld [vmem:[%s170 + $0x13c8] sm:$0xff]
        %v843 = vld [vmem:[%s170 + $0x13d0] sm:$0xff]
        %v844 = vld [vmem:[%s170 + $0x13d8] sm:$0xff]
        %v845 = vld [vmem:[%s170 + $0x13e0] sm:$0xff]
        %v846 = vld [vmem:[%s170 + $0x13e8] sm:$0xff]
        %v847 = vld [vmem:[%s170 + $0x13f0] sm:$0xff]
        %v848 = vld [vmem:[%s170 + $0x13f8] sm:$0xff]
        %v849 = vld [vmem:[%s170 + $0x1400] sm:$0xff]
        %v850 = vld [vmem:[%s170 + $0x1408] sm:$0xff]
        %v851 = vld [vmem:[%s170 + $0x1410] sm:$0xff]
        %v852 = vld [vmem:[%s170 + $0x1418] sm:$0xff]
        %v853 = vld [vmem:[%s170 + $0x1420] sm:$0xff]
        %v854 = vld [vmem:[%s170 + $0x1428] sm:$0xff]
        %v855 = vld [vmem:[%s170 + $0x1430] sm:$0xff]
        %v856 = vld [vmem:[%s170 + $0x1438] sm:$0xff]
        %v857 = vld [vmem:[%s170 + $0x1440] sm:$0xff]
        %v858 = vld [vmem:[%s170 + $0x1448] sm:$0xff]
        %v859 = vld [vmem:[%s170 + $0x1450] sm:$0xff]
        %v860 = vld [vmem:[%s170 + $0x1458] sm:$0xff]
        %v861 = vld [vmem:[%s170 + $0x1460] sm:$0xff]
        %v862 = vld [vmem:[%s170 + $0x1468] sm:$0xff]
        %v863 = vld [vmem:[%s170 + $0x1470] sm:$0xff]
        %v864 = vld [vmem:[%s170 + $0x1478] sm:$0xff]
        %v865 = vld [vmem:[%s170 + $0x1480] sm:$0xff]
        %v866 = vld [vmem:[%s170 + $0x1488] sm:$0xff]
        %v867 = vld [vmem:[%s170 + $0x1490] sm:$0xff]
        %v868 = vld [vmem:[%s170 + $0x1498] sm:$0xff]
        %v869 = vld [vmem:[%s170 + $0x14a0] sm:$0xff]
        %v870 = vld [vmem:[%s170 + $0x14a8] sm:$0xff]
        %v871 = vld [vmem:[%s170 + $0x14b0] sm:$0xff]
        %v872 = vld [vmem:[%s170 + $0x14b8] sm:$0xff]
        %v873 = vld [vmem:[%s170 + $0x14c0] sm:$0xff]
        %v874 = vld [vmem:[%s170 + $0x14c8] sm:$0xff]
        %v875 = vld [vmem:[%s170 + $0x14d0] sm:$0xff]
        %v876 = vld [vmem:[%s170 + $0x14d8] sm:$0xff]
        %v877 = vld [vmem:[%s170 + $0x14e0] sm:$0xff]
        %v878 = vld [vmem:[%s170 + $0x14e8] sm:$0xff]
        %v879 = vld [vmem:[%s170 + $0x14f0] sm:$0xff]
        %v880 = vld [vmem:[%s170 + $0x14f8] sm:$0xff]
        %v881 = vld [vmem:[%s170 + $0x1500] sm:$0xff]
        %v882 = vld [vmem:[%s170 + $0x1508] sm:$0xff]
        %v883 = vld [vmem:[%s170 + $0x1510] sm:$0xff]
        %v884 = vld [vmem:[%s170 + $0x1518] sm:$0xff]
        %v885 = vld [vmem:[%s170 + $0x1520] sm:$0xff]
        %v886 = vld [vmem:[%s170 + $0x1528] sm:$0xff]
        %v887 = vld [vmem:[%s170 + $0x1530] sm:$0xff]
        %v888 = vld [vmem:[%s170 + $0x1538] sm:$0xff]
        %v889 = vld [vmem:[%s170 + $0x1540] sm:$0xff]
        %v890 = vld [vmem:[%s170 + $0x1548] sm:$0xff]
        %v891 = vld [vmem:[%s170 + $0x1550] sm:$0xff]
        %v892 = vld [vmem:[%s170 + $0x1558] sm:$0xff]
        %v893 = vld [vmem:[%s170 + $0x1560] sm:$0xff]
        %v894 = vld [vmem:[%s170 + $0x1568] sm:$0xff]
        %v895 = vld [vmem:[%s170 + $0x1570] sm:$0xff]
        %v896 = vld [vmem:[%s170 + $0x1578] sm:$0xff]
        %v897 = vld [vmem:[%s170 + $0x1580] sm:$0xff]
        %v898 = vld [vmem:[%s170 + $0x1588] sm:$0xff]
        %v899 = vld [vmem:[%s170 + $0x1590] sm:$0xff]
        %v900 = vld [vmem:[%s170 + $0x1598] sm:$0xff]
        %v901 = vld [vmem:[%s170 + $0x15a0] sm:$0xff]
        %v902 = vld [vmem:[%s170 + $0x15a8] sm:$0xff]
        %v903 = vld [vmem:[%s170 + $0x15b0] sm:$0xff]
        %v904 = vld [vmem:[%s170 + $0x15b8] sm:$0xff]
        %v905 = vld [vmem:[%s170 + $0x15c0] sm:$0xff]
        %v906 = vld [vmem:[%s170 + $0x15c8] sm:$0xff]
        %v907 = vld [vmem:[%s170 + $0x15d0] sm:$0xff]
        %v908 = vld [vmem:[%s170 + $0x15d8] sm:$0xff]
        %v909 = vld [vmem:[%s170 + $0x15e0] sm:$0xff]
        %v910 = vld [vmem:[%s170 + $0x15e8] sm:$0xff]
        %v911 = vld [vmem:[%s170 + $0x15f0] sm:$0xff]
        %v912 = vld [vmem:[%s170 + $0x15f8] sm:$0xff]
        %v913 = vld [vmem:[%s170 + $0x1600] sm:$0xff]
        %v914 = vld [vmem:[%s170 + $0x1608] sm:$0xff]
        %v915 = vld [vmem:[%s170 + $0x1610] sm:$0xff]
        %v916 = vld [vmem:[%s170 + $0x1618] sm:$0xff]
        %v917 = vld [vmem:[%s170 + $0x1620] sm:$0xff]
        %v918 = vld [vmem:[%s170 + $0x1628] sm:$0xff]
        %v919 = vld [vmem:[%s170 + $0x1630] sm:$0xff]
        %v920 = vld [vmem:[%s170 + $0x1638] sm:$0xff]
        %v921 = vld [vmem:[%s170 + $0x1640] sm:$0xff]
        %v922 = vld [vmem:[%s170 + $0x1648] sm:$0xff]
        %v923 = vld [vmem:[%s170 + $0x1650] sm:$0xff]
        %v924 = vld [vmem:[%s170 + $0x1658] sm:$0xff]
        %v925 = vld [vmem:[%s170 + $0x1660] sm:$0xff]
        %v926 = vld [vmem:[%s170 + $0x1668] sm:$0xff]
        %v927 = vld [vmem:[%s170 + $0x1670] sm:$0xff]
        %v928 = vld [vmem:[%s170 + $0x1678] sm:$0xff]
        %v929 = vld [vmem:[%s170 + $0x1680] sm:$0xff]
        %v930 = vld [vmem:[%s170 + $0x1688] sm:$0xff]
        %v931 = vld [vmem:[%s170 + $0x1690] sm:$0xff]
        %v932 = vld [vmem:[%s170 + $0x1698] sm:$0xff]
        %v933 = vld [vmem:[%s170 + $0x16a0] sm:$0xff]
        %v934 = vld [vmem:[%s170 + $0x16a8] sm:$0xff]
        %v935 = vld [vmem:[%s170 + $0x16b0] sm:$0xff]
        %v936 = vld [vmem:[%s170 + $0x16b8] sm:$0xff]
        %v937 = vld [vmem:[%s170 + $0x16c0] sm:$0xff]
        %v938 = vld [vmem:[%s170 + $0x16c8] sm:$0xff]
        %v939 = vld [vmem:[%s170 + $0x16d0] sm:$0xff]
        %v940 = vld [vmem:[%s170 + $0x16d8] sm:$0xff]
        %v941 = vld [vmem:[%s170 + $0x16e0] sm:$0xff]
        %v942 = vld [vmem:[%s170 + $0x16e8] sm:$0xff]
        %v943 = vld [vmem:[%s170 + $0x16f0] sm:$0xff]
        %v944 = vld [vmem:[%s170 + $0x16f8] sm:$0xff]
        %v945 = vld [vmem:[%s170 + $0x1700] sm:$0xff]
        %v946 = vld [vmem:[%s170 + $0x1708] sm:$0xff]
        %v947 = vld [vmem:[%s170 + $0x1710] sm:$0xff]
        %v948 = vld [vmem:[%s170 + $0x1718] sm:$0xff]
        %v949 = vld [vmem:[%s170 + $0x1720] sm:$0xff]
        %v950 = vld [vmem:[%s170 + $0x1728] sm:$0xff]
        %v951 = vld [vmem:[%s170 + $0x1730] sm:$0xff]
        %v952 = vld [vmem:[%s170 + $0x1738] sm:$0xff]
        %v953 = vld [vmem:[%s170 + $0x1740] sm:$0xff]
        %v954 = vld [vmem:[%s170 + $0x1748] sm:$0xff]
        %v955 = vld [vmem:[%s170 + $0x1750] sm:$0xff]
        %v956 = vld [vmem:[%s170 + $0x1758] sm:$0xff]
        %v957 = vld [vmem:[%s170 + $0x1760] sm:$0xff]
        %v958 = vld [vmem:[%s170 + $0x1768] sm:$0xff]
        %v959 = vld [vmem:[%s170 + $0x1770] sm:$0xff]
        %v960 = vld [vmem:[%s170 + $0x1778] sm:$0xff]
        %v961 = vld [vmem:[%s170 + $0x1780] sm:$0xff]
        %v962 = vld [vmem:[%s170 + $0x1788] sm:$0xff]
        %v963 = vld [vmem:[%s170 + $0x1790] sm:$0xff]
        %v964 = vld [vmem:[%s170 + $0x1798] sm:$0xff]
        %v965 = vld [vmem:[%s170 + $0x17a0] sm:$0xff]
        %v966 = vld [vmem:[%s170 + $0x17a8] sm:$0xff]
        %v967 = vld [vmem:[%s170 + $0x17b0] sm:$0xff]
        %v968 = vld [vmem:[%s170 + $0x17b8] sm:$0xff]
        %v969 = vld [vmem:[%s170 + $0x17c0] sm:$0xff]
        %v970 = vld [vmem:[%s170 + $0x17c8] sm:$0xff]
        %v971 = vld [vmem:[%s170 + $0x17d0] sm:$0xff]
        %v972 = vld [vmem:[%s170 + $0x17d8] sm:$0xff]
        %v973 = vld [vmem:[%s170 + $0x17e0] sm:$0xff]
        %v974 = vld [vmem:[%s170 + $0x17e8] sm:$0xff]
        %v975 = vld [vmem:[%s170 + $0x17f0] sm:$0xff]
        %v976 = vld [vmem:[%s170 + $0x17f8] sm:$0xff]
        %v977 = vld [vmem:[%s170 + $0x1800] sm:$0xff]
        %v978 = vld [vmem:[%s170 + $0x1808] sm:$0xff]
        %v979 = vld [vmem:[%s170 + $0x1810] sm:$0xff]
        %v980 = vld [vmem:[%s170 + $0x1818] sm:$0xff]
        %v981 = vld [vmem:[%s170 + $0x1820] sm:$0xff]
        %v982 = vld [vmem:[%s170 + $0x1828] sm:$0xff]
        %v983 = vld [vmem:[%s170 + $0x1830] sm:$0xff]
        %v984 = vld [vmem:[%s170 + $0x1838] sm:$0xff]
        %v985 = vld [vmem:[%s170 + $0x1840] sm:$0xff]
        %v986 = vld [vmem:[%s170 + $0x1848] sm:$0xff]
        %v987 = vld [vmem:[%s170 + $0x1850] sm:$0xff]
        %v988 = vld [vmem:[%s170 + $0x1858] sm:$0xff]
        %v989 = vld [vmem:[%s170 + $0x1860] sm:$0xff]
        %v990 = vld [vmem:[%s170 + $0x1868] sm:$0xff]
        %v991 = vld [vmem:[%s170 + $0x1870] sm:$0xff]
        %v992 = vld [vmem:[%s170 + $0x1878] sm:$0xff]
        %v993 = vld [vmem:[%s170 + $0x1880] sm:$0xff]
        %v994 = vld [vmem:[%s170 + $0x1888] sm:$0xff]
        %v995 = vld [vmem:[%s170 + $0x1890] sm:$0xff]
        %v996 = vld [vmem:[%s170 + $0x1898] sm:$0xff]
        %v997 = vld [vmem:[%s170 + $0x18a0] sm:$0xff]
        %v998 = vld [vmem:[%s170 + $0x18a8] sm:$0xff]
        %v999 = vld [vmem:[%s170 + $0x18b0] sm:$0xff]
        %v1000 = vld [vmem:[%s170 + $0x18b8] sm:$0xff]
        %v1001 = vld [vmem:[%s170 + $0x18c0] sm:$0xff]
        %v1002 = vld [vmem:[%s170 + $0x18c8] sm:$0xff]
        %v1003 = vld [vmem:[%s170 + $0x18d0] sm:$0xff]
        %v1004 = vld [vmem:[%s170 + $0x18d8] sm:$0xff]
        %v1005 = vld [vmem:[%s170 + $0x18e0] sm:$0xff]
        %v1006 = vld [vmem:[%s170 + $0x18e8] sm:$0xff]
        %v1007 = vld [vmem:[%s170 + $0x18f0] sm:$0xff]
        %v1008 = vld [vmem:[%s170 + $0x18f8] sm:$0xff]
        %v1009 = vld [vmem:[%s170 + $0x1900] sm:$0xff]
        %v1010 = vld [vmem:[%s170 + $0x1908] sm:$0xff]
        %v1011 = vld [vmem:[%s170 + $0x1910] sm:$0xff]
        %v1012 = vld [vmem:[%s170 + $0x1918] sm:$0xff]
        %v1013 = vld [vmem:[%s170 + $0x1920] sm:$0xff]
        %v1014 = vld [vmem:[%s170 + $0x1928] sm:$0xff]
        %v1015 = vld [vmem:[%s170 + $0x1930] sm:$0xff]
        %v1016 = vld [vmem:[%s170 + $0x1938] sm:$0xff]
        %v1017 = vld [vmem:[%s170 + $0x1940] sm:$0xff]
        %v1018 = vld [vmem:[%s170 + $0x1948] sm:$0xff]
        %v1019 = vld [vmem:[%s170 + $0x1950] sm:$0xff]
        %v1020 = vld [vmem:[%s170 + $0x1958] sm:$0xff]
        %v1021 = vld [vmem:[%s170 + $0x1960] sm:$0xff]
        %v1022 = vld [vmem:[%s170 + $0x1968] sm:$0xff]
        %v1023 = vld [vmem:[%s170 + $0x1970] sm:$0xff]
        %v1024 = vld [vmem:[%s170 + $0x1978] sm:$0xff]
        %v1025 = vld [vmem:[%s170 + $0x1980] sm:$0xff]
        %v1026 = vld [vmem:[%s170 + $0x1988] sm:$0xff]
        %v1027 = vld [vmem:[%s170 + $0x1990] sm:$0xff]
        %v1028 = vld [vmem:[%s170 + $0x1998] sm:$0xff]
        %v1029 = vld [vmem:[%s170 + $0x19a0] sm:$0xff]
        %v1030 = vld [vmem:[%s170 + $0x19a8] sm:$0xff]
        %v1031 = vld [vmem:[%s170 + $0x19b0] sm:$0xff]
        %v1032 = vld [vmem:[%s170 + $0x19b8] sm:$0xff]
        %v1033 = vld [vmem:[%s170 + $0x19c0] sm:$0xff]
        %v1034 = vld [vmem:[%s170 + $0x19c8] sm:$0xff]
        %v1035 = vld [vmem:[%s170 + $0x19d0] sm:$0xff]
        %v1036 = vld [vmem:[%s170 + $0x19d8] sm:$0xff]
        %v1037 = vld [vmem:[%s170 + $0x19e0] sm:$0xff]
        %v1038 = vld [vmem:[%s170 + $0x19e8] sm:$0xff]
        %v1039 = vld [vmem:[%s170 + $0x19f0] sm:$0xff]
        %v1040 = vld [vmem:[%s170 + $0x19f8] sm:$0xff]
        %v1041 = vld [vmem:[%s170 + $0x1a00] sm:$0xff]
        %v1042 = vld [vmem:[%s170 + $0x1a08] sm:$0xff]
        %v1043 = vld [vmem:[%s170 + $0x1a10] sm:$0xff]
        %v1044 = vld [vmem:[%s170 + $0x1a18] sm:$0xff]
        %v1045 = vld [vmem:[%s170 + $0x1a20] sm:$0xff]
        %v1046 = vld [vmem:[%s170 + $0x1a28] sm:$0xff]
        %v1047 = vld [vmem:[%s170 + $0x1a30] sm:$0xff]
        %v1048 = vld [vmem:[%s170 + $0x1a38] sm:$0xff]
        %v1049 = vld [vmem:[%s170 + $0x1a40] sm:$0xff]
        %v1050 = vld [vmem:[%s170 + $0x1a48] sm:$0xff]
        %v1051 = vld [vmem:[%s170 + $0x1a50] sm:$0xff]
        %v1052 = vld [vmem:[%s170 + $0x1a58] sm:$0xff]
        %v1053 = vld [vmem:[%s170 + $0x1a60] sm:$0xff]
        %v1054 = vld [vmem:[%s170 + $0x1a68] sm:$0xff]
        %v1055 = vld [vmem:[%s170 + $0x1a70] sm:$0xff]
        %v1056 = vld [vmem:[%s170 + $0x1a78] sm:$0xff]
        %v1057 = vld [vmem:[%s170 + $0x1a80] sm:$0xff]
        %v1058 = vld [vmem:[%s170 + $0x1a88] sm:$0xff]
        %v1059 = vld [vmem:[%s170 + $0x1a90] sm:$0xff]
        %v1060 = vld [vmem:[%s170 + $0x1a98] sm:$0xff]
        %v1061 = vld [vmem:[%s170 + $0x1aa0] sm:$0xff]
        %v1062 = vld [vmem:[%s170 + $0x1aa8] sm:$0xff]
        %v1063 = vld [vmem:[%s170 + $0x1ab0] sm:$0xff]
        %v1064 = vld [vmem:[%s170 + $0x1ab8] sm:$0xff]
        %v1065 = vld [vmem:[%s170 + $0x1ac0] sm:$0xff]
        %v1066 = vld [vmem:[%s170 + $0x1ac8] sm:$0xff]
        %v1067 = vld [vmem:[%s170 + $0x1ad0] sm:$0xff]
        %v1068 = vld [vmem:[%s170 + $0x1ad8] sm:$0xff]
        %v1069 = vld [vmem:[%s170 + $0x1ae0] sm:$0xff]
        %v1070 = vld [vmem:[%s170 + $0x1ae8] sm:$0xff]
        %v1071 = vld [vmem:[%s170 + $0x1af0] sm:$0xff]
        %v1072 = vld [vmem:[%s170 + $0x1af8] sm:$0xff]
        %v1073 = vld [vmem:[%s170 + $0x1b00] sm:$0xff]
        %v1074 = vld [vmem:[%s170 + $0x1b08] sm:$0xff]
        %v1075 = vld [vmem:[%s170 + $0x1b10] sm:$0xff]
        %v1076 = vld [vmem:[%s170 + $0x1b18] sm:$0xff]
        %v1077 = vld [vmem:[%s170 + $0x1b20] sm:$0xff]
        %v1078 = vld [vmem:[%s170 + $0x1b28] sm:$0xff]
        %v1079 = vld [vmem:[%s170 + $0x1b30] sm:$0xff]
        %v1080 = vld [vmem:[%s170 + $0x1b38] sm:$0xff]
        %v1081 = vld [vmem:[%s170 + $0x1b40] sm:$0xff]
        %v1082 = vld [vmem:[%s170 + $0x1b48] sm:$0xff]
        %v1083 = vld [vmem:[%s170 + $0x1b50] sm:$0xff]
        %v1084 = vld [vmem:[%s170 + $0x1b58] sm:$0xff]
        %v1085 = vld [vmem:[%s170 + $0x1b60] sm:$0xff]
        %v1086 = vld [vmem:[%s170 + $0x1b68] sm:$0xff]
        %v1087 = vld [vmem:[%s170 + $0x1b70] sm:$0xff]
        %v1088 = vld [vmem:[%s170 + $0x1b78] sm:$0xff]
        %v1089 = vld [vmem:[%s170 + $0x1b80] sm:$0xff]
        %v1090 = vld [vmem:[%s170 + $0x1b88] sm:$0xff]
        %v1091 = vld [vmem:[%s170 + $0x1b90] sm:$0xff]
        %v1092 = vld [vmem:[%s170 + $0x1b98] sm:$0xff]
        %v1093 = vld [vmem:[%s170 + $0x1ba0] sm:$0xff]
        %v1094 = vld [vmem:[%s170 + $0x1ba8] sm:$0xff]
        %v1095 = vld [vmem:[%s170 + $0x1bb0] sm:$0xff]
        %v1096 = vld [vmem:[%s170 + $0x1bb8] sm:$0xff]
        %v1097 = vld [vmem:[%s170 + $0x1bc0] sm:$0xff]
        %v1098 = vld [vmem:[%s170 + $0x1bc8] sm:$0xff]
        %v1099 = vld [vmem:[%s170 + $0x1bd0] sm:$0xff]
        %v1100 = vld [vmem:[%s170 + $0x1bd8] sm:$0xff]
        %v1101 = vld [vmem:[%s170 + $0x1be0] sm:$0xff]
        %v1102 = vld [vmem:[%s170 + $0x1be8] sm:$0xff]
        %v1103 = vld [vmem:[%s170 + $0x1bf0] sm:$0xff]
        %v1104 = vld [vmem:[%s170 + $0x1bf8] sm:$0xff]
        %1106 = vst [vmem:[#allocation1] ss:$9 sm:$0xff] %v205
        %v1107 = vld [vmem:[#allocation1] sm:$0xff]
        %v1108 = vld [vmem:[#allocation1 + $0x9] sm:$0xff]
        %v1109 = vld [vmem:[#allocation1 + $0x12] sm:$0xff]
        %v1110 = vld [vmem:[#allocation1 + $0x1b] sm:$0xff]
        %v1111 = vld [vmem:[#allocation1 + $0x24] sm:$0xff]
        %v1112 = vld [vmem:[#allocation1 + $0x2d] sm:$0xff]
        %v1113 = vld [vmem:[#allocation1 + $0x36] sm:$0xff]
        %v1114 = vld [vmem:[#allocation1 + $0x3f] sm:$0xff]
        %1116 = vst [vmem:[#allocation1] ss:$9 sm:$0xff] %v206
        %v1117 = vld [vmem:[#allocation1] sm:$0xff]
        %v1118 = vld [vmem:[#allocation1 + $0x9] sm:$0xff]
        %v1119 = vld [vmem:[#allocation1 + $0x12] sm:$0xff]
        %v1120 = vld [vmem:[#allocation1 + $0x1b] sm:$0xff]
        %v1121 = vld [vmem:[#allocation1 + $0x24] sm:$0xff]
        %v1122 = vld [vmem:[#allocation1 + $0x2d] sm:$0xff]
        %v1123 = vld [vmem:[#allocation1 + $0x36] sm:$0xff]
        %v1124 = vld [vmem:[#allocation1 + $0x3f] sm:$0xff]
        %1126 = vst [vmem:[#allocation1] ss:$9 sm:$0xff] %v207
        %v1127 = vld [vmem:[#allocation1] sm:$0xff]
        %v1128 = vld [vmem:[#allocation1 + $0x9] sm:$0xff]
        %v1129 = vld [vmem:[#allocation1 + $0x12] sm:$0xff]
        %v1130 = vld [vmem:[#allocation1 + $0x1b] sm:$0xff]
        %v1131 = vld [vmem:[#allocation1 + $0x24] sm:$0xff]
        %v1132 = vld [vmem:[#allocation1 + $0x2d] sm:$0xff]
        %v1133 = vld [vmem:[#allocation1 + $0x36] sm:$0xff]
        %v1134 = vld [vmem:[#allocation1 + $0x3f] sm:$0xff]
        %1136 = vst [vmem:[#allocation1] ss:$9 sm:$0xff] %v208
        %v1137 = vld [vmem:[#allocation1] sm:$0xff]
        %v1138 = vld [vmem:[#allocation1 + $0x9] sm:$0xff]
        %v1139 = vld [vmem:[#allocation1 + $0x12] sm:$0xff]
        %v1140 = vld [vmem:[#allocation1 + $0x1b] sm:$0xff]
        %v2065 = vunpack.c.l.b16 %v209
        %v2066 = vunpack.c.h.b16 %v209
        %v2067 = vunpack.c.l.b16 %v210
        %v2068 = vunpack.c.h.b16 %v210
        %v2069 = vunpack.c.l.b16 %v211
        %v2070 = vunpack.c.h.b16 %v211
        %v2071 = vunpack.c.l.b16 %v212
        %v2072 = vunpack.c.h.b16 %v212
        %v2073 = vunpack.c.l.b16 %v213
        %v2074 = vunpack.c.h.b16 %v213
        %v2075 = vunpack.c.l.b16 %v214
        %v2076 = vunpack.c.h.b16 %v214
        %v2077 = vunpack.c.l.b16 %v215
        %v2078 = vunpack.c.h.b16 %v215
        %v2079 = vunpack.c.l.b16 %v216
        %v2080 = vunpack.c.h.b16 %v216
        %v2081 = vunpack.c.l.b16 %v217
        %v2082 = vunpack.c.h.b16 %v217
        %v2083 = vunpack.c.l.b16 %v218
        %v2084 = vunpack.c.h.b16 %v218
        %v2085 = vunpack.c.l.b16 %v219
        %v2086 = vunpack.c.h.b16 %v219
        %v2087 = vunpack.c.l.b16 %v220
        %v2088 = vunpack.c.h.b16 %v220
        %v2089 = vunpack.c.l.b16 %v221
        %v2090 = vunpack.c.h.b16 %v221
        %v2091 = vunpack.c.l.b16 %v222
        %v2092 = vunpack.c.h.b16 %v222
        %v2093 = vunpack.c.l.b16 %v223
        %v2094 = vunpack.c.h.b16 %v223
        %v2095 = vunpack.c.l.b16 %v224
        %v2096 = vunpack.c.h.b16 %v224
        %v2097 = vunpack.c.l.b16 %v225
        %v2098 = vunpack.c.h.b16 %v225
        %v2099 = vunpack.c.l.b16 %v226
        %v2100 = vunpack.c.h.b16 %v226
        %v2101 = vunpack.c.l.b16 %v227
        %v2102 = vunpack.c.h.b16 %v227
        %v2103 = vunpack.c.l.b16 %v228
        %v2104 = vunpack.c.h.b16 %v228
        %v2105 = vunpack.c.l.b16 %v229
        %v2106 = vunpack.c.h.b16 %v229
        %v2107 = vunpack.c.l.b16 %v230
        %v2108 = vunpack.c.h.b16 %v230
        %v2109 = vunpack.c.l.b16 %v231
        %v2110 = vunpack.c.h.b16 %v231
        %v2111 = vunpack.c.l.b16 %v232
        %v2112 = vunpack.c.h.b16 %v232
        %v2113 = vunpack.c.l.b16 %v233
        %v2114 = vunpack.c.h.b16 %v233
        %v2115 = vunpack.c.l.b16 %v234
        %v2116 = vunpack.c.h.b16 %v234
        %v2117 = vunpack.c.l.b16 %v235
        %v2118 = vunpack.c.h.b16 %v235
        %v2119 = vunpack.c.l.b16 %v236
        %v2120 = vunpack.c.h.b16 %v236
        %v2121 = vunpack.c.l.b16 %v237
        %v2122 = vunpack.c.h.b16 %v237
        %v2123 = vunpack.c.l.b16 %v238
        %v2124 = vunpack.c.h.b16 %v238
        %v2125 = vunpack.c.l.b16 %v239
        %v2126 = vunpack.c.h.b16 %v239
        %v2127 = vunpack.c.l.b16 %v240
        %v2128 = vunpack.c.h.b16 %v240
        %v2129 = vunpack.c.l.b16 %v241
        %v2130 = vunpack.c.h.b16 %v241
        %v2131 = vunpack.c.l.b16 %v242
        %v2132 = vunpack.c.h.b16 %v242
        %v2133 = vunpack.c.l.b16 %v243
        %v2134 = vunpack.c.h.b16 %v243
        %v2135 = vunpack.c.l.b16 %v244
        %v2136 = vunpack.c.h.b16 %v244
        %v2137 = vunpack.c.l.b16 %v245
        %v2138 = vunpack.c.h.b16 %v245
        %v2139 = vunpack.c.l.b16 %v246
        %v2140 = vunpack.c.h.b16 %v246
        %v2141 = vunpack.c.l.b16 %v247
        %v2142 = vunpack.c.h.b16 %v247
        %v2143 = vunpack.c.l.b16 %v248
        %v2144 = vunpack.c.h.b16 %v248
        %v2145 = vunpack.c.l.b16 %v249
        %v2146 = vunpack.c.h.b16 %v249
        %v2147 = vunpack.c.l.b16 %v250
        %v2148 = vunpack.c.h.b16 %v250
        %v2149 = vunpack.c.l.b16 %v251
        %v2150 = vunpack.c.h.b16 %v251
        %v2151 = vunpack.c.l.b16 %v252
        %v2152 = vunpack.c.h.b16 %v252
        %v2153 = vunpack.c.l.b16 %v253
        %v2154 = vunpack.c.h.b16 %v253
        %v2155 = vunpack.c.l.b16 %v254
        %v2156 = vunpack.c.h.b16 %v254
        %v2157 = vunpack.c.l.b16 %v255
        %v2158 = vunpack.c.h.b16 %v255
        %v2159 = vunpack.c.l.b16 %v256
        %v2160 = vunpack.c.h.b16 %v256
        %v2161 = vunpack.c.l.b16 %v257
        %v2162 = vunpack.c.h.b16 %v257
        %v2163 = vunpack.c.l.b16 %v258
        %v2164 = vunpack.c.h.b16 %v258
        %v2165 = vunpack.c.l.b16 %v259
        %v2166 = vunpack.c.h.b16 %v259
        %v2167 = vunpack.c.l.b16 %v260
        %v2168 = vunpack.c.h.b16 %v260
        %v2169 = vunpack.c.l.b16 %v261
        %v2170 = vunpack.c.h.b16 %v261
        %v2171 = vunpack.c.l.b16 %v262
        %v2172 = vunpack.c.h.b16 %v262
        %v2173 = vunpack.c.l.b16 %v263
        %v2174 = vunpack.c.h.b16 %v263
        %v2175 = vunpack.c.l.b16 %v264
        %v2176 = vunpack.c.h.b16 %v264
        %v2177 = vunpack.c.l.b16 %v265
        %v2178 = vunpack.c.h.b16 %v265
        %v2179 = vunpack.c.l.b16 %v266
        %v2180 = vunpack.c.h.b16 %v266
        %v2181 = vunpack.c.l.b16 %v267
        %v2182 = vunpack.c.h.b16 %v267
        %v2183 = vunpack.c.l.b16 %v268
        %v2184 = vunpack.c.h.b16 %v268
        %v2185 = vunpack.c.l.b16 %v269
        %v2186 = vunpack.c.h.b16 %v269
        %v2187 = vunpack.c.l.b16 %v270
        %v2188 = vunpack.c.h.b16 %v270
        %v2189 = vunpack.c.l.b16 %v271
        %v2190 = vunpack.c.h.b16 %v271
        %v2191 = vunpack.c.l.b16 %v272
        %v2192 = vunpack.c.h.b16 %v272
        %v2193 = vunpack.c.l.b16 %v273
        %v2194 = vunpack.c.h.b16 %v273
        %v2195 = vunpack.c.l.b16 %v274
        %v2196 = vunpack.c.h.b16 %v274
        %v2197 = vunpack.c.l.b16 %v275
        %v2198 = vunpack.c.h.b16 %v275
        %v2199 = vunpack.c.l.b16 %v276
        %v2200 = vunpack.c.h.b16 %v276
        %v2201 = vunpack.c.l.b16 %v277
        %v2202 = vunpack.c.h.b16 %v277
        %v2203 = vunpack.c.l.b16 %v278
        %v2204 = vunpack.c.h.b16 %v278
        %v2205 = vunpack.c.l.b16 %v279
        %v2206 = vunpack.c.h.b16 %v279
        %v2207 = vunpack.c.l.b16 %v280
        %v2208 = vunpack.c.h.b16 %v280
        %v2209 = vunpack.c.l.b16 %v281
        %v2210 = vunpack.c.h.b16 %v281
        %v2211 = vunpack.c.l.b16 %v282
        %v2212 = vunpack.c.h.b16 %v282
        %v2213 = vunpack.c.l.b16 %v283
        %v2214 = vunpack.c.h.b16 %v283
        %v2215 = vunpack.c.l.b16 %v284
        %v2216 = vunpack.c.h.b16 %v284
        %v2217 = vunpack.c.l.b16 %v285
        %v2218 = vunpack.c.h.b16 %v285
        %v2219 = vunpack.c.l.b16 %v286
        %v2220 = vunpack.c.h.b16 %v286
        %v2221 = vunpack.c.l.b16 %v287
        %v2222 = vunpack.c.h.b16 %v287
        %v2223 = vunpack.c.l.b16 %v288
        %v2224 = vunpack.c.h.b16 %v288
        %v2225 = vunpack.c.l.b16 %v289
        %v2226 = vunpack.c.h.b16 %v289
        %v2227 = vunpack.c.l.b16 %v290
        %v2228 = vunpack.c.h.b16 %v290
        %v2229 = vunpack.c.l.b16 %v291
        %v2230 = vunpack.c.h.b16 %v291
        %v2231 = vunpack.c.l.b16 %v292
        %v2232 = vunpack.c.h.b16 %v292
        %v2233 = vunpack.c.l.b16 %v293
        %v2234 = vunpack.c.h.b16 %v293
        %v2235 = vunpack.c.l.b16 %v294
        %v2236 = vunpack.c.h.b16 %v294
        %v2237 = vunpack.c.l.b16 %v295
        %v2238 = vunpack.c.h.b16 %v295
        %v2239 = vunpack.c.l.b16 %v296
        %v2240 = vunpack.c.h.b16 %v296
        %v2241 = vunpack.c.l.b16 %v297
        %v2242 = vunpack.c.h.b16 %v297
        %v2243 = vunpack.c.l.b16 %v298
        %v2244 = vunpack.c.h.b16 %v298
        %v2245 = vunpack.c.l.b16 %v299
        %v2246 = vunpack.c.h.b16 %v299
        %v2247 = vunpack.c.l.b16 %v300
        %v2248 = vunpack.c.h.b16 %v300
        %v2249 = vunpack.c.l.b16 %v301
        %v2250 = vunpack.c.h.b16 %v301
        %v2251 = vunpack.c.l.b16 %v302
        %v2252 = vunpack.c.h.b16 %v302
        %v2253 = vunpack.c.l.b16 %v303
        %v2254 = vunpack.c.h.b16 %v303
        %v2255 = vunpack.c.l.b16 %v304
        %v2256 = vunpack.c.h.b16 %v304
        %v2257 = vunpack.c.l.b16 %v305
        %v2258 = vunpack.c.h.b16 %v305
        %v2259 = vunpack.c.l.b16 %v306
        %v2260 = vunpack.c.h.b16 %v306
        %v2261 = vunpack.c.l.b16 %v307
        %v2262 = vunpack.c.h.b16 %v307
        %v2263 = vunpack.c.l.b16 %v308
        %v2264 = vunpack.c.h.b16 %v308
        %v2265 = vunpack.c.l.b16 %v309
        %v2266 = vunpack.c.h.b16 %v309
        %v2267 = vunpack.c.l.b16 %v310
        %v2268 = vunpack.c.h.b16 %v310
        %v2269 = vunpack.c.l.b16 %v311
        %v2270 = vunpack.c.h.b16 %v311
        %v2271 = vunpack.c.l.b16 %v312
        %v2272 = vunpack.c.h.b16 %v312
        %v2273 = vunpack.c.l.b16 %v313
        %v2274 = vunpack.c.h.b16 %v313
        %v2275 = vunpack.c.l.b16 %v314
        %v2276 = vunpack.c.h.b16 %v314
        %v2277 = vunpack.c.l.b16 %v315
        %v2278 = vunpack.c.h.b16 %v315
        %v2279 = vunpack.c.l.b16 %v316
        %v2280 = vunpack.c.h.b16 %v316
        %v2281 = vunpack.c.l.b16 %v317
        %v2282 = vunpack.c.h.b16 %v317
        %v2283 = vunpack.c.l.b16 %v318
        %v2284 = vunpack.c.h.b16 %v318
        %v2285 = vunpack.c.l.b16 %v319
        %v2286 = vunpack.c.h.b16 %v319
        %v2287 = vunpack.c.l.b16 %v320
        %v2288 = vunpack.c.h.b16 %v320
        %v2289 = vunpack.c.l.b16 %v321
        %v2290 = vunpack.c.h.b16 %v321
        %v2291 = vunpack.c.l.b16 %v322
        %v2292 = vunpack.c.h.b16 %v322
        %v2293 = vunpack.c.l.b16 %v323
        %v2294 = vunpack.c.h.b16 %v323
        %v2295 = vunpack.c.l.b16 %v324
        %v2296 = vunpack.c.h.b16 %v324
        %v2297 = vunpack.c.l.b16 %v325
        %v2298 = vunpack.c.h.b16 %v325
        %v2299 = vunpack.c.l.b16 %v326
        %v2300 = vunpack.c.h.b16 %v326
        %v2301 = vunpack.c.l.b16 %v327
        %v2302 = vunpack.c.h.b16 %v327
        %v2303 = vunpack.c.l.b16 %v328
        %v2304 = vunpack.c.h.b16 %v328
        %v2305 = vunpack.c.l.b16 %v329
        %v2306 = vunpack.c.h.b16 %v329
        %v2307 = vunpack.c.l.b16 %v330
        %v2308 = vunpack.c.h.b16 %v330
        %v2309 = vunpack.c.l.b16 %v331
        %v2310 = vunpack.c.h.b16 %v331
        %v2311 = vunpack.c.l.b16 %v332
        %v2312 = vunpack.c.h.b16 %v332
        %v2313 = vunpack.c.l.b16 %v333
        %v2314 = vunpack.c.h.b16 %v333
        %v2315 = vunpack.c.l.b16 %v334
        %v2316 = vunpack.c.h.b16 %v334
        %v2317 = vunpack.c.l.b16 %v335
        %v2318 = vunpack.c.h.b16 %v335
        %v2319 = vunpack.c.l.b16 %v336
        %v2320 = vunpack.c.h.b16 %v336
        %v2321 = vunpack.c.l.b16 %v337
        %v2322 = vunpack.c.h.b16 %v337
        %v2323 = vunpack.c.l.b16 %v338
        %v2324 = vunpack.c.h.b16 %v338
        %v2325 = vunpack.c.l.b16 %v339
        %v2326 = vunpack.c.h.b16 %v339
        %v2327 = vunpack.c.l.b16 %v340
        %v2328 = vunpack.c.h.b16 %v340
        %v2329 = vunpack.c.l.b16 %v341
        %v2330 = vunpack.c.h.b16 %v341
        %v2331 = vunpack.c.l.b16 %v342
        %v2332 = vunpack.c.h.b16 %v342
        %v2333 = vunpack.c.l.b16 %v343
        %v2334 = vunpack.c.h.b16 %v343
        %v2335 = vunpack.c.l.b16 %v344
        %v2336 = vunpack.c.h.b16 %v344
        %v2337 = vunpack.c.l.b16 %v345
        %v2338 = vunpack.c.h.b16 %v345
        %v2339 = vunpack.c.l.b16 %v346
        %v2340 = vunpack.c.h.b16 %v346
        %v2341 = vunpack.c.l.b16 %v347
        %v2342 = vunpack.c.h.b16 %v347
        %v2343 = vunpack.c.l.b16 %v348
        %v2344 = vunpack.c.h.b16 %v348
        %v2345 = vunpack.c.l.b16 %v349
        %v2346 = vunpack.c.h.b16 %v349
        %v2347 = vunpack.c.l.b16 %v350
        %v2348 = vunpack.c.h.b16 %v350
        %v2349 = vunpack.c.l.b16 %v351
        %v2350 = vunpack.c.h.b16 %v351
        %v2351 = vunpack.c.l.b16 %v352
        %v2352 = vunpack.c.h.b16 %v352
        %v2353 = vunpack.c.l.b16 %v353
        %v2354 = vunpack.c.h.b16 %v353
        %v2355 = vunpack.c.l.b16 %v354
        %v2356 = vunpack.c.h.b16 %v354
        %v2357 = vunpack.c.l.b16 %v355
        %v2358 = vunpack.c.h.b16 %v355
        %v2359 = vunpack.c.l.b16 %v356
        %v2360 = vunpack.c.h.b16 %v356
        %v2361 = vunpack.c.l.b16 %v357
        %v2362 = vunpack.c.h.b16 %v357
        %v2363 = vunpack.c.l.b16 %v358
        %v2364 = vunpack.c.h.b16 %v358
        %v2365 = vunpack.c.l.b16 %v359
        %v2366 = vunpack.c.h.b16 %v359
        %v2367 = vunpack.c.l.b16 %v360
        %v2368 = vunpack.c.h.b16 %v360
        %v2369 = vunpack.c.l.b16 %v361
        %v2370 = vunpack.c.h.b16 %v361
        %v2371 = vunpack.c.l.b16 %v362
        %v2372 = vunpack.c.h.b16 %v362
        %v2373 = vunpack.c.l.b16 %v363
        %v2374 = vunpack.c.h.b16 %v363
        %v2375 = vunpack.c.l.b16 %v364
        %v2376 = vunpack.c.h.b16 %v364
        %v2377 = vunpack.c.l.b16 %v365
        %v2378 = vunpack.c.h.b16 %v365
        %v2379 = vunpack.c.l.b16 %v366
        %v2380 = vunpack.c.h.b16 %v366
        %v2381 = vunpack.c.l.b16 %v367
        %v2382 = vunpack.c.h.b16 %v367
        %v2383 = vunpack.c.l.b16 %v368
        %v2384 = vunpack.c.h.b16 %v368
        %v2385 = vunpack.c.l.b16 %v369
        %v2386 = vunpack.c.h.b16 %v369
        %v2387 = vunpack.c.l.b16 %v370
        %v2388 = vunpack.c.h.b16 %v370
        %v2389 = vunpack.c.l.b16 %v371
        %v2390 = vunpack.c.h.b16 %v371
        %v2391 = vunpack.c.l.b16 %v372
        %v2392 = vunpack.c.h.b16 %v372
        %v2393 = vunpack.c.l.b16 %v373
        %v2394 = vunpack.c.h.b16 %v373
        %v2395 = vunpack.c.l.b16 %v374
        %v2396 = vunpack.c.h.b16 %v374
        %v2397 = vunpack.c.l.b16 %v375
        %v2398 = vunpack.c.h.b16 %v375
        %v2399 = vunpack.c.l.b16 %v376
        %v2400 = vunpack.c.h.b16 %v376
        %v2401 = vunpack.c.l.b16 %v377
        %v2402 = vunpack.c.h.b16 %v377
        %v2403 = vunpack.c.l.b16 %v378
        %v2404 = vunpack.c.h.b16 %v378
        %v2405 = vunpack.c.l.b16 %v379
        %v2406 = vunpack.c.h.b16 %v379
        %v2407 = vunpack.c.l.b16 %v380
        %v2408 = vunpack.c.h.b16 %v380
        %v2409 = vunpack.c.l.b16 %v381
        %v2410 = vunpack.c.h.b16 %v381
        %v2411 = vunpack.c.l.b16 %v382
        %v2412 = vunpack.c.h.b16 %v382
        %v2413 = vunpack.c.l.b16 %v383
        %v2414 = vunpack.c.h.b16 %v383
        %v2415 = vunpack.c.l.b16 %v384
        %v2416 = vunpack.c.h.b16 %v384
        %v2417 = vunpack.c.l.b16 %v385
        %v2418 = vunpack.c.h.b16 %v385
        %v2419 = vunpack.c.l.b16 %v386
        %v2420 = vunpack.c.h.b16 %v386
        %v2421 = vunpack.c.l.b16 %v387
        %v2422 = vunpack.c.h.b16 %v387
        %v2423 = vunpack.c.l.b16 %v388
        %v2424 = vunpack.c.h.b16 %v388
        %v2425 = vunpack.c.l.b16 %v389
        %v2426 = vunpack.c.h.b16 %v389
        %v2427 = vunpack.c.l.b16 %v390
        %v2428 = vunpack.c.h.b16 %v390
        %v2429 = vunpack.c.l.b16 %v391
        %v2430 = vunpack.c.h.b16 %v391
        %v2431 = vunpack.c.l.b16 %v392
        %v2432 = vunpack.c.h.b16 %v392
        %v2433 = vunpack.c.l.b16 %v393
        %v2434 = vunpack.c.h.b16 %v393
        %v2435 = vunpack.c.l.b16 %v394
        %v2436 = vunpack.c.h.b16 %v394
        %v2437 = vunpack.c.l.b16 %v395
        %v2438 = vunpack.c.h.b16 %v395
        %v2439 = vunpack.c.l.b16 %v396
        %v2440 = vunpack.c.h.b16 %v396
        %v2441 = vunpack.c.l.b16 %v397
        %v2442 = vunpack.c.h.b16 %v397
        %v2443 = vunpack.c.l.b16 %v398
        %v2444 = vunpack.c.h.b16 %v398
        %v2445 = vunpack.c.l.b16 %v399
        %v2446 = vunpack.c.h.b16 %v399
        %v2447 = vunpack.c.l.b16 %v400
        %v2448 = vunpack.c.h.b16 %v400
        %v2449 = vunpack.c.l.b16 %v401
        %v2450 = vunpack.c.h.b16 %v401
        %v2451 = vunpack.c.l.b16 %v402
        %v2452 = vunpack.c.h.b16 %v402
        %v2453 = vunpack.c.l.b16 %v403
        %v2454 = vunpack.c.h.b16 %v403
        %v2455 = vunpack.c.l.b16 %v404
        %v2456 = vunpack.c.h.b16 %v404
        %v2457 = vunpack.c.l.b16 %v405
        %v2458 = vunpack.c.h.b16 %v405
        %v2459 = vunpack.c.l.b16 %v406
        %v2460 = vunpack.c.h.b16 %v406
        %v2461 = vunpack.c.l.b16 %v407
        %v2462 = vunpack.c.h.b16 %v407
        %v2463 = vunpack.c.l.b16 %v408
        %v2464 = vunpack.c.h.b16 %v408
        %v2465 = vunpack.c.l.b16 %v409
        %v2466 = vunpack.c.h.b16 %v409
        %v2467 = vunpack.c.l.b16 %v410
        %v2468 = vunpack.c.h.b16 %v410
        %v2469 = vunpack.c.l.b16 %v411
        %v2470 = vunpack.c.h.b16 %v411
        %v2471 = vunpack.c.l.b16 %v412
        %v2472 = vunpack.c.h.b16 %v412
        %v2473 = vunpack.c.l.b16 %v413
        %v2474 = vunpack.c.h.b16 %v413
        %v2475 = vunpack.c.l.b16 %v414
        %v2476 = vunpack.c.h.b16 %v414
        %v2477 = vunpack.c.l.b16 %v415
        %v2478 = vunpack.c.h.b16 %v415
        %v2479 = vunpack.c.l.b16 %v416
        %v2480 = vunpack.c.h.b16 %v416
        %v2481 = vunpack.c.l.b16 %v417
        %v2482 = vunpack.c.h.b16 %v417
        %v2483 = vunpack.c.l.b16 %v418
        %v2484 = vunpack.c.h.b16 %v418
        %v2485 = vunpack.c.l.b16 %v419
        %v2486 = vunpack.c.h.b16 %v419
        %v2487 = vunpack.c.l.b16 %v420
        %v2488 = vunpack.c.h.b16 %v420
        %v2489 = vunpack.c.l.b16 %v421
        %v2490 = vunpack.c.h.b16 %v421
        %v2491 = vunpack.c.l.b16 %v422
        %v2492 = vunpack.c.h.b16 %v422
        %v2493 = vunpack.c.l.b16 %v423
        %v2494 = vunpack.c.h.b16 %v423
        %v2495 = vunpack.c.l.b16 %v424
        %v2496 = vunpack.c.h.b16 %v424
        %v2497 = vunpack.c.l.b16 %v425
        %v2498 = vunpack.c.h.b16 %v425
        %v2499 = vunpack.c.l.b16 %v426
        %v2500 = vunpack.c.h.b16 %v426
        %v2501 = vunpack.c.l.b16 %v427
        %v2502 = vunpack.c.h.b16 %v427
        %v2503 = vunpack.c.l.b16 %v428
        %v2504 = vunpack.c.h.b16 %v428
        %v2505 = vunpack.c.l.b16 %v429
        %v2506 = vunpack.c.h.b16 %v429
        %v2507 = vunpack.c.l.b16 %v430
        %v2508 = vunpack.c.h.b16 %v430
        %v2509 = vunpack.c.l.b16 %v431
        %v2510 = vunpack.c.h.b16 %v431
        %v2511 = vunpack.c.l.b16 %v432
        %v2512 = vunpack.c.h.b16 %v432
        %v2513 = vunpack.c.l.b16 %v433
        %v2514 = vunpack.c.h.b16 %v433
        %v2515 = vunpack.c.l.b16 %v434
        %v2516 = vunpack.c.h.b16 %v434
        %v2517 = vunpack.c.l.b16 %v435
        %v2518 = vunpack.c.h.b16 %v435
        %v2519 = vunpack.c.l.b16 %v436
        %v2520 = vunpack.c.h.b16 %v436
        %v2521 = vunpack.c.l.b16 %v437
        %v2522 = vunpack.c.h.b16 %v437
        %v2523 = vunpack.c.l.b16 %v438
        %v2524 = vunpack.c.h.b16 %v438
        %v2525 = vunpack.c.l.b16 %v439
        %v2526 = vunpack.c.h.b16 %v439
        %v2527 = vunpack.c.l.b16 %v440
        %v2528 = vunpack.c.h.b16 %v440
        %v2529 = vunpack.c.l.b16 %v441
        %v2530 = vunpack.c.h.b16 %v441
        %v2531 = vunpack.c.l.b16 %v442
        %v2532 = vunpack.c.h.b16 %v442
        %v2533 = vunpack.c.l.b16 %v443
        %v2534 = vunpack.c.h.b16 %v443
        %v2535 = vunpack.c.l.b16 %v444
        %v2536 = vunpack.c.h.b16 %v444
        %v2537 = vunpack.c.l.b16 %v445
        %v2538 = vunpack.c.h.b16 %v445
        %v2539 = vunpack.c.l.b16 %v446
        %v2540 = vunpack.c.h.b16 %v446
        %v2541 = vunpack.c.l.b16 %v447
        %v2542 = vunpack.c.h.b16 %v447
        %v2543 = vunpack.c.l.b16 %v448
        %v2544 = vunpack.c.h.b16 %v448
        %v2545 = vunpack.c.l.b16 %v449
        %v2546 = vunpack.c.h.b16 %v449
        %v2547 = vunpack.c.l.b16 %v450
        %v2548 = vunpack.c.h.b16 %v450
        %v2549 = vunpack.c.l.b16 %v451
        %v2550 = vunpack.c.h.b16 %v451
        %v2551 = vunpack.c.l.b16 %v452
        %v2552 = vunpack.c.h.b16 %v452
        %v2553 = vunpack.c.l.b16 %v453
        %v2554 = vunpack.c.h.b16 %v453
        %v2555 = vunpack.c.l.b16 %v454
        %v2556 = vunpack.c.h.b16 %v454
        %v2557 = vunpack.c.l.b16 %v455
        %v2558 = vunpack.c.h.b16 %v455
        %v2559 = vunpack.c.l.b16 %v456
        %v2560 = vunpack.c.h.b16 %v456
        %v2561 = vunpack.c.l.b16 %v457
        %v2562 = vunpack.c.h.b16 %v457
        %v2563 = vunpack.c.l.b16 %v458
        %v2564 = vunpack.c.h.b16 %v458
        %v2565 = vunpack.c.l.b16 %v459
        %v2566 = vunpack.c.h.b16 %v459
        %v2567 = vunpack.c.l.b16 %v460
        %v2568 = vunpack.c.h.b16 %v460
        %v2569 = vunpack.c.l.b16 %v461
        %v2570 = vunpack.c.h.b16 %v461
        %v2571 = vunpack.c.l.b16 %v462
        %v2572 = vunpack.c.h.b16 %v462
        %v2573 = vunpack.c.l.b16 %v463
        %v2574 = vunpack.c.h.b16 %v463
        %v2575 = vunpack.c.l.b16 %v464
        %v2576 = vunpack.c.h.b16 %v464
        %v2577 = vunpack.c.l.b16 %v465
        %v2578 = vunpack.c.h.b16 %v465
        %v2579 = vunpack.c.l.b16 %v466
        %v2580 = vunpack.c.h.b16 %v466
        %v2581 = vunpack.c.l.b16 %v467
        %v2582 = vunpack.c.h.b16 %v467
        %v2583 = vunpack.c.l.b16 %v468
        %v2584 = vunpack.c.h.b16 %v468
        %v2585 = vunpack.c.l.b16 %v469
        %v2586 = vunpack.c.h.b16 %v469
        %v2587 = vunpack.c.l.b16 %v470
        %v2588 = vunpack.c.h.b16 %v470
        %v2589 = vunpack.c.l.b16 %v471
        %v2590 = vunpack.c.h.b16 %v471
        %v2591 = vunpack.c.l.b16 %v472
        %v2592 = vunpack.c.h.b16 %v472
        %v2593 = vunpack.c.l.b16 %v473
        %v2594 = vunpack.c.h.b16 %v473
        %v2595 = vunpack.c.l.b16 %v474
        %v2596 = vunpack.c.h.b16 %v474
        %v2597 = vunpack.c.l.b16 %v475
        %v2598 = vunpack.c.h.b16 %v475
        %v2599 = vunpack.c.l.b16 %v476
        %v2600 = vunpack.c.h.b16 %v476
        %v2601 = vunpack.c.l.b16 %v477
        %v2602 = vunpack.c.h.b16 %v477
        %v2603 = vunpack.c.l.b16 %v478
        %v2604 = vunpack.c.h.b16 %v478
        %v2605 = vunpack.c.l.b16 %v479
        %v2606 = vunpack.c.h.b16 %v479
        %v2607 = vunpack.c.l.b16 %v480
        %v2608 = vunpack.c.h.b16 %v480
        %v2609 = vunpack.c.l.b16 %v481
        %v2610 = vunpack.c.h.b16 %v481
        %v2611 = vunpack.c.l.b16 %v482
        %v2612 = vunpack.c.h.b16 %v482
        %v2613 = vunpack.c.l.b16 %v483
        %v2614 = vunpack.c.h.b16 %v483
        %v2615 = vunpack.c.l.b16 %v484
        %v2616 = vunpack.c.h.b16 %v484
        %v2617 = vunpack.c.l.b16 %v485
        %v2618 = vunpack.c.h.b16 %v485
        %v2619 = vunpack.c.l.b16 %v486
        %v2620 = vunpack.c.h.b16 %v486
        %v2621 = vunpack.c.l.b16 %v487
        %v2622 = vunpack.c.h.b16 %v487
        %v2623 = vunpack.c.l.b16 %v488
        %v2624 = vunpack.c.h.b16 %v488
        %v2625 = vunpack.c.l.b16 %v489
        %v2626 = vunpack.c.h.b16 %v489
        %v2627 = vunpack.c.l.b16 %v490
        %v2628 = vunpack.c.h.b16 %v490
        %v2629 = vunpack.c.l.b16 %v491
        %v2630 = vunpack.c.h.b16 %v491
        %v2631 = vunpack.c.l.b16 %v492
        %v2632 = vunpack.c.h.b16 %v492
        %v2633 = vunpack.c.l.b16 %v493
        %v2634 = vunpack.c.h.b16 %v493
        %v2635 = vunpack.c.l.b16 %v494
        %v2636 = vunpack.c.h.b16 %v494
        %v2637 = vunpack.c.l.b16 %v495
        %v2638 = vunpack.c.h.b16 %v495
        %v2639 = vunpack.c.l.b16 %v496
        %v2640 = vunpack.c.h.b16 %v496
        %v2641 = vunpack.c.l.b16 %v497
        %v2642 = vunpack.c.h.b16 %v497
        %v2643 = vunpack.c.l.b16 %v498
        %v2644 = vunpack.c.h.b16 %v498
        %v2645 = vunpack.c.l.b16 %v499
        %v2646 = vunpack.c.h.b16 %v499
        %v2647 = vunpack.c.l.b16 %v500
        %v2648 = vunpack.c.h.b16 %v500
        %v2649 = vunpack.c.l.b16 %v501
        %v2650 = vunpack.c.h.b16 %v501
        %v2651 = vunpack.c.l.b16 %v502
        %v2652 = vunpack.c.h.b16 %v502
        %v2653 = vunpack.c.l.b16 %v503
        %v2654 = vunpack.c.h.b16 %v503
        %v2655 = vunpack.c.l.b16 %v504
        %v2656 = vunpack.c.h.b16 %v504
        %v2657 = vunpack.c.l.b16 %v505
        %v2658 = vunpack.c.h.b16 %v505
        %v2659 = vunpack.c.l.b16 %v506
        %v2660 = vunpack.c.h.b16 %v506
        %v2661 = vunpack.c.l.b16 %v507
        %v2662 = vunpack.c.h.b16 %v507
        %v2663 = vunpack.c.l.b16 %v508
        %v2664 = vunpack.c.h.b16 %v508
        %v2665 = vunpack.c.l.b16 %v509
        %v2666 = vunpack.c.h.b16 %v509
        %v2667 = vunpack.c.l.b16 %v510
        %v2668 = vunpack.c.h.b16 %v510
        %v2669 = vunpack.c.l.b16 %v511
        %v2670 = vunpack.c.h.b16 %v511
        %v2671 = vunpack.c.l.b16 %v512
        %v2672 = vunpack.c.h.b16 %v512
        %v2673 = vunpack.c.l.b16 %v513
        %v2674 = vunpack.c.h.b16 %v513
        %v2675 = vunpack.c.l.b16 %v514
        %v2676 = vunpack.c.h.b16 %v514
        %v2677 = vunpack.c.l.b16 %v515
        %v2678 = vunpack.c.h.b16 %v515
        %v2679 = vunpack.c.l.b16 %v516
        %v2680 = vunpack.c.h.b16 %v516
        %v2681 = vunpack.c.l.b16 %v517
        %v2682 = vunpack.c.h.b16 %v517
        %v2683 = vunpack.c.l.b16 %v518
        %v2684 = vunpack.c.h.b16 %v518
        %v2685 = vunpack.c.l.b16 %v519
        %v2686 = vunpack.c.h.b16 %v519
        %v2687 = vunpack.c.l.b16 %v520
        %v2688 = vunpack.c.h.b16 %v520
        %v2689 = vunpack.c.l.b16 %v521
        %v2690 = vunpack.c.h.b16 %v521
        %v2691 = vunpack.c.l.b16 %v522
        %v2692 = vunpack.c.h.b16 %v522
        %v2693 = vunpack.c.l.b16 %v523
        %v2694 = vunpack.c.h.b16 %v523
        %v2695 = vunpack.c.l.b16 %v524
        %v2696 = vunpack.c.h.b16 %v524
        %v2697 = vunpack.c.l.b16 %v525
        %v2698 = vunpack.c.h.b16 %v525
        %v2699 = vunpack.c.l.b16 %v526
        %v2700 = vunpack.c.h.b16 %v526
        %v2701 = vunpack.c.l.b16 %v527
        %v2702 = vunpack.c.h.b16 %v527
        %v2703 = vunpack.c.l.b16 %v528
        %v2704 = vunpack.c.h.b16 %v528
        %v2705 = vunpack.c.l.b16 %v529
        %v2706 = vunpack.c.h.b16 %v529
        %v2707 = vunpack.c.l.b16 %v530
        %v2708 = vunpack.c.h.b16 %v530
        %v2709 = vunpack.c.l.b16 %v531
        %v2710 = vunpack.c.h.b16 %v531
        %v2711 = vunpack.c.l.b16 %v532
        %v2712 = vunpack.c.h.b16 %v532
        %v2713 = vunpack.c.l.b16 %v533
        %v2714 = vunpack.c.h.b16 %v533
        %v2715 = vunpack.c.l.b16 %v534
        %v2716 = vunpack.c.h.b16 %v534
        %v2717 = vunpack.c.l.b16 %v535
        %v2718 = vunpack.c.h.b16 %v535
        %v2719 = vunpack.c.l.b16 %v536
        %v2720 = vunpack.c.h.b16 %v536
        %v2721 = vunpack.c.l.b16 %v537
        %v2722 = vunpack.c.h.b16 %v537
        %v2723 = vunpack.c.l.b16 %v538
        %v2724 = vunpack.c.h.b16 %v538
        %v2725 = vunpack.c.l.b16 %v539
        %v2726 = vunpack.c.h.b16 %v539
        %v2727 = vunpack.c.l.b16 %v540
        %v2728 = vunpack.c.h.b16 %v540
        %v2729 = vunpack.c.l.b16 %v541
        %v2730 = vunpack.c.h.b16 %v541
        %v2731 = vunpack.c.l.b16 %v542
        %v2732 = vunpack.c.h.b16 %v542
        %v2733 = vunpack.c.l.b16 %v543
        %v2734 = vunpack.c.h.b16 %v543
        %v2735 = vunpack.c.l.b16 %v544
        %v2736 = vunpack.c.h.b16 %v544
        %v2737 = vunpack.c.l.b16 %v545
        %v2738 = vunpack.c.h.b16 %v545
        %v2739 = vunpack.c.l.b16 %v546
        %v2740 = vunpack.c.h.b16 %v546
        %v2741 = vunpack.c.l.b16 %v547
        %v2742 = vunpack.c.h.b16 %v547
        %v2743 = vunpack.c.l.b16 %v548
        %v2744 = vunpack.c.h.b16 %v548
        %v2745 = vunpack.c.l.b16 %v549
        %v2746 = vunpack.c.h.b16 %v549
        %v2747 = vunpack.c.l.b16 %v550
        %v2748 = vunpack.c.h.b16 %v550
        %v2749 = vunpack.c.l.b16 %v551
        %v2750 = vunpack.c.h.b16 %v551
        %v2751 = vunpack.c.l.b16 %v552
        %v2752 = vunpack.c.h.b16 %v552
        %v2753 = vunpack.c.l.b16 %v553
        %v2754 = vunpack.c.h.b16 %v553
        %v2755 = vunpack.c.l.b16 %v554
        %v2756 = vunpack.c.h.b16 %v554
        %v2757 = vunpack.c.l.b16 %v555
        %v2758 = vunpack.c.h.b16 %v555
        %v2759 = vunpack.c.l.b16 %v556
        %v2760 = vunpack.c.h.b16 %v556
        %v2761 = vunpack.c.l.b16 %v557
        %v2762 = vunpack.c.h.b16 %v557
        %v2763 = vunpack.c.l.b16 %v558
        %v2764 = vunpack.c.h.b16 %v558
        %v2765 = vunpack.c.l.b16 %v559
        %v2766 = vunpack.c.h.b16 %v559
        %v2767 = vunpack.c.l.b16 %v560
        %v2768 = vunpack.c.h.b16 %v560
        %v2769 = vunpack.c.l.b16 %v561
        %v2770 = vunpack.c.h.b16 %v561
        %v2771 = vunpack.c.l.b16 %v562
        %v2772 = vunpack.c.h.b16 %v562
        %v2773 = vunpack.c.l.b16 %v563
        %v2774 = vunpack.c.h.b16 %v563
        %v2775 = vunpack.c.l.b16 %v564
        %v2776 = vunpack.c.h.b16 %v564
        %v2777 = vunpack.c.l.b16 %v565
        %v2778 = vunpack.c.h.b16 %v565
        %v2779 = vunpack.c.l.b16 %v566
        %v2780 = vunpack.c.h.b16 %v566
        %v2781 = vunpack.c.l.b16 %v567
        %v2782 = vunpack.c.h.b16 %v567
        %v2783 = vunpack.c.l.b16 %v568
        %v2784 = vunpack.c.h.b16 %v568
        %v2785 = vunpack.c.l.b16 %v569
        %v2786 = vunpack.c.h.b16 %v569
        %v2787 = vunpack.c.l.b16 %v570
        %v2788 = vunpack.c.h.b16 %v570
        %v2789 = vunpack.c.l.b16 %v571
        %v2790 = vunpack.c.h.b16 %v571
        %v2791 = vunpack.c.l.b16 %v572
        %v2792 = vunpack.c.h.b16 %v572
        %v2793 = vunpack.c.l.b16 %v573
        %v2794 = vunpack.c.h.b16 %v573
        %v2795 = vunpack.c.l.b16 %v574
        %v2796 = vunpack.c.h.b16 %v574
        %v2797 = vunpack.c.l.b16 %v575
        %v2798 = vunpack.c.h.b16 %v575
        %v2799 = vunpack.c.l.b16 %v576
        %v2800 = vunpack.c.h.b16 %v576
        %v2801 = vunpack.c.l.b16 %v577
        %v2802 = vunpack.c.h.b16 %v577
        %v2803 = vunpack.c.l.b16 %v578
        %v2804 = vunpack.c.h.b16 %v578
        %v2805 = vunpack.c.l.b16 %v579
        %v2806 = vunpack.c.h.b16 %v579
        %v2807 = vunpack.c.l.b16 %v580
        %v2808 = vunpack.c.h.b16 %v580
        %v2809 = vunpack.c.l.b16 %v581
        %v2810 = vunpack.c.h.b16 %v581
        %v2811 = vunpack.c.l.b16 %v582
        %v2812 = vunpack.c.h.b16 %v582
        %v2813 = vunpack.c.l.b16 %v583
        %v2814 = vunpack.c.h.b16 %v583
        %v2815 = vunpack.c.l.b16 %v584
        %v2816 = vunpack.c.h.b16 %v584
        %v2817 = vunpack.c.l.b16 %v585
        %v2818 = vunpack.c.h.b16 %v585
        %v2819 = vunpack.c.l.b16 %v586
        %v2820 = vunpack.c.h.b16 %v586
        %v2821 = vunpack.c.l.b16 %v587
        %v2822 = vunpack.c.h.b16 %v587
        %v2823 = vunpack.c.l.b16 %v588
        %v2824 = vunpack.c.h.b16 %v588
        %v2825 = vunpack.c.l.b16 %v589
        %v2826 = vunpack.c.h.b16 %v589
        %v2827 = vunpack.c.l.b16 %v590
        %v2828 = vunpack.c.h.b16 %v590
        %v2829 = vunpack.c.l.b16 %v591
        %v2830 = vunpack.c.h.b16 %v591
        %v2831 = vunpack.c.l.b16 %v592
        %v2832 = vunpack.c.h.b16 %v592
        %v2833 = vunpack.c.l.b16 %v593
        %v2834 = vunpack.c.h.b16 %v593
        %v2835 = vunpack.c.l.b16 %v594
        %v2836 = vunpack.c.h.b16 %v594
        %v2837 = vunpack.c.l.b16 %v595
        %v2838 = vunpack.c.h.b16 %v595
        %v2839 = vunpack.c.l.b16 %v596
        %v2840 = vunpack.c.h.b16 %v596
        %v2841 = vunpack.c.l.b16 %v597
        %v2842 = vunpack.c.h.b16 %v597
        %v2843 = vunpack.c.l.b16 %v598
        %v2844 = vunpack.c.h.b16 %v598
        %v2845 = vunpack.c.l.b16 %v599
        %v2846 = vunpack.c.h.b16 %v599
        %v2847 = vunpack.c.l.b16 %v600
        %v2848 = vunpack.c.h.b16 %v600
        %v2849 = vunpack.c.l.b16 %v601
        %v2850 = vunpack.c.h.b16 %v601
        %v2851 = vunpack.c.l.b16 %v602
        %v2852 = vunpack.c.h.b16 %v602
        %v2853 = vunpack.c.l.b16 %v603
        %v2854 = vunpack.c.h.b16 %v603
        %v2855 = vunpack.c.l.b16 %v604
        %v2856 = vunpack.c.h.b16 %v604
        %v2857 = vunpack.c.l.b16 %v605
        %v2858 = vunpack.c.h.b16 %v605
        %v2859 = vunpack.c.l.b16 %v606
        %v2860 = vunpack.c.h.b16 %v606
        %v2861 = vunpack.c.l.b16 %v607
        %v2862 = vunpack.c.h.b16 %v607
        %v2863 = vunpack.c.l.b16 %v608
        %v2864 = vunpack.c.h.b16 %v608
        %v2865 = vunpack.c.l.b16 %v609
        %v2866 = vunpack.c.h.b16 %v609
        %v2867 = vunpack.c.l.b16 %v610
        %v2868 = vunpack.c.h.b16 %v610
        %v2869 = vunpack.c.l.b16 %v611
        %v2870 = vunpack.c.h.b16 %v611
        %v2871 = vunpack.c.l.b16 %v612
        %v2872 = vunpack.c.h.b16 %v612
        %v2873 = vunpack.c.l.b16 %v613
        %v2874 = vunpack.c.h.b16 %v613
        %v2875 = vunpack.c.l.b16 %v614
        %v2876 = vunpack.c.h.b16 %v614
        %v2877 = vunpack.c.l.b16 %v615
        %v2878 = vunpack.c.h.b16 %v615
        %v2879 = vunpack.c.l.b16 %v616
        %v2880 = vunpack.c.h.b16 %v616
        %v2881 = vunpack.c.l.b16 %v617
        %v2882 = vunpack.c.h.b16 %v617
        %v2883 = vunpack.c.l.b16 %v618
        %v2884 = vunpack.c.h.b16 %v618
        %v2885 = vunpack.c.l.b16 %v619
        %v2886 = vunpack.c.h.b16 %v619
        %v2887 = vunpack.c.l.b16 %v620
        %v2888 = vunpack.c.h.b16 %v620
        %v2889 = vunpack.c.l.b16 %v621
        %v2890 = vunpack.c.h.b16 %v621
        %v2891 = vunpack.c.l.b16 %v622
        %v2892 = vunpack.c.h.b16 %v622
        %v2893 = vunpack.c.l.b16 %v623
        %v2894 = vunpack.c.h.b16 %v623
        %v2895 = vunpack.c.l.b16 %v624
        %v2896 = vunpack.c.h.b16 %v624
        %v2897 = vunpack.c.l.b16 %v625
        %v2898 = vunpack.c.h.b16 %v625
        %v2899 = vunpack.c.l.b16 %v626
        %v2900 = vunpack.c.h.b16 %v626
        %v2901 = vunpack.c.l.b16 %v627
        %v2902 = vunpack.c.h.b16 %v627
        %v2903 = vunpack.c.l.b16 %v628
        %v2904 = vunpack.c.h.b16 %v628
        %v2905 = vunpack.c.l.b16 %v629
        %v2906 = vunpack.c.h.b16 %v629
        %v2907 = vunpack.c.l.b16 %v630
        %v2908 = vunpack.c.h.b16 %v630
        %v2909 = vunpack.c.l.b16 %v631
        %v2910 = vunpack.c.h.b16 %v631
        %v2911 = vunpack.c.l.b16 %v632
        %v2912 = vunpack.c.h.b16 %v632
        %v2913 = vunpack.c.l.b16 %v633
        %v2914 = vunpack.c.h.b16 %v633
        %v2915 = vunpack.c.l.b16 %v634
        %v2916 = vunpack.c.h.b16 %v634
        %v2917 = vunpack.c.l.b16 %v635
        %v2918 = vunpack.c.h.b16 %v635
        %v2919 = vunpack.c.l.b16 %v636
        %v2920 = vunpack.c.h.b16 %v636
        %v2921 = vunpack.c.l.b16 %v637
        %v2922 = vunpack.c.h.b16 %v637
        %v2923 = vunpack.c.l.b16 %v638
        %v2924 = vunpack.c.h.b16 %v638
        %v2925 = vunpack.c.l.b16 %v639
        %v2926 = vunpack.c.h.b16 %v639
        %v2927 = vunpack.c.l.b16 %v640
        %v2928 = vunpack.c.h.b16 %v640
        %v2929 = vunpack.c.l.b16 %v641
        %v2930 = vunpack.c.h.b16 %v641
        %v2931 = vunpack.c.l.b16 %v642
        %v2932 = vunpack.c.h.b16 %v642
        %v2933 = vunpack.c.l.b16 %v643
        %v2934 = vunpack.c.h.b16 %v643
        %v2935 = vunpack.c.l.b16 %v644
        %v2936 = vunpack.c.h.b16 %v644
        %v2937 = vunpack.c.l.b16 %v645
        %v2938 = vunpack.c.h.b16 %v645
        %v2939 = vunpack.c.l.b16 %v646
        %v2940 = vunpack.c.h.b16 %v646
        %v2941 = vunpack.c.l.b16 %v647
        %v2942 = vunpack.c.h.b16 %v647
        %v2943 = vunpack.c.l.b16 %v648
        %v2944 = vunpack.c.h.b16 %v648
        %v2945 = vunpack.c.l.b16 %v649
        %v2946 = vunpack.c.h.b16 %v649
        %v2947 = vunpack.c.l.b16 %v650
        %v2948 = vunpack.c.h.b16 %v650
        %v2949 = vunpack.c.l.b16 %v651
        %v2950 = vunpack.c.h.b16 %v651
        %v2951 = vunpack.c.l.b16 %v652
        %v2952 = vunpack.c.h.b16 %v652
        %v2953 = vunpack.c.l.b16 %v653
        %v2954 = vunpack.c.h.b16 %v653
        %v2955 = vunpack.c.l.b16 %v654
        %v2956 = vunpack.c.h.b16 %v654
        %v2957 = vunpack.c.l.b16 %v655
        %v2958 = vunpack.c.h.b16 %v655
        %v2959 = vunpack.c.l.b16 %v656
        %v2960 = vunpack.c.h.b16 %v656
        %v2961 = vunpack.c.l.b16 %v657
        %v2962 = vunpack.c.h.b16 %v657
        %v2963 = vunpack.c.l.b16 %v658
        %v2964 = vunpack.c.h.b16 %v658
        %v2965 = vunpack.c.l.b16 %v659
        %v2966 = vunpack.c.h.b16 %v659
        %v2967 = vunpack.c.l.b16 %v660
        %v2968 = vunpack.c.h.b16 %v660
        %v2969 = vunpack.c.l.b16 %v661
        %v2970 = vunpack.c.h.b16 %v661
        %v2971 = vunpack.c.l.b16 %v662
        %v2972 = vunpack.c.h.b16 %v662
        %v2973 = vunpack.c.l.b16 %v663
        %v2974 = vunpack.c.h.b16 %v663
        %v2975 = vunpack.c.l.b16 %v664
        %v2976 = vunpack.c.h.b16 %v664
        %v2977 = vunpack.c.l.b16 %v665
        %v2978 = vunpack.c.h.b16 %v665
        %v2979 = vunpack.c.l.b16 %v666
        %v2980 = vunpack.c.h.b16 %v666
        %v2981 = vunpack.c.l.b16 %v667
        %v2982 = vunpack.c.h.b16 %v667
        %v2983 = vunpack.c.l.b16 %v668
        %v2984 = vunpack.c.h.b16 %v668
        %v2985 = vunpack.c.l.b16 %v669
        %v2986 = vunpack.c.h.b16 %v669
        %v2987 = vunpack.c.l.b16 %v670
        %v2988 = vunpack.c.h.b16 %v670
        %v2989 = vunpack.c.l.b16 %v671
        %v2990 = vunpack.c.h.b16 %v671
        %v2991 = vunpack.c.l.b16 %v672
        %v2992 = vunpack.c.h.b16 %v672
        %v2993 = vunpack.c.l.b16 %v673
        %v2994 = vunpack.c.h.b16 %v673
        %v2995 = vunpack.c.l.b16 %v674
        %v2996 = vunpack.c.h.b16 %v674
        %v2997 = vunpack.c.l.b16 %v675
        %v2998 = vunpack.c.h.b16 %v675
        %v2999 = vunpack.c.l.b16 %v676
        %v3000 = vunpack.c.h.b16 %v676
        %v3001 = vunpack.c.l.b16 %v677
        %v3002 = vunpack.c.h.b16 %v677
        %v3003 = vunpack.c.l.b16 %v678
        %v3004 = vunpack.c.h.b16 %v678
        %v3005 = vunpack.c.l.b16 %v679
        %v3006 = vunpack.c.h.b16 %v679
        %v3007 = vunpack.c.l.b16 %v680
        %v3008 = vunpack.c.h.b16 %v680
        %v3009 = vunpack.c.l.b16 %v681
        %v3010 = vunpack.c.h.b16 %v681
        %v3011 = vunpack.c.l.b16 %v682
        %v3012 = vunpack.c.h.b16 %v682
        %v3013 = vunpack.c.l.b16 %v683
        %v3014 = vunpack.c.h.b16 %v683
        %v3015 = vunpack.c.l.b16 %v684
        %v3016 = vunpack.c.h.b16 %v684
        %v3017 = vunpack.c.l.b16 %v685
        %v3018 = vunpack.c.h.b16 %v685
        %v3019 = vunpack.c.l.b16 %v686
        %v3020 = vunpack.c.h.b16 %v686
        %v3021 = vunpack.c.l.b16 %v687
        %v3022 = vunpack.c.h.b16 %v687
        %v3023 = vunpack.c.l.b16 %v688
        %v3024 = vunpack.c.h.b16 %v688
        %v3025 = vunpack.c.l.b16 %v689
        %v3026 = vunpack.c.h.b16 %v689
        %v3027 = vunpack.c.l.b16 %v690
        %v3028 = vunpack.c.h.b16 %v690
        %v3029 = vunpack.c.l.b16 %v691
        %v3030 = vunpack.c.h.b16 %v691
        %v3031 = vunpack.c.l.b16 %v692
        %v3032 = vunpack.c.h.b16 %v692
        %v3033 = vunpack.c.l.b16 %v693
        %v3034 = vunpack.c.h.b16 %v693
        %v3035 = vunpack.c.l.b16 %v694
        %v3036 = vunpack.c.h.b16 %v694
        %v3037 = vunpack.c.l.b16 %v695
        %v3038 = vunpack.c.h.b16 %v695
        %v3039 = vunpack.c.l.b16 %v696
        %v3040 = vunpack.c.h.b16 %v696
        %v3041 = vunpack.c.l.b16 %v697
        %v3042 = vunpack.c.h.b16 %v697
        %v3043 = vunpack.c.l.b16 %v698
        %v3044 = vunpack.c.h.b16 %v698
        %v3045 = vunpack.c.l.b16 %v699
        %v3046 = vunpack.c.h.b16 %v699
        %v3047 = vunpack.c.l.b16 %v700
        %v3048 = vunpack.c.h.b16 %v700
        %v3049 = vunpack.c.l.b16 %v701
        %v3050 = vunpack.c.h.b16 %v701
        %v3051 = vunpack.c.l.b16 %v702
        %v3052 = vunpack.c.h.b16 %v702
        %v3053 = vunpack.c.l.b16 %v703
        %v3054 = vunpack.c.h.b16 %v703
        %v3055 = vunpack.c.l.b16 %v704
        %v3056 = vunpack.c.h.b16 %v704
        %v3057 = vunpack.c.l.b16 %v705
        %v3058 = vunpack.c.h.b16 %v705
        %v3059 = vunpack.c.l.b16 %v706
        %v3060 = vunpack.c.h.b16 %v706
        %v3061 = vunpack.c.l.b16 %v707
        %v3062 = vunpack.c.h.b16 %v707
        %v3063 = vunpack.c.l.b16 %v708
        %v3064 = vunpack.c.h.b16 %v708
        %v3065 = vunpack.c.l.b16 %v709
        %v3066 = vunpack.c.h.b16 %v709
        %v3067 = vunpack.c.l.b16 %v710
        %v3068 = vunpack.c.h.b16 %v710
        %v3069 = vunpack.c.l.b16 %v711
        %v3070 = vunpack.c.h.b16 %v711
        %v3071 = vunpack.c.l.b16 %v712
        %v3072 = vunpack.c.h.b16 %v712
        %v3073 = vunpack.c.l.b16 %v713
        %v3074 = vunpack.c.h.b16 %v713
        %v3075 = vunpack.c.l.b16 %v714
        %v3076 = vunpack.c.h.b16 %v714
        %v3077 = vunpack.c.l.b16 %v715
        %v3078 = vunpack.c.h.b16 %v715
        %v3079 = vunpack.c.l.b16 %v716
        %v3080 = vunpack.c.h.b16 %v716
        %v3081 = vunpack.c.l.b16 %v717
        %v3082 = vunpack.c.h.b16 %v717
        %v3083 = vunpack.c.l.b16 %v718
        %v3084 = vunpack.c.h.b16 %v718
        %v3085 = vunpack.c.l.b16 %v719
        %v3086 = vunpack.c.h.b16 %v719
        %v3087 = vunpack.c.l.b16 %v720
        %v3088 = vunpack.c.h.b16 %v720
        %v3089 = vunpack.c.l.b16 %v721
        %v3090 = vunpack.c.h.b16 %v721
        %v3091 = vunpack.c.l.b16 %v722
        %v3092 = vunpack.c.h.b16 %v722
        %v3093 = vunpack.c.l.b16 %v723
        %v3094 = vunpack.c.h.b16 %v723
        %v3095 = vunpack.c.l.b16 %v724
        %v3096 = vunpack.c.h.b16 %v724
        %v3097 = vunpack.c.l.b16 %v725
        %v3098 = vunpack.c.h.b16 %v725
        %v3099 = vunpack.c.l.b16 %v726
        %v3100 = vunpack.c.h.b16 %v726
        %v3101 = vunpack.c.l.b16 %v727
        %v3102 = vunpack.c.h.b16 %v727
        %v3103 = vunpack.c.l.b16 %v728
        %v3104 = vunpack.c.h.b16 %v728
        %v3105 = vunpack.c.l.b16 %v729
        %v3106 = vunpack.c.h.b16 %v729
        %v3107 = vunpack.c.l.b16 %v730
        %v3108 = vunpack.c.h.b16 %v730
        %v3109 = vunpack.c.l.b16 %v731
        %v3110 = vunpack.c.h.b16 %v731
        %v3111 = vunpack.c.l.b16 %v732
        %v3112 = vunpack.c.h.b16 %v732
        %v3113 = vunpack.c.l.b16 %v733
        %v3114 = vunpack.c.h.b16 %v733
        %v3115 = vunpack.c.l.b16 %v734
        %v3116 = vunpack.c.h.b16 %v734
        %v3117 = vunpack.c.l.b16 %v735
        %v3118 = vunpack.c.h.b16 %v735
        %v3119 = vunpack.c.l.b16 %v736
        %v3120 = vunpack.c.h.b16 %v736
        %v3121 = vunpack.c.l.b16 %v737
        %v3122 = vunpack.c.h.b16 %v737
        %v3123 = vunpack.c.l.b16 %v738
        %v3124 = vunpack.c.h.b16 %v738
        %v3125 = vunpack.c.l.b16 %v739
        %v3126 = vunpack.c.h.b16 %v739
        %v3127 = vunpack.c.l.b16 %v740
        %v3128 = vunpack.c.h.b16 %v740
        %v3129 = vunpack.c.l.b16 %v741
        %v3130 = vunpack.c.h.b16 %v741
        %v3131 = vunpack.c.l.b16 %v742
        %v3132 = vunpack.c.h.b16 %v742
        %v3133 = vunpack.c.l.b16 %v743
        %v3134 = vunpack.c.h.b16 %v743
        %v3135 = vunpack.c.l.b16 %v744
        %v3136 = vunpack.c.h.b16 %v744
        %v3137 = vunpack.c.l.b16 %v745
        %v3138 = vunpack.c.h.b16 %v745
        %v3139 = vunpack.c.l.b16 %v746
        %v3140 = vunpack.c.h.b16 %v746
        %v3141 = vunpack.c.l.b16 %v747
        %v3142 = vunpack.c.h.b16 %v747
        %v3143 = vunpack.c.l.b16 %v748
        %v3144 = vunpack.c.h.b16 %v748
        %v3145 = vunpack.c.l.b16 %v749
        %v3146 = vunpack.c.h.b16 %v749
        %v3147 = vunpack.c.l.b16 %v750
        %v3148 = vunpack.c.h.b16 %v750
        %v3149 = vunpack.c.l.b16 %v751
        %v3150 = vunpack.c.h.b16 %v751
        %v3151 = vunpack.c.l.b16 %v752
        %v3152 = vunpack.c.h.b16 %v752
        %v3153 = vunpack.c.l.b16 %v753
        %v3154 = vunpack.c.h.b16 %v753
        %v3155 = vunpack.c.l.b16 %v754
        %v3156 = vunpack.c.h.b16 %v754
        %v3157 = vunpack.c.l.b16 %v755
        %v3158 = vunpack.c.h.b16 %v755
        %v3159 = vunpack.c.l.b16 %v756
        %v3160 = vunpack.c.h.b16 %v756
        %v3161 = vunpack.c.l.b16 %v757
        %v3162 = vunpack.c.h.b16 %v757
        %v3163 = vunpack.c.l.b16 %v758
        %v3164 = vunpack.c.h.b16 %v758
        %v3165 = vunpack.c.l.b16 %v759
        %v3166 = vunpack.c.h.b16 %v759
        %v3167 = vunpack.c.l.b16 %v760
        %v3168 = vunpack.c.h.b16 %v760
        %v3169 = vunpack.c.l.b16 %v761
        %v3170 = vunpack.c.h.b16 %v761
        %v3171 = vunpack.c.l.b16 %v762
        %v3172 = vunpack.c.h.b16 %v762
        %v3173 = vunpack.c.l.b16 %v763
        %v3174 = vunpack.c.h.b16 %v763
        %v3175 = vunpack.c.l.b16 %v764
        %v3176 = vunpack.c.h.b16 %v764
        %v3177 = vunpack.c.l.b16 %v765
        %v3178 = vunpack.c.h.b16 %v765
        %v3179 = vunpack.c.l.b16 %v766
        %v3180 = vunpack.c.h.b16 %v766
        %v3181 = vunpack.c.l.b16 %v767
        %v3182 = vunpack.c.h.b16 %v767
        %v3183 = vunpack.c.l.b16 %v768
        %v3184 = vunpack.c.h.b16 %v768
        %v3185 = vunpack.c.l.b16 %v769
        %v3186 = vunpack.c.h.b16 %v769
        %v3187 = vunpack.c.l.b16 %v770
        %v3188 = vunpack.c.h.b16 %v770
        %v3189 = vunpack.c.l.b16 %v771
        %v3190 = vunpack.c.h.b16 %v771
        %v3191 = vunpack.c.l.b16 %v772
        %v3192 = vunpack.c.h.b16 %v772
        %v3193 = vunpack.c.l.b16 %v773
        %v3194 = vunpack.c.h.b16 %v773
        %v3195 = vunpack.c.l.b16 %v774
        %v3196 = vunpack.c.h.b16 %v774
        %v3197 = vunpack.c.l.b16 %v775
        %v3198 = vunpack.c.h.b16 %v775
        %v3199 = vunpack.c.l.b16 %v776
        %v3200 = vunpack.c.h.b16 %v776
        %v3201 = vunpack.c.l.b16 %v777
        %v3202 = vunpack.c.h.b16 %v777
        %v3203 = vunpack.c.l.b16 %v778
        %v3204 = vunpack.c.h.b16 %v778
        %v3205 = vunpack.c.l.b16 %v779
        %v3206 = vunpack.c.h.b16 %v779
        %v3207 = vunpack.c.l.b16 %v780
        %v3208 = vunpack.c.h.b16 %v780
        %v3209 = vunpack.c.l.b16 %v781
        %v3210 = vunpack.c.h.b16 %v781
        %v3211 = vunpack.c.l.b16 %v782
        %v3212 = vunpack.c.h.b16 %v782
        %v3213 = vunpack.c.l.b16 %v783
        %v3214 = vunpack.c.h.b16 %v783
        %v3215 = vunpack.c.l.b16 %v784
        %v3216 = vunpack.c.h.b16 %v784
        %v3217 = vunpack.c.l.b16 %v785
        %v3218 = vunpack.c.h.b16 %v785
        %v3219 = vunpack.c.l.b16 %v786
        %v3220 = vunpack.c.h.b16 %v786
        %v3221 = vunpack.c.l.b16 %v787
        %v3222 = vunpack.c.h.b16 %v787
        %v3223 = vunpack.c.l.b16 %v788
        %v3224 = vunpack.c.h.b16 %v788
        %v3225 = vunpack.c.l.b16 %v789
        %v3226 = vunpack.c.h.b16 %v789
        %v3227 = vunpack.c.l.b16 %v790
        %v3228 = vunpack.c.h.b16 %v790
        %v3229 = vunpack.c.l.b16 %v791
        %v3230 = vunpack.c.h.b16 %v791
        %v3231 = vunpack.c.l.b16 %v792
        %v3232 = vunpack.c.h.b16 %v792
        %v3233 = vunpack.c.l.b16 %v793
        %v3234 = vunpack.c.h.b16 %v793
        %v3235 = vunpack.c.l.b16 %v794
        %v3236 = vunpack.c.h.b16 %v794
        %v3237 = vunpack.c.l.b16 %v795
        %v3238 = vunpack.c.h.b16 %v795
        %v3239 = vunpack.c.l.b16 %v796
        %v3240 = vunpack.c.h.b16 %v796
        %v3241 = vunpack.c.l.b16 %v797
        %v3242 = vunpack.c.h.b16 %v797
        %v3243 = vunpack.c.l.b16 %v798
        %v3244 = vunpack.c.h.b16 %v798
        %v3245 = vunpack.c.l.b16 %v799
        %v3246 = vunpack.c.h.b16 %v799
        %v3247 = vunpack.c.l.b16 %v800
        %v3248 = vunpack.c.h.b16 %v800
        %v3249 = vunpack.c.l.b16 %v801
        %v3250 = vunpack.c.h.b16 %v801
        %v3251 = vunpack.c.l.b16 %v802
        %v3252 = vunpack.c.h.b16 %v802
        %v3253 = vunpack.c.l.b16 %v803
        %v3254 = vunpack.c.h.b16 %v803
        %v3255 = vunpack.c.l.b16 %v804
        %v3256 = vunpack.c.h.b16 %v804
        %v3257 = vunpack.c.l.b16 %v805
        %v3258 = vunpack.c.h.b16 %v805
        %v3259 = vunpack.c.l.b16 %v806
        %v3260 = vunpack.c.h.b16 %v806
        %v3261 = vunpack.c.l.b16 %v807
        %v3262 = vunpack.c.h.b16 %v807
        %v3263 = vunpack.c.l.b16 %v808
        %v3264 = vunpack.c.h.b16 %v808
        %v3265 = vunpack.c.l.b16 %v809
        %v3266 = vunpack.c.h.b16 %v809
        %v3267 = vunpack.c.l.b16 %v810
        %v3268 = vunpack.c.h.b16 %v810
        %v3269 = vunpack.c.l.b16 %v811
        %v3270 = vunpack.c.h.b16 %v811
        %v3271 = vunpack.c.l.b16 %v812
        %v3272 = vunpack.c.h.b16 %v812
        %v3273 = vunpack.c.l.b16 %v813
        %v3274 = vunpack.c.h.b16 %v813
        %v3275 = vunpack.c.l.b16 %v814
        %v3276 = vunpack.c.h.b16 %v814
        %v3277 = vunpack.c.l.b16 %v815
        %v3278 = vunpack.c.h.b16 %v815
        %v3279 = vunpack.c.l.b16 %v816
        %v3280 = vunpack.c.h.b16 %v816
        %v3281 = vunpack.c.l.b16 %v817
        %v3282 = vunpack.c.h.b16 %v817
        %v3283 = vunpack.c.l.b16 %v818
        %v3284 = vunpack.c.h.b16 %v818
        %v3285 = vunpack.c.l.b16 %v819
        %v3286 = vunpack.c.h.b16 %v819
        %v3287 = vunpack.c.l.b16 %v820
        %v3288 = vunpack.c.h.b16 %v820
        %v3289 = vunpack.c.l.b16 %v821
        %v3290 = vunpack.c.h.b16 %v821
        %v3291 = vunpack.c.l.b16 %v822
        %v3292 = vunpack.c.h.b16 %v822
        %v3293 = vunpack.c.l.b16 %v823
        %v3294 = vunpack.c.h.b16 %v823
        %v3295 = vunpack.c.l.b16 %v824
        %v3296 = vunpack.c.h.b16 %v824
        %v3297 = vunpack.c.l.b16 %v825
        %v3298 = vunpack.c.h.b16 %v825
        %v3299 = vunpack.c.l.b16 %v826
        %v3300 = vunpack.c.h.b16 %v826
        %v3301 = vunpack.c.l.b16 %v827
        %v3302 = vunpack.c.h.b16 %v827
        %v3303 = vunpack.c.l.b16 %v828
        %v3304 = vunpack.c.h.b16 %v828
        %v3305 = vunpack.c.l.b16 %v829
        %v3306 = vunpack.c.h.b16 %v829
        %v3307 = vunpack.c.l.b16 %v830
        %v3308 = vunpack.c.h.b16 %v830
        %v3309 = vunpack.c.l.b16 %v831
        %v3310 = vunpack.c.h.b16 %v831
        %v3311 = vunpack.c.l.b16 %v832
        %v3312 = vunpack.c.h.b16 %v832
        %v3313 = vunpack.c.l.b16 %v833
        %v3314 = vunpack.c.h.b16 %v833
        %v3315 = vunpack.c.l.b16 %v834
        %v3316 = vunpack.c.h.b16 %v834
        %v3317 = vunpack.c.l.b16 %v835
        %v3318 = vunpack.c.h.b16 %v835
        %v3319 = vunpack.c.l.b16 %v836
        %v3320 = vunpack.c.h.b16 %v836
        %v3321 = vunpack.c.l.b16 %v837
        %v3322 = vunpack.c.h.b16 %v837
        %v3323 = vunpack.c.l.b16 %v838
        %v3324 = vunpack.c.h.b16 %v838
        %v3325 = vunpack.c.l.b16 %v839
        %v3326 = vunpack.c.h.b16 %v839
        %v3327 = vunpack.c.l.b16 %v840
        %v3328 = vunpack.c.h.b16 %v840
        %v3329 = vunpack.c.l.b16 %v841
        %v3330 = vunpack.c.h.b16 %v841
        %v3331 = vunpack.c.l.b16 %v842
        %v3332 = vunpack.c.h.b16 %v842
        %v3333 = vunpack.c.l.b16 %v843
        %v3334 = vunpack.c.h.b16 %v843
        %v3335 = vunpack.c.l.b16 %v844
        %v3336 = vunpack.c.h.b16 %v844
        %v3337 = vunpack.c.l.b16 %v845
        %v3338 = vunpack.c.h.b16 %v845
        %v3339 = vunpack.c.l.b16 %v846
        %v3340 = vunpack.c.h.b16 %v846
        %v3341 = vunpack.c.l.b16 %v847
        %v3342 = vunpack.c.h.b16 %v847
        %v3343 = vunpack.c.l.b16 %v848
        %v3344 = vunpack.c.h.b16 %v848
        %v3345 = vunpack.c.l.b16 %v849
        %v3346 = vunpack.c.h.b16 %v849
        %v3347 = vunpack.c.l.b16 %v850
        %v3348 = vunpack.c.h.b16 %v850
        %v3349 = vunpack.c.l.b16 %v851
        %v3350 = vunpack.c.h.b16 %v851
        %v3351 = vunpack.c.l.b16 %v852
        %v3352 = vunpack.c.h.b16 %v852
        %v3353 = vunpack.c.l.b16 %v853
        %v3354 = vunpack.c.h.b16 %v853
        %v3355 = vunpack.c.l.b16 %v854
        %v3356 = vunpack.c.h.b16 %v854
        %v3357 = vunpack.c.l.b16 %v855
        %v3358 = vunpack.c.h.b16 %v855
        %v3359 = vunpack.c.l.b16 %v856
        %v3360 = vunpack.c.h.b16 %v856
        %v3361 = vunpack.c.l.b16 %v857
        %v3362 = vunpack.c.h.b16 %v857
        %v3363 = vunpack.c.l.b16 %v858
        %v3364 = vunpack.c.h.b16 %v858
        %v3365 = vunpack.c.l.b16 %v859
        %v3366 = vunpack.c.h.b16 %v859
        %v3367 = vunpack.c.l.b16 %v860
        %v3368 = vunpack.c.h.b16 %v860
        %v3369 = vunpack.c.l.b16 %v861
        %v3370 = vunpack.c.h.b16 %v861
        %v3371 = vunpack.c.l.b16 %v862
        %v3372 = vunpack.c.h.b16 %v862
        %v3373 = vunpack.c.l.b16 %v863
        %v3374 = vunpack.c.h.b16 %v863
        %v3375 = vunpack.c.l.b16 %v864
        %v3376 = vunpack.c.h.b16 %v864
        %v3377 = vunpack.c.l.b16 %v865
        %v3378 = vunpack.c.h.b16 %v865
        %v3379 = vunpack.c.l.b16 %v866
        %v3380 = vunpack.c.h.b16 %v866
        %v3381 = vunpack.c.l.b16 %v867
        %v3382 = vunpack.c.h.b16 %v867
        %v3383 = vunpack.c.l.b16 %v868
        %v3384 = vunpack.c.h.b16 %v868
        %v3385 = vunpack.c.l.b16 %v869
        %v3386 = vunpack.c.h.b16 %v869
        %v3387 = vunpack.c.l.b16 %v870
        %v3388 = vunpack.c.h.b16 %v870
        %v3389 = vunpack.c.l.b16 %v871
        %v3390 = vunpack.c.h.b16 %v871
        %v3391 = vunpack.c.l.b16 %v872
        %v3392 = vunpack.c.h.b16 %v872
        %v3393 = vunpack.c.l.b16 %v873
        %v3394 = vunpack.c.h.b16 %v873
        %v3395 = vunpack.c.l.b16 %v874
        %v3396 = vunpack.c.h.b16 %v874
        %v3397 = vunpack.c.l.b16 %v875
        %v3398 = vunpack.c.h.b16 %v875
        %v3399 = vunpack.c.l.b16 %v876
        %v3400 = vunpack.c.h.b16 %v876
        %v3401 = vunpack.c.l.b16 %v877
        %v3402 = vunpack.c.h.b16 %v877
        %v3403 = vunpack.c.l.b16 %v878
        %v3404 = vunpack.c.h.b16 %v878
        %v3405 = vunpack.c.l.b16 %v879
        %v3406 = vunpack.c.h.b16 %v879
        %v3407 = vunpack.c.l.b16 %v880
        %v3408 = vunpack.c.h.b16 %v880
        %v3409 = vunpack.c.l.b16 %v881
        %v3410 = vunpack.c.h.b16 %v881
        %v3411 = vunpack.c.l.b16 %v882
        %v3412 = vunpack.c.h.b16 %v882
        %v3413 = vunpack.c.l.b16 %v883
        %v3414 = vunpack.c.h.b16 %v883
        %v3415 = vunpack.c.l.b16 %v884
        %v3416 = vunpack.c.h.b16 %v884
        %v3417 = vunpack.c.l.b16 %v885
        %v3418 = vunpack.c.h.b16 %v885
        %v3419 = vunpack.c.l.b16 %v886
        %v3420 = vunpack.c.h.b16 %v886
        %v3421 = vunpack.c.l.b16 %v887
        %v3422 = vunpack.c.h.b16 %v887
        %v3423 = vunpack.c.l.b16 %v888
        %v3424 = vunpack.c.h.b16 %v888
        %v3425 = vunpack.c.l.b16 %v889
        %v3426 = vunpack.c.h.b16 %v889
        %v3427 = vunpack.c.l.b16 %v890
        %v3428 = vunpack.c.h.b16 %v890
        %v3429 = vunpack.c.l.b16 %v891
        %v3430 = vunpack.c.h.b16 %v891
        %v3431 = vunpack.c.l.b16 %v892
        %v3432 = vunpack.c.h.b16 %v892
        %v3433 = vunpack.c.l.b16 %v893
        %v3434 = vunpack.c.h.b16 %v893
        %v3435 = vunpack.c.l.b16 %v894
        %v3436 = vunpack.c.h.b16 %v894
        %v3437 = vunpack.c.l.b16 %v895
        %v3438 = vunpack.c.h.b16 %v895
        %v3439 = vunpack.c.l.b16 %v896
        %v3440 = vunpack.c.h.b16 %v896
        %v3441 = vunpack.c.l.b16 %v897
        %v3442 = vunpack.c.h.b16 %v897
        %v3443 = vunpack.c.l.b16 %v898
        %v3444 = vunpack.c.h.b16 %v898
        %v3445 = vunpack.c.l.b16 %v899
        %v3446 = vunpack.c.h.b16 %v899
        %v3447 = vunpack.c.l.b16 %v900
        %v3448 = vunpack.c.h.b16 %v900
        %v3449 = vunpack.c.l.b16 %v901
        %v3450 = vunpack.c.h.b16 %v901
        %v3451 = vunpack.c.l.b16 %v902
        %v3452 = vunpack.c.h.b16 %v902
        %v3453 = vunpack.c.l.b16 %v903
        %v3454 = vunpack.c.h.b16 %v903
        %v3455 = vunpack.c.l.b16 %v904
        %v3456 = vunpack.c.h.b16 %v904
        %v3457 = vunpack.c.l.b16 %v905
        %v3458 = vunpack.c.h.b16 %v905
        %v3459 = vunpack.c.l.b16 %v906
        %v3460 = vunpack.c.h.b16 %v906
        %v3461 = vunpack.c.l.b16 %v907
        %v3462 = vunpack.c.h.b16 %v907
        %v3463 = vunpack.c.l.b16 %v908
        %v3464 = vunpack.c.h.b16 %v908
        %v3465 = vunpack.c.l.b16 %v909
        %v3466 = vunpack.c.h.b16 %v909
        %v3467 = vunpack.c.l.b16 %v910
        %v3468 = vunpack.c.h.b16 %v910
        %v3469 = vunpack.c.l.b16 %v911
        %v3470 = vunpack.c.h.b16 %v911
        %v3471 = vunpack.c.l.b16 %v912
        %v3472 = vunpack.c.h.b16 %v912
        %v3473 = vunpack.c.l.b16 %v913
        %v3474 = vunpack.c.h.b16 %v913
        %v3475 = vunpack.c.l.b16 %v914
        %v3476 = vunpack.c.h.b16 %v914
        %v3477 = vunpack.c.l.b16 %v915
        %v3478 = vunpack.c.h.b16 %v915
        %v3479 = vunpack.c.l.b16 %v916
        %v3480 = vunpack.c.h.b16 %v916
        %v3481 = vunpack.c.l.b16 %v917
        %v3482 = vunpack.c.h.b16 %v917
        %v3483 = vunpack.c.l.b16 %v918
        %v3484 = vunpack.c.h.b16 %v918
        %v3485 = vunpack.c.l.b16 %v919
        %v3486 = vunpack.c.h.b16 %v919
        %v3487 = vunpack.c.l.b16 %v920
        %v3488 = vunpack.c.h.b16 %v920
        %v3489 = vunpack.c.l.b16 %v921
        %v3490 = vunpack.c.h.b16 %v921
        %v3491 = vunpack.c.l.b16 %v922
        %v3492 = vunpack.c.h.b16 %v922
        %v3493 = vunpack.c.l.b16 %v923
        %v3494 = vunpack.c.h.b16 %v923
        %v3495 = vunpack.c.l.b16 %v924
        %v3496 = vunpack.c.h.b16 %v924
        %v3497 = vunpack.c.l.b16 %v925
        %v3498 = vunpack.c.h.b16 %v925
        %v3499 = vunpack.c.l.b16 %v926
        %v3500 = vunpack.c.h.b16 %v926
        %v3501 = vunpack.c.l.b16 %v927
        %v3502 = vunpack.c.h.b16 %v927
        %v3503 = vunpack.c.l.b16 %v928
        %v3504 = vunpack.c.h.b16 %v928
        %v3505 = vunpack.c.l.b16 %v929
        %v3506 = vunpack.c.h.b16 %v929
        %v3507 = vunpack.c.l.b16 %v930
        %v3508 = vunpack.c.h.b16 %v930
        %v3509 = vunpack.c.l.b16 %v931
        %v3510 = vunpack.c.h.b16 %v931
        %v3511 = vunpack.c.l.b16 %v932
        %v3512 = vunpack.c.h.b16 %v932
        %v3513 = vunpack.c.l.b16 %v933
        %v3514 = vunpack.c.h.b16 %v933
        %v3515 = vunpack.c.l.b16 %v934
        %v3516 = vunpack.c.h.b16 %v934
        %v3517 = vunpack.c.l.b16 %v935
        %v3518 = vunpack.c.h.b16 %v935
        %v3519 = vunpack.c.l.b16 %v936
        %v3520 = vunpack.c.h.b16 %v936
        %v3521 = vunpack.c.l.b16 %v937
        %v3522 = vunpack.c.h.b16 %v937
        %v3523 = vunpack.c.l.b16 %v938
        %v3524 = vunpack.c.h.b16 %v938
        %v3525 = vunpack.c.l.b16 %v939
        %v3526 = vunpack.c.h.b16 %v939
        %v3527 = vunpack.c.l.b16 %v940
        %v3528 = vunpack.c.h.b16 %v940
        %v3529 = vunpack.c.l.b16 %v941
        %v3530 = vunpack.c.h.b16 %v941
        %v3531 = vunpack.c.l.b16 %v942
        %v3532 = vunpack.c.h.b16 %v942
        %v3533 = vunpack.c.l.b16 %v943
        %v3534 = vunpack.c.h.b16 %v943
        %v3535 = vunpack.c.l.b16 %v944
        %v3536 = vunpack.c.h.b16 %v944
        %v3537 = vunpack.c.l.b16 %v945
        %v3538 = vunpack.c.h.b16 %v945
        %v3539 = vunpack.c.l.b16 %v946
        %v3540 = vunpack.c.h.b16 %v946
        %v3541 = vunpack.c.l.b16 %v947
        %v3542 = vunpack.c.h.b16 %v947
        %v3543 = vunpack.c.l.b16 %v948
        %v3544 = vunpack.c.h.b16 %v948
        %v3545 = vunpack.c.l.b16 %v949
        %v3546 = vunpack.c.h.b16 %v949
        %v3547 = vunpack.c.l.b16 %v950
        %v3548 = vunpack.c.h.b16 %v950
        %v3549 = vunpack.c.l.b16 %v951
        %v3550 = vunpack.c.h.b16 %v951
        %v3551 = vunpack.c.l.b16 %v952
        %v3552 = vunpack.c.h.b16 %v952
        %v3553 = vunpack.c.l.b16 %v953
        %v3554 = vunpack.c.h.b16 %v953
        %v3555 = vunpack.c.l.b16 %v954
        %v3556 = vunpack.c.h.b16 %v954
        %v3557 = vunpack.c.l.b16 %v955
        %v3558 = vunpack.c.h.b16 %v955
        %v3559 = vunpack.c.l.b16 %v956
        %v3560 = vunpack.c.h.b16 %v956
        %v3561 = vunpack.c.l.b16 %v957
        %v3562 = vunpack.c.h.b16 %v957
        %v3563 = vunpack.c.l.b16 %v958
        %v3564 = vunpack.c.h.b16 %v958
        %v3565 = vunpack.c.l.b16 %v959
        %v3566 = vunpack.c.h.b16 %v959
        %v3567 = vunpack.c.l.b16 %v960
        %v3568 = vunpack.c.h.b16 %v960
        %v3569 = vunpack.c.l.b16 %v961
        %v3570 = vunpack.c.h.b16 %v961
        %v3571 = vunpack.c.l.b16 %v962
        %v3572 = vunpack.c.h.b16 %v962
        %v3573 = vunpack.c.l.b16 %v963
        %v3574 = vunpack.c.h.b16 %v963
        %v3575 = vunpack.c.l.b16 %v964
        %v3576 = vunpack.c.h.b16 %v964
        %v3577 = vunpack.c.l.b16 %v965
        %v3578 = vunpack.c.h.b16 %v965
        %v3579 = vunpack.c.l.b16 %v966
        %v3580 = vunpack.c.h.b16 %v966
        %v3581 = vunpack.c.l.b16 %v967
        %v3582 = vunpack.c.h.b16 %v967
        %v3583 = vunpack.c.l.b16 %v968
        %v3584 = vunpack.c.h.b16 %v968
        %v3585 = vunpack.c.l.b16 %v969
        %v3586 = vunpack.c.h.b16 %v969
        %v3587 = vunpack.c.l.b16 %v970
        %v3588 = vunpack.c.h.b16 %v970
        %v3589 = vunpack.c.l.b16 %v971
        %v3590 = vunpack.c.h.b16 %v971
        %v3591 = vunpack.c.l.b16 %v972
        %v3592 = vunpack.c.h.b16 %v972
        %v3593 = vunpack.c.l.b16 %v973
        %v3594 = vunpack.c.h.b16 %v973
        %v3595 = vunpack.c.l.b16 %v974
        %v3596 = vunpack.c.h.b16 %v974
        %v3597 = vunpack.c.l.b16 %v975
        %v3598 = vunpack.c.h.b16 %v975
        %v3599 = vunpack.c.l.b16 %v976
        %v3600 = vunpack.c.h.b16 %v976
        %v3601 = vunpack.c.l.b16 %v977
        %v3602 = vunpack.c.h.b16 %v977
        %v3603 = vunpack.c.l.b16 %v978
        %v3604 = vunpack.c.h.b16 %v978
        %v3605 = vunpack.c.l.b16 %v979
        %v3606 = vunpack.c.h.b16 %v979
        %v3607 = vunpack.c.l.b16 %v980
        %v3608 = vunpack.c.h.b16 %v980
        %v3609 = vunpack.c.l.b16 %v981
        %v3610 = vunpack.c.h.b16 %v981
        %v3611 = vunpack.c.l.b16 %v982
        %v3612 = vunpack.c.h.b16 %v982
        %v3613 = vunpack.c.l.b16 %v983
        %v3614 = vunpack.c.h.b16 %v983
        %v3615 = vunpack.c.l.b16 %v984
        %v3616 = vunpack.c.h.b16 %v984
        %v3617 = vunpack.c.l.b16 %v985
        %v3618 = vunpack.c.h.b16 %v985
        %v3619 = vunpack.c.l.b16 %v986
        %v3620 = vunpack.c.h.b16 %v986
        %v3621 = vunpack.c.l.b16 %v987
        %v3622 = vunpack.c.h.b16 %v987
        %v3623 = vunpack.c.l.b16 %v988
        %v3624 = vunpack.c.h.b16 %v988
        %v3625 = vunpack.c.l.b16 %v989
        %v3626 = vunpack.c.h.b16 %v989
        %v3627 = vunpack.c.l.b16 %v990
        %v3628 = vunpack.c.h.b16 %v990
        %v3629 = vunpack.c.l.b16 %v991
        %v3630 = vunpack.c.h.b16 %v991
        %v3631 = vunpack.c.l.b16 %v992
        %v3632 = vunpack.c.h.b16 %v992
        %v3633 = vunpack.c.l.b16 %v993
        %v3634 = vunpack.c.h.b16 %v993
        %v3635 = vunpack.c.l.b16 %v994
        %v3636 = vunpack.c.h.b16 %v994
        %v3637 = vunpack.c.l.b16 %v995
        %v3638 = vunpack.c.h.b16 %v995
        %v3639 = vunpack.c.l.b16 %v996
        %v3640 = vunpack.c.h.b16 %v996
        %v3641 = vunpack.c.l.b16 %v997
        %v3642 = vunpack.c.h.b16 %v997
        %v3643 = vunpack.c.l.b16 %v998
        %v3644 = vunpack.c.h.b16 %v998
        %v3645 = vunpack.c.l.b16 %v999
        %v3646 = vunpack.c.h.b16 %v999
        %v3647 = vunpack.c.l.b16 %v1000
        %v3648 = vunpack.c.h.b16 %v1000
        %v3649 = vunpack.c.l.b16 %v1001
        %v3650 = vunpack.c.h.b16 %v1001
        %v3651 = vunpack.c.l.b16 %v1002
        %v3652 = vunpack.c.h.b16 %v1002
        %v3653 = vunpack.c.l.b16 %v1003
        %v3654 = vunpack.c.h.b16 %v1003
        %v3655 = vunpack.c.l.b16 %v1004
        %v3656 = vunpack.c.h.b16 %v1004
        %v3657 = vunpack.c.l.b16 %v1005
        %v3658 = vunpack.c.h.b16 %v1005
        %v3659 = vunpack.c.l.b16 %v1006
        %v3660 = vunpack.c.h.b16 %v1006
        %v3661 = vunpack.c.l.b16 %v1007
        %v3662 = vunpack.c.h.b16 %v1007
        %v3663 = vunpack.c.l.b16 %v1008
        %v3664 = vunpack.c.h.b16 %v1008
        %v3665 = vunpack.c.l.b16 %v1009
        %v3666 = vunpack.c.h.b16 %v1009
        %v3667 = vunpack.c.l.b16 %v1010
        %v3668 = vunpack.c.h.b16 %v1010
        %v3669 = vunpack.c.l.b16 %v1011
        %v3670 = vunpack.c.h.b16 %v1011
        %v3671 = vunpack.c.l.b16 %v1012
        %v3672 = vunpack.c.h.b16 %v1012
        %v3673 = vunpack.c.l.b16 %v1013
        %v3674 = vunpack.c.h.b16 %v1013
        %v3675 = vunpack.c.l.b16 %v1014
        %v3676 = vunpack.c.h.b16 %v1014
        %v3677 = vunpack.c.l.b16 %v1015
        %v3678 = vunpack.c.h.b16 %v1015
        %v3679 = vunpack.c.l.b16 %v1016
        %v3680 = vunpack.c.h.b16 %v1016
        %v3681 = vunpack.c.l.b16 %v1017
        %v3682 = vunpack.c.h.b16 %v1017
        %v3683 = vunpack.c.l.b16 %v1018
        %v3684 = vunpack.c.h.b16 %v1018
        %v3685 = vunpack.c.l.b16 %v1019
        %v3686 = vunpack.c.h.b16 %v1019
        %v3687 = vunpack.c.l.b16 %v1020
        %v3688 = vunpack.c.h.b16 %v1020
        %v3689 = vunpack.c.l.b16 %v1021
        %v3690 = vunpack.c.h.b16 %v1021
        %v3691 = vunpack.c.l.b16 %v1022
        %v3692 = vunpack.c.h.b16 %v1022
        %v3693 = vunpack.c.l.b16 %v1023
        %v3694 = vunpack.c.h.b16 %v1023
        %v3695 = vunpack.c.l.b16 %v1024
        %v3696 = vunpack.c.h.b16 %v1024
        %v3697 = vunpack.c.l.b16 %v1025
        %v3698 = vunpack.c.h.b16 %v1025
        %v3699 = vunpack.c.l.b16 %v1026
        %v3700 = vunpack.c.h.b16 %v1026
        %v3701 = vunpack.c.l.b16 %v1027
        %v3702 = vunpack.c.h.b16 %v1027
        %v3703 = vunpack.c.l.b16 %v1028
        %v3704 = vunpack.c.h.b16 %v1028
        %v3705 = vunpack.c.l.b16 %v1029
        %v3706 = vunpack.c.h.b16 %v1029
        %v3707 = vunpack.c.l.b16 %v1030
        %v3708 = vunpack.c.h.b16 %v1030
        %v3709 = vunpack.c.l.b16 %v1031
        %v3710 = vunpack.c.h.b16 %v1031
        %v3711 = vunpack.c.l.b16 %v1032
        %v3712 = vunpack.c.h.b16 %v1032
        %v3713 = vunpack.c.l.b16 %v1033
        %v3714 = vunpack.c.h.b16 %v1033
        %v3715 = vunpack.c.l.b16 %v1034
        %v3716 = vunpack.c.h.b16 %v1034
        %v3717 = vunpack.c.l.b16 %v1035
        %v3718 = vunpack.c.h.b16 %v1035
        %v3719 = vunpack.c.l.b16 %v1036
        %v3720 = vunpack.c.h.b16 %v1036
        %v3721 = vunpack.c.l.b16 %v1037
        %v3722 = vunpack.c.h.b16 %v1037
        %v3723 = vunpack.c.l.b16 %v1038
        %v3724 = vunpack.c.h.b16 %v1038
        %v3725 = vunpack.c.l.b16 %v1039
        %v3726 = vunpack.c.h.b16 %v1039
        %v3727 = vunpack.c.l.b16 %v1040
        %v3728 = vunpack.c.h.b16 %v1040
        %v3729 = vunpack.c.l.b16 %v1041
        %v3730 = vunpack.c.h.b16 %v1041
        %v3731 = vunpack.c.l.b16 %v1042
        %v3732 = vunpack.c.h.b16 %v1042
        %v3733 = vunpack.c.l.b16 %v1043
        %v3734 = vunpack.c.h.b16 %v1043
        %v3735 = vunpack.c.l.b16 %v1044
        %v3736 = vunpack.c.h.b16 %v1044
        %v3737 = vunpack.c.l.b16 %v1045
        %v3738 = vunpack.c.h.b16 %v1045
        %v3739 = vunpack.c.l.b16 %v1046
        %v3740 = vunpack.c.h.b16 %v1046
        %v3741 = vunpack.c.l.b16 %v1047
        %v3742 = vunpack.c.h.b16 %v1047
        %v3743 = vunpack.c.l.b16 %v1048
        %v3744 = vunpack.c.h.b16 %v1048
        %v3745 = vunpack.c.l.b16 %v1049
        %v3746 = vunpack.c.h.b16 %v1049
        %v3747 = vunpack.c.l.b16 %v1050
        %v3748 = vunpack.c.h.b16 %v1050
        %v3749 = vunpack.c.l.b16 %v1051
        %v3750 = vunpack.c.h.b16 %v1051
        %v3751 = vunpack.c.l.b16 %v1052
        %v3752 = vunpack.c.h.b16 %v1052
        %v3753 = vunpack.c.l.b16 %v1053
        %v3754 = vunpack.c.h.b16 %v1053
        %v3755 = vunpack.c.l.b16 %v1054
        %v3756 = vunpack.c.h.b16 %v1054
        %v3757 = vunpack.c.l.b16 %v1055
        %v3758 = vunpack.c.h.b16 %v1055
        %v3759 = vunpack.c.l.b16 %v1056
        %v3760 = vunpack.c.h.b16 %v1056
        %v3761 = vunpack.c.l.b16 %v1057
        %v3762 = vunpack.c.h.b16 %v1057
        %v3763 = vunpack.c.l.b16 %v1058
        %v3764 = vunpack.c.h.b16 %v1058
        %v3765 = vunpack.c.l.b16 %v1059
        %v3766 = vunpack.c.h.b16 %v1059
        %v3767 = vunpack.c.l.b16 %v1060
        %v3768 = vunpack.c.h.b16 %v1060
        %v3769 = vunpack.c.l.b16 %v1061
        %v3770 = vunpack.c.h.b16 %v1061
        %v3771 = vunpack.c.l.b16 %v1062
        %v3772 = vunpack.c.h.b16 %v1062
        %v3773 = vunpack.c.l.b16 %v1063
        %v3774 = vunpack.c.h.b16 %v1063
        %v3775 = vunpack.c.l.b16 %v1064
        %v3776 = vunpack.c.h.b16 %v1064
        %v3777 = vunpack.c.l.b16 %v1065
        %v3778 = vunpack.c.h.b16 %v1065
        %v3779 = vunpack.c.l.b16 %v1066
        %v3780 = vunpack.c.h.b16 %v1066
        %v3781 = vunpack.c.l.b16 %v1067
        %v3782 = vunpack.c.h.b16 %v1067
        %v3783 = vunpack.c.l.b16 %v1068
        %v3784 = vunpack.c.h.b16 %v1068
        %v3785 = vunpack.c.l.b16 %v1069
        %v3786 = vunpack.c.h.b16 %v1069
        %v3787 = vunpack.c.l.b16 %v1070
        %v3788 = vunpack.c.h.b16 %v1070
        %v3789 = vunpack.c.l.b16 %v1071
        %v3790 = vunpack.c.h.b16 %v1071
        %v3791 = vunpack.c.l.b16 %v1072
        %v3792 = vunpack.c.h.b16 %v1072
        %v3793 = vunpack.c.l.b16 %v1073
        %v3794 = vunpack.c.h.b16 %v1073
        %v3795 = vunpack.c.l.b16 %v1074
        %v3796 = vunpack.c.h.b16 %v1074
        %v3797 = vunpack.c.l.b16 %v1075
        %v3798 = vunpack.c.h.b16 %v1075
        %v3799 = vunpack.c.l.b16 %v1076
        %v3800 = vunpack.c.h.b16 %v1076
        %v3801 = vunpack.c.l.b16 %v1077
        %v3802 = vunpack.c.h.b16 %v1077
        %v3803 = vunpack.c.l.b16 %v1078
        %v3804 = vunpack.c.h.b16 %v1078
        %v3805 = vunpack.c.l.b16 %v1079
        %v3806 = vunpack.c.h.b16 %v1079
        %v3807 = vunpack.c.l.b16 %v1080
        %v3808 = vunpack.c.h.b16 %v1080
        %v3809 = vunpack.c.l.b16 %v1081
        %v3810 = vunpack.c.h.b16 %v1081
        %v3811 = vunpack.c.l.b16 %v1082
        %v3812 = vunpack.c.h.b16 %v1082
        %v3813 = vunpack.c.l.b16 %v1083
        %v3814 = vunpack.c.h.b16 %v1083
        %v3815 = vunpack.c.l.b16 %v1084
        %v3816 = vunpack.c.h.b16 %v1084
        %v3817 = vunpack.c.l.b16 %v1085
        %v3818 = vunpack.c.h.b16 %v1085
        %v3819 = vunpack.c.l.b16 %v1086
        %v3820 = vunpack.c.h.b16 %v1086
        %v3821 = vunpack.c.l.b16 %v1087
        %v3822 = vunpack.c.h.b16 %v1087
        %v3823 = vunpack.c.l.b16 %v1088
        %v3824 = vunpack.c.h.b16 %v1088
        %v3825 = vunpack.c.l.b16 %v1089
        %v3826 = vunpack.c.h.b16 %v1089
        %v3827 = vunpack.c.l.b16 %v1090
        %v3828 = vunpack.c.h.b16 %v1090
        %v3829 = vunpack.c.l.b16 %v1091
        %v3830 = vunpack.c.h.b16 %v1091
        %v3831 = vunpack.c.l.b16 %v1092
        %v3832 = vunpack.c.h.b16 %v1092
        %v3833 = vunpack.c.l.b16 %v1093
        %v3834 = vunpack.c.h.b16 %v1093
        %v3835 = vunpack.c.l.b16 %v1094
        %v3836 = vunpack.c.h.b16 %v1094
        %v3837 = vunpack.c.l.b16 %v1095
        %v3838 = vunpack.c.h.b16 %v1095
        %v3839 = vunpack.c.l.b16 %v1096
        %v3840 = vunpack.c.h.b16 %v1096
        %v3841 = vunpack.c.l.b16 %v1097
        %v3842 = vunpack.c.h.b16 %v1097
        %v3843 = vunpack.c.l.b16 %v1098
        %v3844 = vunpack.c.h.b16 %v1098
        %v3845 = vunpack.c.l.b16 %v1099
        %v3846 = vunpack.c.h.b16 %v1099
        %v3847 = vunpack.c.l.b16 %v1100
        %v3848 = vunpack.c.h.b16 %v1100
        %v3849 = vunpack.c.l.b16 %v1101
        %v3850 = vunpack.c.h.b16 %v1101
        %v3851 = vunpack.c.l.b16 %v1102
        %v3852 = vunpack.c.h.b16 %v1102
        %v3853 = vunpack.c.l.b16 %v1103
        %v3854 = vunpack.c.h.b16 %v1103
        %v3855 = vunpack.c.l.b16 %v1104
        %v3856 = vunpack.c.h.b16 %v1104
        %v3857 = vpack.c.b16 %v2069, %v2065
        %v3858 = vpack.c.b16 %v2070, %v2066
        %v3859 = vpack.c.b16 %v2071, %v2067
        %v3860 = vpack.c.b16 %v2072, %v2068
        %v3861 = vpack.c.b16 %v2077, %v2073
        %v3862 = vpack.c.b16 %v2078, %v2074
        %v3863 = vpack.c.b16 %v2079, %v2075
        %v3864 = vpack.c.b16 %v2080, %v2076
        %v3865 = vpack.c.b16 %v2085, %v2081
        %v3866 = vpack.c.b16 %v2086, %v2082
        %v3867 = vpack.c.b16 %v2087, %v2083
        %v3868 = vpack.c.b16 %v2088, %v2084
        %v3869 = vpack.c.b16 %v2093, %v2089
        %v3870 = vpack.c.b16 %v2094, %v2090
        %v3871 = vpack.c.b16 %v2095, %v2091
        %v3872 = vpack.c.b16 %v2096, %v2092
        %v3873 = vpack.c.b16 %v2101, %v2097
        %v3874 = vpack.c.b16 %v2102, %v2098
        %v3875 = vpack.c.b16 %v2103, %v2099
        %v3876 = vpack.c.b16 %v2104, %v2100
        %v3877 = vpack.c.b16 %v2109, %v2105
        %v3878 = vpack.c.b16 %v2110, %v2106
        %v3879 = vpack.c.b16 %v2111, %v2107
        %v3880 = vpack.c.b16 %v2112, %v2108
        %v3881 = vpack.c.b16 %v2117, %v2113
        %v3882 = vpack.c.b16 %v2118, %v2114
        %v3883 = vpack.c.b16 %v2119, %v2115
        %v3884 = vpack.c.b16 %v2120, %v2116
        %v3885 = vpack.c.b16 %v2125, %v2121
        %v3886 = vpack.c.b16 %v2126, %v2122
        %v3887 = vpack.c.b16 %v2127, %v2123
        %v3888 = vpack.c.b16 %v2128, %v2124
        %v3889 = vpack.c.b16 %v2133, %v2129
        %v3890 = vpack.c.b16 %v2134, %v2130
        %v3891 = vpack.c.b16 %v2135, %v2131
        %v3892 = vpack.c.b16 %v2136, %v2132
        %v3893 = vpack.c.b16 %v2141, %v2137
        %v3894 = vpack.c.b16 %v2142, %v2138
        %v3895 = vpack.c.b16 %v2143, %v2139
        %v3896 = vpack.c.b16 %v2144, %v2140
        %v3897 = vpack.c.b16 %v2149, %v2145
        %v3898 = vpack.c.b16 %v2150, %v2146
        %v3899 = vpack.c.b16 %v2151, %v2147
        %v3900 = vpack.c.b16 %v2152, %v2148
        %v3901 = vpack.c.b16 %v2157, %v2153
        %v3902 = vpack.c.b16 %v2158, %v2154
        %v3903 = vpack.c.b16 %v2159, %v2155
        %v3904 = vpack.c.b16 %v2160, %v2156
        %v3905 = vpack.c.b16 %v2165, %v2161
        %v3906 = vpack.c.b16 %v2166, %v2162
        %v3907 = vpack.c.b16 %v2167, %v2163
        %v3908 = vpack.c.b16 %v2168, %v2164
        %v3909 = vpack.c.b16 %v2173, %v2169
        %v3910 = vpack.c.b16 %v2174, %v2170
        %v3911 = vpack.c.b16 %v2175, %v2171
        %v3912 = vpack.c.b16 %v2176, %v2172
        %v3913 = vpack.c.b16 %v2181, %v2177
        %v3914 = vpack.c.b16 %v2182, %v2178
        %v3915 = vpack.c.b16 %v2183, %v2179
        %v3916 = vpack.c.b16 %v2184, %v2180
        %v3917 = vpack.c.b16 %v2189, %v2185
        %v3918 = vpack.c.b16 %v2190, %v2186
        %v3919 = vpack.c.b16 %v2191, %v2187
        %v3920 = vpack.c.b16 %v2192, %v2188
        %v3921 = vpack.c.b16 %v2197, %v2193
        %v3922 = vpack.c.b16 %v2198, %v2194
        %v3923 = vpack.c.b16 %v2199, %v2195
        %v3924 = vpack.c.b16 %v2200, %v2196
        %v3925 = vpack.c.b16 %v2205, %v2201
        %v3926 = vpack.c.b16 %v2206, %v2202
        %v3927 = vpack.c.b16 %v2207, %v2203
        %v3928 = vpack.c.b16 %v2208, %v2204
        %v3929 = vpack.c.b16 %v2213, %v2209
        %v3930 = vpack.c.b16 %v2214, %v2210
        %v3931 = vpack.c.b16 %v2215, %v2211
        %v3932 = vpack.c.b16 %v2216, %v2212
        %v3933 = vpack.c.b16 %v2221, %v2217
        %v3934 = vpack.c.b16 %v2222, %v2218
        %v3935 = vpack.c.b16 %v2223, %v2219
        %v3936 = vpack.c.b16 %v2224, %v2220
        %v3937 = vpack.c.b16 %v2229, %v2225
        %v3938 = vpack.c.b16 %v2230, %v2226
        %v3939 = vpack.c.b16 %v2231, %v2227
        %v3940 = vpack.c.b16 %v2232, %v2228
        %v3941 = vpack.c.b16 %v2237, %v2233
        %v3942 = vpack.c.b16 %v2238, %v2234
        %v3943 = vpack.c.b16 %v2239, %v2235
        %v3944 = vpack.c.b16 %v2240, %v2236
        %v3945 = vpack.c.b16 %v2245, %v2241
        %v3946 = vpack.c.b16 %v2246, %v2242
        %v3947 = vpack.c.b16 %v2247, %v2243
        %v3948 = vpack.c.b16 %v2248, %v2244
        %v3949 = vpack.c.b16 %v2253, %v2249
        %v3950 = vpack.c.b16 %v2254, %v2250
        %v3951 = vpack.c.b16 %v2255, %v2251
        %v3952 = vpack.c.b16 %v2256, %v2252
        %v3953 = vpack.c.b16 %v2261, %v2257
        %v3954 = vpack.c.b16 %v2262, %v2258
        %v3955 = vpack.c.b16 %v2263, %v2259
        %v3956 = vpack.c.b16 %v2264, %v2260
        %v3957 = vpack.c.b16 %v2269, %v2265
        %v3958 = vpack.c.b16 %v2270, %v2266
        %v3959 = vpack.c.b16 %v2271, %v2267
        %v3960 = vpack.c.b16 %v2272, %v2268
        %v3961 = vpack.c.b16 %v2277, %v2273
        %v3962 = vpack.c.b16 %v2278, %v2274
        %v3963 = vpack.c.b16 %v2279, %v2275
        %v3964 = vpack.c.b16 %v2280, %v2276
        %v3965 = vpack.c.b16 %v2285, %v2281
        %v3966 = vpack.c.b16 %v2286, %v2282
        %v3967 = vpack.c.b16 %v2287, %v2283
        %v3968 = vpack.c.b16 %v2288, %v2284
        %v3969 = vpack.c.b16 %v2293, %v2289
        %v3970 = vpack.c.b16 %v2294, %v2290
        %v3971 = vpack.c.b16 %v2295, %v2291
        %v3972 = vpack.c.b16 %v2296, %v2292
        %v3973 = vpack.c.b16 %v2301, %v2297
        %v3974 = vpack.c.b16 %v2302, %v2298
        %v3975 = vpack.c.b16 %v2303, %v2299
        %v3976 = vpack.c.b16 %v2304, %v2300
        %v3977 = vpack.c.b16 %v2309, %v2305
        %v3978 = vpack.c.b16 %v2310, %v2306
        %v3979 = vpack.c.b16 %v2311, %v2307
        %v3980 = vpack.c.b16 %v2312, %v2308
        %v3981 = vpack.c.b16 %v2317, %v2313
        %v3982 = vpack.c.b16 %v2318, %v2314
        %v3983 = vpack.c.b16 %v2319, %v2315
        %v3984 = vpack.c.b16 %v2320, %v2316
        %v3985 = vpack.c.b16 %v2325, %v2321
        %v3986 = vpack.c.b16 %v2326, %v2322
        %v3987 = vpack.c.b16 %v2327, %v2323
        %v3988 = vpack.c.b16 %v2328, %v2324
        %v3989 = vpack.c.b16 %v2333, %v2329
        %v3990 = vpack.c.b16 %v2334, %v2330
        %v3991 = vpack.c.b16 %v2335, %v2331
        %v3992 = vpack.c.b16 %v2336, %v2332
        %v3993 = vpack.c.b16 %v2341, %v2337
        %v3994 = vpack.c.b16 %v2342, %v2338
        %v3995 = vpack.c.b16 %v2343, %v2339
        %v3996 = vpack.c.b16 %v2344, %v2340
        %v3997 = vpack.c.b16 %v2349, %v2345
        %v3998 = vpack.c.b16 %v2350, %v2346
        %v3999 = vpack.c.b16 %v2351, %v2347
        %v4000 = vpack.c.b16 %v2352, %v2348
        %v4001 = vpack.c.b16 %v2357, %v2353
        %v4002 = vpack.c.b16 %v2358, %v2354
        %v4003 = vpack.c.b16 %v2359, %v2355
        %v4004 = vpack.c.b16 %v2360, %v2356
        %v4005 = vpack.c.b16 %v2365, %v2361
        %v4006 = vpack.c.b16 %v2366, %v2362
        %v4007 = vpack.c.b16 %v2367, %v2363
        %v4008 = vpack.c.b16 %v2368, %v2364
        %v4009 = vpack.c.b16 %v2373, %v2369
        %v4010 = vpack.c.b16 %v2374, %v2370
        %v4011 = vpack.c.b16 %v2375, %v2371
        %v4012 = vpack.c.b16 %v2376, %v2372
        %v4013 = vpack.c.b16 %v2381, %v2377
        %v4014 = vpack.c.b16 %v2382, %v2378
        %v4015 = vpack.c.b16 %v2383, %v2379
        %v4016 = vpack.c.b16 %v2384, %v2380
        %v4017 = vpack.c.b16 %v2389, %v2385
        %v4018 = vpack.c.b16 %v2390, %v2386
        %v4019 = vpack.c.b16 %v2391, %v2387
        %v4020 = vpack.c.b16 %v2392, %v2388
        %v4021 = vpack.c.b16 %v2397, %v2393
        %v4022 = vpack.c.b16 %v2398, %v2394
        %v4023 = vpack.c.b16 %v2399, %v2395
        %v4024 = vpack.c.b16 %v2400, %v2396
        %v4025 = vpack.c.b16 %v2405, %v2401
        %v4026 = vpack.c.b16 %v2406, %v2402
        %v4027 = vpack.c.b16 %v2407, %v2403
        %v4028 = vpack.c.b16 %v2408, %v2404
        %v4029 = vpack.c.b16 %v2413, %v2409
        %v4030 = vpack.c.b16 %v2414, %v2410
        %v4031 = vpack.c.b16 %v2415, %v2411
        %v4032 = vpack.c.b16 %v2416, %v2412
        %v4033 = vpack.c.b16 %v2421, %v2417
        %v4034 = vpack.c.b16 %v2422, %v2418
        %v4035 = vpack.c.b16 %v2423, %v2419
        %v4036 = vpack.c.b16 %v2424, %v2420
        %v4037 = vpack.c.b16 %v2429, %v2425
        %v4038 = vpack.c.b16 %v2430, %v2426
        %v4039 = vpack.c.b16 %v2431, %v2427
        %v4040 = vpack.c.b16 %v2432, %v2428
        %v4041 = vpack.c.b16 %v2437, %v2433
        %v4042 = vpack.c.b16 %v2438, %v2434
        %v4043 = vpack.c.b16 %v2439, %v2435
        %v4044 = vpack.c.b16 %v2440, %v2436
        %v4045 = vpack.c.b16 %v2445, %v2441
        %v4046 = vpack.c.b16 %v2446, %v2442
        %v4047 = vpack.c.b16 %v2447, %v2443
        %v4048 = vpack.c.b16 %v2448, %v2444
        %v4049 = vpack.c.b16 %v2453, %v2449
        %v4050 = vpack.c.b16 %v2454, %v2450
        %v4051 = vpack.c.b16 %v2455, %v2451
        %v4052 = vpack.c.b16 %v2456, %v2452
        %v4053 = vpack.c.b16 %v2461, %v2457
        %v4054 = vpack.c.b16 %v2462, %v2458
        %v4055 = vpack.c.b16 %v2463, %v2459
        %v4056 = vpack.c.b16 %v2464, %v2460
        %v4057 = vpack.c.b16 %v2469, %v2465
        %v4058 = vpack.c.b16 %v2470, %v2466
        %v4059 = vpack.c.b16 %v2471, %v2467
        %v4060 = vpack.c.b16 %v2472, %v2468
        %v4061 = vpack.c.b16 %v2477, %v2473
        %v4062 = vpack.c.b16 %v2478, %v2474
        %v4063 = vpack.c.b16 %v2479, %v2475
        %v4064 = vpack.c.b16 %v2480, %v2476
        %v4065 = vpack.c.b16 %v2485, %v2481
        %v4066 = vpack.c.b16 %v2486, %v2482
        %v4067 = vpack.c.b16 %v2487, %v2483
        %v4068 = vpack.c.b16 %v2488, %v2484
        %v4069 = vpack.c.b16 %v2493, %v2489
        %v4070 = vpack.c.b16 %v2494, %v2490
        %v4071 = vpack.c.b16 %v2495, %v2491
        %v4072 = vpack.c.b16 %v2496, %v2492
        %v4073 = vpack.c.b16 %v2501, %v2497
        %v4074 = vpack.c.b16 %v2502, %v2498
        %v4075 = vpack.c.b16 %v2503, %v2499
        %v4076 = vpack.c.b16 %v2504, %v2500
        %v4077 = vpack.c.b16 %v2509, %v2505
        %v4078 = vpack.c.b16 %v2510, %v2506
        %v4079 = vpack.c.b16 %v2511, %v2507
        %v4080 = vpack.c.b16 %v2512, %v2508
        %v4081 = vpack.c.b16 %v2517, %v2513
        %v4082 = vpack.c.b16 %v2518, %v2514
        %v4083 = vpack.c.b16 %v2519, %v2515
        %v4084 = vpack.c.b16 %v2520, %v2516
        %v4085 = vpack.c.b16 %v2525, %v2521
        %v4086 = vpack.c.b16 %v2526, %v2522
        %v4087 = vpack.c.b16 %v2527, %v2523
        %v4088 = vpack.c.b16 %v2528, %v2524
        %v4089 = vpack.c.b16 %v2533, %v2529
        %v4090 = vpack.c.b16 %v2534, %v2530
        %v4091 = vpack.c.b16 %v2535, %v2531
        %v4092 = vpack.c.b16 %v2536, %v2532
        %v4093 = vpack.c.b16 %v2541, %v2537
        %v4094 = vpack.c.b16 %v2542, %v2538
        %v4095 = vpack.c.b16 %v2543, %v2539
        %v4096 = vpack.c.b16 %v2544, %v2540
        %v4097 = vpack.c.b16 %v2549, %v2545
        %v4098 = vpack.c.b16 %v2550, %v2546
        %v4099 = vpack.c.b16 %v2551, %v2547
        %v4100 = vpack.c.b16 %v2552, %v2548
        %v4101 = vpack.c.b16 %v2557, %v2553
        %v4102 = vpack.c.b16 %v2558, %v2554
        %v4103 = vpack.c.b16 %v2559, %v2555
        %v4104 = vpack.c.b16 %v2560, %v2556
        %v4105 = vpack.c.b16 %v2565, %v2561
        %v4106 = vpack.c.b16 %v2566, %v2562
        %v4107 = vpack.c.b16 %v2567, %v2563
        %v4108 = vpack.c.b16 %v2568, %v2564
        %v4109 = vpack.c.b16 %v2573, %v2569
        %v4110 = vpack.c.b16 %v2574, %v2570
        %v4111 = vpack.c.b16 %v2575, %v2571
        %v4112 = vpack.c.b16 %v2576, %v2572
        %v4113 = vpack.c.b16 %v2581, %v2577
        %v4114 = vpack.c.b16 %v2582, %v2578
        %v4115 = vpack.c.b16 %v2583, %v2579
        %v4116 = vpack.c.b16 %v2584, %v2580
        %v4117 = vpack.c.b16 %v2589, %v2585
        %v4118 = vpack.c.b16 %v2590, %v2586
        %v4119 = vpack.c.b16 %v2591, %v2587
        %v4120 = vpack.c.b16 %v2592, %v2588
        %v4121 = vpack.c.b16 %v2597, %v2593
        %v4122 = vpack.c.b16 %v2598, %v2594
        %v4123 = vpack.c.b16 %v2599, %v2595
        %v4124 = vpack.c.b16 %v2600, %v2596
        %v4125 = vpack.c.b16 %v2605, %v2601
        %v4126 = vpack.c.b16 %v2606, %v2602
        %v4127 = vpack.c.b16 %v2607, %v2603
        %v4128 = vpack.c.b16 %v2608, %v2604
        %v4129 = vpack.c.b16 %v2613, %v2609
        %v4130 = vpack.c.b16 %v2614, %v2610
        %v4131 = vpack.c.b16 %v2615, %v2611
        %v4132 = vpack.c.b16 %v2616, %v2612
        %v4133 = vpack.c.b16 %v2621, %v2617
        %v4134 = vpack.c.b16 %v2622, %v2618
        %v4135 = vpack.c.b16 %v2623, %v2619
        %v4136 = vpack.c.b16 %v2624, %v2620
        %v4137 = vpack.c.b16 %v2629, %v2625
        %v4138 = vpack.c.b16 %v2630, %v2626
        %v4139 = vpack.c.b16 %v2631, %v2627
        %v4140 = vpack.c.b16 %v2632, %v2628
        %v4141 = vpack.c.b16 %v2637, %v2633
        %v4142 = vpack.c.b16 %v2638, %v2634
        %v4143 = vpack.c.b16 %v2639, %v2635
        %v4144 = vpack.c.b16 %v2640, %v2636
        %v4145 = vpack.c.b16 %v2645, %v2641
        %v4146 = vpack.c.b16 %v2646, %v2642
        %v4147 = vpack.c.b16 %v2647, %v2643
        %v4148 = vpack.c.b16 %v2648, %v2644
        %v4149 = vpack.c.b16 %v2653, %v2649
        %v4150 = vpack.c.b16 %v2654, %v2650
        %v4151 = vpack.c.b16 %v2655, %v2651
        %v4152 = vpack.c.b16 %v2656, %v2652
        %v4153 = vpack.c.b16 %v2661, %v2657
        %v4154 = vpack.c.b16 %v2662, %v2658
        %v4155 = vpack.c.b16 %v2663, %v2659
        %v4156 = vpack.c.b16 %v2664, %v2660
        %v4157 = vpack.c.b16 %v2669, %v2665
        %v4158 = vpack.c.b16 %v2670, %v2666
        %v4159 = vpack.c.b16 %v2671, %v2667
        %v4160 = vpack.c.b16 %v2672, %v2668
        %v4161 = vpack.c.b16 %v2677, %v2673
        %v4162 = vpack.c.b16 %v2678, %v2674
        %v4163 = vpack.c.b16 %v2679, %v2675
        %v4164 = vpack.c.b16 %v2680, %v2676
        %v4165 = vpack.c.b16 %v2685, %v2681
        %v4166 = vpack.c.b16 %v2686, %v2682
        %v4167 = vpack.c.b16 %v2687, %v2683
        %v4168 = vpack.c.b16 %v2688, %v2684
        %v4169 = vpack.c.b16 %v2693, %v2689
        %v4170 = vpack.c.b16 %v2694, %v2690
        %v4171 = vpack.c.b16 %v2695, %v2691
        %v4172 = vpack.c.b16 %v2696, %v2692
        %v4173 = vpack.c.b16 %v2701, %v2697
        %v4174 = vpack.c.b16 %v2702, %v2698
        %v4175 = vpack.c.b16 %v2703, %v2699
        %v4176 = vpack.c.b16 %v2704, %v2700
        %v4177 = vpack.c.b16 %v2709, %v2705
        %v4178 = vpack.c.b16 %v2710, %v2706
        %v4179 = vpack.c.b16 %v2711, %v2707
        %v4180 = vpack.c.b16 %v2712, %v2708
        %v4181 = vpack.c.b16 %v2717, %v2713
        %v4182 = vpack.c.b16 %v2718, %v2714
        %v4183 = vpack.c.b16 %v2719, %v2715
        %v4184 = vpack.c.b16 %v2720, %v2716
        %v4185 = vpack.c.b16 %v2725, %v2721
        %v4186 = vpack.c.b16 %v2726, %v2722
        %v4187 = vpack.c.b16 %v2727, %v2723
        %v4188 = vpack.c.b16 %v2728, %v2724
        %v4189 = vpack.c.b16 %v2733, %v2729
        %v4190 = vpack.c.b16 %v2734, %v2730
        %v4191 = vpack.c.b16 %v2735, %v2731
        %v4192 = vpack.c.b16 %v2736, %v2732
        %v4193 = vpack.c.b16 %v2741, %v2737
        %v4194 = vpack.c.b16 %v2742, %v2738
        %v4195 = vpack.c.b16 %v2743, %v2739
        %v4196 = vpack.c.b16 %v2744, %v2740
        %v4197 = vpack.c.b16 %v2749, %v2745
        %v4198 = vpack.c.b16 %v2750, %v2746
        %v4199 = vpack.c.b16 %v2751, %v2747
        %v4200 = vpack.c.b16 %v2752, %v2748
        %v4201 = vpack.c.b16 %v2757, %v2753
        %v4202 = vpack.c.b16 %v2758, %v2754
        %v4203 = vpack.c.b16 %v2759, %v2755
        %v4204 = vpack.c.b16 %v2760, %v2756
        %v4205 = vpack.c.b16 %v2765, %v2761
        %v4206 = vpack.c.b16 %v2766, %v2762
        %v4207 = vpack.c.b16 %v2767, %v2763
        %v4208 = vpack.c.b16 %v2768, %v2764
        %v4209 = vpack.c.b16 %v2773, %v2769
        %v4210 = vpack.c.b16 %v2774, %v2770
        %v4211 = vpack.c.b16 %v2775, %v2771
        %v4212 = vpack.c.b16 %v2776, %v2772
        %v4213 = vpack.c.b16 %v2781, %v2777
        %v4214 = vpack.c.b16 %v2782, %v2778
        %v4215 = vpack.c.b16 %v2783, %v2779
        %v4216 = vpack.c.b16 %v2784, %v2780
        %v4217 = vpack.c.b16 %v2789, %v2785
        %v4218 = vpack.c.b16 %v2790, %v2786
        %v4219 = vpack.c.b16 %v2791, %v2787
        %v4220 = vpack.c.b16 %v2792, %v2788
        %v4221 = vpack.c.b16 %v2797, %v2793
        %v4222 = vpack.c.b16 %v2798, %v2794
        %v4223 = vpack.c.b16 %v2799, %v2795
        %v4224 = vpack.c.b16 %v2800, %v2796
        %v4225 = vpack.c.b16 %v2805, %v2801
        %v4226 = vpack.c.b16 %v2806, %v2802
        %v4227 = vpack.c.b16 %v2807, %v2803
        %v4228 = vpack.c.b16 %v2808, %v2804
        %v4229 = vpack.c.b16 %v2813, %v2809
        %v4230 = vpack.c.b16 %v2814, %v2810
        %v4231 = vpack.c.b16 %v2815, %v2811
        %v4232 = vpack.c.b16 %v2816, %v2812
        %v4233 = vpack.c.b16 %v2821, %v2817
        %v4234 = vpack.c.b16 %v2822, %v2818
        %v4235 = vpack.c.b16 %v2823, %v2819
        %v4236 = vpack.c.b16 %v2824, %v2820
        %v4237 = vpack.c.b16 %v2829, %v2825
        %v4238 = vpack.c.b16 %v2830, %v2826
        %v4239 = vpack.c.b16 %v2831, %v2827
        %v4240 = vpack.c.b16 %v2832, %v2828
        %v4241 = vpack.c.b16 %v2837, %v2833
        %v4242 = vpack.c.b16 %v2838, %v2834
        %v4243 = vpack.c.b16 %v2839, %v2835
        %v4244 = vpack.c.b16 %v2840, %v2836
        %v4245 = vpack.c.b16 %v2845, %v2841
        %v4246 = vpack.c.b16 %v2846, %v2842
        %v4247 = vpack.c.b16 %v2847, %v2843
        %v4248 = vpack.c.b16 %v2848, %v2844
        %v4249 = vpack.c.b16 %v2853, %v2849
        %v4250 = vpack.c.b16 %v2854, %v2850
        %v4251 = vpack.c.b16 %v2855, %v2851
        %v4252 = vpack.c.b16 %v2856, %v2852
        %v4253 = vpack.c.b16 %v2861, %v2857
        %v4254 = vpack.c.b16 %v2862, %v2858
        %v4255 = vpack.c.b16 %v2863, %v2859
        %v4256 = vpack.c.b16 %v2864, %v2860
        %v4257 = vpack.c.b16 %v2869, %v2865
        %v4258 = vpack.c.b16 %v2870, %v2866
        %v4259 = vpack.c.b16 %v2871, %v2867
        %v4260 = vpack.c.b16 %v2872, %v2868
        %v4261 = vpack.c.b16 %v2877, %v2873
        %v4262 = vpack.c.b16 %v2878, %v2874
        %v4263 = vpack.c.b16 %v2879, %v2875
        %v4264 = vpack.c.b16 %v2880, %v2876
        %v4265 = vpack.c.b16 %v2885, %v2881
        %v4266 = vpack.c.b16 %v2886, %v2882
        %v4267 = vpack.c.b16 %v2887, %v2883
        %v4268 = vpack.c.b16 %v2888, %v2884
        %v4269 = vpack.c.b16 %v2893, %v2889
        %v4270 = vpack.c.b16 %v2894, %v2890
        %v4271 = vpack.c.b16 %v2895, %v2891
        %v4272 = vpack.c.b16 %v2896, %v2892
        %v4273 = vpack.c.b16 %v2901, %v2897
        %v4274 = vpack.c.b16 %v2902, %v2898
        %v4275 = vpack.c.b16 %v2903, %v2899
        %v4276 = vpack.c.b16 %v2904, %v2900
        %v4277 = vpack.c.b16 %v2909, %v2905
        %v4278 = vpack.c.b16 %v2910, %v2906
        %v4279 = vpack.c.b16 %v2911, %v2907
        %v4280 = vpack.c.b16 %v2912, %v2908
        %v4281 = vpack.c.b16 %v2917, %v2913
        %v4282 = vpack.c.b16 %v2918, %v2914
        %v4283 = vpack.c.b16 %v2919, %v2915
        %v4284 = vpack.c.b16 %v2920, %v2916
        %v4285 = vpack.c.b16 %v2925, %v2921
        %v4286 = vpack.c.b16 %v2926, %v2922
        %v4287 = vpack.c.b16 %v2927, %v2923
        %v4288 = vpack.c.b16 %v2928, %v2924
        %v4289 = vpack.c.b16 %v2933, %v2929
        %v4290 = vpack.c.b16 %v2934, %v2930
        %v4291 = vpack.c.b16 %v2935, %v2931
        %v4292 = vpack.c.b16 %v2936, %v2932
        %v4293 = vpack.c.b16 %v2941, %v2937
        %v4294 = vpack.c.b16 %v2942, %v2938
        %v4295 = vpack.c.b16 %v2943, %v2939
        %v4296 = vpack.c.b16 %v2944, %v2940
        %v4297 = vpack.c.b16 %v2949, %v2945
        %v4298 = vpack.c.b16 %v2950, %v2946
        %v4299 = vpack.c.b16 %v2951, %v2947
        %v4300 = vpack.c.b16 %v2952, %v2948
        %v4301 = vpack.c.b16 %v2957, %v2953
        %v4302 = vpack.c.b16 %v2958, %v2954
        %v4303 = vpack.c.b16 %v2959, %v2955
        %v4304 = vpack.c.b16 %v2960, %v2956
        %v4305 = vpack.c.b16 %v2965, %v2961
        %v4306 = vpack.c.b16 %v2966, %v2962
        %v4307 = vpack.c.b16 %v2967, %v2963
        %v4308 = vpack.c.b16 %v2968, %v2964
        %v4309 = vpack.c.b16 %v2973, %v2969
        %v4310 = vpack.c.b16 %v2974, %v2970
        %v4311 = vpack.c.b16 %v2975, %v2971
        %v4312 = vpack.c.b16 %v2976, %v2972
        %v4313 = vpack.c.b16 %v2981, %v2977
        %v4314 = vpack.c.b16 %v2982, %v2978
        %v4315 = vpack.c.b16 %v2983, %v2979
        %v4316 = vpack.c.b16 %v2984, %v2980
        %v4317 = vpack.c.b16 %v2989, %v2985
        %v4318 = vpack.c.b16 %v2990, %v2986
        %v4319 = vpack.c.b16 %v2991, %v2987
        %v4320 = vpack.c.b16 %v2992, %v2988
        %v4321 = vpack.c.b16 %v2997, %v2993
        %v4322 = vpack.c.b16 %v2998, %v2994
        %v4323 = vpack.c.b16 %v2999, %v2995
        %v4324 = vpack.c.b16 %v3000, %v2996
        %v4325 = vpack.c.b16 %v3005, %v3001
        %v4326 = vpack.c.b16 %v3006, %v3002
        %v4327 = vpack.c.b16 %v3007, %v3003
        %v4328 = vpack.c.b16 %v3008, %v3004
        %v4329 = vpack.c.b16 %v3013, %v3009
        %v4330 = vpack.c.b16 %v3014, %v3010
        %v4331 = vpack.c.b16 %v3015, %v3011
        %v4332 = vpack.c.b16 %v3016, %v3012
        %v4333 = vpack.c.b16 %v3021, %v3017
        %v4334 = vpack.c.b16 %v3022, %v3018
        %v4335 = vpack.c.b16 %v3023, %v3019
        %v4336 = vpack.c.b16 %v3024, %v3020
        %v4337 = vpack.c.b16 %v3029, %v3025
        %v4338 = vpack.c.b16 %v3030, %v3026
        %v4339 = vpack.c.b16 %v3031, %v3027
        %v4340 = vpack.c.b16 %v3032, %v3028
        %v4341 = vpack.c.b16 %v3037, %v3033
        %v4342 = vpack.c.b16 %v3038, %v3034
        %v4343 = vpack.c.b16 %v3039, %v3035
        %v4344 = vpack.c.b16 %v3040, %v3036
        %v4345 = vpack.c.b16 %v3045, %v3041
        %v4346 = vpack.c.b16 %v3046, %v3042
        %v4347 = vpack.c.b16 %v3047, %v3043
        %v4348 = vpack.c.b16 %v3048, %v3044
        %v4349 = vpack.c.b16 %v3053, %v3049
        %v4350 = vpack.c.b16 %v3054, %v3050
        %v4351 = vpack.c.b16 %v3055, %v3051
        %v4352 = vpack.c.b16 %v3056, %v3052
        %v4353 = vpack.c.b16 %v3061, %v3057
        %v4354 = vpack.c.b16 %v3062, %v3058
        %v4355 = vpack.c.b16 %v3063, %v3059
        %v4356 = vpack.c.b16 %v3064, %v3060
        %v4357 = vpack.c.b16 %v3069, %v3065
        %v4358 = vpack.c.b16 %v3070, %v3066
        %v4359 = vpack.c.b16 %v3071, %v3067
        %v4360 = vpack.c.b16 %v3072, %v3068
        %v4361 = vpack.c.b16 %v3077, %v3073
        %v4362 = vpack.c.b16 %v3078, %v3074
        %v4363 = vpack.c.b16 %v3079, %v3075
        %v4364 = vpack.c.b16 %v3080, %v3076
        %v4365 = vpack.c.b16 %v3085, %v3081
        %v4366 = vpack.c.b16 %v3086, %v3082
        %v4367 = vpack.c.b16 %v3087, %v3083
        %v4368 = vpack.c.b16 %v3088, %v3084
        %v4369 = vpack.c.b16 %v3093, %v3089
        %v4370 = vpack.c.b16 %v3094, %v3090
        %v4371 = vpack.c.b16 %v3095, %v3091
        %v4372 = vpack.c.b16 %v3096, %v3092
        %v4373 = vpack.c.b16 %v3101, %v3097
        %v4374 = vpack.c.b16 %v3102, %v3098
        %v4375 = vpack.c.b16 %v3103, %v3099
        %v4376 = vpack.c.b16 %v3104, %v3100
        %v4377 = vpack.c.b16 %v3109, %v3105
        %v4378 = vpack.c.b16 %v3110, %v3106
        %v4379 = vpack.c.b16 %v3111, %v3107
        %v4380 = vpack.c.b16 %v3112, %v3108
        %v4381 = vpack.c.b16 %v3117, %v3113
        %v4382 = vpack.c.b16 %v3118, %v3114
        %v4383 = vpack.c.b16 %v3119, %v3115
        %v4384 = vpack.c.b16 %v3120, %v3116
        %v4385 = vpack.c.b16 %v3125, %v3121
        %v4386 = vpack.c.b16 %v3126, %v3122
        %v4387 = vpack.c.b16 %v3127, %v3123
        %v4388 = vpack.c.b16 %v3128, %v3124
        %v4389 = vpack.c.b16 %v3133, %v3129
        %v4390 = vpack.c.b16 %v3134, %v3130
        %v4391 = vpack.c.b16 %v3135, %v3131
        %v4392 = vpack.c.b16 %v3136, %v3132
        %v4393 = vpack.c.b16 %v3141, %v3137
        %v4394 = vpack.c.b16 %v3142, %v3138
        %v4395 = vpack.c.b16 %v3143, %v3139
        %v4396 = vpack.c.b16 %v3144, %v3140
        %v4397 = vpack.c.b16 %v3149, %v3145
        %v4398 = vpack.c.b16 %v3150, %v3146
        %v4399 = vpack.c.b16 %v3151, %v3147
        %v4400 = vpack.c.b16 %v3152, %v3148
        %v4401 = vpack.c.b16 %v3157, %v3153
        %v4402 = vpack.c.b16 %v3158, %v3154
        %v4403 = vpack.c.b16 %v3159, %v3155
        %v4404 = vpack.c.b16 %v3160, %v3156
        %v4405 = vpack.c.b16 %v3165, %v3161
        %v4406 = vpack.c.b16 %v3166, %v3162
        %v4407 = vpack.c.b16 %v3167, %v3163
        %v4408 = vpack.c.b16 %v3168, %v3164
        %v4409 = vpack.c.b16 %v3173, %v3169
        %v4410 = vpack.c.b16 %v3174, %v3170
        %v4411 = vpack.c.b16 %v3175, %v3171
        %v4412 = vpack.c.b16 %v3176, %v3172
        %v4413 = vpack.c.b16 %v3181, %v3177
        %v4414 = vpack.c.b16 %v3182, %v3178
        %v4415 = vpack.c.b16 %v3183, %v3179
        %v4416 = vpack.c.b16 %v3184, %v3180
        %v4417 = vpack.c.b16 %v3189, %v3185
        %v4418 = vpack.c.b16 %v3190, %v3186
        %v4419 = vpack.c.b16 %v3191, %v3187
        %v4420 = vpack.c.b16 %v3192, %v3188
        %v4421 = vpack.c.b16 %v3197, %v3193
        %v4422 = vpack.c.b16 %v3198, %v3194
        %v4423 = vpack.c.b16 %v3199, %v3195
        %v4424 = vpack.c.b16 %v3200, %v3196
        %v4425 = vpack.c.b16 %v3205, %v3201
        %v4426 = vpack.c.b16 %v3206, %v3202
        %v4427 = vpack.c.b16 %v3207, %v3203
        %v4428 = vpack.c.b16 %v3208, %v3204
        %v4429 = vpack.c.b16 %v3213, %v3209
        %v4430 = vpack.c.b16 %v3214, %v3210
        %v4431 = vpack.c.b16 %v3215, %v3211
        %v4432 = vpack.c.b16 %v3216, %v3212
        %v4433 = vpack.c.b16 %v3221, %v3217
        %v4434 = vpack.c.b16 %v3222, %v3218
        %v4435 = vpack.c.b16 %v3223, %v3219
        %v4436 = vpack.c.b16 %v3224, %v3220
        %v4437 = vpack.c.b16 %v3229, %v3225
        %v4438 = vpack.c.b16 %v3230, %v3226
        %v4439 = vpack.c.b16 %v3231, %v3227
        %v4440 = vpack.c.b16 %v3232, %v3228
        %v4441 = vpack.c.b16 %v3237, %v3233
        %v4442 = vpack.c.b16 %v3238, %v3234
        %v4443 = vpack.c.b16 %v3239, %v3235
        %v4444 = vpack.c.b16 %v3240, %v3236
        %v4445 = vpack.c.b16 %v3245, %v3241
        %v4446 = vpack.c.b16 %v3246, %v3242
        %v4447 = vpack.c.b16 %v3247, %v3243
        %v4448 = vpack.c.b16 %v3248, %v3244
        %v4449 = vpack.c.b16 %v3253, %v3249
        %v4450 = vpack.c.b16 %v3254, %v3250
        %v4451 = vpack.c.b16 %v3255, %v3251
        %v4452 = vpack.c.b16 %v3256, %v3252
        %v4453 = vpack.c.b16 %v3261, %v3257
        %v4454 = vpack.c.b16 %v3262, %v3258
        %v4455 = vpack.c.b16 %v3263, %v3259
        %v4456 = vpack.c.b16 %v3264, %v3260
        %v4457 = vpack.c.b16 %v3269, %v3265
        %v4458 = vpack.c.b16 %v3270, %v3266
        %v4459 = vpack.c.b16 %v3271, %v3267
        %v4460 = vpack.c.b16 %v3272, %v3268
        %v4461 = vpack.c.b16 %v3277, %v3273
        %v4462 = vpack.c.b16 %v3278, %v3274
        %v4463 = vpack.c.b16 %v3279, %v3275
        %v4464 = vpack.c.b16 %v3280, %v3276
        %v4465 = vpack.c.b16 %v3285, %v3281
        %v4466 = vpack.c.b16 %v3286, %v3282
        %v4467 = vpack.c.b16 %v3287, %v3283
        %v4468 = vpack.c.b16 %v3288, %v3284
        %v4469 = vpack.c.b16 %v3293, %v3289
        %v4470 = vpack.c.b16 %v3294, %v3290
        %v4471 = vpack.c.b16 %v3295, %v3291
        %v4472 = vpack.c.b16 %v3296, %v3292
        %v4473 = vpack.c.b16 %v3301, %v3297
        %v4474 = vpack.c.b16 %v3302, %v3298
        %v4475 = vpack.c.b16 %v3303, %v3299
        %v4476 = vpack.c.b16 %v3304, %v3300
        %v4477 = vpack.c.b16 %v3309, %v3305
        %v4478 = vpack.c.b16 %v3310, %v3306
        %v4479 = vpack.c.b16 %v3311, %v3307
        %v4480 = vpack.c.b16 %v3312, %v3308
        %v4481 = vpack.c.b16 %v3317, %v3313
        %v4482 = vpack.c.b16 %v3318, %v3314
        %v4483 = vpack.c.b16 %v3319, %v3315
        %v4484 = vpack.c.b16 %v3320, %v3316
        %v4485 = vpack.c.b16 %v3325, %v3321
        %v4486 = vpack.c.b16 %v3326, %v3322
        %v4487 = vpack.c.b16 %v3327, %v3323
        %v4488 = vpack.c.b16 %v3328, %v3324
        %v4489 = vpack.c.b16 %v3333, %v3329
        %v4490 = vpack.c.b16 %v3334, %v3330
        %v4491 = vpack.c.b16 %v3335, %v3331
        %v4492 = vpack.c.b16 %v3336, %v3332
        %v4493 = vpack.c.b16 %v3341, %v3337
        %v4494 = vpack.c.b16 %v3342, %v3338
        %v4495 = vpack.c.b16 %v3343, %v3339
        %v4496 = vpack.c.b16 %v3344, %v3340
        %v4497 = vpack.c.b16 %v3349, %v3345
        %v4498 = vpack.c.b16 %v3350, %v3346
        %v4499 = vpack.c.b16 %v3351, %v3347
        %v4500 = vpack.c.b16 %v3352, %v3348
        %v4501 = vpack.c.b16 %v3357, %v3353
        %v4502 = vpack.c.b16 %v3358, %v3354
        %v4503 = vpack.c.b16 %v3359, %v3355
        %v4504 = vpack.c.b16 %v3360, %v3356
        %v4505 = vpack.c.b16 %v3365, %v3361
        %v4506 = vpack.c.b16 %v3366, %v3362
        %v4507 = vpack.c.b16 %v3367, %v3363
        %v4508 = vpack.c.b16 %v3368, %v3364
        %v4509 = vpack.c.b16 %v3373, %v3369
        %v4510 = vpack.c.b16 %v3374, %v3370
        %v4511 = vpack.c.b16 %v3375, %v3371
        %v4512 = vpack.c.b16 %v3376, %v3372
        %v4513 = vpack.c.b16 %v3381, %v3377
        %v4514 = vpack.c.b16 %v3382, %v3378
        %v4515 = vpack.c.b16 %v3383, %v3379
        %v4516 = vpack.c.b16 %v3384, %v3380
        %v4517 = vpack.c.b16 %v3389, %v3385
        %v4518 = vpack.c.b16 %v3390, %v3386
        %v4519 = vpack.c.b16 %v3391, %v3387
        %v4520 = vpack.c.b16 %v3392, %v3388
        %v4521 = vpack.c.b16 %v3397, %v3393
        %v4522 = vpack.c.b16 %v3398, %v3394
        %v4523 = vpack.c.b16 %v3399, %v3395
        %v4524 = vpack.c.b16 %v3400, %v3396
        %v4525 = vpack.c.b16 %v3405, %v3401
        %v4526 = vpack.c.b16 %v3406, %v3402
        %v4527 = vpack.c.b16 %v3407, %v3403
        %v4528 = vpack.c.b16 %v3408, %v3404
        %v4529 = vpack.c.b16 %v3413, %v3409
        %v4530 = vpack.c.b16 %v3414, %v3410
        %v4531 = vpack.c.b16 %v3415, %v3411
        %v4532 = vpack.c.b16 %v3416, %v3412
        %v4533 = vpack.c.b16 %v3421, %v3417
        %v4534 = vpack.c.b16 %v3422, %v3418
        %v4535 = vpack.c.b16 %v3423, %v3419
        %v4536 = vpack.c.b16 %v3424, %v3420
        %v4537 = vpack.c.b16 %v3429, %v3425
        %v4538 = vpack.c.b16 %v3430, %v3426
        %v4539 = vpack.c.b16 %v3431, %v3427
        %v4540 = vpack.c.b16 %v3432, %v3428
        %v4541 = vpack.c.b16 %v3437, %v3433
        %v4542 = vpack.c.b16 %v3438, %v3434
        %v4543 = vpack.c.b16 %v3439, %v3435
        %v4544 = vpack.c.b16 %v3440, %v3436
        %v4545 = vpack.c.b16 %v3445, %v3441
        %v4546 = vpack.c.b16 %v3446, %v3442
        %v4547 = vpack.c.b16 %v3447, %v3443
        %v4548 = vpack.c.b16 %v3448, %v3444
        %v4549 = vpack.c.b16 %v3453, %v3449
        %v4550 = vpack.c.b16 %v3454, %v3450
        %v4551 = vpack.c.b16 %v3455, %v3451
        %v4552 = vpack.c.b16 %v3456, %v3452
        %v4553 = vpack.c.b16 %v3461, %v3457
        %v4554 = vpack.c.b16 %v3462, %v3458
        %v4555 = vpack.c.b16 %v3463, %v3459
        %v4556 = vpack.c.b16 %v3464, %v3460
        %v4557 = vpack.c.b16 %v3469, %v3465
        %v4558 = vpack.c.b16 %v3470, %v3466
        %v4559 = vpack.c.b16 %v3471, %v3467
        %v4560 = vpack.c.b16 %v3472, %v3468
        %v4561 = vpack.c.b16 %v3477, %v3473
        %v4562 = vpack.c.b16 %v3478, %v3474
        %v4563 = vpack.c.b16 %v3479, %v3475
        %v4564 = vpack.c.b16 %v3480, %v3476
        %v4565 = vpack.c.b16 %v3485, %v3481
        %v4566 = vpack.c.b16 %v3486, %v3482
        %v4567 = vpack.c.b16 %v3487, %v3483
        %v4568 = vpack.c.b16 %v3488, %v3484
        %v4569 = vpack.c.b16 %v3493, %v3489
        %v4570 = vpack.c.b16 %v3494, %v3490
        %v4571 = vpack.c.b16 %v3495, %v3491
        %v4572 = vpack.c.b16 %v3496, %v3492
        %v4573 = vpack.c.b16 %v3501, %v3497
        %v4574 = vpack.c.b16 %v3502, %v3498
        %v4575 = vpack.c.b16 %v3503, %v3499
        %v4576 = vpack.c.b16 %v3504, %v3500
        %v4577 = vpack.c.b16 %v3509, %v3505
        %v4578 = vpack.c.b16 %v3510, %v3506
        %v4579 = vpack.c.b16 %v3511, %v3507
        %v4580 = vpack.c.b16 %v3512, %v3508
        %v4581 = vpack.c.b16 %v3517, %v3513
        %v4582 = vpack.c.b16 %v3518, %v3514
        %v4583 = vpack.c.b16 %v3519, %v3515
        %v4584 = vpack.c.b16 %v3520, %v3516
        %v4585 = vpack.c.b16 %v3525, %v3521
        %v4586 = vpack.c.b16 %v3526, %v3522
        %v4587 = vpack.c.b16 %v3527, %v3523
        %v4588 = vpack.c.b16 %v3528, %v3524
        %v4589 = vpack.c.b16 %v3533, %v3529
        %v4590 = vpack.c.b16 %v3534, %v3530
        %v4591 = vpack.c.b16 %v3535, %v3531
        %v4592 = vpack.c.b16 %v3536, %v3532
        %v4593 = vpack.c.b16 %v3541, %v3537
        %v4594 = vpack.c.b16 %v3542, %v3538
        %v4595 = vpack.c.b16 %v3543, %v3539
        %v4596 = vpack.c.b16 %v3544, %v3540
        %v4597 = vpack.c.b16 %v3549, %v3545
        %v4598 = vpack.c.b16 %v3550, %v3546
        %v4599 = vpack.c.b16 %v3551, %v3547
        %v4600 = vpack.c.b16 %v3552, %v3548
        %v4601 = vpack.c.b16 %v3557, %v3553
        %v4602 = vpack.c.b16 %v3558, %v3554
        %v4603 = vpack.c.b16 %v3559, %v3555
        %v4604 = vpack.c.b16 %v3560, %v3556
        %v4605 = vpack.c.b16 %v3565, %v3561
        %v4606 = vpack.c.b16 %v3566, %v3562
        %v4607 = vpack.c.b16 %v3567, %v3563
        %v4608 = vpack.c.b16 %v3568, %v3564
        %v4609 = vpack.c.b16 %v3573, %v3569
        %v4610 = vpack.c.b16 %v3574, %v3570
        %v4611 = vpack.c.b16 %v3575, %v3571
        %v4612 = vpack.c.b16 %v3576, %v3572
        %v4613 = vpack.c.b16 %v3581, %v3577
        %v4614 = vpack.c.b16 %v3582, %v3578
        %v4615 = vpack.c.b16 %v3583, %v3579
        %v4616 = vpack.c.b16 %v3584, %v3580
        %v4617 = vpack.c.b16 %v3589, %v3585
        %v4618 = vpack.c.b16 %v3590, %v3586
        %v4619 = vpack.c.b16 %v3591, %v3587
        %v4620 = vpack.c.b16 %v3592, %v3588
        %v4621 = vpack.c.b16 %v3597, %v3593
        %v4622 = vpack.c.b16 %v3598, %v3594
        %v4623 = vpack.c.b16 %v3599, %v3595
        %v4624 = vpack.c.b16 %v3600, %v3596
        %v4625 = vpack.c.b16 %v3605, %v3601
        %v4626 = vpack.c.b16 %v3606, %v3602
        %v4627 = vpack.c.b16 %v3607, %v3603
        %v4628 = vpack.c.b16 %v3608, %v3604
        %v4629 = vpack.c.b16 %v3613, %v3609
        %v4630 = vpack.c.b16 %v3614, %v3610
        %v4631 = vpack.c.b16 %v3615, %v3611
        %v4632 = vpack.c.b16 %v3616, %v3612
        %v4633 = vpack.c.b16 %v3621, %v3617
        %v4634 = vpack.c.b16 %v3622, %v3618
        %v4635 = vpack.c.b16 %v3623, %v3619
        %v4636 = vpack.c.b16 %v3624, %v3620
        %v4637 = vpack.c.b16 %v3629, %v3625
        %v4638 = vpack.c.b16 %v3630, %v3626
        %v4639 = vpack.c.b16 %v3631, %v3627
        %v4640 = vpack.c.b16 %v3632, %v3628
        %v4641 = vpack.c.b16 %v3637, %v3633
        %v4642 = vpack.c.b16 %v3638, %v3634
        %v4643 = vpack.c.b16 %v3639, %v3635
        %v4644 = vpack.c.b16 %v3640, %v3636
        %v4645 = vpack.c.b16 %v3645, %v3641
        %v4646 = vpack.c.b16 %v3646, %v3642
        %v4647 = vpack.c.b16 %v3647, %v3643
        %v4648 = vpack.c.b16 %v3648, %v3644
        %v4649 = vpack.c.b16 %v3653, %v3649
        %v4650 = vpack.c.b16 %v3654, %v3650
        %v4651 = vpack.c.b16 %v3655, %v3651
        %v4652 = vpack.c.b16 %v3656, %v3652
        %v4653 = vpack.c.b16 %v3661, %v3657
        %v4654 = vpack.c.b16 %v3662, %v3658
        %v4655 = vpack.c.b16 %v3663, %v3659
        %v4656 = vpack.c.b16 %v3664, %v3660
        %v4657 = vpack.c.b16 %v3669, %v3665
        %v4658 = vpack.c.b16 %v3670, %v3666
        %v4659 = vpack.c.b16 %v3671, %v3667
        %v4660 = vpack.c.b16 %v3672, %v3668
        %v4661 = vpack.c.b16 %v3677, %v3673
        %v4662 = vpack.c.b16 %v3678, %v3674
        %v4663 = vpack.c.b16 %v3679, %v3675
        %v4664 = vpack.c.b16 %v3680, %v3676
        %v4665 = vpack.c.b16 %v3685, %v3681
        %v4666 = vpack.c.b16 %v3686, %v3682
        %v4667 = vpack.c.b16 %v3687, %v3683
        %v4668 = vpack.c.b16 %v3688, %v3684
        %v4669 = vpack.c.b16 %v3693, %v3689
        %v4670 = vpack.c.b16 %v3694, %v3690
        %v4671 = vpack.c.b16 %v3695, %v3691
        %v4672 = vpack.c.b16 %v3696, %v3692
        %v4673 = vpack.c.b16 %v3701, %v3697
        %v4674 = vpack.c.b16 %v3702, %v3698
        %v4675 = vpack.c.b16 %v3703, %v3699
        %v4676 = vpack.c.b16 %v3704, %v3700
        %v4677 = vpack.c.b16 %v3709, %v3705
        %v4678 = vpack.c.b16 %v3710, %v3706
        %v4679 = vpack.c.b16 %v3711, %v3707
        %v4680 = vpack.c.b16 %v3712, %v3708
        %v4681 = vpack.c.b16 %v3717, %v3713
        %v4682 = vpack.c.b16 %v3718, %v3714
        %v4683 = vpack.c.b16 %v3719, %v3715
        %v4684 = vpack.c.b16 %v3720, %v3716
        %v4685 = vpack.c.b16 %v3725, %v3721
        %v4686 = vpack.c.b16 %v3726, %v3722
        %v4687 = vpack.c.b16 %v3727, %v3723
        %v4688 = vpack.c.b16 %v3728, %v3724
        %v4689 = vpack.c.b16 %v3733, %v3729
        %v4690 = vpack.c.b16 %v3734, %v3730
        %v4691 = vpack.c.b16 %v3735, %v3731
        %v4692 = vpack.c.b16 %v3736, %v3732
        %v4693 = vpack.c.b16 %v3741, %v3737
        %v4694 = vpack.c.b16 %v3742, %v3738
        %v4695 = vpack.c.b16 %v3743, %v3739
        %v4696 = vpack.c.b16 %v3744, %v3740
        %v4697 = vpack.c.b16 %v3749, %v3745
        %v4698 = vpack.c.b16 %v3750, %v3746
        %v4699 = vpack.c.b16 %v3751, %v3747
        %v4700 = vpack.c.b16 %v3752, %v3748
        %v4701 = vpack.c.b16 %v3757, %v3753
        %v4702 = vpack.c.b16 %v3758, %v3754
        %v4703 = vpack.c.b16 %v3759, %v3755
        %v4704 = vpack.c.b16 %v3760, %v3756
        %v4705 = vpack.c.b16 %v3765, %v3761
        %v4706 = vpack.c.b16 %v3766, %v3762
        %v4707 = vpack.c.b16 %v3767, %v3763
        %v4708 = vpack.c.b16 %v3768, %v3764
        %v4709 = vpack.c.b16 %v3773, %v3769
        %v4710 = vpack.c.b16 %v3774, %v3770
        %v4711 = vpack.c.b16 %v3775, %v3771
        %v4712 = vpack.c.b16 %v3776, %v3772
        %v4713 = vpack.c.b16 %v3781, %v3777
        %v4714 = vpack.c.b16 %v3782, %v3778
        %v4715 = vpack.c.b16 %v3783, %v3779
        %v4716 = vpack.c.b16 %v3784, %v3780
        %v4717 = vpack.c.b16 %v3789, %v3785
        %v4718 = vpack.c.b16 %v3790, %v3786
        %v4719 = vpack.c.b16 %v3791, %v3787
        %v4720 = vpack.c.b16 %v3792, %v3788
        %v4721 = vpack.c.b16 %v3797, %v3793
        %v4722 = vpack.c.b16 %v3798, %v3794
        %v4723 = vpack.c.b16 %v3799, %v3795
        %v4724 = vpack.c.b16 %v3800, %v3796
        %v4725 = vpack.c.b16 %v3805, %v3801
        %v4726 = vpack.c.b16 %v3806, %v3802
        %v4727 = vpack.c.b16 %v3807, %v3803
        %v4728 = vpack.c.b16 %v3808, %v3804
        %v4729 = vpack.c.b16 %v3813, %v3809
        %v4730 = vpack.c.b16 %v3814, %v3810
        %v4731 = vpack.c.b16 %v3815, %v3811
        %v4732 = vpack.c.b16 %v3816, %v3812
        %v4733 = vpack.c.b16 %v3821, %v3817
        %v4734 = vpack.c.b16 %v3822, %v3818
        %v4735 = vpack.c.b16 %v3823, %v3819
        %v4736 = vpack.c.b16 %v3824, %v3820
        %v4737 = vpack.c.b16 %v3829, %v3825
        %v4738 = vpack.c.b16 %v3830, %v3826
        %v4739 = vpack.c.b16 %v3831, %v3827
        %v4740 = vpack.c.b16 %v3832, %v3828
        %v4741 = vpack.c.b16 %v3837, %v3833
        %v4742 = vpack.c.b16 %v3838, %v3834
        %v4743 = vpack.c.b16 %v3839, %v3835
        %v4744 = vpack.c.b16 %v3840, %v3836
        %v4745 = vpack.c.b16 %v3845, %v3841
        %v4746 = vpack.c.b16 %v3846, %v3842
        %v4747 = vpack.c.b16 %v3847, %v3843
        %v4748 = vpack.c.b16 %v3848, %v3844
        %v4749 = vpack.c.b16 %v3853, %v3849
        %v4750 = vpack.c.b16 %v3854, %v3850
        %v4751 = vpack.c.b16 %v3855, %v3851
        %v4752 = vpack.c.b16 %v3856, %v3852
        %5649 = vmatpush.bf16.msra.mxu0 %v3885
        %5650 = vmatpush.bf16.msra.mxu0 %v3881
        %5651 = vmatpush.bf16.msra.mxu0 %v3877
        %5652 = vmatpush.bf16.msra.mxu0 %v3873
        %5653 = vmatpush.bf16.msra.mxu0 %v3869
        %5654 = vmatpush.bf16.msra.mxu0 %v3865
        %5655 = vmatpush.bf16.msra.mxu0 %v3861
        %5656 = vmatpush.bf16.msra.mxu0 %v3857
        %5657 = vmatmul.bf16.gmra.mxu0 %v1107
        %v5658 = vpop.f32.mrf.mxu0
        %v5659 = vadd.f32 0.0, %v5658
        %v5660 = vpop.f32.mrf.mxu0
        %5661 = vdwg.mxu0
        %5662 = vmatpush.bf16.msra.mxu0 %v3917
        %5663 = vmatpush.bf16.msra.mxu0 %v3913
        %5664 = vmatpush.bf16.msra.mxu0 %v3909
        %5665 = vmatpush.bf16.msra.mxu0 %v3905
        %5666 = vmatpush.bf16.msra.mxu0 %v3901
        %5667 = vmatpush.bf16.msra.mxu0 %v3897
        %5668 = vmatpush.bf16.msra.mxu0 %v3893
        %5669 = vmatpush.bf16.msra.mxu0 %v3889
        %5670 = vmatmul.bf16.gmra.mxu0 %v1108
        %v5671 = vpop.f32.mrf.mxu0
        %v5672 = vadd.f32 %v5659, %v5671
        %v5673 = vpop.f32.mrf.mxu0
        %5674 = vdwg.mxu0
        %5675 = vmatpush.bf16.msra.mxu0 %v3949
        %5676 = vmatpush.bf16.msra.mxu0 %v3945
        %5677 = vmatpush.bf16.msra.mxu0 %v3941
        %5678 = vmatpush.bf16.msra.mxu0 %v3937
        %5679 = vmatpush.bf16.msra.mxu0 %v3933
        %5680 = vmatpush.bf16.msra.mxu0 %v3929
        %5681 = vmatpush.bf16.msra.mxu0 %v3925
        %5682 = vmatpush.bf16.msra.mxu0 %v3921
        %5683 = vmatmul.bf16.gmra.mxu0 %v1109
        %v5684 = vpop.f32.mrf.mxu0
        %v5685 = vadd.f32 %v5672, %v5684
        %v5686 = vpop.f32.mrf.mxu0
        %5687 = vdwg.mxu0
        %5688 = vmatpush.bf16.msra.mxu0 %v3981
        %5689 = vmatpush.bf16.msra.mxu0 %v3977
        %5690 = vmatpush.bf16.msra.mxu0 %v3973
        %5691 = vmatpush.bf16.msra.mxu0 %v3969
        %5692 = vmatpush.bf16.msra.mxu0 %v3965
        %5693 = vmatpush.bf16.msra.mxu0 %v3961
        %5694 = vmatpush.bf16.msra.mxu0 %v3957
        %5695 = vmatpush.bf16.msra.mxu0 %v3953
        %5696 = vmatmul.bf16.gmra.mxu0 %v1110
        %v5697 = vpop.f32.mrf.mxu0
        %v5698 = vadd.f32 %v5685, %v5697
        %v5699 = vpop.f32.mrf.mxu0
        %5700 = vdwg.mxu0
        %5701 = vmatpush.bf16.msra.mxu0 %v4013
        %5702 = vmatpush.bf16.msra.mxu0 %v4009
        %5703 = vmatpush.bf16.msra.mxu0 %v4005
        %5704 = vmatpush.bf16.msra.mxu0 %v4001
        %5705 = vmatpush.bf16.msra.mxu0 %v3997
        %5706 = vmatpush.bf16.msra.mxu0 %v3993
        %5707 = vmatpush.bf16.msra.mxu0 %v3989
        %5708 = vmatpush.bf16.msra.mxu0 %v3985
        %5709 = vmatmul.bf16.gmra.mxu0 %v1111
        %v5710 = vpop.f32.mrf.mxu0
        %v5711 = vadd.f32 %v5698, %v5710
        %v5712 = vpop.f32.mrf.mxu0
        %5713 = vdwg.mxu0
        %5714 = vmatpush.bf16.msra.mxu0 %v4045
        %5715 = vmatpush.bf16.msra.mxu0 %v4041
        %5716 = vmatpush.bf16.msra.mxu0 %v4037
        %5717 = vmatpush.bf16.msra.mxu0 %v4033
        %5718 = vmatpush.bf16.msra.mxu0 %v4029
        %5719 = vmatpush.bf16.msra.mxu0 %v4025
        %5720 = vmatpush.bf16.msra.mxu0 %v4021
        %5721 = vmatpush.bf16.msra.mxu0 %v4017
        %5722 = vmatmul.bf16.gmra.mxu0 %v1112
        %v5723 = vpop.f32.mrf.mxu0
        %v5724 = vadd.f32 %v5711, %v5723
        %v5725 = vpop.f32.mrf.mxu0
        %5726 = vdwg.mxu0
        %5727 = vmatpush.bf16.msra.mxu0 %v4077
        %5728 = vmatpush.bf16.msra.mxu0 %v4073
        %5729 = vmatpush.bf16.msra.mxu0 %v4069
        %5730 = vmatpush.bf16.msra.mxu0 %v4065
        %5731 = vmatpush.bf16.msra.mxu0 %v4061
        %5732 = vmatpush.bf16.msra.mxu0 %v4057
        %5733 = vmatpush.bf16.msra.mxu0 %v4053
        %5734 = vmatpush.bf16.msra.mxu0 %v4049
        %5735 = vmatmul.bf16.gmra.mxu0 %v1113
        %v5736 = vpop.f32.mrf.mxu0
        %v5737 = vadd.f32 %v5724, %v5736
        %v5738 = vpop.f32.mrf.mxu0
        %5739 = vdwg.mxu0
        %5740 = vmatpush.bf16.msra.mxu0 %v4109
        %5741 = vmatpush.bf16.msra.mxu0 %v4105
        %5742 = vmatpush.bf16.msra.mxu0 %v4101
        %5743 = vmatpush.bf16.msra.mxu0 %v4097
        %5744 = vmatpush.bf16.msra.mxu0 %v4093
        %5745 = vmatpush.bf16.msra.mxu0 %v4089
        %5746 = vmatpush.bf16.msra.mxu0 %v4085
        %5747 = vmatpush.bf16.msra.mxu0 %v4081
        %5748 = vmatmul.bf16.gmra.mxu0 %v1114
        %v5749 = vpop.f32.mrf.mxu0
        %v5750 = vadd.f32 %v5737, %v5749
        %v5751 = vpop.f32.mrf.mxu0
        %5752 = vdwg.mxu0
        %5753 = vmatpush.bf16.msra.mxu0 %v4141
        %5754 = vmatpush.bf16.msra.mxu0 %v4137
        %5755 = vmatpush.bf16.msra.mxu0 %v4133
        %5756 = vmatpush.bf16.msra.mxu0 %v4129
        %5757 = vmatpush.bf16.msra.mxu0 %v4125
        %5758 = vmatpush.bf16.msra.mxu0 %v4121
        %5759 = vmatpush.bf16.msra.mxu0 %v4117
        %5760 = vmatpush.bf16.msra.mxu0 %v4113
        %5761 = vmatmul.bf16.gmra.mxu0 %v1117
        %v5762 = vpop.f32.mrf.mxu0
        %v5763 = vadd.f32 %v5750, %v5762
        %v5764 = vpop.f32.mrf.mxu0
        %5765 = vdwg.mxu0
        %5766 = vmatpush.bf16.msra.mxu0 %v4173
        %5767 = vmatpush.bf16.msra.mxu0 %v4169
        %5768 = vmatpush.bf16.msra.mxu0 %v4165
        %5769 = vmatpush.bf16.msra.mxu0 %v4161
        %5770 = vmatpush.bf16.msra.mxu0 %v4157
        %5771 = vmatpush.bf16.msra.mxu0 %v4153
        %5772 = vmatpush.bf16.msra.mxu0 %v4149
        %5773 = vmatpush.bf16.msra.mxu0 %v4145
        %5774 = vmatmul.bf16.gmra.mxu0 %v1118
        %v5775 = vpop.f32.mrf.mxu0
        %v5776 = vadd.f32 %v5763, %v5775
        %v5777 = vpop.f32.mrf.mxu0
        %5778 = vdwg.mxu0
        %5779 = vmatpush.bf16.msra.mxu0 %v4205
        %5780 = vmatpush.bf16.msra.mxu0 %v4201
        %5781 = vmatpush.bf16.msra.mxu0 %v4197
        %5782 = vmatpush.bf16.msra.mxu0 %v4193
        %5783 = vmatpush.bf16.msra.mxu0 %v4189
        %5784 = vmatpush.bf16.msra.mxu0 %v4185
        %5785 = vmatpush.bf16.msra.mxu0 %v4181
        %5786 = vmatpush.bf16.msra.mxu0 %v4177
        %5787 = vmatmul.bf16.gmra.mxu0 %v1119
        %v5788 = vpop.f32.mrf.mxu0
        %v5789 = vadd.f32 %v5776, %v5788
        %v5790 = vpop.f32.mrf.mxu0
        %5791 = vdwg.mxu0
        %5792 = vmatpush.bf16.msra.mxu0 %v4237
        %5793 = vmatpush.bf16.msra.mxu0 %v4233
        %5794 = vmatpush.bf16.msra.mxu0 %v4229
        %5795 = vmatpush.bf16.msra.mxu0 %v4225
        %5796 = vmatpush.bf16.msra.mxu0 %v4221
        %5797 = vmatpush.bf16.msra.mxu0 %v4217
        %5798 = vmatpush.bf16.msra.mxu0 %v4213
        %5799 = vmatpush.bf16.msra.mxu0 %v4209
        %5800 = vmatmul.bf16.gmra.mxu0 %v1120
        %v5801 = vpop.f32.mrf.mxu0
        %v5802 = vadd.f32 %v5789, %v5801
        %v5803 = vpop.f32.mrf.mxu0
        %5804 = vdwg.mxu0
        %5805 = vmatpush.bf16.msra.mxu0 %v4269
        %5806 = vmatpush.bf16.msra.mxu0 %v4265
        %5807 = vmatpush.bf16.msra.mxu0 %v4261
        %5808 = vmatpush.bf16.msra.mxu0 %v4257
        %5809 = vmatpush.bf16.msra.mxu0 %v4253
        %5810 = vmatpush.bf16.msra.mxu0 %v4249
        %5811 = vmatpush.bf16.msra.mxu0 %v4245
        %5812 = vmatpush.bf16.msra.mxu0 %v4241
        %5813 = vmatmul.bf16.gmra.mxu0 %v1121
        %v5814 = vpop.f32.mrf.mxu0
        %v5815 = vadd.f32 %v5802, %v5814
        %v5816 = vpop.f32.mrf.mxu0
        %5817 = vdwg.mxu0
        %5818 = vmatpush.bf16.msra.mxu0 %v4301
        %5819 = vmatpush.bf16.msra.mxu0 %v4297
        %5820 = vmatpush.bf16.msra.mxu0 %v4293
        %5821 = vmatpush.bf16.msra.mxu0 %v4289
        %5822 = vmatpush.bf16.msra.mxu0 %v4285
        %5823 = vmatpush.bf16.msra.mxu0 %v4281
        %5824 = vmatpush.bf16.msra.mxu0 %v4277
        %5825 = vmatpush.bf16.msra.mxu0 %v4273
        %5826 = vmatmul.bf16.gmra.mxu0 %v1122
        %v5827 = vpop.f32.mrf.mxu0
        %v5828 = vadd.f32 %v5815, %v5827
        %v5829 = vpop.f32.mrf.mxu0
        %5830 = vdwg.mxu0
        %5831 = vmatpush.bf16.msra.mxu0 %v4333
        %5832 = vmatpush.bf16.msra.mxu0 %v4329
        %5833 = vmatpush.bf16.msra.mxu0 %v4325
        %5834 = vmatpush.bf16.msra.mxu0 %v4321
        %5835 = vmatpush.bf16.msra.mxu0 %v4317
        %5836 = vmatpush.bf16.msra.mxu0 %v4313
        %5837 = vmatpush.bf16.msra.mxu0 %v4309
        %5838 = vmatpush.bf16.msra.mxu0 %v4305
        %5839 = vmatmul.bf16.gmra.mxu0 %v1123
        %v5840 = vpop.f32.mrf.mxu0
        %v5841 = vadd.f32 %v5828, %v5840
        %v5842 = vpop.f32.mrf.mxu0
        %5843 = vdwg.mxu0
        %5844 = vmatpush.bf16.msra.mxu0 %v4365
        %5845 = vmatpush.bf16.msra.mxu0 %v4361
        %5846 = vmatpush.bf16.msra.mxu0 %v4357
        %5847 = vmatpush.bf16.msra.mxu0 %v4353
        %5848 = vmatpush.bf16.msra.mxu0 %v4349
        %5849 = vmatpush.bf16.msra.mxu0 %v4345
        %5850 = vmatpush.bf16.msra.mxu0 %v4341
        %5851 = vmatpush.bf16.msra.mxu0 %v4337
        %5852 = vmatmul.bf16.gmra.mxu0 %v1124
        %v5853 = vpop.f32.mrf.mxu0
        %v5854 = vadd.f32 %v5841, %v5853
        %v5855 = vpop.f32.mrf.mxu0
        %5856 = vdwg.mxu0
        %5857 = vmatpush.bf16.msra.mxu0 %v4397
        %5858 = vmatpush.bf16.msra.mxu0 %v4393
        %5859 = vmatpush.bf16.msra.mxu0 %v4389
        %5860 = vmatpush.bf16.msra.mxu0 %v4385
        %5861 = vmatpush.bf16.msra.mxu0 %v4381
        %5862 = vmatpush.bf16.msra.mxu0 %v4377
        %5863 = vmatpush.bf16.msra.mxu0 %v4373
        %5864 = vmatpush.bf16.msra.mxu0 %v4369
        %5865 = vmatmul.bf16.gmra.mxu0 %v1127
        %v5866 = vpop.f32.mrf.mxu0
        %v5867 = vadd.f32 %v5854, %v5866
        %v5868 = vpop.f32.mrf.mxu0
        %5869 = vdwg.mxu0
        %5870 = vmatpush.bf16.msra.mxu0 %v4429
        %5871 = vmatpush.bf16.msra.mxu0 %v4425
        %5872 = vmatpush.bf16.msra.mxu0 %v4421
        %5873 = vmatpush.bf16.msra.mxu0 %v4417
        %5874 = vmatpush.bf16.msra.mxu0 %v4413
        %5875 = vmatpush.bf16.msra.mxu0 %v4409
        %5876 = vmatpush.bf16.msra.mxu0 %v4405
        %5877 = vmatpush.bf16.msra.mxu0 %v4401
        %5878 = vmatmul.bf16.gmra.mxu0 %v1128
        %v5879 = vpop.f32.mrf.mxu0
        %v5880 = vadd.f32 %v5867, %v5879
        %v5881 = vpop.f32.mrf.mxu0
        %5882 = vdwg.mxu0
        %5883 = vmatpush.bf16.msra.mxu0 %v4461
        %5884 = vmatpush.bf16.msra.mxu0 %v4457
        %5885 = vmatpush.bf16.msra.mxu0 %v4453
        %5886 = vmatpush.bf16.msra.mxu0 %v4449
        %5887 = vmatpush.bf16.msra.mxu0 %v4445
        %5888 = vmatpush.bf16.msra.mxu0 %v4441
        %5889 = vmatpush.bf16.msra.mxu0 %v4437
        %5890 = vmatpush.bf16.msra.mxu0 %v4433
        %5891 = vmatmul.bf16.gmra.mxu0 %v1129
        %v5892 = vpop.f32.mrf.mxu0
        %v5893 = vadd.f32 %v5880, %v5892
        %v5894 = vpop.f32.mrf.mxu0
        %5895 = vdwg.mxu0
        %5896 = vmatpush.bf16.msra.mxu0 %v4493
        %5897 = vmatpush.bf16.msra.mxu0 %v4489
        %5898 = vmatpush.bf16.msra.mxu0 %v4485
        %5899 = vmatpush.bf16.msra.mxu0 %v4481
        %5900 = vmatpush.bf16.msra.mxu0 %v4477
        %5901 = vmatpush.bf16.msra.mxu0 %v4473
        %5902 = vmatpush.bf16.msra.mxu0 %v4469
        %5903 = vmatpush.bf16.msra.mxu0 %v4465
        %5904 = vmatmul.bf16.gmra.mxu0 %v1130
        %v5905 = vpop.f32.mrf.mxu0
        %v5906 = vadd.f32 %v5893, %v5905
        %v5907 = vpop.f32.mrf.mxu0
        %5908 = vdwg.mxu0
        %5909 = vmatpush.bf16.msra.mxu0 %v4525
        %5910 = vmatpush.bf16.msra.mxu0 %v4521
        %5911 = vmatpush.bf16.msra.mxu0 %v4517
        %5912 = vmatpush.bf16.msra.mxu0 %v4513
        %5913 = vmatpush.bf16.msra.mxu0 %v4509
        %5914 = vmatpush.bf16.msra.mxu0 %v4505
        %5915 = vmatpush.bf16.msra.mxu0 %v4501
        %5916 = vmatpush.bf16.msra.mxu0 %v4497
        %5917 = vmatmul.bf16.gmra.mxu0 %v1131
        %v5918 = vpop.f32.mrf.mxu0
        %v5919 = vadd.f32 %v5906, %v5918
        %v5920 = vpop.f32.mrf.mxu0
        %5921 = vdwg.mxu0
        %5922 = vmatpush.bf16.msra.mxu0 %v4557
        %5923 = vmatpush.bf16.msra.mxu0 %v4553
        %5924 = vmatpush.bf16.msra.mxu0 %v4549
        %5925 = vmatpush.bf16.msra.mxu0 %v4545
        %5926 = vmatpush.bf16.msra.mxu0 %v4541
        %5927 = vmatpush.bf16.msra.mxu0 %v4537
        %5928 = vmatpush.bf16.msra.mxu0 %v4533
        %5929 = vmatpush.bf16.msra.mxu0 %v4529
        %5930 = vmatmul.bf16.gmra.mxu0 %v1132
        %v5931 = vpop.f32.mrf.mxu0
        %v5932 = vadd.f32 %v5919, %v5931
        %v5933 = vpop.f32.mrf.mxu0
        %5934 = vdwg.mxu0
        %5935 = vmatpush.bf16.msra.mxu0 %v4589
        %5936 = vmatpush.bf16.msra.mxu0 %v4585
        %5937 = vmatpush.bf16.msra.mxu0 %v4581
        %5938 = vmatpush.bf16.msra.mxu0 %v4577
        %5939 = vmatpush.bf16.msra.mxu0 %v4573
        %5940 = vmatpush.bf16.msra.mxu0 %v4569
        %5941 = vmatpush.bf16.msra.mxu0 %v4565
        %5942 = vmatpush.bf16.msra.mxu0 %v4561
        %5943 = vmatmul.bf16.gmra.mxu0 %v1133
        %v5944 = vpop.f32.mrf.mxu0
        %v5945 = vadd.f32 %v5932, %v5944
        %v5946 = vpop.f32.mrf.mxu0
        %5947 = vdwg.mxu0
        %5948 = vmatpush.bf16.msra.mxu0 %v4621
        %5949 = vmatpush.bf16.msra.mxu0 %v4617
        %5950 = vmatpush.bf16.msra.mxu0 %v4613
        %5951 = vmatpush.bf16.msra.mxu0 %v4609
        %5952 = vmatpush.bf16.msra.mxu0 %v4605
        %5953 = vmatpush.bf16.msra.mxu0 %v4601
        %5954 = vmatpush.bf16.msra.mxu0 %v4597
        %5955 = vmatpush.bf16.msra.mxu0 %v4593
        %5956 = vmatmul.bf16.gmra.mxu0 %v1134
        %v5957 = vpop.f32.mrf.mxu0
        %v5958 = vadd.f32 %v5945, %v5957
        %v5959 = vpop.f32.mrf.mxu0
        %5960 = vdwg.mxu0
        %5961 = vmatpush.bf16.msra.mxu0 %v4653
        %5962 = vmatpush.bf16.msra.mxu0 %v4649
        %5963 = vmatpush.bf16.msra.mxu0 %v4645
        %5964 = vmatpush.bf16.msra.mxu0 %v4641
        %5965 = vmatpush.bf16.msra.mxu0 %v4637
        %5966 = vmatpush.bf16.msra.mxu0 %v4633
        %5967 = vmatpush.bf16.msra.mxu0 %v4629
        %5968 = vmatpush.bf16.msra.mxu0 %v4625
        %5969 = vmatmul.bf16.gmra.mxu0 %v1137
        %v5970 = vpop.f32.mrf.mxu0
        %v5971 = vadd.f32 %v5958, %v5970
        %v5972 = vpop.f32.mrf.mxu0
        %5973 = vdwg.mxu0
        %5974 = vmatpush.bf16.msra.mxu0 %v4685
        %5975 = vmatpush.bf16.msra.mxu0 %v4681
        %5976 = vmatpush.bf16.msra.mxu0 %v4677
        %5977 = vmatpush.bf16.msra.mxu0 %v4673
        %5978 = vmatpush.bf16.msra.mxu0 %v4669
        %5979 = vmatpush.bf16.msra.mxu0 %v4665
        %5980 = vmatpush.bf16.msra.mxu0 %v4661
        %5981 = vmatpush.bf16.msra.mxu0 %v4657
        %5982 = vmatmul.bf16.gmra.mxu0 %v1138
        %v5983 = vpop.f32.mrf.mxu0
        %v5984 = vadd.f32 %v5971, %v5983
        %v5985 = vpop.f32.mrf.mxu0
        %5986 = vdwg.mxu0
        %5987 = vmatpush.bf16.msra.mxu0 %v4717
        %5988 = vmatpush.bf16.msra.mxu0 %v4713
        %5989 = vmatpush.bf16.msra.mxu0 %v4709
        %5990 = vmatpush.bf16.msra.mxu0 %v4705
        %5991 = vmatpush.bf16.msra.mxu0 %v4701
        %5992 = vmatpush.bf16.msra.mxu0 %v4697
        %5993 = vmatpush.bf16.msra.mxu0 %v4693
        %5994 = vmatpush.bf16.msra.mxu0 %v4689
        %5995 = vmatmul.bf16.gmra.mxu0 %v1139
        %v5996 = vpop.f32.mrf.mxu0
        %v5997 = vadd.f32 %v5984, %v5996
        %v5998 = vpop.f32.mrf.mxu0
        %5999 = vdwg.mxu0
        %6000 = vmatpush.bf16.msra.mxu0 %v4749
        %6001 = vmatpush.bf16.msra.mxu0 %v4745
        %6002 = vmatpush.bf16.msra.mxu0 %v4741
        %6003 = vmatpush.bf16.msra.mxu0 %v4737
        %6004 = vmatpush.bf16.msra.mxu0 %v4733
        %6005 = vmatpush.bf16.msra.mxu0 %v4729
        %6006 = vmatpush.bf16.msra.mxu0 %v4725
        %6007 = vmatpush.bf16.msra.mxu0 %v4721
        %6008 = vmatmul.bf16.gmra.mxu0 %v1140
        %v6009 = vpop.f32.mrf.mxu0
        %v6010 = vadd.f32 %v5997, %v6009
        %v6011 = vpop.f32.mrf.mxu0
        %6012 = vdwg.mxu0
        %6013 = vmatpush.bf16.msra.mxu0 %v3886
        %6014 = vmatpush.bf16.msra.mxu0 %v3882
        %6015 = vmatpush.bf16.msra.mxu0 %v3878
        %6016 = vmatpush.bf16.msra.mxu0 %v3874
        %6017 = vmatpush.bf16.msra.mxu0 %v3870
        %6018 = vmatpush.bf16.msra.mxu0 %v3866
        %6019 = vmatpush.bf16.msra.mxu0 %v3862
        %6020 = vmatpush.bf16.msra.mxu0 %v3858
        %6021 = vmatmul.bf16.gmra.mxu0 %v1107
        %v6022 = vpop.f32.mrf.mxu0
        %v6023 = vadd.f32 0.0, %v6022
        %v6024 = vpop.f32.mrf.mxu0
        %6025 = vdwg.mxu0
        %6026 = vmatpush.bf16.msra.mxu0 %v3918
        %6027 = vmatpush.bf16.msra.mxu0 %v3914
        %6028 = vmatpush.bf16.msra.mxu0 %v3910
        %6029 = vmatpush.bf16.msra.mxu0 %v3906
        %6030 = vmatpush.bf16.msra.mxu0 %v3902
        %6031 = vmatpush.bf16.msra.mxu0 %v3898
        %6032 = vmatpush.bf16.msra.mxu0 %v3894
        %6033 = vmatpush.bf16.msra.mxu0 %v3890
        %6034 = vmatmul.bf16.gmra.mxu0 %v1108
        %v6035 = vpop.f32.mrf.mxu0
        %v6036 = vadd.f32 %v6023, %v6035
        %v6037 = vpop.f32.mrf.mxu0
        %6038 = vdwg.mxu0
        %6039 = vmatpush.bf16.msra.mxu0 %v3950
        %6040 = vmatpush.bf16.msra.mxu0 %v3946
        %6041 = vmatpush.bf16.msra.mxu0 %v3942
        %6042 = vmatpush.bf16.msra.mxu0 %v3938
        %6043 = vmatpush.bf16.msra.mxu0 %v3934
        %6044 = vmatpush.bf16.msra.mxu0 %v3930
        %6045 = vmatpush.bf16.msra.mxu0 %v3926
        %6046 = vmatpush.bf16.msra.mxu0 %v3922
        %6047 = vmatmul.bf16.gmra.mxu0 %v1109
        %v6048 = vpop.f32.mrf.mxu0
        %v6049 = vadd.f32 %v6036, %v6048
        %v6050 = vpop.f32.mrf.mxu0
        %6051 = vdwg.mxu0
        %6052 = vmatpush.bf16.msra.mxu0 %v3982
        %6053 = vmatpush.bf16.msra.mxu0 %v3978
        %6054 = vmatpush.bf16.msra.mxu0 %v3974
        %6055 = vmatpush.bf16.msra.mxu0 %v3970
        %6056 = vmatpush.bf16.msra.mxu0 %v3966
        %6057 = vmatpush.bf16.msra.mxu0 %v3962
        %6058 = vmatpush.bf16.msra.mxu0 %v3958
        %6059 = vmatpush.bf16.msra.mxu0 %v3954
        %6060 = vmatmul.bf16.gmra.mxu0 %v1110
        %v6061 = vpop.f32.mrf.mxu0
        %v6062 = vadd.f32 %v6049, %v6061
        %v6063 = vpop.f32.mrf.mxu0
        %6064 = vdwg.mxu0
        %6065 = vmatpush.bf16.msra.mxu0 %v4014
        %6066 = vmatpush.bf16.msra.mxu0 %v4010
        %6067 = vmatpush.bf16.msra.mxu0 %v4006
        %6068 = vmatpush.bf16.msra.mxu0 %v4002
        %6069 = vmatpush.bf16.msra.mxu0 %v3998
        %6070 = vmatpush.bf16.msra.mxu0 %v3994
        %6071 = vmatpush.bf16.msra.mxu0 %v3990
        %6072 = vmatpush.bf16.msra.mxu0 %v3986
        %6073 = vmatmul.bf16.gmra.mxu0 %v1111
        %v6074 = vpop.f32.mrf.mxu0
        %v6075 = vadd.f32 %v6062, %v6074
        %v6076 = vpop.f32.mrf.mxu0
        %6077 = vdwg.mxu0
        %6078 = vmatpush.bf16.msra.mxu0 %v4046
        %6079 = vmatpush.bf16.msra.mxu0 %v4042
        %6080 = vmatpush.bf16.msra.mxu0 %v4038
        %6081 = vmatpush.bf16.msra.mxu0 %v4034
        %6082 = vmatpush.bf16.msra.mxu0 %v4030
        %6083 = vmatpush.bf16.msra.mxu0 %v4026
        %6084 = vmatpush.bf16.msra.mxu0 %v4022
        %6085 = vmatpush.bf16.msra.mxu0 %v4018
        %6086 = vmatmul.bf16.gmra.mxu0 %v1112
        %v6087 = vpop.f32.mrf.mxu0
        %v6088 = vadd.f32 %v6075, %v6087
        %v6089 = vpop.f32.mrf.mxu0
        %6090 = vdwg.mxu0
        %6091 = vmatpush.bf16.msra.mxu0 %v4078
        %6092 = vmatpush.bf16.msra.mxu0 %v4074
        %6093 = vmatpush.bf16.msra.mxu0 %v4070
        %6094 = vmatpush.bf16.msra.mxu0 %v4066
        %6095 = vmatpush.bf16.msra.mxu0 %v4062
        %6096 = vmatpush.bf16.msra.mxu0 %v4058
        %6097 = vmatpush.bf16.msra.mxu0 %v4054
        %6098 = vmatpush.bf16.msra.mxu0 %v4050
        %6099 = vmatmul.bf16.gmra.mxu0 %v1113
        %v6100 = vpop.f32.mrf.mxu0
        %v6101 = vadd.f32 %v6088, %v6100
        %v6102 = vpop.f32.mrf.mxu0
        %6103 = vdwg.mxu0
        %6104 = vmatpush.bf16.msra.mxu0 %v4110
        %6105 = vmatpush.bf16.msra.mxu0 %v4106
        %6106 = vmatpush.bf16.msra.mxu0 %v4102
        %6107 = vmatpush.bf16.msra.mxu0 %v4098
        %6108 = vmatpush.bf16.msra.mxu0 %v4094
        %6109 = vmatpush.bf16.msra.mxu0 %v4090
        %6110 = vmatpush.bf16.msra.mxu0 %v4086
        %6111 = vmatpush.bf16.msra.mxu0 %v4082
        %6112 = vmatmul.bf16.gmra.mxu0 %v1114
        %v6113 = vpop.f32.mrf.mxu0
        %v6114 = vadd.f32 %v6101, %v6113
        %v6115 = vpop.f32.mrf.mxu0
        %6116 = vdwg.mxu0
        %6117 = vmatpush.bf16.msra.mxu0 %v4142
        %6118 = vmatpush.bf16.msra.mxu0 %v4138
        %6119 = vmatpush.bf16.msra.mxu0 %v4134
        %6120 = vmatpush.bf16.msra.mxu0 %v4130
        %6121 = vmatpush.bf16.msra.mxu0 %v4126
        %6122 = vmatpush.bf16.msra.mxu0 %v4122
        %6123 = vmatpush.bf16.msra.mxu0 %v4118
        %6124 = vmatpush.bf16.msra.mxu0 %v4114
        %6125 = vmatmul.bf16.gmra.mxu0 %v1117
        %v6126 = vpop.f32.mrf.mxu0
        %v6127 = vadd.f32 %v6114, %v6126
        %v6128 = vpop.f32.mrf.mxu0
        %6129 = vdwg.mxu0
        %6130 = vmatpush.bf16.msra.mxu0 %v4174
        %6131 = vmatpush.bf16.msra.mxu0 %v4170
        %6132 = vmatpush.bf16.msra.mxu0 %v4166
        %6133 = vmatpush.bf16.msra.mxu0 %v4162
        %6134 = vmatpush.bf16.msra.mxu0 %v4158
        %6135 = vmatpush.bf16.msra.mxu0 %v4154
        %6136 = vmatpush.bf16.msra.mxu0 %v4150
        %6137 = vmatpush.bf16.msra.mxu0 %v4146
        %6138 = vmatmul.bf16.gmra.mxu0 %v1118
        %v6139 = vpop.f32.mrf.mxu0
        %v6140 = vadd.f32 %v6127, %v6139
        %v6141 = vpop.f32.mrf.mxu0
        %6142 = vdwg.mxu0
        %6143 = vmatpush.bf16.msra.mxu0 %v4206
        %6144 = vmatpush.bf16.msra.mxu0 %v4202
        %6145 = vmatpush.bf16.msra.mxu0 %v4198
        %6146 = vmatpush.bf16.msra.mxu0 %v4194
        %6147 = vmatpush.bf16.msra.mxu0 %v4190
        %6148 = vmatpush.bf16.msra.mxu0 %v4186
        %6149 = vmatpush.bf16.msra.mxu0 %v4182
        %6150 = vmatpush.bf16.msra.mxu0 %v4178
        %6151 = vmatmul.bf16.gmra.mxu0 %v1119
        %v6152 = vpop.f32.mrf.mxu0
        %v6153 = vadd.f32 %v6140, %v6152
        %v6154 = vpop.f32.mrf.mxu0
        %6155 = vdwg.mxu0
        %6156 = vmatpush.bf16.msra.mxu0 %v4238
        %6157 = vmatpush.bf16.msra.mxu0 %v4234
        %6158 = vmatpush.bf16.msra.mxu0 %v4230
        %6159 = vmatpush.bf16.msra.mxu0 %v4226
        %6160 = vmatpush.bf16.msra.mxu0 %v4222
        %6161 = vmatpush.bf16.msra.mxu0 %v4218
        %6162 = vmatpush.bf16.msra.mxu0 %v4214
        %6163 = vmatpush.bf16.msra.mxu0 %v4210
        %6164 = vmatmul.bf16.gmra.mxu0 %v1120
        %v6165 = vpop.f32.mrf.mxu0
        %v6166 = vadd.f32 %v6153, %v6165
        %v6167 = vpop.f32.mrf.mxu0
        %6168 = vdwg.mxu0
        %6169 = vmatpush.bf16.msra.mxu0 %v4270
        %6170 = vmatpush.bf16.msra.mxu0 %v4266
        %6171 = vmatpush.bf16.msra.mxu0 %v4262
        %6172 = vmatpush.bf16.msra.mxu0 %v4258
        %6173 = vmatpush.bf16.msra.mxu0 %v4254
        %6174 = vmatpush.bf16.msra.mxu0 %v4250
        %6175 = vmatpush.bf16.msra.mxu0 %v4246
        %6176 = vmatpush.bf16.msra.mxu0 %v4242
        %6177 = vmatmul.bf16.gmra.mxu0 %v1121
        %v6178 = vpop.f32.mrf.mxu0
        %v6179 = vadd.f32 %v6166, %v6178
        %v6180 = vpop.f32.mrf.mxu0
        %6181 = vdwg.mxu0
        %6182 = vmatpush.bf16.msra.mxu0 %v4302
        %6183 = vmatpush.bf16.msra.mxu0 %v4298
        %6184 = vmatpush.bf16.msra.mxu0 %v4294
        %6185 = vmatpush.bf16.msra.mxu0 %v4290
        %6186 = vmatpush.bf16.msra.mxu0 %v4286
        %6187 = vmatpush.bf16.msra.mxu0 %v4282
        %6188 = vmatpush.bf16.msra.mxu0 %v4278
        %6189 = vmatpush.bf16.msra.mxu0 %v4274
        %6190 = vmatmul.bf16.gmra.mxu0 %v1122
        %v6191 = vpop.f32.mrf.mxu0
        %v6192 = vadd.f32 %v6179, %v6191
        %v6193 = vpop.f32.mrf.mxu0
        %6194 = vdwg.mxu0
        %6195 = vmatpush.bf16.msra.mxu0 %v4334
        %6196 = vmatpush.bf16.msra.mxu0 %v4330
        %6197 = vmatpush.bf16.msra.mxu0 %v4326
        %6198 = vmatpush.bf16.msra.mxu0 %v4322
        %6199 = vmatpush.bf16.msra.mxu0 %v4318
        %6200 = vmatpush.bf16.msra.mxu0 %v4314
        %6201 = vmatpush.bf16.msra.mxu0 %v4310
        %6202 = vmatpush.bf16.msra.mxu0 %v4306
        %6203 = vmatmul.bf16.gmra.mxu0 %v1123
        %v6204 = vpop.f32.mrf.mxu0
        %v6205 = vadd.f32 %v6192, %v6204
        %v6206 = vpop.f32.mrf.mxu0
        %6207 = vdwg.mxu0
        %6208 = vmatpush.bf16.msra.mxu0 %v4366
        %6209 = vmatpush.bf16.msra.mxu0 %v4362
        %6210 = vmatpush.bf16.msra.mxu0 %v4358
        %6211 = vmatpush.bf16.msra.mxu0 %v4354
        %6212 = vmatpush.bf16.msra.mxu0 %v4350
        %6213 = vmatpush.bf16.msra.mxu0 %v4346
        %6214 = vmatpush.bf16.msra.mxu0 %v4342
        %6215 = vmatpush.bf16.msra.mxu0 %v4338
        %6216 = vmatmul.bf16.gmra.mxu0 %v1124
        %v6217 = vpop.f32.mrf.mxu0
        %v6218 = vadd.f32 %v6205, %v6217
        %v6219 = vpop.f32.mrf.mxu0
        %6220 = vdwg.mxu0
        %6221 = vmatpush.bf16.msra.mxu0 %v4398
        %6222 = vmatpush.bf16.msra.mxu0 %v4394
        %6223 = vmatpush.bf16.msra.mxu0 %v4390
        %6224 = vmatpush.bf16.msra.mxu0 %v4386
        %6225 = vmatpush.bf16.msra.mxu0 %v4382
        %6226 = vmatpush.bf16.msra.mxu0 %v4378
        %6227 = vmatpush.bf16.msra.mxu0 %v4374
        %6228 = vmatpush.bf16.msra.mxu0 %v4370
        %6229 = vmatmul.bf16.gmra.mxu0 %v1127
        %v6230 = vpop.f32.mrf.mxu0
        %v6231 = vadd.f32 %v6218, %v6230
        %v6232 = vpop.f32.mrf.mxu0
        %6233 = vdwg.mxu0
        %6234 = vmatpush.bf16.msra.mxu0 %v4430
        %6235 = vmatpush.bf16.msra.mxu0 %v4426
        %6236 = vmatpush.bf16.msra.mxu0 %v4422
        %6237 = vmatpush.bf16.msra.mxu0 %v4418
        %6238 = vmatpush.bf16.msra.mxu0 %v4414
        %6239 = vmatpush.bf16.msra.mxu0 %v4410
        %6240 = vmatpush.bf16.msra.mxu0 %v4406
        %6241 = vmatpush.bf16.msra.mxu0 %v4402
        %6242 = vmatmul.bf16.gmra.mxu0 %v1128
        %v6243 = vpop.f32.mrf.mxu0
        %v6244 = vadd.f32 %v6231, %v6243
        %v6245 = vpop.f32.mrf.mxu0
        %6246 = vdwg.mxu0
        %6247 = vmatpush.bf16.msra.mxu0 %v4462
        %6248 = vmatpush.bf16.msra.mxu0 %v4458
        %6249 = vmatpush.bf16.msra.mxu0 %v4454
        %6250 = vmatpush.bf16.msra.mxu0 %v4450
        %6251 = vmatpush.bf16.msra.mxu0 %v4446
        %6252 = vmatpush.bf16.msra.mxu0 %v4442
        %6253 = vmatpush.bf16.msra.mxu0 %v4438
        %6254 = vmatpush.bf16.msra.mxu0 %v4434
        %6255 = vmatmul.bf16.gmra.mxu0 %v1129
        %v6256 = vpop.f32.mrf.mxu0
        %v6257 = vadd.f32 %v6244, %v6256
        %v6258 = vpop.f32.mrf.mxu0
        %6259 = vdwg.mxu0
        %6260 = vmatpush.bf16.msra.mxu0 %v4494
        %6261 = vmatpush.bf16.msra.mxu0 %v4490
        %6262 = vmatpush.bf16.msra.mxu0 %v4486
        %6263 = vmatpush.bf16.msra.mxu0 %v4482
        %6264 = vmatpush.bf16.msra.mxu0 %v4478
        %6265 = vmatpush.bf16.msra.mxu0 %v4474
        %6266 = vmatpush.bf16.msra.mxu0 %v4470
        %6267 = vmatpush.bf16.msra.mxu0 %v4466
        %6268 = vmatmul.bf16.gmra.mxu0 %v1130
        %v6269 = vpop.f32.mrf.mxu0
        %v6270 = vadd.f32 %v6257, %v6269
        %v6271 = vpop.f32.mrf.mxu0
        %6272 = vdwg.mxu0
        %6273 = vmatpush.bf16.msra.mxu0 %v4526
        %6274 = vmatpush.bf16.msra.mxu0 %v4522
        %6275 = vmatpush.bf16.msra.mxu0 %v4518
        %6276 = vmatpush.bf16.msra.mxu0 %v4514
        %6277 = vmatpush.bf16.msra.mxu0 %v4510
        %6278 = vmatpush.bf16.msra.mxu0 %v4506
        %6279 = vmatpush.bf16.msra.mxu0 %v4502
        %6280 = vmatpush.bf16.msra.mxu0 %v4498
        %6281 = vmatmul.bf16.gmra.mxu0 %v1131
        %v6282 = vpop.f32.mrf.mxu0
        %v6283 = vadd.f32 %v6270, %v6282
        %v6284 = vpop.f32.mrf.mxu0
        %6285 = vdwg.mxu0
        %6286 = vmatpush.bf16.msra.mxu0 %v4558
        %6287 = vmatpush.bf16.msra.mxu0 %v4554
        %6288 = vmatpush.bf16.msra.mxu0 %v4550
        %6289 = vmatpush.bf16.msra.mxu0 %v4546
        %6290 = vmatpush.bf16.msra.mxu0 %v4542
        %6291 = vmatpush.bf16.msra.mxu0 %v4538
        %6292 = vmatpush.bf16.msra.mxu0 %v4534
        %6293 = vmatpush.bf16.msra.mxu0 %v4530
        %6294 = vmatmul.bf16.gmra.mxu0 %v1132
        %v6295 = vpop.f32.mrf.mxu0
        %v6296 = vadd.f32 %v6283, %v6295
        %v6297 = vpop.f32.mrf.mxu0
        %6298 = vdwg.mxu0
        %6299 = vmatpush.bf16.msra.mxu0 %v4590
        %6300 = vmatpush.bf16.msra.mxu0 %v4586
        %6301 = vmatpush.bf16.msra.mxu0 %v4582
        %6302 = vmatpush.bf16.msra.mxu0 %v4578
        %6303 = vmatpush.bf16.msra.mxu0 %v4574
        %6304 = vmatpush.bf16.msra.mxu0 %v4570
        %6305 = vmatpush.bf16.msra.mxu0 %v4566
        %6306 = vmatpush.bf16.msra.mxu0 %v4562
        %6307 = vmatmul.bf16.gmra.mxu0 %v1133
        %v6308 = vpop.f32.mrf.mxu0
        %v6309 = vadd.f32 %v6296, %v6308
        %v6310 = vpop.f32.mrf.mxu0
        %6311 = vdwg.mxu0
        %6312 = vmatpush.bf16.msra.mxu0 %v4622
        %6313 = vmatpush.bf16.msra.mxu0 %v4618
        %6314 = vmatpush.bf16.msra.mxu0 %v4614
        %6315 = vmatpush.bf16.msra.mxu0 %v4610
        %6316 = vmatpush.bf16.msra.mxu0 %v4606
        %6317 = vmatpush.bf16.msra.mxu0 %v4602
        %6318 = vmatpush.bf16.msra.mxu0 %v4598
        %6319 = vmatpush.bf16.msra.mxu0 %v4594
        %6320 = vmatmul.bf16.gmra.mxu0 %v1134
        %v6321 = vpop.f32.mrf.mxu0
        %v6322 = vadd.f32 %v6309, %v6321
        %v6323 = vpop.f32.mrf.mxu0
        %6324 = vdwg.mxu0
        %6325 = vmatpush.bf16.msra.mxu0 %v4654
        %6326 = vmatpush.bf16.msra.mxu0 %v4650
        %6327 = vmatpush.bf16.msra.mxu0 %v4646
        %6328 = vmatpush.bf16.msra.mxu0 %v4642
        %6329 = vmatpush.bf16.msra.mxu0 %v4638
        %6330 = vmatpush.bf16.msra.mxu0 %v4634
        %6331 = vmatpush.bf16.msra.mxu0 %v4630
        %6332 = vmatpush.bf16.msra.mxu0 %v4626
        %6333 = vmatmul.bf16.gmra.mxu0 %v1137
        %v6334 = vpop.f32.mrf.mxu0
        %v6335 = vadd.f32 %v6322, %v6334
        %v6336 = vpop.f32.mrf.mxu0
        %6337 = vdwg.mxu0
        %6338 = vmatpush.bf16.msra.mxu0 %v4686
        %6339 = vmatpush.bf16.msra.mxu0 %v4682
        %6340 = vmatpush.bf16.msra.mxu0 %v4678
        %6341 = vmatpush.bf16.msra.mxu0 %v4674
        %6342 = vmatpush.bf16.msra.mxu0 %v4670
        %6343 = vmatpush.bf16.msra.mxu0 %v4666
        %6344 = vmatpush.bf16.msra.mxu0 %v4662
        %6345 = vmatpush.bf16.msra.mxu0 %v4658
        %6346 = vmatmul.bf16.gmra.mxu0 %v1138
        %v6347 = vpop.f32.mrf.mxu0
        %v6348 = vadd.f32 %v6335, %v6347
        %v6349 = vpop.f32.mrf.mxu0
        %6350 = vdwg.mxu0
        %6351 = vmatpush.bf16.msra.mxu0 %v4718
        %6352 = vmatpush.bf16.msra.mxu0 %v4714
        %6353 = vmatpush.bf16.msra.mxu0 %v4710
        %6354 = vmatpush.bf16.msra.mxu0 %v4706
        %6355 = vmatpush.bf16.msra.mxu0 %v4702
        %6356 = vmatpush.bf16.msra.mxu0 %v4698
        %6357 = vmatpush.bf16.msra.mxu0 %v4694
        %6358 = vmatpush.bf16.msra.mxu0 %v4690
        %6359 = vmatmul.bf16.gmra.mxu0 %v1139
        %v6360 = vpop.f32.mrf.mxu0
        %v6361 = vadd.f32 %v6348, %v6360
        %v6362 = vpop.f32.mrf.mxu0
        %6363 = vdwg.mxu0
        %6364 = vmatpush.bf16.msra.mxu0 %v4750
        %6365 = vmatpush.bf16.msra.mxu0 %v4746
        %6366 = vmatpush.bf16.msra.mxu0 %v4742
        %6367 = vmatpush.bf16.msra.mxu0 %v4738
        %6368 = vmatpush.bf16.msra.mxu0 %v4734
        %6369 = vmatpush.bf16.msra.mxu0 %v4730
        %6370 = vmatpush.bf16.msra.mxu0 %v4726
        %6371 = vmatpush.bf16.msra.mxu0 %v4722
        %6372 = vmatmul.bf16.gmra.mxu0 %v1140
        %v6373 = vpop.f32.mrf.mxu0
        %v6374 = vadd.f32 %v6361, %v6373
        %v6375 = vpop.f32.mrf.mxu0
        %6376 = vdwg.mxu0
        %6377 = vmatpush.bf16.msra.mxu0 %v3887
        %6378 = vmatpush.bf16.msra.mxu0 %v3883
        %6379 = vmatpush.bf16.msra.mxu0 %v3879
        %6380 = vmatpush.bf16.msra.mxu0 %v3875
        %6381 = vmatpush.bf16.msra.mxu0 %v3871
        %6382 = vmatpush.bf16.msra.mxu0 %v3867
        %6383 = vmatpush.bf16.msra.mxu0 %v3863
        %6384 = vmatpush.bf16.msra.mxu0 %v3859
        %6385 = vmatmul.bf16.gmra.mxu0 %v1107
        %v6386 = vpop.f32.mrf.mxu0
        %v6387 = vadd.f32 0.0, %v6386
        %v6388 = vpop.f32.mrf.mxu0
        %6389 = vdwg.mxu0
        %6390 = vmatpush.bf16.msra.mxu0 %v3919
        %6391 = vmatpush.bf16.msra.mxu0 %v3915
        %6392 = vmatpush.bf16.msra.mxu0 %v3911
        %6393 = vmatpush.bf16.msra.mxu0 %v3907
        %6394 = vmatpush.bf16.msra.mxu0 %v3903
        %6395 = vmatpush.bf16.msra.mxu0 %v3899
        %6396 = vmatpush.bf16.msra.mxu0 %v3895
        %6397 = vmatpush.bf16.msra.mxu0 %v3891
        %6398 = vmatmul.bf16.gmra.mxu0 %v1108
        %v6399 = vpop.f32.mrf.mxu0
        %v6400 = vadd.f32 %v6387, %v6399
        %v6401 = vpop.f32.mrf.mxu0
        %6402 = vdwg.mxu0
        %6403 = vmatpush.bf16.msra.mxu0 %v3951
        %6404 = vmatpush.bf16.msra.mxu0 %v3947
        %6405 = vmatpush.bf16.msra.mxu0 %v3943
        %6406 = vmatpush.bf16.msra.mxu0 %v3939
        %6407 = vmatpush.bf16.msra.mxu0 %v3935
        %6408 = vmatpush.bf16.msra.mxu0 %v3931
        %6409 = vmatpush.bf16.msra.mxu0 %v3927
        %6410 = vmatpush.bf16.msra.mxu0 %v3923
        %6411 = vmatmul.bf16.gmra.mxu0 %v1109
        %v6412 = vpop.f32.mrf.mxu0
        %v6413 = vadd.f32 %v6400, %v6412
        %v6414 = vpop.f32.mrf.mxu0
        %6415 = vdwg.mxu0
        %6416 = vmatpush.bf16.msra.mxu0 %v3983
        %6417 = vmatpush.bf16.msra.mxu0 %v3979
        %6418 = vmatpush.bf16.msra.mxu0 %v3975
        %6419 = vmatpush.bf16.msra.mxu0 %v3971
        %6420 = vmatpush.bf16.msra.mxu0 %v3967
        %6421 = vmatpush.bf16.msra.mxu0 %v3963
        %6422 = vmatpush.bf16.msra.mxu0 %v3959
        %6423 = vmatpush.bf16.msra.mxu0 %v3955
        %6424 = vmatmul.bf16.gmra.mxu0 %v1110
        %v6425 = vpop.f32.mrf.mxu0
        %v6426 = vadd.f32 %v6413, %v6425
        %v6427 = vpop.f32.mrf.mxu0
        %6428 = vdwg.mxu0
        %6429 = vmatpush.bf16.msra.mxu0 %v4015
        %6430 = vmatpush.bf16.msra.mxu0 %v4011
        %6431 = vmatpush.bf16.msra.mxu0 %v4007
        %6432 = vmatpush.bf16.msra.mxu0 %v4003
        %6433 = vmatpush.bf16.msra.mxu0 %v3999
        %6434 = vmatpush.bf16.msra.mxu0 %v3995
        %6435 = vmatpush.bf16.msra.mxu0 %v3991
        %6436 = vmatpush.bf16.msra.mxu0 %v3987
        %6437 = vmatmul.bf16.gmra.mxu0 %v1111
        %v6438 = vpop.f32.mrf.mxu0
        %v6439 = vadd.f32 %v6426, %v6438
        %v6440 = vpop.f32.mrf.mxu0
        %6441 = vdwg.mxu0
        %6442 = vmatpush.bf16.msra.mxu0 %v4047
        %6443 = vmatpush.bf16.msra.mxu0 %v4043
        %6444 = vmatpush.bf16.msra.mxu0 %v4039
        %6445 = vmatpush.bf16.msra.mxu0 %v4035
        %6446 = vmatpush.bf16.msra.mxu0 %v4031
        %6447 = vmatpush.bf16.msra.mxu0 %v4027
        %6448 = vmatpush.bf16.msra.mxu0 %v4023
        %6449 = vmatpush.bf16.msra.mxu0 %v4019
        %6450 = vmatmul.bf16.gmra.mxu0 %v1112
        %v6451 = vpop.f32.mrf.mxu0
        %v6452 = vadd.f32 %v6439, %v6451
        %v6453 = vpop.f32.mrf.mxu0
        %6454 = vdwg.mxu0
        %6455 = vmatpush.bf16.msra.mxu0 %v4079
        %6456 = vmatpush.bf16.msra.mxu0 %v4075
        %6457 = vmatpush.bf16.msra.mxu0 %v4071
        %6458 = vmatpush.bf16.msra.mxu0 %v4067
        %6459 = vmatpush.bf16.msra.mxu0 %v4063
        %6460 = vmatpush.bf16.msra.mxu0 %v4059
        %6461 = vmatpush.bf16.msra.mxu0 %v4055
        %6462 = vmatpush.bf16.msra.mxu0 %v4051
        %6463 = vmatmul.bf16.gmra.mxu0 %v1113
        %v6464 = vpop.f32.mrf.mxu0
        %v6465 = vadd.f32 %v6452, %v6464
        %v6466 = vpop.f32.mrf.mxu0
        %6467 = vdwg.mxu0
        %6468 = vmatpush.bf16.msra.mxu0 %v4111
        %6469 = vmatpush.bf16.msra.mxu0 %v4107
        %6470 = vmatpush.bf16.msra.mxu0 %v4103
        %6471 = vmatpush.bf16.msra.mxu0 %v4099
        %6472 = vmatpush.bf16.msra.mxu0 %v4095
        %6473 = vmatpush.bf16.msra.mxu0 %v4091
        %6474 = vmatpush.bf16.msra.mxu0 %v4087
        %6475 = vmatpush.bf16.msra.mxu0 %v4083
        %6476 = vmatmul.bf16.gmra.mxu0 %v1114
        %v6477 = vpop.f32.mrf.mxu0
        %v6478 = vadd.f32 %v6465, %v6477
        %v6479 = vpop.f32.mrf.mxu0
        %6480 = vdwg.mxu0
        %6481 = vmatpush.bf16.msra.mxu0 %v4143
        %6482 = vmatpush.bf16.msra.mxu0 %v4139
        %6483 = vmatpush.bf16.msra.mxu0 %v4135
        %6484 = vmatpush.bf16.msra.mxu0 %v4131
        %6485 = vmatpush.bf16.msra.mxu0 %v4127
        %6486 = vmatpush.bf16.msra.mxu0 %v4123
        %6487 = vmatpush.bf16.msra.mxu0 %v4119
        %6488 = vmatpush.bf16.msra.mxu0 %v4115
        %6489 = vmatmul.bf16.gmra.mxu0 %v1117
        %v6490 = vpop.f32.mrf.mxu0
        %v6491 = vadd.f32 %v6478, %v6490
        %v6492 = vpop.f32.mrf.mxu0
        %6493 = vdwg.mxu0
        %6494 = vmatpush.bf16.msra.mxu0 %v4175
        %6495 = vmatpush.bf16.msra.mxu0 %v4171
        %6496 = vmatpush.bf16.msra.mxu0 %v4167
        %6497 = vmatpush.bf16.msra.mxu0 %v4163
        %6498 = vmatpush.bf16.msra.mxu0 %v4159
        %6499 = vmatpush.bf16.msra.mxu0 %v4155
        %6500 = vmatpush.bf16.msra.mxu0 %v4151
        %6501 = vmatpush.bf16.msra.mxu0 %v4147
        %6502 = vmatmul.bf16.gmra.mxu0 %v1118
        %v6503 = vpop.f32.mrf.mxu0
        %v6504 = vadd.f32 %v6491, %v6503
        %v6505 = vpop.f32.mrf.mxu0
        %6506 = vdwg.mxu0
        %6507 = vmatpush.bf16.msra.mxu0 %v4207
        %6508 = vmatpush.bf16.msra.mxu0 %v4203
        %6509 = vmatpush.bf16.msra.mxu0 %v4199
        %6510 = vmatpush.bf16.msra.mxu0 %v4195
        %6511 = vmatpush.bf16.msra.mxu0 %v4191
        %6512 = vmatpush.bf16.msra.mxu0 %v4187
        %6513 = vmatpush.bf16.msra.mxu0 %v4183
        %6514 = vmatpush.bf16.msra.mxu0 %v4179
        %6515 = vmatmul.bf16.gmra.mxu0 %v1119
        %v6516 = vpop.f32.mrf.mxu0
        %v6517 = vadd.f32 %v6504, %v6516
        %v6518 = vpop.f32.mrf.mxu0
        %6519 = vdwg.mxu0
        %6520 = vmatpush.bf16.msra.mxu0 %v4239
        %6521 = vmatpush.bf16.msra.mxu0 %v4235
        %6522 = vmatpush.bf16.msra.mxu0 %v4231
        %6523 = vmatpush.bf16.msra.mxu0 %v4227
        %6524 = vmatpush.bf16.msra.mxu0 %v4223
        %6525 = vmatpush.bf16.msra.mxu0 %v4219
        %6526 = vmatpush.bf16.msra.mxu0 %v4215
        %6527 = vmatpush.bf16.msra.mxu0 %v4211
        %6528 = vmatmul.bf16.gmra.mxu0 %v1120
        %v6529 = vpop.f32.mrf.mxu0
        %v6530 = vadd.f32 %v6517, %v6529
        %v6531 = vpop.f32.mrf.mxu0
        %6532 = vdwg.mxu0
        %6533 = vmatpush.bf16.msra.mxu0 %v4271
        %6534 = vmatpush.bf16.msra.mxu0 %v4267
        %6535 = vmatpush.bf16.msra.mxu0 %v4263
        %6536 = vmatpush.bf16.msra.mxu0 %v4259
        %6537 = vmatpush.bf16.msra.mxu0 %v4255
        %6538 = vmatpush.bf16.msra.mxu0 %v4251
        %6539 = vmatpush.bf16.msra.mxu0 %v4247
        %6540 = vmatpush.bf16.msra.mxu0 %v4243
        %6541 = vmatmul.bf16.gmra.mxu0 %v1121
        %v6542 = vpop.f32.mrf.mxu0
        %v6543 = vadd.f32 %v6530, %v6542
        %v6544 = vpop.f32.mrf.mxu0
        %6545 = vdwg.mxu0
        %6546 = vmatpush.bf16.msra.mxu0 %v4303
        %6547 = vmatpush.bf16.msra.mxu0 %v4299
        %6548 = vmatpush.bf16.msra.mxu0 %v4295
        %6549 = vmatpush.bf16.msra.mxu0 %v4291
        %6550 = vmatpush.bf16.msra.mxu0 %v4287
        %6551 = vmatpush.bf16.msra.mxu0 %v4283
        %6552 = vmatpush.bf16.msra.mxu0 %v4279
        %6553 = vmatpush.bf16.msra.mxu0 %v4275
        %6554 = vmatmul.bf16.gmra.mxu0 %v1122
        %v6555 = vpop.f32.mrf.mxu0
        %v6556 = vadd.f32 %v6543, %v6555
        %v6557 = vpop.f32.mrf.mxu0
        %6558 = vdwg.mxu0
        %6559 = vmatpush.bf16.msra.mxu0 %v4335
        %6560 = vmatpush.bf16.msra.mxu0 %v4331
        %6561 = vmatpush.bf16.msra.mxu0 %v4327
        %6562 = vmatpush.bf16.msra.mxu0 %v4323
        %6563 = vmatpush.bf16.msra.mxu0 %v4319
        %6564 = vmatpush.bf16.msra.mxu0 %v4315
        %6565 = vmatpush.bf16.msra.mxu0 %v4311
        %6566 = vmatpush.bf16.msra.mxu0 %v4307
        %6567 = vmatmul.bf16.gmra.mxu0 %v1123
        %v6568 = vpop.f32.mrf.mxu0
        %v6569 = vadd.f32 %v6556, %v6568
        %v6570 = vpop.f32.mrf.mxu0
        %6571 = vdwg.mxu0
        %6572 = vmatpush.bf16.msra.mxu0 %v4367
        %6573 = vmatpush.bf16.msra.mxu0 %v4363
        %6574 = vmatpush.bf16.msra.mxu0 %v4359
        %6575 = vmatpush.bf16.msra.mxu0 %v4355
        %6576 = vmatpush.bf16.msra.mxu0 %v4351
        %6577 = vmatpush.bf16.msra.mxu0 %v4347
        %6578 = vmatpush.bf16.msra.mxu0 %v4343
        %6579 = vmatpush.bf16.msra.mxu0 %v4339
        %6580 = vmatmul.bf16.gmra.mxu0 %v1124
        %v6581 = vpop.f32.mrf.mxu0
        %v6582 = vadd.f32 %v6569, %v6581
        %v6583 = vpop.f32.mrf.mxu0
        %6584 = vdwg.mxu0
        %6585 = vmatpush.bf16.msra.mxu0 %v4399
        %6586 = vmatpush.bf16.msra.mxu0 %v4395
        %6587 = vmatpush.bf16.msra.mxu0 %v4391
        %6588 = vmatpush.bf16.msra.mxu0 %v4387
        %6589 = vmatpush.bf16.msra.mxu0 %v4383
        %6590 = vmatpush.bf16.msra.mxu0 %v4379
        %6591 = vmatpush.bf16.msra.mxu0 %v4375
        %6592 = vmatpush.bf16.msra.mxu0 %v4371
        %6593 = vmatmul.bf16.gmra.mxu0 %v1127
        %v6594 = vpop.f32.mrf.mxu0
        %v6595 = vadd.f32 %v6582, %v6594
        %v6596 = vpop.f32.mrf.mxu0
        %6597 = vdwg.mxu0
        %6598 = vmatpush.bf16.msra.mxu0 %v4431
        %6599 = vmatpush.bf16.msra.mxu0 %v4427
        %6600 = vmatpush.bf16.msra.mxu0 %v4423
        %6601 = vmatpush.bf16.msra.mxu0 %v4419
        %6602 = vmatpush.bf16.msra.mxu0 %v4415
        %6603 = vmatpush.bf16.msra.mxu0 %v4411
        %6604 = vmatpush.bf16.msra.mxu0 %v4407
        %6605 = vmatpush.bf16.msra.mxu0 %v4403
        %6606 = vmatmul.bf16.gmra.mxu0 %v1128
        %v6607 = vpop.f32.mrf.mxu0
        %v6608 = vadd.f32 %v6595, %v6607
        %v6609 = vpop.f32.mrf.mxu0
        %6610 = vdwg.mxu0
        %6611 = vmatpush.bf16.msra.mxu0 %v4463
        %6612 = vmatpush.bf16.msra.mxu0 %v4459
        %6613 = vmatpush.bf16.msra.mxu0 %v4455
        %6614 = vmatpush.bf16.msra.mxu0 %v4451
        %6615 = vmatpush.bf16.msra.mxu0 %v4447
        %6616 = vmatpush.bf16.msra.mxu0 %v4443
        %6617 = vmatpush.bf16.msra.mxu0 %v4439
        %6618 = vmatpush.bf16.msra.mxu0 %v4435
        %6619 = vmatmul.bf16.gmra.mxu0 %v1129
        %v6620 = vpop.f32.mrf.mxu0
        %v6621 = vadd.f32 %v6608, %v6620
        %v6622 = vpop.f32.mrf.mxu0
        %6623 = vdwg.mxu0
        %6624 = vmatpush.bf16.msra.mxu0 %v4495
        %6625 = vmatpush.bf16.msra.mxu0 %v4491
        %6626 = vmatpush.bf16.msra.mxu0 %v4487
        %6627 = vmatpush.bf16.msra.mxu0 %v4483
        %6628 = vmatpush.bf16.msra.mxu0 %v4479
        %6629 = vmatpush.bf16.msra.mxu0 %v4475
        %6630 = vmatpush.bf16.msra.mxu0 %v4471
        %6631 = vmatpush.bf16.msra.mxu0 %v4467
        %6632 = vmatmul.bf16.gmra.mxu0 %v1130
        %v6633 = vpop.f32.mrf.mxu0
        %v6634 = vadd.f32 %v6621, %v6633
        %v6635 = vpop.f32.mrf.mxu0
        %6636 = vdwg.mxu0
        %6637 = vmatpush.bf16.msra.mxu0 %v4527
        %6638 = vmatpush.bf16.msra.mxu0 %v4523
        %6639 = vmatpush.bf16.msra.mxu0 %v4519
        %6640 = vmatpush.bf16.msra.mxu0 %v4515
        %6641 = vmatpush.bf16.msra.mxu0 %v4511
        %6642 = vmatpush.bf16.msra.mxu0 %v4507
        %6643 = vmatpush.bf16.msra.mxu0 %v4503
        %6644 = vmatpush.bf16.msra.mxu0 %v4499
        %6645 = vmatmul.bf16.gmra.mxu0 %v1131
        %v6646 = vpop.f32.mrf.mxu0
        %v6647 = vadd.f32 %v6634, %v6646
        %v6648 = vpop.f32.mrf.mxu0
        %6649 = vdwg.mxu0
        %6650 = vmatpush.bf16.msra.mxu0 %v4559
        %6651 = vmatpush.bf16.msra.mxu0 %v4555
        %6652 = vmatpush.bf16.msra.mxu0 %v4551
        %6653 = vmatpush.bf16.msra.mxu0 %v4547
        %6654 = vmatpush.bf16.msra.mxu0 %v4543
        %6655 = vmatpush.bf16.msra.mxu0 %v4539
        %6656 = vmatpush.bf16.msra.mxu0 %v4535
        %6657 = vmatpush.bf16.msra.mxu0 %v4531
        %6658 = vmatmul.bf16.gmra.mxu0 %v1132
        %v6659 = vpop.f32.mrf.mxu0
        %v6660 = vadd.f32 %v6647, %v6659
        %v6661 = vpop.f32.mrf.mxu0
        %6662 = vdwg.mxu0
        %6663 = vmatpush.bf16.msra.mxu0 %v4591
        %6664 = vmatpush.bf16.msra.mxu0 %v4587
        %6665 = vmatpush.bf16.msra.mxu0 %v4583
        %6666 = vmatpush.bf16.msra.mxu0 %v4579
        %6667 = vmatpush.bf16.msra.mxu0 %v4575
        %6668 = vmatpush.bf16.msra.mxu0 %v4571
        %6669 = vmatpush.bf16.msra.mxu0 %v4567
        %6670 = vmatpush.bf16.msra.mxu0 %v4563
        %6671 = vmatmul.bf16.gmra.mxu0 %v1133
        %v6672 = vpop.f32.mrf.mxu0
        %v6673 = vadd.f32 %v6660, %v6672
        %v6674 = vpop.f32.mrf.mxu0
        %6675 = vdwg.mxu0
        %6676 = vmatpush.bf16.msra.mxu0 %v4623
        %6677 = vmatpush.bf16.msra.mxu0 %v4619
        %6678 = vmatpush.bf16.msra.mxu0 %v4615
        %6679 = vmatpush.bf16.msra.mxu0 %v4611
        %6680 = vmatpush.bf16.msra.mxu0 %v4607
        %6681 = vmatpush.bf16.msra.mxu0 %v4603
        %6682 = vmatpush.bf16.msra.mxu0 %v4599
        %6683 = vmatpush.bf16.msra.mxu0 %v4595
        %6684 = vmatmul.bf16.gmra.mxu0 %v1134
        %v6685 = vpop.f32.mrf.mxu0
        %v6686 = vadd.f32 %v6673, %v6685
        %v6687 = vpop.f32.mrf.mxu0
        %6688 = vdwg.mxu0
        %6689 = vmatpush.bf16.msra.mxu0 %v4655
        %6690 = vmatpush.bf16.msra.mxu0 %v4651
        %6691 = vmatpush.bf16.msra.mxu0 %v4647
        %6692 = vmatpush.bf16.msra.mxu0 %v4643
        %6693 = vmatpush.bf16.msra.mxu0 %v4639
        %6694 = vmatpush.bf16.msra.mxu0 %v4635
        %6695 = vmatpush.bf16.msra.mxu0 %v4631
        %6696 = vmatpush.bf16.msra.mxu0 %v4627
        %6697 = vmatmul.bf16.gmra.mxu0 %v1137
        %v6698 = vpop.f32.mrf.mxu0
        %v6699 = vadd.f32 %v6686, %v6698
        %v6700 = vpop.f32.mrf.mxu0
        %6701 = vdwg.mxu0
        %6702 = vmatpush.bf16.msra.mxu0 %v4687
        %6703 = vmatpush.bf16.msra.mxu0 %v4683
        %6704 = vmatpush.bf16.msra.mxu0 %v4679
        %6705 = vmatpush.bf16.msra.mxu0 %v4675
        %6706 = vmatpush.bf16.msra.mxu0 %v4671
        %6707 = vmatpush.bf16.msra.mxu0 %v4667
        %6708 = vmatpush.bf16.msra.mxu0 %v4663
        %6709 = vmatpush.bf16.msra.mxu0 %v4659
        %6710 = vmatmul.bf16.gmra.mxu0 %v1138
        %v6711 = vpop.f32.mrf.mxu0
        %v6712 = vadd.f32 %v6699, %v6711
        %v6713 = vpop.f32.mrf.mxu0
        %6714 = vdwg.mxu0
        %6715 = vmatpush.bf16.msra.mxu0 %v4719
        %6716 = vmatpush.bf16.msra.mxu0 %v4715
        %6717 = vmatpush.bf16.msra.mxu0 %v4711
        %6718 = vmatpush.bf16.msra.mxu0 %v4707
        %6719 = vmatpush.bf16.msra.mxu0 %v4703
        %6720 = vmatpush.bf16.msra.mxu0 %v4699
        %6721 = vmatpush.bf16.msra.mxu0 %v4695
        %6722 = vmatpush.bf16.msra.mxu0 %v4691
        %6723 = vmatmul.bf16.gmra.mxu0 %v1139
        %v6724 = vpop.f32.mrf.mxu0
        %v6725 = vadd.f32 %v6712, %v6724
        %v6726 = vpop.f32.mrf.mxu0
        %6727 = vdwg.mxu0
        %6728 = vmatpush.bf16.msra.mxu0 %v4751
        %6729 = vmatpush.bf16.msra.mxu0 %v4747
        %6730 = vmatpush.bf16.msra.mxu0 %v4743
        %6731 = vmatpush.bf16.msra.mxu0 %v4739
        %6732 = vmatpush.bf16.msra.mxu0 %v4735
        %6733 = vmatpush.bf16.msra.mxu0 %v4731
        %6734 = vmatpush.bf16.msra.mxu0 %v4727
        %6735 = vmatpush.bf16.msra.mxu0 %v4723
        %6736 = vmatmul.bf16.gmra.mxu0 %v1140
        %v6737 = vpop.f32.mrf.mxu0
        %v6738 = vadd.f32 %v6725, %v6737
        %v6739 = vpop.f32.mrf.mxu0
        %6740 = vdwg.mxu0
        %6741 = vmatpush.bf16.msra.mxu0 %v3888
        %6742 = vmatpush.bf16.msra.mxu0 %v3884
        %6743 = vmatpush.bf16.msra.mxu0 %v3880
        %6744 = vmatpush.bf16.msra.mxu0 %v3876
        %6745 = vmatpush.bf16.msra.mxu0 %v3872
        %6746 = vmatpush.bf16.msra.mxu0 %v3868
        %6747 = vmatpush.bf16.msra.mxu0 %v3864
        %6748 = vmatpush.bf16.msra.mxu0 %v3860
        %6749 = vmatmul.bf16.gmra.mxu0 %v1107
        %v6750 = vpop.f32.mrf.mxu0
        %v6751 = vadd.f32 0.0, %v6750
        %v6752 = vpop.f32.mrf.mxu0
        %6753 = vdwg.mxu0
        %6754 = vmatpush.bf16.msra.mxu0 %v3920
        %6755 = vmatpush.bf16.msra.mxu0 %v3916
        %6756 = vmatpush.bf16.msra.mxu0 %v3912
        %6757 = vmatpush.bf16.msra.mxu0 %v3908
        %6758 = vmatpush.bf16.msra.mxu0 %v3904
        %6759 = vmatpush.bf16.msra.mxu0 %v3900
        %6760 = vmatpush.bf16.msra.mxu0 %v3896
        %6761 = vmatpush.bf16.msra.mxu0 %v3892
        %6762 = vmatmul.bf16.gmra.mxu0 %v1108
        %v6763 = vpop.f32.mrf.mxu0
        %v6764 = vadd.f32 %v6751, %v6763
        %v6765 = vpop.f32.mrf.mxu0
        %6766 = vdwg.mxu0
        %6767 = vmatpush.bf16.msra.mxu0 %v3952
        %6768 = vmatpush.bf16.msra.mxu0 %v3948
        %6769 = vmatpush.bf16.msra.mxu0 %v3944
        %6770 = vmatpush.bf16.msra.mxu0 %v3940
        %6771 = vmatpush.bf16.msra.mxu0 %v3936
        %6772 = vmatpush.bf16.msra.mxu0 %v3932
        %6773 = vmatpush.bf16.msra.mxu0 %v3928
        %6774 = vmatpush.bf16.msra.mxu0 %v3924
        %6775 = vmatmul.bf16.gmra.mxu0 %v1109
        %v6776 = vpop.f32.mrf.mxu0
        %v6777 = vadd.f32 %v6764, %v6776
        %v6778 = vpop.f32.mrf.mxu0
        %6779 = vdwg.mxu0
        %6780 = vmatpush.bf16.msra.mxu0 %v3984
        %6781 = vmatpush.bf16.msra.mxu0 %v3980
        %6782 = vmatpush.bf16.msra.mxu0 %v3976
        %6783 = vmatpush.bf16.msra.mxu0 %v3972
        %6784 = vmatpush.bf16.msra.mxu0 %v3968
        %6785 = vmatpush.bf16.msra.mxu0 %v3964
        %6786 = vmatpush.bf16.msra.mxu0 %v3960
        %6787 = vmatpush.bf16.msra.mxu0 %v3956
        %6788 = vmatmul.bf16.gmra.mxu0 %v1110
        %v6789 = vpop.f32.mrf.mxu0
        %v6790 = vadd.f32 %v6777, %v6789
        %v6791 = vpop.f32.mrf.mxu0
        %6792 = vdwg.mxu0
        %6793 = vmatpush.bf16.msra.mxu0 %v4016
        %6794 = vmatpush.bf16.msra.mxu0 %v4012
        %6795 = vmatpush.bf16.msra.mxu0 %v4008
        %6796 = vmatpush.bf16.msra.mxu0 %v4004
        %6797 = vmatpush.bf16.msra.mxu0 %v4000
        %6798 = vmatpush.bf16.msra.mxu0 %v3996
        %6799 = vmatpush.bf16.msra.mxu0 %v3992
        %6800 = vmatpush.bf16.msra.mxu0 %v3988
        %6801 = vmatmul.bf16.gmra.mxu0 %v1111
        %v6802 = vpop.f32.mrf.mxu0
        %v6803 = vadd.f32 %v6790, %v6802
        %v6804 = vpop.f32.mrf.mxu0
        %6805 = vdwg.mxu0
        %6806 = vmatpush.bf16.msra.mxu0 %v4048
        %6807 = vmatpush.bf16.msra.mxu0 %v4044
        %6808 = vmatpush.bf16.msra.mxu0 %v4040
        %6809 = vmatpush.bf16.msra.mxu0 %v4036
        %6810 = vmatpush.bf16.msra.mxu0 %v4032
        %6811 = vmatpush.bf16.msra.mxu0 %v4028
        %6812 = vmatpush.bf16.msra.mxu0 %v4024
        %6813 = vmatpush.bf16.msra.mxu0 %v4020
        %6814 = vmatmul.bf16.gmra.mxu0 %v1112
        %v6815 = vpop.f32.mrf.mxu0
        %v6816 = vadd.f32 %v6803, %v6815
        %v6817 = vpop.f32.mrf.mxu0
        %6818 = vdwg.mxu0
        %6819 = vmatpush.bf16.msra.mxu0 %v4080
        %6820 = vmatpush.bf16.msra.mxu0 %v4076
        %6821 = vmatpush.bf16.msra.mxu0 %v4072
        %6822 = vmatpush.bf16.msra.mxu0 %v4068
        %6823 = vmatpush.bf16.msra.mxu0 %v4064
        %6824 = vmatpush.bf16.msra.mxu0 %v4060
        %6825 = vmatpush.bf16.msra.mxu0 %v4056
        %6826 = vmatpush.bf16.msra.mxu0 %v4052
        %6827 = vmatmul.bf16.gmra.mxu0 %v1113
        %v6828 = vpop.f32.mrf.mxu0
        %v6829 = vadd.f32 %v6816, %v6828
        %v6830 = vpop.f32.mrf.mxu0
        %6831 = vdwg.mxu0
        %6832 = vmatpush.bf16.msra.mxu0 %v4112
        %6833 = vmatpush.bf16.msra.mxu0 %v4108
        %6834 = vmatpush.bf16.msra.mxu0 %v4104
        %6835 = vmatpush.bf16.msra.mxu0 %v4100
        %6836 = vmatpush.bf16.msra.mxu0 %v4096
        %6837 = vmatpush.bf16.msra.mxu0 %v4092
        %6838 = vmatpush.bf16.msra.mxu0 %v4088
        %6839 = vmatpush.bf16.msra.mxu0 %v4084
        %6840 = vmatmul.bf16.gmra.mxu0 %v1114
        %v6841 = vpop.f32.mrf.mxu0
        %v6842 = vadd.f32 %v6829, %v6841
        %v6843 = vpop.f32.mrf.mxu0
        %6844 = vdwg.mxu0
        %6845 = vmatpush.bf16.msra.mxu0 %v4144
        %6846 = vmatpush.bf16.msra.mxu0 %v4140
        %6847 = vmatpush.bf16.msra.mxu0 %v4136
        %6848 = vmatpush.bf16.msra.mxu0 %v4132
        %6849 = vmatpush.bf16.msra.mxu0 %v4128
        %6850 = vmatpush.bf16.msra.mxu0 %v4124
        %6851 = vmatpush.bf16.msra.mxu0 %v4120
        %6852 = vmatpush.bf16.msra.mxu0 %v4116
        %6853 = vmatmul.bf16.gmra.mxu0 %v1117
        %v6854 = vpop.f32.mrf.mxu0
        %v6855 = vadd.f32 %v6842, %v6854
        %v6856 = vpop.f32.mrf.mxu0
        %6857 = vdwg.mxu0
        %6858 = vmatpush.bf16.msra.mxu0 %v4176
        %6859 = vmatpush.bf16.msra.mxu0 %v4172
        %6860 = vmatpush.bf16.msra.mxu0 %v4168
        %6861 = vmatpush.bf16.msra.mxu0 %v4164
        %6862 = vmatpush.bf16.msra.mxu0 %v4160
        %6863 = vmatpush.bf16.msra.mxu0 %v4156
        %6864 = vmatpush.bf16.msra.mxu0 %v4152
        %6865 = vmatpush.bf16.msra.mxu0 %v4148
        %6866 = vmatmul.bf16.gmra.mxu0 %v1118
        %v6867 = vpop.f32.mrf.mxu0
        %v6868 = vadd.f32 %v6855, %v6867
        %v6869 = vpop.f32.mrf.mxu0
        %6870 = vdwg.mxu0
        %6871 = vmatpush.bf16.msra.mxu0 %v4208
        %6872 = vmatpush.bf16.msra.mxu0 %v4204
        %6873 = vmatpush.bf16.msra.mxu0 %v4200
        %6874 = vmatpush.bf16.msra.mxu0 %v4196
        %6875 = vmatpush.bf16.msra.mxu0 %v4192
        %6876 = vmatpush.bf16.msra.mxu0 %v4188
        %6877 = vmatpush.bf16.msra.mxu0 %v4184
        %6878 = vmatpush.bf16.msra.mxu0 %v4180
        %6879 = vmatmul.bf16.gmra.mxu0 %v1119
        %v6880 = vpop.f32.mrf.mxu0
        %v6881 = vadd.f32 %v6868, %v6880
        %v6882 = vpop.f32.mrf.mxu0
        %6883 = vdwg.mxu0
        %6884 = vmatpush.bf16.msra.mxu0 %v4240
        %6885 = vmatpush.bf16.msra.mxu0 %v4236
        %6886 = vmatpush.bf16.msra.mxu0 %v4232
        %6887 = vmatpush.bf16.msra.mxu0 %v4228
        %6888 = vmatpush.bf16.msra.mxu0 %v4224
        %6889 = vmatpush.bf16.msra.mxu0 %v4220
        %6890 = vmatpush.bf16.msra.mxu0 %v4216
        %6891 = vmatpush.bf16.msra.mxu0 %v4212
        %6892 = vmatmul.bf16.gmra.mxu0 %v1120
        %v6893 = vpop.f32.mrf.mxu0
        %v6894 = vadd.f32 %v6881, %v6893
        %v6895 = vpop.f32.mrf.mxu0
        %6896 = vdwg.mxu0
        %6897 = vmatpush.bf16.msra.mxu0 %v4272
        %6898 = vmatpush.bf16.msra.mxu0 %v4268
        %6899 = vmatpush.bf16.msra.mxu0 %v4264
        %6900 = vmatpush.bf16.msra.mxu0 %v4260
        %6901 = vmatpush.bf16.msra.mxu0 %v4256
        %6902 = vmatpush.bf16.msra.mxu0 %v4252
        %6903 = vmatpush.bf16.msra.mxu0 %v4248
        %6904 = vmatpush.bf16.msra.mxu0 %v4244
        %6905 = vmatmul.bf16.gmra.mxu0 %v1121
        %v6906 = vpop.f32.mrf.mxu0
        %v6907 = vadd.f32 %v6894, %v6906
        %v6908 = vpop.f32.mrf.mxu0
        %6909 = vdwg.mxu0
        %6910 = vmatpush.bf16.msra.mxu0 %v4304
        %6911 = vmatpush.bf16.msra.mxu0 %v4300
        %6912 = vmatpush.bf16.msra.mxu0 %v4296
        %6913 = vmatpush.bf16.msra.mxu0 %v4292
        %6914 = vmatpush.bf16.msra.mxu0 %v4288
        %6915 = vmatpush.bf16.msra.mxu0 %v4284
        %6916 = vmatpush.bf16.msra.mxu0 %v4280
        %6917 = vmatpush.bf16.msra.mxu0 %v4276
        %6918 = vmatmul.bf16.gmra.mxu0 %v1122
        %v6919 = vpop.f32.mrf.mxu0
        %v6920 = vadd.f32 %v6907, %v6919
        %v6921 = vpop.f32.mrf.mxu0
        %6922 = vdwg.mxu0
        %6923 = vmatpush.bf16.msra.mxu0 %v4336
        %6924 = vmatpush.bf16.msra.mxu0 %v4332
        %6925 = vmatpush.bf16.msra.mxu0 %v4328
        %6926 = vmatpush.bf16.msra.mxu0 %v4324
        %6927 = vmatpush.bf16.msra.mxu0 %v4320
        %6928 = vmatpush.bf16.msra.mxu0 %v4316
        %6929 = vmatpush.bf16.msra.mxu0 %v4312
        %6930 = vmatpush.bf16.msra.mxu0 %v4308
        %6931 = vmatmul.bf16.gmra.mxu0 %v1123
        %v6932 = vpop.f32.mrf.mxu0
        %v6933 = vadd.f32 %v6920, %v6932
        %v6934 = vpop.f32.mrf.mxu0
        %6935 = vdwg.mxu0
        %6936 = vmatpush.bf16.msra.mxu0 %v4368
        %6937 = vmatpush.bf16.msra.mxu0 %v4364
        %6938 = vmatpush.bf16.msra.mxu0 %v4360
        %6939 = vmatpush.bf16.msra.mxu0 %v4356
        %6940 = vmatpush.bf16.msra.mxu0 %v4352
        %6941 = vmatpush.bf16.msra.mxu0 %v4348
        %6942 = vmatpush.bf16.msra.mxu0 %v4344
        %6943 = vmatpush.bf16.msra.mxu0 %v4340
        %6944 = vmatmul.bf16.gmra.mxu0 %v1124
        %v6945 = vpop.f32.mrf.mxu0
        %v6946 = vadd.f32 %v6933, %v6945
        %v6947 = vpop.f32.mrf.mxu0
        %6948 = vdwg.mxu0
        %6949 = vmatpush.bf16.msra.mxu0 %v4400
        %6950 = vmatpush.bf16.msra.mxu0 %v4396
        %6951 = vmatpush.bf16.msra.mxu0 %v4392
        %6952 = vmatpush.bf16.msra.mxu0 %v4388
        %6953 = vmatpush.bf16.msra.mxu0 %v4384
        %6954 = vmatpush.bf16.msra.mxu0 %v4380
        %6955 = vmatpush.bf16.msra.mxu0 %v4376
        %6956 = vmatpush.bf16.msra.mxu0 %v4372
        %6957 = vmatmul.bf16.gmra.mxu0 %v1127
        %v6958 = vpop.f32.mrf.mxu0
        %v6959 = vadd.f32 %v6946, %v6958
        %v6960 = vpop.f32.mrf.mxu0
        %6961 = vdwg.mxu0
        %6962 = vmatpush.bf16.msra.mxu0 %v4432
        %6963 = vmatpush.bf16.msra.mxu0 %v4428
        %6964 = vmatpush.bf16.msra.mxu0 %v4424
        %6965 = vmatpush.bf16.msra.mxu0 %v4420
        %6966 = vmatpush.bf16.msra.mxu0 %v4416
        %6967 = vmatpush.bf16.msra.mxu0 %v4412
        %6968 = vmatpush.bf16.msra.mxu0 %v4408
        %6969 = vmatpush.bf16.msra.mxu0 %v4404
        %6970 = vmatmul.bf16.gmra.mxu0 %v1128
        %v6971 = vpop.f32.mrf.mxu0
        %v6972 = vadd.f32 %v6959, %v6971
        %v6973 = vpop.f32.mrf.mxu0
        %6974 = vdwg.mxu0
        %6975 = vmatpush.bf16.msra.mxu0 %v4464
        %6976 = vmatpush.bf16.msra.mxu0 %v4460
        %6977 = vmatpush.bf16.msra.mxu0 %v4456
        %6978 = vmatpush.bf16.msra.mxu0 %v4452
        %6979 = vmatpush.bf16.msra.mxu0 %v4448
        %6980 = vmatpush.bf16.msra.mxu0 %v4444
        %6981 = vmatpush.bf16.msra.mxu0 %v4440
        %6982 = vmatpush.bf16.msra.mxu0 %v4436
        %6983 = vmatmul.bf16.gmra.mxu0 %v1129
        %v6984 = vpop.f32.mrf.mxu0
        %v6985 = vadd.f32 %v6972, %v6984
        %v6986 = vpop.f32.mrf.mxu0
        %6987 = vdwg.mxu0
        %6988 = vmatpush.bf16.msra.mxu0 %v4496
        %6989 = vmatpush.bf16.msra.mxu0 %v4492
        %6990 = vmatpush.bf16.msra.mxu0 %v4488
        %6991 = vmatpush.bf16.msra.mxu0 %v4484
        %6992 = vmatpush.bf16.msra.mxu0 %v4480
        %6993 = vmatpush.bf16.msra.mxu0 %v4476
        %6994 = vmatpush.bf16.msra.mxu0 %v4472
        %6995 = vmatpush.bf16.msra.mxu0 %v4468
        %6996 = vmatmul.bf16.gmra.mxu0 %v1130
        %v6997 = vpop.f32.mrf.mxu0
        %v6998 = vadd.f32 %v6985, %v6997
        %v6999 = vpop.f32.mrf.mxu0
        %7000 = vdwg.mxu0
        %7001 = vmatpush.bf16.msra.mxu0 %v4528
        %7002 = vmatpush.bf16.msra.mxu0 %v4524
        %7003 = vmatpush.bf16.msra.mxu0 %v4520
        %7004 = vmatpush.bf16.msra.mxu0 %v4516
        %7005 = vmatpush.bf16.msra.mxu0 %v4512
        %7006 = vmatpush.bf16.msra.mxu0 %v4508
        %7007 = vmatpush.bf16.msra.mxu0 %v4504
        %7008 = vmatpush.bf16.msra.mxu0 %v4500
        %7009 = vmatmul.bf16.gmra.mxu0 %v1131
        %v7010 = vpop.f32.mrf.mxu0
        %v7011 = vadd.f32 %v6998, %v7010
        %v7012 = vpop.f32.mrf.mxu0
        %7013 = vdwg.mxu0
        %7014 = vmatpush.bf16.msra.mxu0 %v4560
        %7015 = vmatpush.bf16.msra.mxu0 %v4556
        %7016 = vmatpush.bf16.msra.mxu0 %v4552
        %7017 = vmatpush.bf16.msra.mxu0 %v4548
        %7018 = vmatpush.bf16.msra.mxu0 %v4544
        %7019 = vmatpush.bf16.msra.mxu0 %v4540
        %7020 = vmatpush.bf16.msra.mxu0 %v4536
        %7021 = vmatpush.bf16.msra.mxu0 %v4532
        %7022 = vmatmul.bf16.gmra.mxu0 %v1132
        %v7023 = vpop.f32.mrf.mxu0
        %v7024 = vadd.f32 %v7011, %v7023
        %v7025 = vpop.f32.mrf.mxu0
        %7026 = vdwg.mxu0
        %7027 = vmatpush.bf16.msra.mxu0 %v4592
        %7028 = vmatpush.bf16.msra.mxu0 %v4588
        %7029 = vmatpush.bf16.msra.mxu0 %v4584
        %7030 = vmatpush.bf16.msra.mxu0 %v4580
        %7031 = vmatpush.bf16.msra.mxu0 %v4576
        %7032 = vmatpush.bf16.msra.mxu0 %v4572
        %7033 = vmatpush.bf16.msra.mxu0 %v4568
        %7034 = vmatpush.bf16.msra.mxu0 %v4564
        %7035 = vmatmul.bf16.gmra.mxu0 %v1133
        %v7036 = vpop.f32.mrf.mxu0
        %v7037 = vadd.f32 %v7024, %v7036
        %v7038 = vpop.f32.mrf.mxu0
        %7039 = vdwg.mxu0
        %7040 = vmatpush.bf16.msra.mxu0 %v4624
        %7041 = vmatpush.bf16.msra.mxu0 %v4620
        %7042 = vmatpush.bf16.msra.mxu0 %v4616
        %7043 = vmatpush.bf16.msra.mxu0 %v4612
        %7044 = vmatpush.bf16.msra.mxu0 %v4608
        %7045 = vmatpush.bf16.msra.mxu0 %v4604
        %7046 = vmatpush.bf16.msra.mxu0 %v4600
        %7047 = vmatpush.bf16.msra.mxu0 %v4596
        %7048 = vmatmul.bf16.gmra.mxu0 %v1134
        %v7049 = vpop.f32.mrf.mxu0
        %v7050 = vadd.f32 %v7037, %v7049
        %v7051 = vpop.f32.mrf.mxu0
        %7052 = vdwg.mxu0
        %7053 = vmatpush.bf16.msra.mxu0 %v4656
        %7054 = vmatpush.bf16.msra.mxu0 %v4652
        %7055 = vmatpush.bf16.msra.mxu0 %v4648
        %7056 = vmatpush.bf16.msra.mxu0 %v4644
        %7057 = vmatpush.bf16.msra.mxu0 %v4640
        %7058 = vmatpush.bf16.msra.mxu0 %v4636
        %7059 = vmatpush.bf16.msra.mxu0 %v4632
        %7060 = vmatpush.bf16.msra.mxu0 %v4628
        %7061 = vmatmul.bf16.gmra.mxu0 %v1137
        %v7062 = vpop.f32.mrf.mxu0
        %v7063 = vadd.f32 %v7050, %v7062
        %v7064 = vpop.f32.mrf.mxu0
        %7065 = vdwg.mxu0
        %7066 = vmatpush.bf16.msra.mxu0 %v4688
        %7067 = vmatpush.bf16.msra.mxu0 %v4684
        %7068 = vmatpush.bf16.msra.mxu0 %v4680
        %7069 = vmatpush.bf16.msra.mxu0 %v4676
        %7070 = vmatpush.bf16.msra.mxu0 %v4672
        %7071 = vmatpush.bf16.msra.mxu0 %v4668
        %7072 = vmatpush.bf16.msra.mxu0 %v4664
        %7073 = vmatpush.bf16.msra.mxu0 %v4660
        %7074 = vmatmul.bf16.gmra.mxu0 %v1138
        %v7075 = vpop.f32.mrf.mxu0
        %v7076 = vadd.f32 %v7063, %v7075
        %v7077 = vpop.f32.mrf.mxu0
        %7078 = vdwg.mxu0
        %7079 = vmatpush.bf16.msra.mxu0 %v4720
        %7080 = vmatpush.bf16.msra.mxu0 %v4716
        %7081 = vmatpush.bf16.msra.mxu0 %v4712
        %7082 = vmatpush.bf16.msra.mxu0 %v4708
        %7083 = vmatpush.bf16.msra.mxu0 %v4704
        %7084 = vmatpush.bf16.msra.mxu0 %v4700
        %7085 = vmatpush.bf16.msra.mxu0 %v4696
        %7086 = vmatpush.bf16.msra.mxu0 %v4692
        %7087 = vmatmul.bf16.gmra.mxu0 %v1139
        %v7088 = vpop.f32.mrf.mxu0
        %v7089 = vadd.f32 %v7076, %v7088
        %v7090 = vpop.f32.mrf.mxu0
        %7091 = vdwg.mxu0
        %7092 = vmatpush.bf16.msra.mxu0 %v4752
        %7093 = vmatpush.bf16.msra.mxu0 %v4748
        %7094 = vmatpush.bf16.msra.mxu0 %v4744
        %7095 = vmatpush.bf16.msra.mxu0 %v4740
        %7096 = vmatpush.bf16.msra.mxu0 %v4736
        %7097 = vmatpush.bf16.msra.mxu0 %v4732
        %7098 = vmatpush.bf16.msra.mxu0 %v4728
        %7099 = vmatpush.bf16.msra.mxu0 %v4724
        %7100 = vmatmul.bf16.gmra.mxu0 %v1140
        %v7101 = vpop.f32.mrf.mxu0
        %v7102 = vadd.f32 %v7089, %v7101
        %v7103 = vpop.f32.mrf.mxu0
        %7104 = vdwg.mxu0
        %v7109 = vrot.slane %v6374, 6
        %v7110 = vrot.slane %v6738, 4
        %v7111 = vrot.slane %v7102, 2
        %vm7112 = vcmask 1041408
        %v7113 = vsel %vm7112, %v6010, %v7109
        %vm7114 = vcmask 1045508
        %v7115 = vsel %vm7114, %v7110, %v7111
        %vm7116 = vcmask 1043456
        %v7117 = vsel %vm7116, %v7113, %v7115
        %v7119 = vadd.f32 %v204, %v7117
        %7120 = vst [vmem:[#allocation2] sm:$0xff] %v7119
        %p7121 = scmp.eq.s32.totalorder %s17, 6
        // Predicated region
        $region41: #{vgg_forward.9} parent=31 // pred_check
          %p7122 = pneg %p7121
        $region42: #{vgg_forward.9} parent=31 // pred_check_branch
          %7124 = sbr.rel (%p7122) target = $region44
        $region43: #{vgg_forward.9} parent=31 // pred_region
          %v7125 = vld [vmem:[#allocation2] sm:$0xff]
          %v7126 = vld [vmem:[%s2] sm:$0xf]
          %v7128 = vperm.slane %v7126, 0
          %v7129 = vperm.slane %v7126, 1
          %v7130 = vperm.slane %v7126, 2
          %v7131 = vperm.slane %v7126, 3
          %v7132 = vrot.slane %v7129, 6
          %v7133 = vrot.slane %v7130, 4
          %v7134 = vrot.slane %v7131, 2
          %v7135 = vsel %vm7112, %v7128, %v7132
          %v7136 = vsel %vm7114, %v7133, %v7134
          %v7137 = vsel %vm7116, %v7135, %v7136
          %v7139 = vadd.f32 %v7125, %v7137
          %v7140 = vmax.f32 %v7139, 0.0
          %7141 = vst [vmem:[%s3] sm:$0xff] %v7140
        $region44: #{vgg_forward.9} parent=31 // pred_fallthru
          _
        // Predicated region
        $region45: #{vgg_forward.9} parent=31 // pred_check
          %p7142 = pneg %p103
        $region46: #{vgg_forward.9} parent=31 // pred_check_branch
          %7144 = sbr.rel (%p7142) target = $region48
        $region47: #{vgg_forward.9} parent=31 // pred_region
          _
        $region48: #{vgg_forward.9} parent=31 // pred_fallthru
          _
        // Predicated region
        $region49: #{vgg_forward.9} parent=31 // pred_check
          %p7145 = pneg %p103
        $region50: #{vgg_forward.9} parent=31 // pred_check_branch
          %7147 = sbr.rel (%p7145) target = $region52
        $region51: #{vgg_forward.9} parent=31 // pred_region
          _
        $region52: #{vgg_forward.9} parent=31 // pred_fallthru
          _
      $region32: #{vgg_forward.9} parent=5 // pred_fallthru
        _
      %p7148 = scmp.le.s32.totalorder 2, %s12
      // Predicated region
      $region53: #{vgg_forward.9} parent=5 // pred_check
        %p7149 = pneg %p7148
      $region54: #{vgg_forward.9} parent=5 // pred_check_branch
        %7151 = sbr.rel (%p7149) target = $region56
      $region55: #{vgg_forward.9} parent=5 // pred_region
        %s7152 = ssub.s32 %s12, 2
      $region56: #{vgg_forward.9} parent=5 // pred_fallthru
        _
    $region6: #{vgg_forward.9} parent=1 // loop_footer
      %s16 = sadd.s32 1, %s12
    $region7: #{vgg_forward.9} parent=1 // loop_footer_branch
      %11 = sbr.rel target = $region3
    $region8: #{vgg_forward.9} parent=1 // loop_exit
      _
    %7153 = vsyncpa [#allocation4], 1
    %s7154 = scalar_lea.sflag [#allocation4], 1
    %7155 = vsyncpa %s7154, 1

</llo_original>
